<compile_context>
chip_gen: v7x
topology: tpu7x:2x2x1
jax: 0.10.0
libtpu: 0.0.40
codegen_flags: <defaults>
</compile_context>

<pallas_src>
import functools

import jax
import jax.numpy as jnp
import numpy as np
from jax.experimental import pallas as pl
from jax.experimental.pallas import tpu as pltpu

# Accurate f32 passes on the MXU for the DFT matmuls (DEFAULT precision would
# round the f32 operands to bf16).
_MM_PRECISION = jax.lax.Precision.HIGHEST


def _round_up(x: int, m: int) -> int:
    return ((x + m - 1) // m) * m


def _pick_tile_b(batch: int, num_fields: int, num_pairs: int, embed_dim: int,
                 max_tile_b: int = 1024,
                 vmem_budget_bytes: int = 8 * 1024 * 1024) -> int:
    """Batch-tile size such that double-buffered in/out blocks plus the
    per-field forward-DFT scratch stay well inside the scoped VMEM limit on
    every TPU generation (v5e 16 MiB default, v6e/v7x 32 MiB default)."""
    bytes_per_row = 4 * embed_dim * (
        2 * num_fields        # input block, double-buffered
        + 2 * num_pairs       # output block, double-buffered
        + 2 * num_fields)     # xr/xs forward-DFT scratch (not double-buffered)
    tile = vmem_budget_bytes // max(bytes_per_row, 1)
    tile = min(tile, max_tile_b, _round_up(batch, 8))
    return max(8, (tile // 8) * 8)


def _hfm_kernel(x_ref, cos_ref, sin_ref, o_ref, xr_ref, xs_ref, *,
                pairs, num_fields, inv_d, interaction_type):
    """One batch tile of HolographicInteraction.

    x_ref   : (TILE_B, F, D)   raw field embeddings (pair gather fused here)
    cos_ref : (D, D)           cos(2*pi*m*n/D)   -- fixed DFT matrix (real part)
    sin_ref : (D, D)           sin(2*pi*m*n/D)   -- fixed DFT matrix
    o_ref   : (TILE_B, P, D)   interaction tensor per field pair
    xr_ref, xs_ref : (F, TILE_B, D) f32 VMEM scratch holding the per-field
        forward DFT (xr = x@cos, xs = x@sin; true spectrum is xr - i*xs),
        computed once and reused by every pair that touches the field.
    """
    if interaction_type == "hadamard_product":
        for p, (fi, fj) in enumerate(pairs):
            a = x_ref[:, fi, :].astype(jnp.float32)
            b = x_ref[:, fj, :].astype(jnp.float32)
            o_ref[:, p, :] = (a * b).astype(o_ref.dtype)
        return

    cos = cos_ref[...]
    sin = sin_ref[...]

    # Forward DFT of every field (MXU), shared across its (F-1) pairs.
    for f in range(num_fields):
        xf = x_ref[:, f, :].astype(jnp.float32)                      # (TILE_B, D)
        xr_ref[f] = jnp.dot(xf, cos, precision=_MM_PRECISION,
                            preferred_element_type=jnp.float32)
        xs_ref[f] = jnp.dot(xf, sin, precision=_MM_PRECISION,
                            preferred_element_type=jnp.float32)

    # Per pair: complex product in the frequency domain (VPU) + inverse DFT (MXU).
    for p, (fi, fj) in enumerate(pairs):
        ar, as_ = xr_ref[fi], xs_ref[fi]        # A = ar - i*as_
        br, bs = xr_ref[fj], xs_ref[fj]         # B = br - i*bs
        if interaction_type == "circular_convolution":
            cr = ar * br - as_ * bs             # Re(A*B)
            cs = ar * bs + as_ * br             # -Im(A*B)
        else:  # "circular_correlation": conj(A) * B
            cr = ar * br + as_ * bs             # Re(conj(A)*B)
            cs = ar * bs - as_ * br             # -Im(conj(A)*B)
        # real(IDFT(C)) = (Re(C) @ cos - Im(C) @ sin) / D, with Im(C) = -cs.
        conv = (jnp.dot(cr, cos, precision=_MM_PRECISION,
                        preferred_element_type=jnp.float32)
                + jnp.dot(cs, sin, precision=_MM_PRECISION,
                          preferred_element_type=jnp.float32)) * inv_d
        o_ref[:, p, :] = conv.astype(o_ref.dtype)


def holographic_interaction(feature_emb: jax.Array, num_fields: int, *,
                            interaction_type: str = "circular_convolution",
                            max_tile_b: int = 1024) -> jax.Array:
    """Pallas forward of HolographicInteraction.

    feature_emb: (B, F, D)  ->  returns (B, P, D) float32,  P = F*(F-1)//2
    """
    if interaction_type not in ("circular_convolution", "circular_correlation",
                                "hadamard_product"):
        raise ValueError(f"interaction_type={interaction_type} not supported.")

    B, F, D = feature_emb.shape
    assert F == num_fields

    # Static upper-triangular pair list (same order as torch.triu_indices(F, F, 1)).
    ti, tj = np.triu_indices(F, k=1)
    pairs = tuple(zip(ti.tolist(), tj.tolist()))
    P = len(pairs)

    # Fixed real/imag DFT matrices, folded as trace-time constants.
    n = np.arange(D)
    theta = (2.0 * np.pi / D) * np.outer(n, n)
    cos_mat = jnp.asarray(np.cos(theta), dtype=jnp.float32)
    sin_mat = jnp.asarray(np.sin(theta), dtype=jnp.float32)

    tile_b = _pick_tile_b(B, F, P, D, max_tile_b=max_tile_b)
    b_pad = _round_up(B, tile_b)
    x = feature_emb
    if b_pad != B:
        x = jnp.pad(x, ((0, b_pad - B), (0, 0), (0, 0)))

    grid = (b_pad // tile_b,)

    if interaction_type == "hadamard_product":
        flops = 2 * b_pad * P * D
    else:
        flops = 4 * b_pad * (F + P) * D * D + 6 * b_pad * P * D
    bytes_accessed = 4 * b_pad * D * (F + P) + grid[0] * 2 * D * D * 4

    kernel = functools.partial(
        _hfm_kernel, pairs=pairs, num_fields=F, inv_d=float(1.0 / D),
        interaction_type=interaction_type)

    out = pl.pallas_call(
        kernel,
        out_shape=jax.ShapeDtypeStruct((b_pad, P, D), jnp.float32),
        grid=grid,
        in_specs=[
            pl.BlockSpec((tile_b, F, D), lambda i: (i, 0, 0)),   # embeddings
            pl.BlockSpec((D, D), lambda i: (0, 0)),              # cos DFT matrix
            pl.BlockSpec((D, D), lambda i: (0, 0)),              # sin DFT matrix
        ],
        out_specs=pl.BlockSpec((tile_b, P, D), lambda i: (i, 0, 0)),
        scratch_shapes=[
            pltpu.VMEM((F, tile_b, D), jnp.float32),   # per-field fwd DFT (real)
            pltpu.VMEM((F, tile_b, D), jnp.float32),   # per-field fwd DFT (sin part)
        ],
        compiler_params=pltpu.CompilerParams(
            dimension_semantics=("parallel",),        # batch tiles -> megacore on v7x
            vmem_limit_bytes=48 * 1024 * 1024,        # headroom above v5e's 16 MiB default
        ),
        cost_estimate=pl.CostEstimate(
            flops=int(flops), transcendentals=0,
            bytes_accessed=int(bytes_accessed)),
    )(x, cos_mat, sin_mat)

    return out[:B]


def _reference(feature_emb: jax.Array, num_fields: int) -> jax.Array:
    """Pure-JAX FFT reference mirroring the PyTorch forward exactly."""
    ti, tj = jnp.triu_indices(num_fields, k=1)
    emb1 = jnp.take(feature_emb, ti, axis=1)
    emb2 = jnp.take(feature_emb, tj, axis=1)
    fft1 = jnp.fft.fft(emb1)
    fft2 = jnp.fft.fft(emb2)
    return jnp.real(jnp.fft.ifft(fft1 * fft2)).astype(jnp.float32)


if __name__ == "__main__":
    # (B, F, D, max_tile_b): a small config matching the module's intended use,
    # plus one that exercises batch padding and a multi-step pipelined grid.
    test_configs = [(2, 4, 16, 1024), (300, 5, 32, 128)]
    key = jax.random.PRNGKey(0)
    for B, F, D, mtb in test_configs:
        key, sub = jax.random.split(key)
        feature_emb = jax.random.normal(sub, (B, F, D), dtype=jnp.float32)
        fn = jax.jit(functools.partial(holographic_interaction, num_fields=F,
                                       max_tile_b=mtb))
        out = jax.block_until_ready(fn(feature_emb))
        ref = _reference(feature_emb, F)
        # With Precision.HIGHEST the DFT matmuls are ~f32-exact (|err| ~ 1e-6).
        # The loose bound only guards against toolchains that still execute f32
        # MXU matmuls as reduced-precision bf16 passes; algorithmic errors
        # (wrong pair order / conv direction) would be O(1), far above this.
        np.testing.assert_allclose(np.asarray(out), np.asarray(ref),
                                   rtol=2e-2, atol=2e-2)
    # TODO(synk): 'hadamard_product' and 'circular_correlation' branches are
    # implemented in the kernel but only the module-default
    # 'circular_convolution' path is exercised here.
    print("KERNEL_OK")
</pallas_src>

<mosaic_0001>
module attributes {stable_mosaic.version = 11 : i64} {
  func.func @_hfm_kernel(%arg0: i32, %arg1: memref<8x4x16xf32, #tpu.memory_space<vmem>>, %arg2: memref<16x16xf32, #tpu.memory_space<vmem>>, %arg3: memref<16x16xf32, #tpu.memory_space<vmem>>, %arg4: memref<8x6x16xf32, #tpu.memory_space<vmem>>, %arg5: memref<4x8x16xf32, #tpu.memory_space<vmem>>, %arg6: memref<4x8x16xf32, #tpu.memory_space<vmem>>) attributes {dimension_semantics = [#tpu.dimension_semantics<parallel>], iteration_bounds = array<i64: 1>, scalar_prefetch = 0 : i64, scratch_operands = 2 : i64, tpu.core_type = #tpu.core_type<tc>, window_params = [{transform_indices = @transform_0, window_bounds = array<i64: 8, 4, 16>}, {pipeline_mode = #tpu.pipeline_mode<synchronous>, transform_indices = @transform_1, window_bounds = array<i64: 16, 16>}, {pipeline_mode = #tpu.pipeline_mode<synchronous>, transform_indices = @transform_2, window_bounds = array<i64: 16, 16>}, {transform_indices = @transform_3, window_bounds = array<i64: 8, 6, 16>}]} {
    %c0 = arith.constant 0 : index
    %c0_0 = arith.constant 0 : index
    %0 = vector.load %arg2[%c0, %c0_0] : memref<16x16xf32, #tpu.memory_space<vmem>>, vector<16x16xf32>
    %c0_1 = arith.constant 0 : index
    %c0_2 = arith.constant 0 : index
    %1 = vector.load %arg3[%c0_1, %c0_2] : memref<16x16xf32, #tpu.memory_space<vmem>>, vector<16x16xf32>
    %c0_3 = arith.constant 0 : index
    %c0_4 = arith.constant 0 : index
    %c0_5 = arith.constant 0 : index
    %2 = vector.load %arg1[%c0_3, %c0_4, %c0_5] : memref<8x4x16xf32, #tpu.memory_space<vmem>>, vector<8x1x16xf32>
    %3 = vector.shape_cast %2 : vector<8x1x16xf32> to vector<8x16xf32>
    %cst = arith.constant dense<0.000000e+00> : vector<8x16xf32>
    %4 = tpu.matmul %3, %0, %cst {dimension_numbers = #tpu.dot_dimension_numbers<[1], [0], [0], [1], [0, 0, 1, 1], [], []>, precision = #tpu.contract_precision<fp32>} : vector<8x16xf32>, vector<16x16xf32>, vector<8x16xf32> -> vector<8x16xf32>
    %c0_6 = arith.constant 0 : index
    %c0_7 = arith.constant 0 : index
    %c0_8 = arith.constant 0 : index
    %5 = vector.load %arg5[%c0_6, %c0_7, %c0_8] : memref<4x8x16xf32, #tpu.memory_space<vmem>>, vector<1x8x16xf32>
    %6 = vector.shape_cast %5 : vector<1x8x16xf32> to vector<8x16xf32>
    %7 = vector.shape_cast %4 : vector<8x16xf32> to vector<1x8x16xf32>
    tpu.vector_store %arg5[%c0_6, %c0_7, %c0_8], %7 {strides = array<i32>} : memref<4x8x16xf32, #tpu.memory_space<vmem>>, vector<1x8x16xf32>,
    %cst_9 = arith.constant dense<0.000000e+00> : vector<8x16xf32>
    %8 = tpu.matmul %3, %1, %cst_9 {dimension_numbers = #tpu.dot_dimension_numbers<[1], [0], [0], [1], [0, 0, 1, 1], [], []>, precision = #tpu.contract_precision<fp32>} : vector<8x16xf32>, vector<16x16xf32>, vector<8x16xf32> -> vector<8x16xf32>
    %c0_10 = arith.constant 0 : index
    %c0_11 = arith.constant 0 : index
    %c0_12 = arith.constant 0 : index
    %9 = vector.load %arg6[%c0_10, %c0_11, %c0_12] : memref<4x8x16xf32, #tpu.memory_space<vmem>>, vector<1x8x16xf32>
    %10 = vector.shape_cast %9 : vector<1x8x16xf32> to vector<8x16xf32>
    %11 = vector.shape_cast %8 : vector<8x16xf32> to vector<1x8x16xf32>
    tpu.vector_store %arg6[%c0_10, %c0_11, %c0_12], %11 {strides = array<i32>} : memref<4x8x16xf32, #tpu.memory_space<vmem>>, vector<1x8x16xf32>,
    %c0_13 = arith.constant 0 : index
    %c1 = arith.constant 1 : index
    %c0_14 = arith.constant 0 : index
    %12 = vector.load %arg1[%c0_13, %c1, %c0_14] : memref<8x4x16xf32, #tpu.memory_space<vmem>>, vector<8x1x16xf32>
    %13 = vector.shape_cast %12 : vector<8x1x16xf32> to vector<8x16xf32>
    %cst_15 = arith.constant dense<0.000000e+00> : vector<8x16xf32>
    %14 = tpu.matmul %13, %0, %cst_15 {dimension_numbers = #tpu.dot_dimension_numbers<[1], [0], [0], [1], [0, 0, 1, 1], [], []>, precision = #tpu.contract_precision<fp32>} : vector<8x16xf32>, vector<16x16xf32>, vector<8x16xf32> -> vector<8x16xf32>
    %c1_16 = arith.constant 1 : index
    %c0_17 = arith.constant 0 : index
    %c0_18 = arith.constant 0 : index
    %15 = vector.load %arg5[%c1_16, %c0_17, %c0_18] : memref<4x8x16xf32, #tpu.memory_space<vmem>>, vector<1x8x16xf32>
    %16 = vector.shape_cast %15 : vector<1x8x16xf32> to vector<8x16xf32>
    %17 = vector.shape_cast %14 : vector<8x16xf32> to vector<1x8x16xf32>
    tpu.vector_store %arg5[%c1_16, %c0_17, %c0_18], %17 {strides = array<i32>} : memref<4x8x16xf32, #tpu.memory_space<vmem>>, vector<1x8x16xf32>,
    %cst_19 = arith.constant dense<0.000000e+00> : vector<8x16xf32>
    %18 = tpu.matmul %13, %1, %cst_19 {dimension_numbers = #tpu.dot_dimension_numbers<[1], [0], [0], [1], [0, 0, 1, 1], [], []>, precision = #tpu.contract_precision<fp32>} : vector<8x16xf32>, vector<16x16xf32>, vector<8x16xf32> -> vector<8x16xf32>
    %c1_20 = arith.constant 1 : index
    %c0_21 = arith.constant 0 : index
    %c0_22 = arith.constant 0 : index
    %19 = vector.load %arg6[%c1_20, %c0_21, %c0_22] : memref<4x8x16xf32, #tpu.memory_space<vmem>>, vector<1x8x16xf32>
    %20 = vector.shape_cast %19 : vector<1x8x16xf32> to vector<8x16xf32>
    %21 = vector.shape_cast %18 : vector<8x16xf32> to vector<1x8x16xf32>
    tpu.vector_store %arg6[%c1_20, %c0_21, %c0_22], %21 {strides = array<i32>} : memref<4x8x16xf32, #tpu.memory_space<vmem>>, vector<1x8x16xf32>,
    %c0_23 = arith.constant 0 : index
    %c2 = arith.constant 2 : index
    %c0_24 = arith.constant 0 : index
    %22 = vector.load %arg1[%c0_23, %c2, %c0_24] : memref<8x4x16xf32, #tpu.memory_space<vmem>>, vector<8x1x16xf32>
    %23 = vector.shape_cast %22 : vector<8x1x16xf32> to vector<8x16xf32>
    %cst_25 = arith.constant dense<0.000000e+00> : vector<8x16xf32>
    %24 = tpu.matmul %23, %0, %cst_25 {dimension_numbers = #tpu.dot_dimension_numbers<[1], [0], [0], [1], [0, 0, 1, 1], [], []>, precision = #tpu.contract_precision<fp32>} : vector<8x16xf32>, vector<16x16xf32>, vector<8x16xf32> -> vector<8x16xf32>
    %c2_26 = arith.constant 2 : index
    %c0_27 = arith.constant 0 : index
    %c0_28 = arith.constant 0 : index
    %25 = vector.load %arg5[%c2_26, %c0_27, %c0_28] : memref<4x8x16xf32, #tpu.memory_space<vmem>>, vector<1x8x16xf32>
    %26 = vector.shape_cast %25 : vector<1x8x16xf32> to vector<8x16xf32>
    %27 = vector.shape_cast %24 : vector<8x16xf32> to vector<1x8x16xf32>
    tpu.vector_store %arg5[%c2_26, %c0_27, %c0_28], %27 {strides = array<i32>} : memref<4x8x16xf32, #tpu.memory_space<vmem>>, vector<1x8x16xf32>,
    %cst_29 = arith.constant dense<0.000000e+00> : vector<8x16xf32>
    %28 = tpu.matmul %23, %1, %cst_29 {dimension_numbers = #tpu.dot_dimension_numbers<[1], [0], [0], [1], [0, 0, 1, 1], [], []>, precision = #tpu.contract_precision<fp32>} : vector<8x16xf32>, vector<16x16xf32>, vector<8x16xf32> -> vector<8x16xf32>
    %c2_30 = arith.constant 2 : index
    %c0_31 = arith.constant 0 : index
    %c0_32 = arith.constant 0 : index
    %29 = vector.load %arg6[%c2_30, %c0_31, %c0_32] : memref<4x8x16xf32, #tpu.memory_space<vmem>>, vector<1x8x16xf32>
    %30 = vector.shape_cast %29 : vector<1x8x16xf32> to vector<8x16xf32>
    %31 = vector.shape_cast %28 : vector<8x16xf32> to vector<1x8x16xf32>
    tpu.vector_store %arg6[%c2_30, %c0_31, %c0_32], %31 {strides = array<i32>} : memref<4x8x16xf32, #tpu.memory_space<vmem>>, vector<1x8x16xf32>,
    %c0_33 = arith.constant 0 : index
    %c3 = arith.constant 3 : index
    %c0_34 = arith.constant 0 : index
    %32 = vector.load %arg1[%c0_33, %c3, %c0_34] : memref<8x4x16xf32, #tpu.memory_space<vmem>>, vector<8x1x16xf32>
    %33 = vector.shape_cast %32 : vector<8x1x16xf32> to vector<8x16xf32>
    %cst_35 = arith.constant dense<0.000000e+00> : vector<8x16xf32>
    %34 = tpu.matmul %33, %0, %cst_35 {dimension_numbers = #tpu.dot_dimension_numbers<[1], [0], [0], [1], [0, 0, 1, 1], [], []>, precision = #tpu.contract_precision<fp32>} : vector<8x16xf32>, vector<16x16xf32>, vector<8x16xf32> -> vector<8x16xf32>
    %c3_36 = arith.constant 3 : index
    %c0_37 = arith.constant 0 : index
    %c0_38 = arith.constant 0 : index
    %35 = vector.load %arg5[%c3_36, %c0_37, %c0_38] : memref<4x8x16xf32, #tpu.memory_space<vmem>>, vector<1x8x16xf32>
    %36 = vector.shape_cast %35 : vector<1x8x16xf32> to vector<8x16xf32>
    %37 = vector.shape_cast %34 : vector<8x16xf32> to vector<1x8x16xf32>
    tpu.vector_store %arg5[%c3_36, %c0_37, %c0_38], %37 {strides = array<i32>} : memref<4x8x16xf32, #tpu.memory_space<vmem>>, vector<1x8x16xf32>,
    %cst_39 = arith.constant dense<0.000000e+00> : vector<8x16xf32>
    %38 = tpu.matmul %33, %1, %cst_39 {dimension_numbers = #tpu.dot_dimension_numbers<[1], [0], [0], [1], [0, 0, 1, 1], [], []>, precision = #tpu.contract_precision<fp32>} : vector<8x16xf32>, vector<16x16xf32>, vector<8x16xf32> -> vector<8x16xf32>
    %c3_40 = arith.constant 3 : index
    %c0_41 = arith.constant 0 : index
    %c0_42 = arith.constant 0 : index
    %39 = vector.load %arg6[%c3_40, %c0_41, %c0_42] : memref<4x8x16xf32, #tpu.memory_space<vmem>>, vector<1x8x16xf32>
    %40 = vector.shape_cast %39 : vector<1x8x16xf32> to vector<8x16xf32>
    %41 = vector.shape_cast %38 : vector<8x16xf32> to vector<1x8x16xf32>
    tpu.vector_store %arg6[%c3_40, %c0_41, %c0_42], %41 {strides = array<i32>} : memref<4x8x16xf32, #tpu.memory_space<vmem>>, vector<1x8x16xf32>,
    %c0_43 = arith.constant 0 : index
    %c0_44 = arith.constant 0 : index
    %c0_45 = arith.constant 0 : index
    %42 = vector.load %arg5[%c0_43, %c0_44, %c0_45] : memref<4x8x16xf32, #tpu.memory_space<vmem>>, vector<1x8x16xf32>
    %43 = vector.shape_cast %42 : vector<1x8x16xf32> to vector<8x16xf32>
    %c0_46 = arith.constant 0 : index
    %c0_47 = arith.constant 0 : index
    %c0_48 = arith.constant 0 : index
    %44 = vector.load %arg6[%c0_46, %c0_47, %c0_48] : memref<4x8x16xf32, #tpu.memory_space<vmem>>, vector<1x8x16xf32>
    %45 = vector.shape_cast %44 : vector<1x8x16xf32> to vector<8x16xf32>
    %c1_49 = arith.constant 1 : index
    %c0_50 = arith.constant 0 : index
    %c0_51 = arith.constant 0 : index
    %46 = vector.load %arg5[%c1_49, %c0_50, %c0_51] : memref<4x8x16xf32, #tpu.memory_space<vmem>>, vector<1x8x16xf32>
    %47 = vector.shape_cast %46 : vector<1x8x16xf32> to vector<8x16xf32>
    %c1_52 = arith.constant 1 : index
    %c0_53 = arith.constant 0 : index
    %c0_54 = arith.constant 0 : index
    %48 = vector.load %arg6[%c1_52, %c0_53, %c0_54] : memref<4x8x16xf32, #tpu.memory_space<vmem>>, vector<1x8x16xf32>
    %49 = vector.shape_cast %48 : vector<1x8x16xf32> to vector<8x16xf32>
    %50 = arith.mulf %43, %47 : vector<8x16xf32>
    %51 = arith.mulf %45, %49 : vector<8x16xf32>
    %52 = arith.subf %50, %51 : vector<8x16xf32>
    %53 = arith.mulf %43, %49 : vector<8x16xf32>
    %54 = arith.mulf %45, %47 : vector<8x16xf32>
    %55 = arith.addf %53, %54 : vector<8x16xf32>
    %cst_55 = arith.constant dense<0.000000e+00> : vector<8x16xf32>
    %56 = tpu.matmul %52, %0, %cst_55 {dimension_numbers = #tpu.dot_dimension_numbers<[1], [0], [0], [1], [0, 0, 1, 1], [], []>, precision = #tpu.contract_precision<fp32>} : vector<8x16xf32>, vector<16x16xf32>, vector<8x16xf32> -> vector<8x16xf32>
    %cst_56 = arith.constant dense<0.000000e+00> : vector<8x16xf32>
    %57 = tpu.matmul %55, %1, %cst_56 {dimension_numbers = #tpu.dot_dimension_numbers<[1], [0], [0], [1], [0, 0, 1, 1], [], []>, precision = #tpu.contract_precision<fp32>} : vector<8x16xf32>, vector<16x16xf32>, vector<8x16xf32> -> vector<8x16xf32>
    %58 = arith.addf %56, %57 : vector<8x16xf32>
    %cst_57 = arith.constant 6.250000e-02 : f32
    %59 = vector.broadcast %cst_57 : f32 to vector<8x16xf32>
    %60 = arith.mulf %58, %59 : vector<8x16xf32>
    %c0_58 = arith.constant 0 : index
    %c0_59 = arith.constant 0 : index
    %c0_60 = arith.constant 0 : index
    %61 = vector.load %arg4[%c0_58, %c0_59, %c0_60] : memref<8x6x16xf32, #tpu.memory_space<vmem>>, vector<8x1x16xf32>
    %62 = vector.shape_cast %61 : vector<8x1x16xf32> to vector<8x16xf32>
    %63 = vector.shape_cast %60 : vector<8x16xf32> to vector<8x1x16xf32>
    tpu.vector_store %arg4[%c0_58, %c0_59, %c0_60], %63 {strides = array<i32>} : memref<8x6x16xf32, #tpu.memory_space<vmem>>, vector<8x1x16xf32>,
    %c0_61 = arith.constant 0 : index
    %c0_62 = arith.constant 0 : index
    %c0_63 = arith.constant 0 : index
    %64 = vector.load %arg5[%c0_61, %c0_62, %c0_63] : memref<4x8x16xf32, #tpu.memory_space<vmem>>, vector<1x8x16xf32>
    %65 = vector.shape_cast %64 : vector<1x8x16xf32> to vector<8x16xf32>
    %c0_64 = arith.constant 0 : index
    %c0_65 = arith.constant 0 : index
    %c0_66 = arith.constant 0 : index
    %66 = vector.load %arg6[%c0_64, %c0_65, %c0_66] : memref<4x8x16xf32, #tpu.memory_space<vmem>>, vector<1x8x16xf32>
    %67 = vector.shape_cast %66 : vector<1x8x16xf32> to vector<8x16xf32>
    %c2_67 = arith.constant 2 : index
    %c0_68 = arith.constant 0 : index
    %c0_69 = arith.constant 0 : index
    %68 = vector.load %arg5[%c2_67, %c0_68, %c0_69] : memref<4x8x16xf32, #tpu.memory_space<vmem>>, vector<1x8x16xf32>
    %69 = vector.shape_cast %68 : vector<1x8x16xf32> to vector<8x16xf32>
    %c2_70 = arith.constant 2 : index
    %c0_71 = arith.constant 0 : index
    %c0_72 = arith.constant 0 : index
    %70 = vector.load %arg6[%c2_70, %c0_71, %c0_72] : memref<4x8x16xf32, #tpu.memory_space<vmem>>, vector<1x8x16xf32>
    %71 = vector.shape_cast %70 : vector<1x8x16xf32> to vector<8x16xf32>
    %72 = arith.mulf %65, %69 : vector<8x16xf32>
    %73 = arith.mulf %67, %71 : vector<8x16xf32>
    %74 = arith.subf %72, %73 : vector<8x16xf32>
    %75 = arith.mulf %65, %71 : vector<8x16xf32>
    %76 = arith.mulf %67, %69 : vector<8x16xf32>
    %77 = arith.addf %75, %76 : vector<8x16xf32>
    %cst_73 = arith.constant dense<0.000000e+00> : vector<8x16xf32>
    %78 = tpu.matmul %74, %0, %cst_73 {dimension_numbers = #tpu.dot_dimension_numbers<[1], [0], [0], [1], [0, 0, 1, 1], [], []>, precision = #tpu.contract_precision<fp32>} : vector<8x16xf32>, vector<16x16xf32>, vector<8x16xf32> -> vector<8x16xf32>
    %cst_74 = arith.constant dense<0.000000e+00> : vector<8x16xf32>
    %79 = tpu.matmul %77, %1, %cst_74 {dimension_numbers = #tpu.dot_dimension_numbers<[1], [0], [0], [1], [0, 0, 1, 1], [], []>, precision = #tpu.contract_precision<fp32>} : vector<8x16xf32>, vector<16x16xf32>, vector<8x16xf32> -> vector<8x16xf32>
    %80 = arith.addf %78, %79 : vector<8x16xf32>
    %cst_75 = arith.constant 6.250000e-02 : f32
    %81 = vector.broadcast %cst_75 : f32 to vector<8x16xf32>
    %82 = arith.mulf %80, %81 : vector<8x16xf32>
    %c0_76 = arith.constant 0 : index
    %c1_77 = arith.constant 1 : index
    %c0_78 = arith.constant 0 : index
    %83 = vector.load %arg4[%c0_76, %c1_77, %c0_78] : memref<8x6x16xf32, #tpu.memory_space<vmem>>, vector<8x1x16xf32>
    %84 = vector.shape_cast %83 : vector<8x1x16xf32> to vector<8x16xf32>
    %85 = vector.shape_cast %82 : vector<8x16xf32> to vector<8x1x16xf32>
    tpu.vector_store %arg4[%c0_76, %c1_77, %c0_78], %85 {strides = array<i32>} : memref<8x6x16xf32, #tpu.memory_space<vmem>>, vector<8x1x16xf32>,
    %c0_79 = arith.constant 0 : index
    %c0_80 = arith.constant 0 : index
    %c0_81 = arith.constant 0 : index
    %86 = vector.load %arg5[%c0_79, %c0_80, %c0_81] : memref<4x8x16xf32, #tpu.memory_space<vmem>>, vector<1x8x16xf32>
    %87 = vector.shape_cast %86 : vector<1x8x16xf32> to vector<8x16xf32>
    %c0_82 = arith.constant 0 : index
    %c0_83 = arith.constant 0 : index
    %c0_84 = arith.constant 0 : index
    %88 = vector.load %arg6[%c0_82, %c0_83, %c0_84] : memref<4x8x16xf32, #tpu.memory_space<vmem>>, vector<1x8x16xf32>
    %89 = vector.shape_cast %88 : vector<1x8x16xf32> to vector<8x16xf32>
    %c3_85 = arith.constant 3 : index
    %c0_86 = arith.constant 0 : index
    %c0_87 = arith.constant 0 : index
    %90 = vector.load %arg5[%c3_85, %c0_86, %c0_87] : memref<4x8x16xf32, #tpu.memory_space<vmem>>, vector<1x8x16xf32>
    %91 = vector.shape_cast %90 : vector<1x8x16xf32> to vector<8x16xf32>
    %c3_88 = arith.constant 3 : index
    %c0_89 = arith.constant 0 : index
    %c0_90 = arith.constant 0 : index
    %92 = vector.load %arg6[%c3_88, %c0_89, %c0_90] : memref<4x8x16xf32, #tpu.memory_space<vmem>>, vector<1x8x16xf32>
    %93 = vector.shape_cast %92 : vector<1x8x16xf32> to vector<8x16xf32>
    %94 = arith.mulf %87, %91 : vector<8x16xf32>
    %95 = arith.mulf %89, %93 : vector<8x16xf32>
    %96 = arith.subf %94, %95 : vector<8x16xf32>
    %97 = arith.mulf %87, %93 : vector<8x16xf32>
    %98 = arith.mulf %89, %91 : vector<8x16xf32>
    %99 = arith.addf %97, %98 : vector<8x16xf32>
    %cst_91 = arith.constant dense<0.000000e+00> : vector<8x16xf32>
    %100 = tpu.matmul %96, %0, %cst_91 {dimension_numbers = #tpu.dot_dimension_numbers<[1], [0], [0], [1], [0, 0, 1, 1], [], []>, precision = #tpu.contract_precision<fp32>} : vector<8x16xf32>, vector<16x16xf32>, vector<8x16xf32> -> vector<8x16xf32>
    %cst_92 = arith.constant dense<0.000000e+00> : vector<8x16xf32>
    %101 = tpu.matmul %99, %1, %cst_92 {dimension_numbers = #tpu.dot_dimension_numbers<[1], [0], [0], [1], [0, 0, 1, 1], [], []>, precision = #tpu.contract_precision<fp32>} : vector<8x16xf32>, vector<16x16xf32>, vector<8x16xf32> -> vector<8x16xf32>
    %102 = arith.addf %100, %101 : vector<8x16xf32>
    %cst_93 = arith.constant 6.250000e-02 : f32
    %103 = vector.broadcast %cst_93 : f32 to vector<8x16xf32>
    %104 = arith.mulf %102, %103 : vector<8x16xf32>
    %c0_94 = arith.constant 0 : index
    %c2_95 = arith.constant 2 : index
    %c0_96 = arith.constant 0 : index
    %105 = vector.load %arg4[%c0_94, %c2_95, %c0_96] : memref<8x6x16xf32, #tpu.memory_space<vmem>>, vector<8x1x16xf32>
    %106 = vector.shape_cast %105 : vector<8x1x16xf32> to vector<8x16xf32>
    %107 = vector.shape_cast %104 : vector<8x16xf32> to vector<8x1x16xf32>
    tpu.vector_store %arg4[%c0_94, %c2_95, %c0_96], %107 {strides = array<i32>} : memref<8x6x16xf32, #tpu.memory_space<vmem>>, vector<8x1x16xf32>,
    %c1_97 = arith.constant 1 : index
    %c0_98 = arith.constant 0 : index
    %c0_99 = arith.constant 0 : index
    %108 = vector.load %arg5[%c1_97, %c0_98, %c0_99] : memref<4x8x16xf32, #tpu.memory_space<vmem>>, vector<1x8x16xf32>
    %109 = vector.shape_cast %108 : vector<1x8x16xf32> to vector<8x16xf32>
    %c1_100 = arith.constant 1 : index
    %c0_101 = arith.constant 0 : index
    %c0_102 = arith.constant 0 : index
    %110 = vector.load %arg6[%c1_100, %c0_101, %c0_102] : memref<4x8x16xf32, #tpu.memory_space<vmem>>, vector<1x8x16xf32>
    %111 = vector.shape_cast %110 : vector<1x8x16xf32> to vector<8x16xf32>
    %c2_103 = arith.constant 2 : index
    %c0_104 = arith.constant 0 : index
    %c0_105 = arith.constant 0 : index
    %112 = vector.load %arg5[%c2_103, %c0_104, %c0_105] : memref<4x8x16xf32, #tpu.memory_space<vmem>>, vector<1x8x16xf32>
    %113 = vector.shape_cast %112 : vector<1x8x16xf32> to vector<8x16xf32>
    %c2_106 = arith.constant 2 : index
    %c0_107 = arith.constant 0 : index
    %c0_108 = arith.constant 0 : index
    %114 = vector.load %arg6[%c2_106, %c0_107, %c0_108] : memref<4x8x16xf32, #tpu.memory_space<vmem>>, vector<1x8x16xf32>
    %115 = vector.shape_cast %114 : vector<1x8x16xf32> to vector<8x16xf32>
    %116 = arith.mulf %109, %113 : vector<8x16xf32>
    %117 = arith.mulf %111, %115 : vector<8x16xf32>
    %118 = arith.subf %116, %117 : vector<8x16xf32>
    %119 = arith.mulf %109, %115 : vector<8x16xf32>
    %120 = arith.mulf %111, %113 : vector<8x16xf32>
    %121 = arith.addf %119, %120 : vector<8x16xf32>
    %cst_109 = arith.constant dense<0.000000e+00> : vector<8x16xf32>
    %122 = tpu.matmul %118, %0, %cst_109 {dimension_numbers = #tpu.dot_dimension_numbers<[1], [0], [0], [1], [0, 0, 1, 1], [], []>, precision = #tpu.contract_precision<fp32>} : vector<8x16xf32>, vector<16x16xf32>, vector<8x16xf32> -> vector<8x16xf32>
    %cst_110 = arith.constant dense<0.000000e+00> : vector<8x16xf32>
    %123 = tpu.matmul %121, %1, %cst_110 {dimension_numbers = #tpu.dot_dimension_numbers<[1], [0], [0], [1], [0, 0, 1, 1], [], []>, precision = #tpu.contract_precision<fp32>} : vector<8x16xf32>, vector<16x16xf32>, vector<8x16xf32> -> vector<8x16xf32>
    %124 = arith.addf %122, %123 : vector<8x16xf32>
    %cst_111 = arith.constant 6.250000e-02 : f32
    %125 = vector.broadcast %cst_111 : f32 to vector<8x16xf32>
    %126 = arith.mulf %124, %125 : vector<8x16xf32>
    %c0_112 = arith.constant 0 : index
    %c3_113 = arith.constant 3 : index
    %c0_114 = arith.constant 0 : index
    %127 = vector.load %arg4[%c0_112, %c3_113, %c0_114] : memref<8x6x16xf32, #tpu.memory_space<vmem>>, vector<8x1x16xf32>
    %128 = vector.shape_cast %127 : vector<8x1x16xf32> to vector<8x16xf32>
    %129 = vector.shape_cast %126 : vector<8x16xf32> to vector<8x1x16xf32>
    tpu.vector_store %arg4[%c0_112, %c3_113, %c0_114], %129 {strides = array<i32>} : memref<8x6x16xf32, #tpu.memory_space<vmem>>, vector<8x1x16xf32>,
    %c1_115 = arith.constant 1 : index
    %c0_116 = arith.constant 0 : index
    %c0_117 = arith.constant 0 : index
    %130 = vector.load %arg5[%c1_115, %c0_116, %c0_117] : memref<4x8x16xf32, #tpu.memory_space<vmem>>, vector<1x8x16xf32>
    %131 = vector.shape_cast %130 : vector<1x8x16xf32> to vector<8x16xf32>
    %c1_118 = arith.constant 1 : index
    %c0_119 = arith.constant 0 : index
    %c0_120 = arith.constant 0 : index
    %132 = vector.load %arg6[%c1_118, %c0_119, %c0_120] : memref<4x8x16xf32, #tpu.memory_space<vmem>>, vector<1x8x16xf32>
    %133 = vector.shape_cast %132 : vector<1x8x16xf32> to vector<8x16xf32>
    %c3_121 = arith.constant 3 : index
    %c0_122 = arith.constant 0 : index
    %c0_123 = arith.constant 0 : index
    %134 = vector.load %arg5[%c3_121, %c0_122, %c0_123] : memref<4x8x16xf32, #tpu.memory_space<vmem>>, vector<1x8x16xf32>
    %135 = vector.shape_cast %134 : vector<1x8x16xf32> to vector<8x16xf32>
    %c3_124 = arith.constant 3 : index
    %c0_125 = arith.constant 0 : index
    %c0_126 = arith.constant 0 : index
    %136 = vector.load %arg6[%c3_124, %c0_125, %c0_126] : memref<4x8x16xf32, #tpu.memory_space<vmem>>, vector<1x8x16xf32>
    %137 = vector.shape_cast %136 : vector<1x8x16xf32> to vector<8x16xf32>
    %138 = arith.mulf %131, %135 : vector<8x16xf32>
    %139 = arith.mulf %133, %137 : vector<8x16xf32>
    %140 = arith.subf %138, %139 : vector<8x16xf32>
    %141 = arith.mulf %131, %137 : vector<8x16xf32>
    %142 = arith.mulf %133, %135 : vector<8x16xf32>
    %143 = arith.addf %141, %142 : vector<8x16xf32>
    %cst_127 = arith.constant dense<0.000000e+00> : vector<8x16xf32>
    %144 = tpu.matmul %140, %0, %cst_127 {dimension_numbers = #tpu.dot_dimension_numbers<[1], [0], [0], [1], [0, 0, 1, 1], [], []>, precision = #tpu.contract_precision<fp32>} : vector<8x16xf32>, vector<16x16xf32>, vector<8x16xf32> -> vector<8x16xf32>
    %cst_128 = arith.constant dense<0.000000e+00> : vector<8x16xf32>
    %145 = tpu.matmul %143, %1, %cst_128 {dimension_numbers = #tpu.dot_dimension_numbers<[1], [0], [0], [1], [0, 0, 1, 1], [], []>, precision = #tpu.contract_precision<fp32>} : vector<8x16xf32>, vector<16x16xf32>, vector<8x16xf32> -> vector<8x16xf32>
    %146 = arith.addf %144, %145 : vector<8x16xf32>
    %cst_129 = arith.constant 6.250000e-02 : f32
    %147 = vector.broadcast %cst_129 : f32 to vector<8x16xf32>
    %148 = arith.mulf %146, %147 : vector<8x16xf32>
    %c0_130 = arith.constant 0 : index
    %c4 = arith.constant 4 : index
    %c0_131 = arith.constant 0 : index
    %149 = vector.load %arg4[%c0_130, %c4, %c0_131] : memref<8x6x16xf32, #tpu.memory_space<vmem>>, vector<8x1x16xf32>
    %150 = vector.shape_cast %149 : vector<8x1x16xf32> to vector<8x16xf32>
    %151 = vector.shape_cast %148 : vector<8x16xf32> to vector<8x1x16xf32>
    tpu.vector_store %arg4[%c0_130, %c4, %c0_131], %151 {strides = array<i32>} : memref<8x6x16xf32, #tpu.memory_space<vmem>>, vector<8x1x16xf32>,
    %c2_132 = arith.constant 2 : index
    %c0_133 = arith.constant 0 : index
    %c0_134 = arith.constant 0 : index
    %152 = vector.load %arg5[%c2_132, %c0_133, %c0_134] : memref<4x8x16xf32, #tpu.memory_space<vmem>>, vector<1x8x16xf32>
    %153 = vector.shape_cast %152 : vector<1x8x16xf32> to vector<8x16xf32>
    %c2_135 = arith.constant 2 : index
    %c0_136 = arith.constant 0 : index
    %c0_137 = arith.constant 0 : index
    %154 = vector.load %arg6[%c2_135, %c0_136, %c0_137] : memref<4x8x16xf32, #tpu.memory_space<vmem>>, vector<1x8x16xf32>
    %155 = vector.shape_cast %154 : vector<1x8x16xf32> to vector<8x16xf32>
    %c3_138 = arith.constant 3 : index
    %c0_139 = arith.constant 0 : index
    %c0_140 = arith.constant 0 : index
    %156 = vector.load %arg5[%c3_138, %c0_139, %c0_140] : memref<4x8x16xf32, #tpu.memory_space<vmem>>, vector<1x8x16xf32>
    %157 = vector.shape_cast %156 : vector<1x8x16xf32> to vector<8x16xf32>
    %c3_141 = arith.constant 3 : index
    %c0_142 = arith.constant 0 : index
    %c0_143 = arith.constant 0 : index
    %158 = vector.load %arg6[%c3_141, %c0_142, %c0_143] : memref<4x8x16xf32, #tpu.memory_space<vmem>>, vector<1x8x16xf32>
    %159 = vector.shape_cast %158 : vector<1x8x16xf32> to vector<8x16xf32>
    %160 = arith.mulf %153, %157 : vector<8x16xf32>
    %161 = arith.mulf %155, %159 : vector<8x16xf32>
    %162 = arith.subf %160, %161 : vector<8x16xf32>
    %163 = arith.mulf %153, %159 : vector<8x16xf32>
    %164 = arith.mulf %155, %157 : vector<8x16xf32>
    %165 = arith.addf %163, %164 : vector<8x16xf32>
    %cst_144 = arith.constant dense<0.000000e+00> : vector<8x16xf32>
    %166 = tpu.matmul %162, %0, %cst_144 {dimension_numbers = #tpu.dot_dimension_numbers<[1], [0], [0], [1], [0, 0, 1, 1], [], []>, precision = #tpu.contract_precision<fp32>} : vector<8x16xf32>, vector<16x16xf32>, vector<8x16xf32> -> vector<8x16xf32>
    %cst_145 = arith.constant dense<0.000000e+00> : vector<8x16xf32>
    %167 = tpu.matmul %165, %1, %cst_145 {dimension_numbers = #tpu.dot_dimension_numbers<[1], [0], [0], [1], [0, 0, 1, 1], [], []>, precision = #tpu.contract_precision<fp32>} : vector<8x16xf32>, vector<16x16xf32>, vector<8x16xf32> -> vector<8x16xf32>
    %168 = arith.addf %166, %167 : vector<8x16xf32>
    %cst_146 = arith.constant 6.250000e-02 : f32
    %169 = vector.broadcast %cst_146 : f32 to vector<8x16xf32>
    %170 = arith.mulf %168, %169 : vector<8x16xf32>
    %c0_147 = arith.constant 0 : index
    %c5 = arith.constant 5 : index
    %c0_148 = arith.constant 0 : index
    %171 = vector.load %arg4[%c0_147, %c5, %c0_148] : memref<8x6x16xf32, #tpu.memory_space<vmem>>, vector<8x1x16xf32>
    %172 = vector.shape_cast %171 : vector<8x1x16xf32> to vector<8x16xf32>
    %173 = vector.shape_cast %170 : vector<8x16xf32> to vector<8x1x16xf32>
    tpu.vector_store %arg4[%c0_147, %c5, %c0_148], %173 {strides = array<i32>} : memref<8x6x16xf32, #tpu.memory_space<vmem>>, vector<8x1x16xf32>,
    return
  }
  func.func @transform_0(%arg0: i32) -> (i32, i32, i32) {
    %c0_i32 = arith.constant 0 : i32
    %c0_i32_0 = arith.constant 0 : i32
    %c0_i32_1 = arith.constant 0 : i32
    return %arg0, %c0_i32, %c0_i32_0 : i32, i32, i32
  }
  func.func @transform_1(%arg0: i32) -> (i32, i32) {
    %c0_i32 = arith.constant 0 : i32
    %c0_i32_0 = arith.constant 0 : i32
    %c0_i32_1 = arith.constant 0 : i32
    return %c0_i32, %c0_i32_0 : i32, i32
  }
  func.func @transform_2(%arg0: i32) -> (i32, i32) {
    %c0_i32 = arith.constant 0 : i32
    %c0_i32_0 = arith.constant 0 : i32
    %c0_i32_1 = arith.constant 0 : i32
    return %c0_i32, %c0_i32_0 : i32, i32
  }
  func.func @transform_3(%arg0: i32) -> (i32, i32, i32) {
    %c0_i32 = arith.constant 0 : i32
    %c0_i32_0 = arith.constant 0 : i32
    %c0_i32_1 = arith.constant 0 : i32
    return %arg0, %c0_i32, %c0_i32_0 : i32, i32, i32
  }
}

</mosaic_0001>

<llo_original>
// kernel: holographic_interaction.1
$region0: #{holographic_interaction.1}
  #allocation0 [shape = 'u32[]', space=smem, size = 0x4, offset = 0x4, fixed_abs, tag = 'smem constant byte address 0x4 - core index']
  #allocation1 [shape = 'u32[144,128]{1,0:T(1,128)}', space=vmem, size = 0x12000, scoped, tag = 'internal scratch']
  #allocation2 [shape = 'f32[4,8,16]{2,1,0:T(8,128)}', space=vmem, size = 0x4000, scoped, tag = 'scratch operand']
  #allocation3 [shape = 'f32[4,8,16]{2,1,0:T(8,128)}', space=vmem, size = 0x4000, scoped, tag = 'scratch operand']
  %s0 = inlined_call_operand.vmem [shape: f32[8,4,16], index: 0, kind: input, shape index: {}]
  %s1 = inlined_call_operand.vmem [shape: f32[16,16], index: 1, kind: input, shape index: {}]
  %s2 = inlined_call_operand.vmem [shape: f32[16,16], index: 2, kind: input, shape index: {}]
  %s3 = inlined_call_operand.vmem [shape: f32[8,6,16], index: 3, kind: output, shape index: {}]
  %s4 = sld [smem:[#allocation0]]
  $region22: #{holographic_interaction.1} parent=0
    _
  %s6 = ssub.s32 1, %s4
  %s7 = scalar_select 0, %s6, %s4
  // Predicated region
  $region2: #{holographic_interaction.1} parent=0 // pred_check
    _
  $region3: #{holographic_interaction.1} parent=0 // pred_check_branch
    %9 = sbr.rel (0) target = $region5
  $region4: #{holographic_interaction.1} parent=0 // pred_region
    _
  $region5: #{holographic_interaction.1} parent=0 // pred_fallthru
    _
  // Predicated region
  $region6: #{holographic_interaction.1} parent=0 // pred_check
    _
  $region7: #{holographic_interaction.1} parent=0 // pred_check_branch
    %11 = sbr.rel (0) target = $region9
  $region8: #{holographic_interaction.1} parent=0 // pred_region
    _
  $region9: #{holographic_interaction.1} parent=0 // pred_fallthru
    _
  // Predicated region
  $region10: #{holographic_interaction.1} parent=0 // pred_check
    _
  $region11: #{holographic_interaction.1} parent=0 // pred_check_branch
    %13 = sbr.rel (0) target = $region13
  $region12: #{holographic_interaction.1} parent=0 // pred_region
    _
  $region13: #{holographic_interaction.1} parent=0 // pred_fallthru
    _
  %v14 = vld [vmem:[%s1] sm:$0xff]
  %v15 = vld [vmem:[%s1 + $0x8] sm:$0xff]
  %v16 = vld [vmem:[%s2] sm:$0xff]
  %v17 = vld [vmem:[%s2 + $0x8] sm:$0xff]
  %v18 = vld [vmem:[%s0] sm:$0x1]
  %v19 = vld [vmem:[%s0 + $0x4] sm:$0x1]
  %v20 = vld [vmem:[%s0 + $0x8] sm:$0x1]
  %v21 = vld [vmem:[%s0 + $0xc] sm:$0x1]
  %v22 = vld [vmem:[%s0 + $0x10] sm:$0x1]
  %v23 = vld [vmem:[%s0 + $0x14] sm:$0x1]
  %v24 = vld [vmem:[%s0 + $0x18] sm:$0x1]
  %v25 = vld [vmem:[%s0 + $0x1c] sm:$0x1]
  %v34 = vrot.slane %v19, 7
  %vm35 = vcmask 1041409
  %v36 = vsel %vm35, %v34, %v18
  %v37 = vrot.slane %v20, 6
  %vm38 = vcmask 1042434
  %v39 = vsel %vm38, %v37, %v36
  %v40 = vrot.slane %v21, 5
  %vm41 = vcmask 1043459
  %v42 = vsel %vm41, %v40, %v39
  %v43 = vrot.slane %v22, 4
  %vm44 = vcmask 1044484
  %v45 = vsel %vm44, %v43, %v42
  %v46 = vrot.slane %v23, 3
  %vm47 = vcmask 1045509
  %v48 = vsel %vm47, %v46, %v45
  %v49 = vrot.slane %v24, 2
  %vm50 = vcmask 1046534
  %v51 = vsel %vm50, %v49, %v48
  %v52 = vrot.slane %v25, 1
  %vm53 = vcmask 1047559
  %v54 = vsel %vm53, %v52, %v51
  %vm55 = vcmask 130048
  %v56 = vsel %vm55, %v54, 0
  %58 = vmatprep.subr.mxu0 0.0
  %v59 = vand.u32 %v14, 4294901760
  %60 = vmatpush1.msra.mxu0 %v59
  %61 = vmatprep.subr.mxu0 0.0
  %v62 = vand.u32 %v15, 4294901760
  %63 = vmatpush1.msra.mxu0 %v62
  %64 = vmatprep.subr.mxu0 0.0
  %65 = vmatpush1.msra.mxu0 0.0
  %66 = vmatprep.subr.mxu0 0.0
  %67 = vmatpush1.msra.mxu0 0.0
  %68 = vmatprep.subr.mxu0 0.0
  %69 = vmatpush1.msra.mxu0 0.0
  %70 = vmatprep.subr.mxu0 0.0
  %71 = vmatpush1.msra.mxu0 0.0
  %72 = vmatprep.subr.mxu0 0.0
  %73 = vmatpush1.msra.mxu0 0.0
  %74 = vmatprep.subr.mxu0 0.0
  %75 = vmatpush1.msra.mxu0 0.0
  %76 = vmatprep.subr.mxu0 0.0
  %77 = vmatpush1.msra.mxu0 0.0
  %78 = vmatprep.subr.mxu0 0.0
  %79 = vmatpush1.msra.mxu0 0.0
  %80 = vmatprep.subr.mxu0 0.0
  %81 = vmatpush1.msra.mxu0 0.0
  %82 = vmatprep.subr.mxu0 0.0
  %83 = vmatpush1.msra.mxu0 0.0
  %84 = vmatprep.subr.mxu0 0.0
  %85 = vmatpush1.msra.mxu0 0.0
  %86 = vmatprep.subr.mxu0 0.0
  %87 = vmatpush1.msra.mxu0 0.0
  %88 = vmatprep.subr.mxu0 0.0
  %89 = vmatpush1.msra.mxu0 0.0
  %90 = vmatprep.subr.mxu0 0.0
  %91 = vmatpush1.msra.mxu0 0.0
  %92 = vmatprep.subr.mxu0 0.0
  %93 = vmatpush1.msra.mxu0 0.0
  %94 = vmatprep.subr.mxu0 0.0
  %95 = vmatpush1.msra.mxu0 0.0
  %96 = vmatprep.subr.mxu0 0.0
  %97 = vmatpush1.msra.mxu0 0.0
  %98 = vmatprep.subr.mxu0 0.0
  %99 = vmatpush1.msra.mxu0 0.0
  %100 = vmatprep.subr.mxu0 0.0
  %101 = vmatpush1.msra.mxu0 0.0
  %102 = vmatprep.subr.mxu0 0.0
  %103 = vmatpush1.msra.mxu0 0.0
  %104 = vmatprep.subr.mxu0 0.0
  %105 = vmatpush1.msra.mxu0 0.0
  %106 = vmatprep.subr.mxu0 0.0
  %107 = vmatpush1.msra.mxu0 0.0
  %108 = vmatprep.subr.mxu0 0.0
  %109 = vmatpush1.msra.mxu0 0.0
  %110 = vmatprep.subr.mxu0 0.0
  %111 = vmatpush1.msra.mxu0 0.0
  %112 = vmatprep.subr.mxu0 0.0
  %113 = vmatpush1.msra.mxu0 0.0
  %114 = vmatprep.subr.mxu0 0.0
  %115 = vmatpush1.msra.mxu0 0.0
  %116 = vmatprep.subr.mxu0 0.0
  %117 = vmatpush1.msra.mxu0 0.0
  %118 = vmatprep.subr.mxu0 0.0
  %119 = vmatpush1.msra.mxu0 0.0
  %120 = vmatprep.subr.mxu0 0.0
  %121 = vmatpush1.msra.mxu0 0.0
  %122 = vmatprep.subr.mxu0 0.0
  %123 = vmatpush1.msra.mxu0 0.0
  %124 = vmatprep.mubr.f32.mxu0 0.0
  %v125 = vand.u32 %v56, 4294901760
  %v126 = vsub.f32 %v56, %v125
  %v127 = vand.u32 %v126, 4294901760
  %v128 = vsub.f32 %v126, %v127
  %v129 = vand.u32 %v128, 4294901760
  %130 = vmatmul.mubr.f32.gmra.mrb[0].mxu0 %v129
  %v131 = vpop.f32.mrb[0].mxu0
  %v132 = vadd.f32 0.0, %v131
  %v133 = vpop.f32.mrb[0].mxu0
  %134 = vdwg.mxu0
  %135 = vmatprep.subr.mxu0 0.0
  %v136 = vand.u32 %v14, 4294901760
  %v137 = vsub.f32 %v14, %v136
  %v138 = vand.u32 %v137, 4294901760
  %v139 = vsub.f32 %v137, %v138
  %v140 = vand.u32 %v139, 4294901760
  %141 = vmatpush1.msra.mxu0 %v140
  %142 = vmatprep.subr.mxu0 0.0
  %v143 = vand.u32 %v15, 4294901760
  %v144 = vsub.f32 %v15, %v143
  %v145 = vand.u32 %v144, 4294901760
  %v146 = vsub.f32 %v144, %v145
  %v147 = vand.u32 %v146, 4294901760
  %148 = vmatpush1.msra.mxu0 %v147
  %149 = vmatprep.subr.mxu0 0.0
  %150 = vmatpush1.msra.mxu0 0.0
  %151 = vmatprep.subr.mxu0 0.0
  %152 = vmatpush1.msra.mxu0 0.0
  %153 = vmatprep.subr.mxu0 0.0
  %154 = vmatpush1.msra.mxu0 0.0
  %155 = vmatprep.subr.mxu0 0.0
  %156 = vmatpush1.msra.mxu0 0.0
  %157 = vmatprep.subr.mxu0 0.0
  %158 = vmatpush1.msra.mxu0 0.0
  %159 = vmatprep.subr.mxu0 0.0
  %160 = vmatpush1.msra.mxu0 0.0
  %161 = vmatprep.subr.mxu0 0.0
  %162 = vmatpush1.msra.mxu0 0.0
  %163 = vmatprep.subr.mxu0 0.0
  %164 = vmatpush1.msra.mxu0 0.0
  %165 = vmatprep.subr.mxu0 0.0
  %166 = vmatpush1.msra.mxu0 0.0
  %167 = vmatprep.subr.mxu0 0.0
  %168 = vmatpush1.msra.mxu0 0.0
  %169 = vmatprep.subr.mxu0 0.0
  %170 = vmatpush1.msra.mxu0 0.0
  %171 = vmatprep.subr.mxu0 0.0
  %172 = vmatpush1.msra.mxu0 0.0
  %173 = vmatprep.subr.mxu0 0.0
  %174 = vmatpush1.msra.mxu0 0.0
  %175 = vmatprep.subr.mxu0 0.0
  %176 = vmatpush1.msra.mxu0 0.0
  %177 = vmatprep.subr.mxu0 0.0
  %178 = vmatpush1.msra.mxu0 0.0
  %179 = vmatprep.subr.mxu0 0.0
  %180 = vmatpush1.msra.mxu0 0.0
  %181 = vmatprep.subr.mxu0 0.0
  %182 = vmatpush1.msra.mxu0 0.0
  %183 = vmatprep.subr.mxu0 0.0
  %184 = vmatpush1.msra.mxu0 0.0
  %185 = vmatprep.subr.mxu0 0.0
  %186 = vmatpush1.msra.mxu0 0.0
  %187 = vmatprep.subr.mxu0 0.0
  %188 = vmatpush1.msra.mxu0 0.0
  %189 = vmatprep.subr.mxu0 0.0
  %190 = vmatpush1.msra.mxu0 0.0
  %191 = vmatprep.subr.mxu0 0.0
  %192 = vmatpush1.msra.mxu0 0.0
  %193 = vmatprep.subr.mxu0 0.0
  %194 = vmatpush1.msra.mxu0 0.0
  %195 = vmatprep.subr.mxu0 0.0
  %196 = vmatpush1.msra.mxu0 0.0
  %197 = vmatprep.subr.mxu0 0.0
  %198 = vmatpush1.msra.mxu0 0.0
  %199 = vmatprep.subr.mxu0 0.0
  %200 = vmatpush1.msra.mxu0 0.0
  %201 = vmatprep.subr.mxu0 0.0
  %202 = vmatpush1.msra.mxu0 0.0
  %203 = vmatprep.subr.mxu0 0.0
  %204 = vmatpush1.msra.mxu0 0.0
  %205 = vmatprep.subr.mxu0 0.0
  %206 = vmatpush1.msra.mxu0 0.0
  %207 = vmatprep.subr.mxu0 0.0
  %208 = vmatpush1.msra.mxu0 0.0
  %209 = vmatprep.mubr.f32.mxu0 0.0
  %v210 = vand.u32 %v56, 4294901760
  %211 = vmatmul.mubr.f32.gmra.mrb[0].mxu0 %v210
  %v212 = vpop.f32.mrb[0].mxu0
  %v213 = vadd.f32 %v132, %v212
  %v214 = vpop.f32.mrb[0].mxu0
  %215 = vdwg.mxu0
  %216 = vmatprep.subr.mxu0 0.0
  %v217 = vand.u32 %v14, 4294901760
  %v218 = vsub.f32 %v14, %v217
  %219 = vmatpush1.msra.mxu0 %v218
  %220 = vmatprep.subr.mxu0 0.0
  %v221 = vand.u32 %v15, 4294901760
  %v222 = vsub.f32 %v15, %v221
  %223 = vmatpush1.msra.mxu0 %v222
  %224 = vmatprep.subr.mxu0 0.0
  %225 = vmatpush1.msra.mxu0 0.0
  %226 = vmatprep.subr.mxu0 0.0
  %227 = vmatpush1.msra.mxu0 0.0
  %228 = vmatprep.subr.mxu0 0.0
  %229 = vmatpush1.msra.mxu0 0.0
  %230 = vmatprep.subr.mxu0 0.0
  %231 = vmatpush1.msra.mxu0 0.0
  %232 = vmatprep.subr.mxu0 0.0
  %233 = vmatpush1.msra.mxu0 0.0
  %234 = vmatprep.subr.mxu0 0.0
  %235 = vmatpush1.msra.mxu0 0.0
  %236 = vmatprep.subr.mxu0 0.0
  %237 = vmatpush1.msra.mxu0 0.0
  %238 = vmatprep.subr.mxu0 0.0
  %239 = vmatpush1.msra.mxu0 0.0
  %240 = vmatprep.subr.mxu0 0.0
  %241 = vmatpush1.msra.mxu0 0.0
  %242 = vmatprep.subr.mxu0 0.0
  %243 = vmatpush1.msra.mxu0 0.0
  %244 = vmatprep.subr.mxu0 0.0
  %245 = vmatpush1.msra.mxu0 0.0
  %246 = vmatprep.subr.mxu0 0.0
  %247 = vmatpush1.msra.mxu0 0.0
  %248 = vmatprep.subr.mxu0 0.0
  %249 = vmatpush1.msra.mxu0 0.0
  %250 = vmatprep.subr.mxu0 0.0
  %251 = vmatpush1.msra.mxu0 0.0
  %252 = vmatprep.subr.mxu0 0.0
  %253 = vmatpush1.msra.mxu0 0.0
  %254 = vmatprep.subr.mxu0 0.0
  %255 = vmatpush1.msra.mxu0 0.0
  %256 = vmatprep.subr.mxu0 0.0
  %257 = vmatpush1.msra.mxu0 0.0
  %258 = vmatprep.subr.mxu0 0.0
  %259 = vmatpush1.msra.mxu0 0.0
  %260 = vmatprep.subr.mxu0 0.0
  %261 = vmatpush1.msra.mxu0 0.0
  %262 = vmatprep.subr.mxu0 0.0
  %263 = vmatpush1.msra.mxu0 0.0
  %264 = vmatprep.subr.mxu0 0.0
  %265 = vmatpush1.msra.mxu0 0.0
  %266 = vmatprep.subr.mxu0 0.0
  %267 = vmatpush1.msra.mxu0 0.0
  %268 = vmatprep.subr.mxu0 0.0
  %269 = vmatpush1.msra.mxu0 0.0
  %270 = vmatprep.subr.mxu0 0.0
  %271 = vmatpush1.msra.mxu0 0.0
  %272 = vmatprep.subr.mxu0 0.0
  %273 = vmatpush1.msra.mxu0 0.0
  %274 = vmatprep.subr.mxu0 0.0
  %275 = vmatpush1.msra.mxu0 0.0
  %276 = vmatprep.subr.mxu0 0.0
  %277 = vmatpush1.msra.mxu0 0.0
  %278 = vmatprep.subr.mxu0 0.0
  %279 = vmatpush1.msra.mxu0 0.0
  %280 = vmatprep.subr.mxu0 0.0
  %281 = vmatpush1.msra.mxu0 0.0
  %282 = vmatprep.subr.mxu0 0.0
  %283 = vmatpush1.msra.mxu0 0.0
  %284 = vmatprep.mubr.f32.mxu0 0.0
  %v285 = vand.u32 %v56, 4294901760
  %v286 = vsub.f32 %v56, %v285
  %287 = vmatmul.mubr.f32.gmra.mrb[0].mxu0 %v286
  %v288 = vpop.f32.mrb[0].mxu0
  %v289 = vadd.f32 %v213, %v288
  %v290 = vpop.f32.mrb[0].mxu0
  %291 = vdwg.mxu0
  %292 = vmatprep.subr.mxu0 0.0
  %v293 = vand.u32 %v14, 4294901760
  %294 = vmatpush1.msra.mxu0 %v293
  %295 = vmatprep.subr.mxu0 0.0
  %v296 = vand.u32 %v15, 4294901760
  %297 = vmatpush1.msra.mxu0 %v296
  %298 = vmatprep.subr.mxu0 0.0
  %299 = vmatpush1.msra.mxu0 0.0
  %300 = vmatprep.subr.mxu0 0.0
  %301 = vmatpush1.msra.mxu0 0.0
  %302 = vmatprep.subr.mxu0 0.0
  %303 = vmatpush1.msra.mxu0 0.0
  %304 = vmatprep.subr.mxu0 0.0
  %305 = vmatpush1.msra.mxu0 0.0
  %306 = vmatprep.subr.mxu0 0.0
  %307 = vmatpush1.msra.mxu0 0.0
  %308 = vmatprep.subr.mxu0 0.0
  %309 = vmatpush1.msra.mxu0 0.0
  %310 = vmatprep.subr.mxu0 0.0
  %311 = vmatpush1.msra.mxu0 0.0
  %312 = vmatprep.subr.mxu0 0.0
  %313 = vmatpush1.msra.mxu0 0.0
  %314 = vmatprep.subr.mxu0 0.0
  %315 = vmatpush1.msra.mxu0 0.0
  %316 = vmatprep.subr.mxu0 0.0
  %317 = vmatpush1.msra.mxu0 0.0
  %318 = vmatprep.subr.mxu0 0.0
  %319 = vmatpush1.msra.mxu0 0.0
  %320 = vmatprep.subr.mxu0 0.0
  %321 = vmatpush1.msra.mxu0 0.0
  %322 = vmatprep.subr.mxu0 0.0
  %323 = vmatpush1.msra.mxu0 0.0
  %324 = vmatprep.subr.mxu0 0.0
  %325 = vmatpush1.msra.mxu0 0.0
  %326 = vmatprep.subr.mxu0 0.0
  %327 = vmatpush1.msra.mxu0 0.0
  %328 = vmatprep.subr.mxu0 0.0
  %329 = vmatpush1.msra.mxu0 0.0
  %330 = vmatprep.subr.mxu0 0.0
  %331 = vmatpush1.msra.mxu0 0.0
  %332 = vmatprep.subr.mxu0 0.0
  %333 = vmatpush1.msra.mxu0 0.0
  %334 = vmatprep.subr.mxu0 0.0
  %335 = vmatpush1.msra.mxu0 0.0
  %336 = vmatprep.subr.mxu0 0.0
  %337 = vmatpush1.msra.mxu0 0.0
  %338 = vmatprep.subr.mxu0 0.0
  %339 = vmatpush1.msra.mxu0 0.0
  %340 = vmatprep.subr.mxu0 0.0
  %341 = vmatpush1.msra.mxu0 0.0
  %342 = vmatprep.subr.mxu0 0.0
  %343 = vmatpush1.msra.mxu0 0.0
  %344 = vmatprep.subr.mxu0 0.0
  %345 = vmatpush1.msra.mxu0 0.0
  %346 = vmatprep.subr.mxu0 0.0
  %347 = vmatpush1.msra.mxu0 0.0
  %348 = vmatprep.subr.mxu0 0.0
  %349 = vmatpush1.msra.mxu0 0.0
  %350 = vmatprep.subr.mxu0 0.0
  %351 = vmatpush1.msra.mxu0 0.0
  %352 = vmatprep.subr.mxu0 0.0
  %353 = vmatpush1.msra.mxu0 0.0
  %354 = vmatprep.subr.mxu0 0.0
  %355 = vmatpush1.msra.mxu0 0.0
  %356 = vmatprep.subr.mxu0 0.0
  %357 = vmatpush1.msra.mxu0 0.0
  %358 = vmatprep.mubr.f32.mxu0 0.0
  %v359 = vand.u32 %v56, 4294901760
  %v360 = vsub.f32 %v56, %v359
  %v361 = vand.u32 %v360, 4294901760
  %362 = vmatmul.mubr.f32.gmra.mrb[0].mxu0 %v361
  %v363 = vpop.f32.mrb[0].mxu0
  %v364 = vadd.f32 %v289, %v363
  %v365 = vpop.f32.mrb[0].mxu0
  %366 = vdwg.mxu0
  %367 = vmatprep.subr.mxu0 0.0
  %v368 = vand.u32 %v14, 4294901760
  %v369 = vsub.f32 %v14, %v368
  %v370 = vand.u32 %v369, 4294901760
  %371 = vmatpush1.msra.mxu0 %v370
  %372 = vmatprep.subr.mxu0 0.0
  %v373 = vand.u32 %v15, 4294901760
  %v374 = vsub.f32 %v15, %v373
  %v375 = vand.u32 %v374, 4294901760
  %376 = vmatpush1.msra.mxu0 %v375
  %377 = vmatprep.subr.mxu0 0.0
  %378 = vmatpush1.msra.mxu0 0.0
  %379 = vmatprep.subr.mxu0 0.0
  %380 = vmatpush1.msra.mxu0 0.0
  %381 = vmatprep.subr.mxu0 0.0
  %382 = vmatpush1.msra.mxu0 0.0
  %383 = vmatprep.subr.mxu0 0.0
  %384 = vmatpush1.msra.mxu0 0.0
  %385 = vmatprep.subr.mxu0 0.0
  %386 = vmatpush1.msra.mxu0 0.0
  %387 = vmatprep.subr.mxu0 0.0
  %388 = vmatpush1.msra.mxu0 0.0
  %389 = vmatprep.subr.mxu0 0.0
  %390 = vmatpush1.msra.mxu0 0.0
  %391 = vmatprep.subr.mxu0 0.0
  %392 = vmatpush1.msra.mxu0 0.0
  %393 = vmatprep.subr.mxu0 0.0
  %394 = vmatpush1.msra.mxu0 0.0
  %395 = vmatprep.subr.mxu0 0.0
  %396 = vmatpush1.msra.mxu0 0.0
  %397 = vmatprep.subr.mxu0 0.0
  %398 = vmatpush1.msra.mxu0 0.0
  %399 = vmatprep.subr.mxu0 0.0
  %400 = vmatpush1.msra.mxu0 0.0
  %401 = vmatprep.subr.mxu0 0.0
  %402 = vmatpush1.msra.mxu0 0.0
  %403 = vmatprep.subr.mxu0 0.0
  %404 = vmatpush1.msra.mxu0 0.0
  %405 = vmatprep.subr.mxu0 0.0
  %406 = vmatpush1.msra.mxu0 0.0
  %407 = vmatprep.subr.mxu0 0.0
  %408 = vmatpush1.msra.mxu0 0.0
  %409 = vmatprep.subr.mxu0 0.0
  %410 = vmatpush1.msra.mxu0 0.0
  %411 = vmatprep.subr.mxu0 0.0
  %412 = vmatpush1.msra.mxu0 0.0
  %413 = vmatprep.subr.mxu0 0.0
  %414 = vmatpush1.msra.mxu0 0.0
  %415 = vmatprep.subr.mxu0 0.0
  %416 = vmatpush1.msra.mxu0 0.0
  %417 = vmatprep.subr.mxu0 0.0
  %418 = vmatpush1.msra.mxu0 0.0
  %419 = vmatprep.subr.mxu0 0.0
  %420 = vmatpush1.msra.mxu0 0.0
  %421 = vmatprep.subr.mxu0 0.0
  %422 = vmatpush1.msra.mxu0 0.0
  %423 = vmatprep.subr.mxu0 0.0
  %424 = vmatpush1.msra.mxu0 0.0
  %425 = vmatprep.subr.mxu0 0.0
  %426 = vmatpush1.msra.mxu0 0.0
  %427 = vmatprep.subr.mxu0 0.0
  %428 = vmatpush1.msra.mxu0 0.0
  %429 = vmatprep.subr.mxu0 0.0
  %430 = vmatpush1.msra.mxu0 0.0
  %431 = vmatprep.subr.mxu0 0.0
  %432 = vmatpush1.msra.mxu0 0.0
  %433 = vmatprep.subr.mxu0 0.0
  %434 = vmatpush1.msra.mxu0 0.0
  %435 = vmatprep.subr.mxu0 0.0
  %436 = vmatpush1.msra.mxu0 0.0
  %437 = vmatprep.mubr.f32.mxu0 0.0
  %v438 = vand.u32 %v56, 4294901760
  %439 = vmatmul.mubr.f32.gmra.mrb[0].mxu0 %v438
  %v440 = vpop.f32.mrb[0].mxu0
  %v441 = vadd.f32 %v364, %v440
  %v442 = vpop.f32.mrb[0].mxu0
  %443 = vdwg.mxu0
  %444 = vmatprep.subr.mxu0 0.0
  %v445 = vand.u32 %v14, 4294901760
  %446 = vmatpush1.msra.mxu0 %v445
  %447 = vmatprep.subr.mxu0 0.0
  %v448 = vand.u32 %v15, 4294901760
  %449 = vmatpush1.msra.mxu0 %v448
  %450 = vmatprep.subr.mxu0 0.0
  %451 = vmatpush1.msra.mxu0 0.0
  %452 = vmatprep.subr.mxu0 0.0
  %453 = vmatpush1.msra.mxu0 0.0
  %454 = vmatprep.subr.mxu0 0.0
  %455 = vmatpush1.msra.mxu0 0.0
  %456 = vmatprep.subr.mxu0 0.0
  %457 = vmatpush1.msra.mxu0 0.0
  %458 = vmatprep.subr.mxu0 0.0
  %459 = vmatpush1.msra.mxu0 0.0
  %460 = vmatprep.subr.mxu0 0.0
  %461 = vmatpush1.msra.mxu0 0.0
  %462 = vmatprep.subr.mxu0 0.0
  %463 = vmatpush1.msra.mxu0 0.0
  %464 = vmatprep.subr.mxu0 0.0
  %465 = vmatpush1.msra.mxu0 0.0
  %466 = vmatprep.subr.mxu0 0.0
  %467 = vmatpush1.msra.mxu0 0.0
  %468 = vmatprep.subr.mxu0 0.0
  %469 = vmatpush1.msra.mxu0 0.0
  %470 = vmatprep.subr.mxu0 0.0
  %471 = vmatpush1.msra.mxu0 0.0
  %472 = vmatprep.subr.mxu0 0.0
  %473 = vmatpush1.msra.mxu0 0.0
  %474 = vmatprep.subr.mxu0 0.0
  %475 = vmatpush1.msra.mxu0 0.0
  %476 = vmatprep.subr.mxu0 0.0
  %477 = vmatpush1.msra.mxu0 0.0
  %478 = vmatprep.subr.mxu0 0.0
  %479 = vmatpush1.msra.mxu0 0.0
  %480 = vmatprep.subr.mxu0 0.0
  %481 = vmatpush1.msra.mxu0 0.0
  %482 = vmatprep.subr.mxu0 0.0
  %483 = vmatpush1.msra.mxu0 0.0
  %484 = vmatprep.subr.mxu0 0.0
  %485 = vmatpush1.msra.mxu0 0.0
  %486 = vmatprep.subr.mxu0 0.0
  %487 = vmatpush1.msra.mxu0 0.0
  %488 = vmatprep.subr.mxu0 0.0
  %489 = vmatpush1.msra.mxu0 0.0
  %490 = vmatprep.subr.mxu0 0.0
  %491 = vmatpush1.msra.mxu0 0.0
  %492 = vmatprep.subr.mxu0 0.0
  %493 = vmatpush1.msra.mxu0 0.0
  %494 = vmatprep.subr.mxu0 0.0
  %495 = vmatpush1.msra.mxu0 0.0
  %496 = vmatprep.subr.mxu0 0.0
  %497 = vmatpush1.msra.mxu0 0.0
  %498 = vmatprep.subr.mxu0 0.0
  %499 = vmatpush1.msra.mxu0 0.0
  %500 = vmatprep.subr.mxu0 0.0
  %501 = vmatpush1.msra.mxu0 0.0
  %502 = vmatprep.subr.mxu0 0.0
  %503 = vmatpush1.msra.mxu0 0.0
  %504 = vmatprep.subr.mxu0 0.0
  %505 = vmatpush1.msra.mxu0 0.0
  %506 = vmatprep.subr.mxu0 0.0
  %507 = vmatpush1.msra.mxu0 0.0
  %508 = vmatprep.subr.mxu0 0.0
  %509 = vmatpush1.msra.mxu0 0.0
  %510 = vmatprep.mubr.f32.mxu0 0.0
  %v511 = vand.u32 %v56, 4294901760
  %512 = vmatmul.mubr.f32.gmra.mrb[0].mxu0 %v511
  %v513 = vpop.f32.mrb[0].mxu0
  %v514 = vadd.f32 %v441, %v513
  %v515 = vpop.f32.mrb[0].mxu0
  %516 = vdwg.mxu0
  %517 = vst.msk [vmem:[#allocation2] sm:$0xff] %vm55, %v514
  %518 = vmatprep.subr.mxu0 0.0
  %v519 = vand.u32 %v16, 4294901760
  %520 = vmatpush1.msra.mxu0 %v519
  %521 = vmatprep.subr.mxu0 0.0
  %v522 = vand.u32 %v17, 4294901760
  %523 = vmatpush1.msra.mxu0 %v522
  %524 = vmatprep.subr.mxu0 0.0
  %525 = vmatpush1.msra.mxu0 0.0
  %526 = vmatprep.subr.mxu0 0.0
  %527 = vmatpush1.msra.mxu0 0.0
  %528 = vmatprep.subr.mxu0 0.0
  %529 = vmatpush1.msra.mxu0 0.0
  %530 = vmatprep.subr.mxu0 0.0
  %531 = vmatpush1.msra.mxu0 0.0
  %532 = vmatprep.subr.mxu0 0.0
  %533 = vmatpush1.msra.mxu0 0.0
  %534 = vmatprep.subr.mxu0 0.0
  %535 = vmatpush1.msra.mxu0 0.0
  %536 = vmatprep.subr.mxu0 0.0
  %537 = vmatpush1.msra.mxu0 0.0
  %538 = vmatprep.subr.mxu0 0.0
  %539 = vmatpush1.msra.mxu0 0.0
  %540 = vmatprep.subr.mxu0 0.0
  %541 = vmatpush1.msra.mxu0 0.0
  %542 = vmatprep.subr.mxu0 0.0
  %543 = vmatpush1.msra.mxu0 0.0
  %544 = vmatprep.subr.mxu0 0.0
  %545 = vmatpush1.msra.mxu0 0.0
  %546 = vmatprep.subr.mxu0 0.0
  %547 = vmatpush1.msra.mxu0 0.0
  %548 = vmatprep.subr.mxu0 0.0
  %549 = vmatpush1.msra.mxu0 0.0
  %550 = vmatprep.subr.mxu0 0.0
  %551 = vmatpush1.msra.mxu0 0.0
  %552 = vmatprep.subr.mxu0 0.0
  %553 = vmatpush1.msra.mxu0 0.0
  %554 = vmatprep.subr.mxu0 0.0
  %555 = vmatpush1.msra.mxu0 0.0
  %556 = vmatprep.subr.mxu0 0.0
  %557 = vmatpush1.msra.mxu0 0.0
  %558 = vmatprep.subr.mxu0 0.0
  %559 = vmatpush1.msra.mxu0 0.0
  %560 = vmatprep.subr.mxu0 0.0
  %561 = vmatpush1.msra.mxu0 0.0
  %562 = vmatprep.subr.mxu0 0.0
  %563 = vmatpush1.msra.mxu0 0.0
  %564 = vmatprep.subr.mxu0 0.0
  %565 = vmatpush1.msra.mxu0 0.0
  %566 = vmatprep.subr.mxu0 0.0
  %567 = vmatpush1.msra.mxu0 0.0
  %568 = vmatprep.subr.mxu0 0.0
  %569 = vmatpush1.msra.mxu0 0.0
  %570 = vmatprep.subr.mxu0 0.0
  %571 = vmatpush1.msra.mxu0 0.0
  %572 = vmatprep.subr.mxu0 0.0
  %573 = vmatpush1.msra.mxu0 0.0
  %574 = vmatprep.subr.mxu0 0.0
  %575 = vmatpush1.msra.mxu0 0.0
  %576 = vmatprep.subr.mxu0 0.0
  %577 = vmatpush1.msra.mxu0 0.0
  %578 = vmatprep.subr.mxu0 0.0
  %579 = vmatpush1.msra.mxu0 0.0
  %580 = vmatprep.subr.mxu0 0.0
  %581 = vmatpush1.msra.mxu0 0.0
  %582 = vmatprep.subr.mxu0 0.0
  %583 = vmatpush1.msra.mxu0 0.0
  %584 = vmatprep.mubr.f32.mxu0 0.0
  %v585 = vand.u32 %v56, 4294901760
  %v586 = vsub.f32 %v56, %v585
  %v587 = vand.u32 %v586, 4294901760
  %v588 = vsub.f32 %v586, %v587
  %v589 = vand.u32 %v588, 4294901760
  %590 = vmatmul.mubr.f32.gmra.mrb[0].mxu0 %v589
  %v591 = vpop.f32.mrb[0].mxu0
  %v592 = vadd.f32 0.0, %v591
  %v593 = vpop.f32.mrb[0].mxu0
  %594 = vdwg.mxu0
  %595 = vmatprep.subr.mxu0 0.0
  %v596 = vand.u32 %v16, 4294901760
  %v597 = vsub.f32 %v16, %v596
  %v598 = vand.u32 %v597, 4294901760
  %v599 = vsub.f32 %v597, %v598
  %v600 = vand.u32 %v599, 4294901760
  %601 = vmatpush1.msra.mxu0 %v600
  %602 = vmatprep.subr.mxu0 0.0
  %v603 = vand.u32 %v17, 4294901760
  %v604 = vsub.f32 %v17, %v603
  %v605 = vand.u32 %v604, 4294901760
  %v606 = vsub.f32 %v604, %v605
  %v607 = vand.u32 %v606, 4294901760
  %608 = vmatpush1.msra.mxu0 %v607
  %609 = vmatprep.subr.mxu0 0.0
  %610 = vmatpush1.msra.mxu0 0.0
  %611 = vmatprep.subr.mxu0 0.0
  %612 = vmatpush1.msra.mxu0 0.0
  %613 = vmatprep.subr.mxu0 0.0
  %614 = vmatpush1.msra.mxu0 0.0
  %615 = vmatprep.subr.mxu0 0.0
  %616 = vmatpush1.msra.mxu0 0.0
  %617 = vmatprep.subr.mxu0 0.0
  %618 = vmatpush1.msra.mxu0 0.0
  %619 = vmatprep.subr.mxu0 0.0
  %620 = vmatpush1.msra.mxu0 0.0
  %621 = vmatprep.subr.mxu0 0.0
  %622 = vmatpush1.msra.mxu0 0.0
  %623 = vmatprep.subr.mxu0 0.0
  %624 = vmatpush1.msra.mxu0 0.0
  %625 = vmatprep.subr.mxu0 0.0
  %626 = vmatpush1.msra.mxu0 0.0
  %627 = vmatprep.subr.mxu0 0.0
  %628 = vmatpush1.msra.mxu0 0.0
  %629 = vmatprep.subr.mxu0 0.0
  %630 = vmatpush1.msra.mxu0 0.0
  %631 = vmatprep.subr.mxu0 0.0
  %632 = vmatpush1.msra.mxu0 0.0
  %633 = vmatprep.subr.mxu0 0.0
  %634 = vmatpush1.msra.mxu0 0.0
  %635 = vmatprep.subr.mxu0 0.0
  %636 = vmatpush1.msra.mxu0 0.0
  %637 = vmatprep.subr.mxu0 0.0
  %638 = vmatpush1.msra.mxu0 0.0
  %639 = vmatprep.subr.mxu0 0.0
  %640 = vmatpush1.msra.mxu0 0.0
  %641 = vmatprep.subr.mxu0 0.0
  %642 = vmatpush1.msra.mxu0 0.0
  %643 = vmatprep.subr.mxu0 0.0
  %644 = vmatpush1.msra.mxu0 0.0
  %645 = vmatprep.subr.mxu0 0.0
  %646 = vmatpush1.msra.mxu0 0.0
  %647 = vmatprep.subr.mxu0 0.0
  %648 = vmatpush1.msra.mxu0 0.0
  %649 = vmatprep.subr.mxu0 0.0
  %650 = vmatpush1.msra.mxu0 0.0
  %651 = vmatprep.subr.mxu0 0.0
  %652 = vmatpush1.msra.mxu0 0.0
  %653 = vmatprep.subr.mxu0 0.0
  %654 = vmatpush1.msra.mxu0 0.0
  %655 = vmatprep.subr.mxu0 0.0
  %656 = vmatpush1.msra.mxu0 0.0
  %657 = vmatprep.subr.mxu0 0.0
  %658 = vmatpush1.msra.mxu0 0.0
  %659 = vmatprep.subr.mxu0 0.0
  %660 = vmatpush1.msra.mxu0 0.0
  %661 = vmatprep.subr.mxu0 0.0
  %662 = vmatpush1.msra.mxu0 0.0
  %663 = vmatprep.subr.mxu0 0.0
  %664 = vmatpush1.msra.mxu0 0.0
  %665 = vmatprep.subr.mxu0 0.0
  %666 = vmatpush1.msra.mxu0 0.0
  %667 = vmatprep.subr.mxu0 0.0
  %668 = vmatpush1.msra.mxu0 0.0
  %669 = vmatprep.mubr.f32.mxu0 0.0
  %v670 = vand.u32 %v56, 4294901760
  %671 = vmatmul.mubr.f32.gmra.mrb[0].mxu0 %v670
  %v672 = vpop.f32.mrb[0].mxu0
  %v673 = vadd.f32 %v592, %v672
  %v674 = vpop.f32.mrb[0].mxu0
  %675 = vdwg.mxu0
  %676 = vmatprep.subr.mxu0 0.0
  %v677 = vand.u32 %v16, 4294901760
  %v678 = vsub.f32 %v16, %v677
  %679 = vmatpush1.msra.mxu0 %v678
  %680 = vmatprep.subr.mxu0 0.0
  %v681 = vand.u32 %v17, 4294901760
  %v682 = vsub.f32 %v17, %v681
  %683 = vmatpush1.msra.mxu0 %v682
  %684 = vmatprep.subr.mxu0 0.0
  %685 = vmatpush1.msra.mxu0 0.0
  %686 = vmatprep.subr.mxu0 0.0
  %687 = vmatpush1.msra.mxu0 0.0
  %688 = vmatprep.subr.mxu0 0.0
  %689 = vmatpush1.msra.mxu0 0.0
  %690 = vmatprep.subr.mxu0 0.0
  %691 = vmatpush1.msra.mxu0 0.0
  %692 = vmatprep.subr.mxu0 0.0
  %693 = vmatpush1.msra.mxu0 0.0
  %694 = vmatprep.subr.mxu0 0.0
  %695 = vmatpush1.msra.mxu0 0.0
  %696 = vmatprep.subr.mxu0 0.0
  %697 = vmatpush1.msra.mxu0 0.0
  %698 = vmatprep.subr.mxu0 0.0
  %699 = vmatpush1.msra.mxu0 0.0
  %700 = vmatprep.subr.mxu0 0.0
  %701 = vmatpush1.msra.mxu0 0.0
  %702 = vmatprep.subr.mxu0 0.0
  %703 = vmatpush1.msra.mxu0 0.0
  %704 = vmatprep.subr.mxu0 0.0
  %705 = vmatpush1.msra.mxu0 0.0
  %706 = vmatprep.subr.mxu0 0.0
  %707 = vmatpush1.msra.mxu0 0.0
  %708 = vmatprep.subr.mxu0 0.0
  %709 = vmatpush1.msra.mxu0 0.0
  %710 = vmatprep.subr.mxu0 0.0
  %711 = vmatpush1.msra.mxu0 0.0
  %712 = vmatprep.subr.mxu0 0.0
  %713 = vmatpush1.msra.mxu0 0.0
  %714 = vmatprep.subr.mxu0 0.0
  %715 = vmatpush1.msra.mxu0 0.0
  %716 = vmatprep.subr.mxu0 0.0
  %717 = vmatpush1.msra.mxu0 0.0
  %718 = vmatprep.subr.mxu0 0.0
  %719 = vmatpush1.msra.mxu0 0.0
  %720 = vmatprep.subr.mxu0 0.0
  %721 = vmatpush1.msra.mxu0 0.0
  %722 = vmatprep.subr.mxu0 0.0
  %723 = vmatpush1.msra.mxu0 0.0
  %724 = vmatprep.subr.mxu0 0.0
  %725 = vmatpush1.msra.mxu0 0.0
  %726 = vmatprep.subr.mxu0 0.0
  %727 = vmatpush1.msra.mxu0 0.0
  %728 = vmatprep.subr.mxu0 0.0
  %729 = vmatpush1.msra.mxu0 0.0
  %730 = vmatprep.subr.mxu0 0.0
  %731 = vmatpush1.msra.mxu0 0.0
  %732 = vmatprep.subr.mxu0 0.0
  %733 = vmatpush1.msra.mxu0 0.0
  %734 = vmatprep.subr.mxu0 0.0
  %735 = vmatpush1.msra.mxu0 0.0
  %736 = vmatprep.subr.mxu0 0.0
  %737 = vmatpush1.msra.mxu0 0.0
  %738 = vmatprep.subr.mxu0 0.0
  %739 = vmatpush1.msra.mxu0 0.0
  %740 = vmatprep.subr.mxu0 0.0
  %741 = vmatpush1.msra.mxu0 0.0
  %742 = vmatprep.subr.mxu0 0.0
  %743 = vmatpush1.msra.mxu0 0.0
  %744 = vmatprep.mubr.f32.mxu0 0.0
  %v745 = vand.u32 %v56, 4294901760
  %v746 = vsub.f32 %v56, %v745
  %747 = vmatmul.mubr.f32.gmra.mrb[0].mxu0 %v746
  %v748 = vpop.f32.mrb[0].mxu0
  %v749 = vadd.f32 %v673, %v748
  %v750 = vpop.f32.mrb[0].mxu0
  %751 = vdwg.mxu0
  %752 = vmatprep.subr.mxu0 0.0
  %v753 = vand.u32 %v16, 4294901760
  %754 = vmatpush1.msra.mxu0 %v753
  %755 = vmatprep.subr.mxu0 0.0
  %v756 = vand.u32 %v17, 4294901760
  %757 = vmatpush1.msra.mxu0 %v756
  %758 = vmatprep.subr.mxu0 0.0
  %759 = vmatpush1.msra.mxu0 0.0
  %760 = vmatprep.subr.mxu0 0.0
  %761 = vmatpush1.msra.mxu0 0.0
  %762 = vmatprep.subr.mxu0 0.0
  %763 = vmatpush1.msra.mxu0 0.0
  %764 = vmatprep.subr.mxu0 0.0
  %765 = vmatpush1.msra.mxu0 0.0
  %766 = vmatprep.subr.mxu0 0.0
  %767 = vmatpush1.msra.mxu0 0.0
  %768 = vmatprep.subr.mxu0 0.0
  %769 = vmatpush1.msra.mxu0 0.0
  %770 = vmatprep.subr.mxu0 0.0
  %771 = vmatpush1.msra.mxu0 0.0
  %772 = vmatprep.subr.mxu0 0.0
  %773 = vmatpush1.msra.mxu0 0.0
  %774 = vmatprep.subr.mxu0 0.0
  %775 = vmatpush1.msra.mxu0 0.0
  %776 = vmatprep.subr.mxu0 0.0
  %777 = vmatpush1.msra.mxu0 0.0
  %778 = vmatprep.subr.mxu0 0.0
  %779 = vmatpush1.msra.mxu0 0.0
  %780 = vmatprep.subr.mxu0 0.0
  %781 = vmatpush1.msra.mxu0 0.0
  %782 = vmatprep.subr.mxu0 0.0
  %783 = vmatpush1.msra.mxu0 0.0
  %784 = vmatprep.subr.mxu0 0.0
  %785 = vmatpush1.msra.mxu0 0.0
  %786 = vmatprep.subr.mxu0 0.0
  %787 = vmatpush1.msra.mxu0 0.0
  %788 = vmatprep.subr.mxu0 0.0
  %789 = vmatpush1.msra.mxu0 0.0
  %790 = vmatprep.subr.mxu0 0.0
  %791 = vmatpush1.msra.mxu0 0.0
  %792 = vmatprep.subr.mxu0 0.0
  %793 = vmatpush1.msra.mxu0 0.0
  %794 = vmatprep.subr.mxu0 0.0
  %795 = vmatpush1.msra.mxu0 0.0
  %796 = vmatprep.subr.mxu0 0.0
  %797 = vmatpush1.msra.mxu0 0.0
  %798 = vmatprep.subr.mxu0 0.0
  %799 = vmatpush1.msra.mxu0 0.0
  %800 = vmatprep.subr.mxu0 0.0
  %801 = vmatpush1.msra.mxu0 0.0
  %802 = vmatprep.subr.mxu0 0.0
  %803 = vmatpush1.msra.mxu0 0.0
  %804 = vmatprep.subr.mxu0 0.0
  %805 = vmatpush1.msra.mxu0 0.0
  %806 = vmatprep.subr.mxu0 0.0
  %807 = vmatpush1.msra.mxu0 0.0
  %808 = vmatprep.subr.mxu0 0.0
  %809 = vmatpush1.msra.mxu0 0.0
  %810 = vmatprep.subr.mxu0 0.0
  %811 = vmatpush1.msra.mxu0 0.0
  %812 = vmatprep.subr.mxu0 0.0
  %813 = vmatpush1.msra.mxu0 0.0
  %814 = vmatprep.subr.mxu0 0.0
  %815 = vmatpush1.msra.mxu0 0.0
  %816 = vmatprep.subr.mxu0 0.0
  %817 = vmatpush1.msra.mxu0 0.0
  %818 = vmatprep.mubr.f32.mxu0 0.0
  %v819 = vand.u32 %v56, 4294901760
  %v820 = vsub.f32 %v56, %v819
  %v821 = vand.u32 %v820, 4294901760
  %822 = vmatmul.mubr.f32.gmra.mrb[0].mxu0 %v821
  %v823 = vpop.f32.mrb[0].mxu0
  %v824 = vadd.f32 %v749, %v823
  %v825 = vpop.f32.mrb[0].mxu0
  %826 = vdwg.mxu0
  %827 = vmatprep.subr.mxu0 0.0
  %v828 = vand.u32 %v16, 4294901760
  %v829 = vsub.f32 %v16, %v828
  %v830 = vand.u32 %v829, 4294901760
  %831 = vmatpush1.msra.mxu0 %v830
  %832 = vmatprep.subr.mxu0 0.0
  %v833 = vand.u32 %v17, 4294901760
  %v834 = vsub.f32 %v17, %v833
  %v835 = vand.u32 %v834, 4294901760
  %836 = vmatpush1.msra.mxu0 %v835
  %837 = vmatprep.subr.mxu0 0.0
  %838 = vmatpush1.msra.mxu0 0.0
  %839 = vmatprep.subr.mxu0 0.0
  %840 = vmatpush1.msra.mxu0 0.0
  %841 = vmatprep.subr.mxu0 0.0
  %842 = vmatpush1.msra.mxu0 0.0
  %843 = vmatprep.subr.mxu0 0.0
  %844 = vmatpush1.msra.mxu0 0.0
  %845 = vmatprep.subr.mxu0 0.0
  %846 = vmatpush1.msra.mxu0 0.0
  %847 = vmatprep.subr.mxu0 0.0
  %848 = vmatpush1.msra.mxu0 0.0
  %849 = vmatprep.subr.mxu0 0.0
  %850 = vmatpush1.msra.mxu0 0.0
  %851 = vmatprep.subr.mxu0 0.0
  %852 = vmatpush1.msra.mxu0 0.0
  %853 = vmatprep.subr.mxu0 0.0
  %854 = vmatpush1.msra.mxu0 0.0
  %855 = vmatprep.subr.mxu0 0.0
  %856 = vmatpush1.msra.mxu0 0.0
  %857 = vmatprep.subr.mxu0 0.0
  %858 = vmatpush1.msra.mxu0 0.0
  %859 = vmatprep.subr.mxu0 0.0
  %860 = vmatpush1.msra.mxu0 0.0
  %861 = vmatprep.subr.mxu0 0.0
  %862 = vmatpush1.msra.mxu0 0.0
  %863 = vmatprep.subr.mxu0 0.0
  %864 = vmatpush1.msra.mxu0 0.0
  %865 = vmatprep.subr.mxu0 0.0
  %866 = vmatpush1.msra.mxu0 0.0
  %867 = vmatprep.subr.mxu0 0.0
  %868 = vmatpush1.msra.mxu0 0.0
  %869 = vmatprep.subr.mxu0 0.0
  %870 = vmatpush1.msra.mxu0 0.0
  %871 = vmatprep.subr.mxu0 0.0
  %872 = vmatpush1.msra.mxu0 0.0
  %873 = vmatprep.subr.mxu0 0.0
  %874 = vmatpush1.msra.mxu0 0.0
  %875 = vmatprep.subr.mxu0 0.0
  %876 = vmatpush1.msra.mxu0 0.0
  %877 = vmatprep.subr.mxu0 0.0
  %878 = vmatpush1.msra.mxu0 0.0
  %879 = vmatprep.subr.mxu0 0.0
  %880 = vmatpush1.msra.mxu0 0.0
  %881 = vmatprep.subr.mxu0 0.0
  %882 = vmatpush1.msra.mxu0 0.0
  %883 = vmatprep.subr.mxu0 0.0
  %884 = vmatpush1.msra.mxu0 0.0
  %885 = vmatprep.subr.mxu0 0.0
  %886 = vmatpush1.msra.mxu0 0.0
  %887 = vmatprep.subr.mxu0 0.0
  %888 = vmatpush1.msra.mxu0 0.0
  %889 = vmatprep.subr.mxu0 0.0
  %890 = vmatpush1.msra.mxu0 0.0
  %891 = vmatprep.subr.mxu0 0.0
  %892 = vmatpush1.msra.mxu0 0.0
  %893 = vmatprep.subr.mxu0 0.0
  %894 = vmatpush1.msra.mxu0 0.0
  %895 = vmatprep.subr.mxu0 0.0
  %896 = vmatpush1.msra.mxu0 0.0
  %897 = vmatprep.mubr.f32.mxu0 0.0
  %v898 = vand.u32 %v56, 4294901760
  %899 = vmatmul.mubr.f32.gmra.mrb[0].mxu0 %v898
  %v900 = vpop.f32.mrb[0].mxu0
  %v901 = vadd.f32 %v824, %v900
  %v902 = vpop.f32.mrb[0].mxu0
  %903 = vdwg.mxu0
  %904 = vmatprep.subr.mxu0 0.0
  %v905 = vand.u32 %v16, 4294901760
  %906 = vmatpush1.msra.mxu0 %v905
  %907 = vmatprep.subr.mxu0 0.0
  %v908 = vand.u32 %v17, 4294901760
  %909 = vmatpush1.msra.mxu0 %v908
  %910 = vmatprep.subr.mxu0 0.0
  %911 = vmatpush1.msra.mxu0 0.0
  %912 = vmatprep.subr.mxu0 0.0
  %913 = vmatpush1.msra.mxu0 0.0
  %914 = vmatprep.subr.mxu0 0.0
  %915 = vmatpush1.msra.mxu0 0.0
  %916 = vmatprep.subr.mxu0 0.0
  %917 = vmatpush1.msra.mxu0 0.0
  %918 = vmatprep.subr.mxu0 0.0
  %919 = vmatpush1.msra.mxu0 0.0
  %920 = vmatprep.subr.mxu0 0.0
  %921 = vmatpush1.msra.mxu0 0.0
  %922 = vmatprep.subr.mxu0 0.0
  %923 = vmatpush1.msra.mxu0 0.0
  %924 = vmatprep.subr.mxu0 0.0
  %925 = vmatpush1.msra.mxu0 0.0
  %926 = vmatprep.subr.mxu0 0.0
  %927 = vmatpush1.msra.mxu0 0.0
  %928 = vmatprep.subr.mxu0 0.0
  %929 = vmatpush1.msra.mxu0 0.0
  %930 = vmatprep.subr.mxu0 0.0
  %931 = vmatpush1.msra.mxu0 0.0
  %932 = vmatprep.subr.mxu0 0.0
  %933 = vmatpush1.msra.mxu0 0.0
  %934 = vmatprep.subr.mxu0 0.0
  %935 = vmatpush1.msra.mxu0 0.0
  %936 = vmatprep.subr.mxu0 0.0
  %937 = vmatpush1.msra.mxu0 0.0
  %938 = vmatprep.subr.mxu0 0.0
  %939 = vmatpush1.msra.mxu0 0.0
  %940 = vmatprep.subr.mxu0 0.0
  %941 = vmatpush1.msra.mxu0 0.0
  %942 = vmatprep.subr.mxu0 0.0
  %943 = vmatpush1.msra.mxu0 0.0
  %944 = vmatprep.subr.mxu0 0.0
  %945 = vmatpush1.msra.mxu0 0.0
  %946 = vmatprep.subr.mxu0 0.0
  %947 = vmatpush1.msra.mxu0 0.0
  %948 = vmatprep.subr.mxu0 0.0
  %949 = vmatpush1.msra.mxu0 0.0
  %950 = vmatprep.subr.mxu0 0.0
  %951 = vmatpush1.msra.mxu0 0.0
  %952 = vmatprep.subr.mxu0 0.0
  %953 = vmatpush1.msra.mxu0 0.0
  %954 = vmatprep.subr.mxu0 0.0
  %955 = vmatpush1.msra.mxu0 0.0
  %956 = vmatprep.subr.mxu0 0.0
  %957 = vmatpush1.msra.mxu0 0.0
  %958 = vmatprep.subr.mxu0 0.0
  %959 = vmatpush1.msra.mxu0 0.0
  %960 = vmatprep.subr.mxu0 0.0
  %961 = vmatpush1.msra.mxu0 0.0
  %962 = vmatprep.subr.mxu0 0.0
  %963 = vmatpush1.msra.mxu0 0.0
  %964 = vmatprep.subr.mxu0 0.0
  %965 = vmatpush1.msra.mxu0 0.0
  %966 = vmatprep.subr.mxu0 0.0
  %967 = vmatpush1.msra.mxu0 0.0
  %968 = vmatprep.subr.mxu0 0.0
  %969 = vmatpush1.msra.mxu0 0.0
  %970 = vmatprep.mubr.f32.mxu0 0.0
  %v971 = vand.u32 %v56, 4294901760
  %972 = vmatmul.mubr.f32.gmra.mrb[0].mxu0 %v971
  %v973 = vpop.f32.mrb[0].mxu0
  %v974 = vadd.f32 %v901, %v973
  %v975 = vpop.f32.mrb[0].mxu0
  %976 = vdwg.mxu0
  %977 = vst.msk [vmem:[#allocation3] sm:$0xff] %vm55, %v974
  %v978 = vld [vmem:[%s0 + $0x1] sm:$0x1]
  %v979 = vld [vmem:[%s0 + $0x5] sm:$0x1]
  %v980 = vld [vmem:[%s0 + $0x9] sm:$0x1]
  %v981 = vld [vmem:[%s0 + $0xd] sm:$0x1]
  %v982 = vld [vmem:[%s0 + $0x11] sm:$0x1]
  %v983 = vld [vmem:[%s0 + $0x15] sm:$0x1]
  %v984 = vld [vmem:[%s0 + $0x19] sm:$0x1]
  %v985 = vld [vmem:[%s0 + $0x1d] sm:$0x1]
  %v994 = vrot.slane %v979, 7
  %v995 = vsel %vm35, %v994, %v978
  %v996 = vrot.slane %v980, 6
  %v997 = vsel %vm38, %v996, %v995
  %v998 = vrot.slane %v981, 5
  %v999 = vsel %vm41, %v998, %v997
  %v1000 = vrot.slane %v982, 4
  %v1001 = vsel %vm44, %v1000, %v999
  %v1002 = vrot.slane %v983, 3
  %v1003 = vsel %vm47, %v1002, %v1001
  %v1004 = vrot.slane %v984, 2
  %v1005 = vsel %vm50, %v1004, %v1003
  %v1006 = vrot.slane %v985, 1
  %v1007 = vsel %vm53, %v1006, %v1005
  %v1008 = vsel %vm55, %v1007, 0
  %1010 = vmatprep.subr.mxu0 0.0
  %v1011 = vand.u32 %v14, 4294901760
  %1012 = vmatpush1.msra.mxu0 %v1011
  %1013 = vmatprep.subr.mxu0 0.0
  %v1014 = vand.u32 %v15, 4294901760
  %1015 = vmatpush1.msra.mxu0 %v1014
  %1016 = vmatprep.subr.mxu0 0.0
  %1017 = vmatpush1.msra.mxu0 0.0
  %1018 = vmatprep.subr.mxu0 0.0
  %1019 = vmatpush1.msra.mxu0 0.0
  %1020 = vmatprep.subr.mxu0 0.0
  %1021 = vmatpush1.msra.mxu0 0.0
  %1022 = vmatprep.subr.mxu0 0.0
  %1023 = vmatpush1.msra.mxu0 0.0
  %1024 = vmatprep.subr.mxu0 0.0
  %1025 = vmatpush1.msra.mxu0 0.0
  %1026 = vmatprep.subr.mxu0 0.0
  %1027 = vmatpush1.msra.mxu0 0.0
  %1028 = vmatprep.subr.mxu0 0.0
  %1029 = vmatpush1.msra.mxu0 0.0
  %1030 = vmatprep.subr.mxu0 0.0
  %1031 = vmatpush1.msra.mxu0 0.0
  %1032 = vmatprep.subr.mxu0 0.0
  %1033 = vmatpush1.msra.mxu0 0.0
  %1034 = vmatprep.subr.mxu0 0.0
  %1035 = vmatpush1.msra.mxu0 0.0
  %1036 = vmatprep.subr.mxu0 0.0
  %1037 = vmatpush1.msra.mxu0 0.0
  %1038 = vmatprep.subr.mxu0 0.0
  %1039 = vmatpush1.msra.mxu0 0.0
  %1040 = vmatprep.subr.mxu0 0.0
  %1041 = vmatpush1.msra.mxu0 0.0
  %1042 = vmatprep.subr.mxu0 0.0
  %1043 = vmatpush1.msra.mxu0 0.0
  %1044 = vmatprep.subr.mxu0 0.0
  %1045 = vmatpush1.msra.mxu0 0.0
  %1046 = vmatprep.subr.mxu0 0.0
  %1047 = vmatpush1.msra.mxu0 0.0
  %1048 = vmatprep.subr.mxu0 0.0
  %1049 = vmatpush1.msra.mxu0 0.0
  %1050 = vmatprep.subr.mxu0 0.0
  %1051 = vmatpush1.msra.mxu0 0.0
  %1052 = vmatprep.subr.mxu0 0.0
  %1053 = vmatpush1.msra.mxu0 0.0
  %1054 = vmatprep.subr.mxu0 0.0
  %1055 = vmatpush1.msra.mxu0 0.0
  %1056 = vmatprep.subr.mxu0 0.0
  %1057 = vmatpush1.msra.mxu0 0.0
  %1058 = vmatprep.subr.mxu0 0.0
  %1059 = vmatpush1.msra.mxu0 0.0
  %1060 = vmatprep.subr.mxu0 0.0
  %1061 = vmatpush1.msra.mxu0 0.0
  %1062 = vmatprep.subr.mxu0 0.0
  %1063 = vmatpush1.msra.mxu0 0.0
  %1064 = vmatprep.subr.mxu0 0.0
  %1065 = vmatpush1.msra.mxu0 0.0
  %1066 = vmatprep.subr.mxu0 0.0
  %1067 = vmatpush1.msra.mxu0 0.0
  %1068 = vmatprep.subr.mxu0 0.0
  %1069 = vmatpush1.msra.mxu0 0.0
  %1070 = vmatprep.subr.mxu0 0.0
  %1071 = vmatpush1.msra.mxu0 0.0
  %1072 = vmatprep.subr.mxu0 0.0
  %1073 = vmatpush1.msra.mxu0 0.0
  %1074 = vmatprep.subr.mxu0 0.0
  %1075 = vmatpush1.msra.mxu0 0.0
  %1076 = vmatprep.mubr.f32.mxu0 0.0
  %v1077 = vand.u32 %v1008, 4294901760
  %v1078 = vsub.f32 %v1008, %v1077
  %v1079 = vand.u32 %v1078, 4294901760
  %v1080 = vsub.f32 %v1078, %v1079
  %v1081 = vand.u32 %v1080, 4294901760
  %1082 = vmatmul.mubr.f32.gmra.mrb[0].mxu0 %v1081
  %v1083 = vpop.f32.mrb[0].mxu0
  %v1084 = vadd.f32 0.0, %v1083
  %v1085 = vpop.f32.mrb[0].mxu0
  %1086 = vdwg.mxu0
  %1087 = vmatprep.subr.mxu0 0.0
  %v1088 = vand.u32 %v14, 4294901760
  %v1089 = vsub.f32 %v14, %v1088
  %v1090 = vand.u32 %v1089, 4294901760
  %v1091 = vsub.f32 %v1089, %v1090
  %v1092 = vand.u32 %v1091, 4294901760
  %1093 = vmatpush1.msra.mxu0 %v1092
  %1094 = vmatprep.subr.mxu0 0.0
  %v1095 = vand.u32 %v15, 4294901760
  %v1096 = vsub.f32 %v15, %v1095
  %v1097 = vand.u32 %v1096, 4294901760
  %v1098 = vsub.f32 %v1096, %v1097
  %v1099 = vand.u32 %v1098, 4294901760
  %1100 = vmatpush1.msra.mxu0 %v1099
  %1101 = vmatprep.subr.mxu0 0.0
  %1102 = vmatpush1.msra.mxu0 0.0
  %1103 = vmatprep.subr.mxu0 0.0
  %1104 = vmatpush1.msra.mxu0 0.0
  %1105 = vmatprep.subr.mxu0 0.0
  %1106 = vmatpush1.msra.mxu0 0.0
  %1107 = vmatprep.subr.mxu0 0.0
  %1108 = vmatpush1.msra.mxu0 0.0
  %1109 = vmatprep.subr.mxu0 0.0
  %1110 = vmatpush1.msra.mxu0 0.0
  %1111 = vmatprep.subr.mxu0 0.0
  %1112 = vmatpush1.msra.mxu0 0.0
  %1113 = vmatprep.subr.mxu0 0.0
  %1114 = vmatpush1.msra.mxu0 0.0
  %1115 = vmatprep.subr.mxu0 0.0
  %1116 = vmatpush1.msra.mxu0 0.0
  %1117 = vmatprep.subr.mxu0 0.0
  %1118 = vmatpush1.msra.mxu0 0.0
  %1119 = vmatprep.subr.mxu0 0.0
  %1120 = vmatpush1.msra.mxu0 0.0
  %1121 = vmatprep.subr.mxu0 0.0
  %1122 = vmatpush1.msra.mxu0 0.0
  %1123 = vmatprep.subr.mxu0 0.0
  %1124 = vmatpush1.msra.mxu0 0.0
  %1125 = vmatprep.subr.mxu0 0.0
  %1126 = vmatpush1.msra.mxu0 0.0
  %1127 = vmatprep.subr.mxu0 0.0
  %1128 = vmatpush1.msra.mxu0 0.0
  %1129 = vmatprep.subr.mxu0 0.0
  %1130 = vmatpush1.msra.mxu0 0.0
  %1131 = vmatprep.subr.mxu0 0.0
  %1132 = vmatpush1.msra.mxu0 0.0
  %1133 = vmatprep.subr.mxu0 0.0
  %1134 = vmatpush1.msra.mxu0 0.0
  %1135 = vmatprep.subr.mxu0 0.0
  %1136 = vmatpush1.msra.mxu0 0.0
  %1137 = vmatprep.subr.mxu0 0.0
  %1138 = vmatpush1.msra.mxu0 0.0
  %1139 = vmatprep.subr.mxu0 0.0
  %1140 = vmatpush1.msra.mxu0 0.0
  %1141 = vmatprep.subr.mxu0 0.0
  %1142 = vmatpush1.msra.mxu0 0.0
  %1143 = vmatprep.subr.mxu0 0.0
  %1144 = vmatpush1.msra.mxu0 0.0
  %1145 = vmatprep.subr.mxu0 0.0
  %1146 = vmatpush1.msra.mxu0 0.0
  %1147 = vmatprep.subr.mxu0 0.0
  %1148 = vmatpush1.msra.mxu0 0.0
  %1149 = vmatprep.subr.mxu0 0.0
  %1150 = vmatpush1.msra.mxu0 0.0
  %1151 = vmatprep.subr.mxu0 0.0
  %1152 = vmatpush1.msra.mxu0 0.0
  %1153 = vmatprep.subr.mxu0 0.0
  %1154 = vmatpush1.msra.mxu0 0.0
  %1155 = vmatprep.subr.mxu0 0.0
  %1156 = vmatpush1.msra.mxu0 0.0
  %1157 = vmatprep.subr.mxu0 0.0
  %1158 = vmatpush1.msra.mxu0 0.0
  %1159 = vmatprep.subr.mxu0 0.0
  %1160 = vmatpush1.msra.mxu0 0.0
  %1161 = vmatprep.mubr.f32.mxu0 0.0
  %v1162 = vand.u32 %v1008, 4294901760
  %1163 = vmatmul.mubr.f32.gmra.mrb[0].mxu0 %v1162
  %v1164 = vpop.f32.mrb[0].mxu0
  %v1165 = vadd.f32 %v1084, %v1164
  %v1166 = vpop.f32.mrb[0].mxu0
  %1167 = vdwg.mxu0
  %1168 = vmatprep.subr.mxu0 0.0
  %v1169 = vand.u32 %v14, 4294901760
  %v1170 = vsub.f32 %v14, %v1169
  %1171 = vmatpush1.msra.mxu0 %v1170
  %1172 = vmatprep.subr.mxu0 0.0
  %v1173 = vand.u32 %v15, 4294901760
  %v1174 = vsub.f32 %v15, %v1173
  %1175 = vmatpush1.msra.mxu0 %v1174
  %1176 = vmatprep.subr.mxu0 0.0
  %1177 = vmatpush1.msra.mxu0 0.0
  %1178 = vmatprep.subr.mxu0 0.0
  %1179 = vmatpush1.msra.mxu0 0.0
  %1180 = vmatprep.subr.mxu0 0.0
  %1181 = vmatpush1.msra.mxu0 0.0
  %1182 = vmatprep.subr.mxu0 0.0
  %1183 = vmatpush1.msra.mxu0 0.0
  %1184 = vmatprep.subr.mxu0 0.0
  %1185 = vmatpush1.msra.mxu0 0.0
  %1186 = vmatprep.subr.mxu0 0.0
  %1187 = vmatpush1.msra.mxu0 0.0
  %1188 = vmatprep.subr.mxu0 0.0
  %1189 = vmatpush1.msra.mxu0 0.0
  %1190 = vmatprep.subr.mxu0 0.0
  %1191 = vmatpush1.msra.mxu0 0.0
  %1192 = vmatprep.subr.mxu0 0.0
  %1193 = vmatpush1.msra.mxu0 0.0
  %1194 = vmatprep.subr.mxu0 0.0
  %1195 = vmatpush1.msra.mxu0 0.0
  %1196 = vmatprep.subr.mxu0 0.0
  %1197 = vmatpush1.msra.mxu0 0.0
  %1198 = vmatprep.subr.mxu0 0.0
  %1199 = vmatpush1.msra.mxu0 0.0
  %1200 = vmatprep.subr.mxu0 0.0
  %1201 = vmatpush1.msra.mxu0 0.0
  %1202 = vmatprep.subr.mxu0 0.0
  %1203 = vmatpush1.msra.mxu0 0.0
  %1204 = vmatprep.subr.mxu0 0.0
  %1205 = vmatpush1.msra.mxu0 0.0
  %1206 = vmatprep.subr.mxu0 0.0
  %1207 = vmatpush1.msra.mxu0 0.0
  %1208 = vmatprep.subr.mxu0 0.0
  %1209 = vmatpush1.msra.mxu0 0.0
  %1210 = vmatprep.subr.mxu0 0.0
  %1211 = vmatpush1.msra.mxu0 0.0
  %1212 = vmatprep.subr.mxu0 0.0
  %1213 = vmatpush1.msra.mxu0 0.0
  %1214 = vmatprep.subr.mxu0 0.0
  %1215 = vmatpush1.msra.mxu0 0.0
  %1216 = vmatprep.subr.mxu0 0.0
  %1217 = vmatpush1.msra.mxu0 0.0
  %1218 = vmatprep.subr.mxu0 0.0
  %1219 = vmatpush1.msra.mxu0 0.0
  %1220 = vmatprep.subr.mxu0 0.0
  %1221 = vmatpush1.msra.mxu0 0.0
  %1222 = vmatprep.subr.mxu0 0.0
  %1223 = vmatpush1.msra.mxu0 0.0
  %1224 = vmatprep.subr.mxu0 0.0
  %1225 = vmatpush1.msra.mxu0 0.0
  %1226 = vmatprep.subr.mxu0 0.0
  %1227 = vmatpush1.msra.mxu0 0.0
  %1228 = vmatprep.subr.mxu0 0.0
  %1229 = vmatpush1.msra.mxu0 0.0
  %1230 = vmatprep.subr.mxu0 0.0
  %1231 = vmatpush1.msra.mxu0 0.0
  %1232 = vmatprep.subr.mxu0 0.0
  %1233 = vmatpush1.msra.mxu0 0.0
  %1234 = vmatprep.subr.mxu0 0.0
  %1235 = vmatpush1.msra.mxu0 0.0
  %1236 = vmatprep.mubr.f32.mxu0 0.0
  %v1237 = vand.u32 %v1008, 4294901760
  %v1238 = vsub.f32 %v1008, %v1237
  %1239 = vmatmul.mubr.f32.gmra.mrb[0].mxu0 %v1238
  %v1240 = vpop.f32.mrb[0].mxu0
  %v1241 = vadd.f32 %v1165, %v1240
  %v1242 = vpop.f32.mrb[0].mxu0
  %1243 = vdwg.mxu0
  %1244 = vmatprep.subr.mxu0 0.0
  %v1245 = vand.u32 %v14, 4294901760
  %1246 = vmatpush1.msra.mxu0 %v1245
  %1247 = vmatprep.subr.mxu0 0.0
  %v1248 = vand.u32 %v15, 4294901760
  %1249 = vmatpush1.msra.mxu0 %v1248
  %1250 = vmatprep.subr.mxu0 0.0
  %1251 = vmatpush1.msra.mxu0 0.0
  %1252 = vmatprep.subr.mxu0 0.0
  %1253 = vmatpush1.msra.mxu0 0.0
  %1254 = vmatprep.subr.mxu0 0.0
  %1255 = vmatpush1.msra.mxu0 0.0
  %1256 = vmatprep.subr.mxu0 0.0
  %1257 = vmatpush1.msra.mxu0 0.0
  %1258 = vmatprep.subr.mxu0 0.0
  %1259 = vmatpush1.msra.mxu0 0.0
  %1260 = vmatprep.subr.mxu0 0.0
  %1261 = vmatpush1.msra.mxu0 0.0
  %1262 = vmatprep.subr.mxu0 0.0
  %1263 = vmatpush1.msra.mxu0 0.0
  %1264 = vmatprep.subr.mxu0 0.0
  %1265 = vmatpush1.msra.mxu0 0.0
  %1266 = vmatprep.subr.mxu0 0.0
  %1267 = vmatpush1.msra.mxu0 0.0
  %1268 = vmatprep.subr.mxu0 0.0
  %1269 = vmatpush1.msra.mxu0 0.0
  %1270 = vmatprep.subr.mxu0 0.0
  %1271 = vmatpush1.msra.mxu0 0.0
  %1272 = vmatprep.subr.mxu0 0.0
  %1273 = vmatpush1.msra.mxu0 0.0
  %1274 = vmatprep.subr.mxu0 0.0
  %1275 = vmatpush1.msra.mxu0 0.0
  %1276 = vmatprep.subr.mxu0 0.0
  %1277 = vmatpush1.msra.mxu0 0.0
  %1278 = vmatprep.subr.mxu0 0.0
  %1279 = vmatpush1.msra.mxu0 0.0
  %1280 = vmatprep.subr.mxu0 0.0
  %1281 = vmatpush1.msra.mxu0 0.0
  %1282 = vmatprep.subr.mxu0 0.0
  %1283 = vmatpush1.msra.mxu0 0.0
  %1284 = vmatprep.subr.mxu0 0.0
  %1285 = vmatpush1.msra.mxu0 0.0
  %1286 = vmatprep.subr.mxu0 0.0
  %1287 = vmatpush1.msra.mxu0 0.0
  %1288 = vmatprep.subr.mxu0 0.0
  %1289 = vmatpush1.msra.mxu0 0.0
  %1290 = vmatprep.subr.mxu0 0.0
  %1291 = vmatpush1.msra.mxu0 0.0
  %1292 = vmatprep.subr.mxu0 0.0
  %1293 = vmatpush1.msra.mxu0 0.0
  %1294 = vmatprep.subr.mxu0 0.0
  %1295 = vmatpush1.msra.mxu0 0.0
  %1296 = vmatprep.subr.mxu0 0.0
  %1297 = vmatpush1.msra.mxu0 0.0
  %1298 = vmatprep.subr.mxu0 0.0
  %1299 = vmatpush1.msra.mxu0 0.0
  %1300 = vmatprep.subr.mxu0 0.0
  %1301 = vmatpush1.msra.mxu0 0.0
  %1302 = vmatprep.subr.mxu0 0.0
  %1303 = vmatpush1.msra.mxu0 0.0
  %1304 = vmatprep.subr.mxu0 0.0
  %1305 = vmatpush1.msra.mxu0 0.0
  %1306 = vmatprep.subr.mxu0 0.0
  %1307 = vmatpush1.msra.mxu0 0.0
  %1308 = vmatprep.subr.mxu0 0.0
  %1309 = vmatpush1.msra.mxu0 0.0
  %1310 = vmatprep.mubr.f32.mxu0 0.0
  %v1311 = vand.u32 %v1008, 4294901760
  %v1312 = vsub.f32 %v1008, %v1311
  %v1313 = vand.u32 %v1312, 4294901760
  %1314 = vmatmul.mubr.f32.gmra.mrb[0].mxu0 %v1313
  %v1315 = vpop.f32.mrb[0].mxu0
  %v1316 = vadd.f32 %v1241, %v1315
  %v1317 = vpop.f32.mrb[0].mxu0
  %1318 = vdwg.mxu0
  %1319 = vmatprep.subr.mxu0 0.0
  %v1320 = vand.u32 %v14, 4294901760
  %v1321 = vsub.f32 %v14, %v1320
  %v1322 = vand.u32 %v1321, 4294901760
  %1323 = vmatpush1.msra.mxu0 %v1322
  %1324 = vmatprep.subr.mxu0 0.0
  %v1325 = vand.u32 %v15, 4294901760
  %v1326 = vsub.f32 %v15, %v1325
  %v1327 = vand.u32 %v1326, 4294901760
  %1328 = vmatpush1.msra.mxu0 %v1327
  %1329 = vmatprep.subr.mxu0 0.0
  %1330 = vmatpush1.msra.mxu0 0.0
  %1331 = vmatprep.subr.mxu0 0.0
  %1332 = vmatpush1.msra.mxu0 0.0
  %1333 = vmatprep.subr.mxu0 0.0
  %1334 = vmatpush1.msra.mxu0 0.0
  %1335 = vmatprep.subr.mxu0 0.0
  %1336 = vmatpush1.msra.mxu0 0.0
  %1337 = vmatprep.subr.mxu0 0.0
  %1338 = vmatpush1.msra.mxu0 0.0
  %1339 = vmatprep.subr.mxu0 0.0
  %1340 = vmatpush1.msra.mxu0 0.0
  %1341 = vmatprep.subr.mxu0 0.0
  %1342 = vmatpush1.msra.mxu0 0.0
  %1343 = vmatprep.subr.mxu0 0.0
  %1344 = vmatpush1.msra.mxu0 0.0
  %1345 = vmatprep.subr.mxu0 0.0
  %1346 = vmatpush1.msra.mxu0 0.0
  %1347 = vmatprep.subr.mxu0 0.0
  %1348 = vmatpush1.msra.mxu0 0.0
  %1349 = vmatprep.subr.mxu0 0.0
  %1350 = vmatpush1.msra.mxu0 0.0
  %1351 = vmatprep.subr.mxu0 0.0
  %1352 = vmatpush1.msra.mxu0 0.0
  %1353 = vmatprep.subr.mxu0 0.0
  %1354 = vmatpush1.msra.mxu0 0.0
  %1355 = vmatprep.subr.mxu0 0.0
  %1356 = vmatpush1.msra.mxu0 0.0
  %1357 = vmatprep.subr.mxu0 0.0
  %1358 = vmatpush1.msra.mxu0 0.0
  %1359 = vmatprep.subr.mxu0 0.0
  %1360 = vmatpush1.msra.mxu0 0.0
  %1361 = vmatprep.subr.mxu0 0.0
  %1362 = vmatpush1.msra.mxu0 0.0
  %1363 = vmatprep.subr.mxu0 0.0
  %1364 = vmatpush1.msra.mxu0 0.0
  %1365 = vmatprep.subr.mxu0 0.0
  %1366 = vmatpush1.msra.mxu0 0.0
  %1367 = vmatprep.subr.mxu0 0.0
  %1368 = vmatpush1.msra.mxu0 0.0
  %1369 = vmatprep.subr.mxu0 0.0
  %1370 = vmatpush1.msra.mxu0 0.0
  %1371 = vmatprep.subr.mxu0 0.0
  %1372 = vmatpush1.msra.mxu0 0.0
  %1373 = vmatprep.subr.mxu0 0.0
  %1374 = vmatpush1.msra.mxu0 0.0
  %1375 = vmatprep.subr.mxu0 0.0
  %1376 = vmatpush1.msra.mxu0 0.0
  %1377 = vmatprep.subr.mxu0 0.0
  %1378 = vmatpush1.msra.mxu0 0.0
  %1379 = vmatprep.subr.mxu0 0.0
  %1380 = vmatpush1.msra.mxu0 0.0
  %1381 = vmatprep.subr.mxu0 0.0
  %1382 = vmatpush1.msra.mxu0 0.0
  %1383 = vmatprep.subr.mxu0 0.0
  %1384 = vmatpush1.msra.mxu0 0.0
  %1385 = vmatprep.subr.mxu0 0.0
  %1386 = vmatpush1.msra.mxu0 0.0
  %1387 = vmatprep.subr.mxu0 0.0
  %1388 = vmatpush1.msra.mxu0 0.0
  %1389 = vmatprep.mubr.f32.mxu0 0.0
  %v1390 = vand.u32 %v1008, 4294901760
  %1391 = vmatmul.mubr.f32.gmra.mrb[0].mxu0 %v1390
  %v1392 = vpop.f32.mrb[0].mxu0
  %v1393 = vadd.f32 %v1316, %v1392
  %v1394 = vpop.f32.mrb[0].mxu0
  %1395 = vdwg.mxu0
  %1396 = vmatprep.subr.mxu0 0.0
  %v1397 = vand.u32 %v14, 4294901760
  %1398 = vmatpush1.msra.mxu0 %v1397
  %1399 = vmatprep.subr.mxu0 0.0
  %v1400 = vand.u32 %v15, 4294901760
  %1401 = vmatpush1.msra.mxu0 %v1400
  %1402 = vmatprep.subr.mxu0 0.0
  %1403 = vmatpush1.msra.mxu0 0.0
  %1404 = vmatprep.subr.mxu0 0.0
  %1405 = vmatpush1.msra.mxu0 0.0
  %1406 = vmatprep.subr.mxu0 0.0
  %1407 = vmatpush1.msra.mxu0 0.0
  %1408 = vmatprep.subr.mxu0 0.0
  %1409 = vmatpush1.msra.mxu0 0.0
  %1410 = vmatprep.subr.mxu0 0.0
  %1411 = vmatpush1.msra.mxu0 0.0
  %1412 = vmatprep.subr.mxu0 0.0
  %1413 = vmatpush1.msra.mxu0 0.0
  %1414 = vmatprep.subr.mxu0 0.0
  %1415 = vmatpush1.msra.mxu0 0.0
  %1416 = vmatprep.subr.mxu0 0.0
  %1417 = vmatpush1.msra.mxu0 0.0
  %1418 = vmatprep.subr.mxu0 0.0
  %1419 = vmatpush1.msra.mxu0 0.0
  %1420 = vmatprep.subr.mxu0 0.0
  %1421 = vmatpush1.msra.mxu0 0.0
  %1422 = vmatprep.subr.mxu0 0.0
  %1423 = vmatpush1.msra.mxu0 0.0
  %1424 = vmatprep.subr.mxu0 0.0
  %1425 = vmatpush1.msra.mxu0 0.0
  %1426 = vmatprep.subr.mxu0 0.0
  %1427 = vmatpush1.msra.mxu0 0.0
  %1428 = vmatprep.subr.mxu0 0.0
  %1429 = vmatpush1.msra.mxu0 0.0
  %1430 = vmatprep.subr.mxu0 0.0
  %1431 = vmatpush1.msra.mxu0 0.0
  %1432 = vmatprep.subr.mxu0 0.0
  %1433 = vmatpush1.msra.mxu0 0.0
  %1434 = vmatprep.subr.mxu0 0.0
  %1435 = vmatpush1.msra.mxu0 0.0
  %1436 = vmatprep.subr.mxu0 0.0
  %1437 = vmatpush1.msra.mxu0 0.0
  %1438 = vmatprep.subr.mxu0 0.0
  %1439 = vmatpush1.msra.mxu0 0.0
  %1440 = vmatprep.subr.mxu0 0.0
  %1441 = vmatpush1.msra.mxu0 0.0
  %1442 = vmatprep.subr.mxu0 0.0
  %1443 = vmatpush1.msra.mxu0 0.0
  %1444 = vmatprep.subr.mxu0 0.0
  %1445 = vmatpush1.msra.mxu0 0.0
  %1446 = vmatprep.subr.mxu0 0.0
  %1447 = vmatpush1.msra.mxu0 0.0
  %1448 = vmatprep.subr.mxu0 0.0
  %1449 = vmatpush1.msra.mxu0 0.0
  %1450 = vmatprep.subr.mxu0 0.0
  %1451 = vmatpush1.msra.mxu0 0.0
  %1452 = vmatprep.subr.mxu0 0.0
  %1453 = vmatpush1.msra.mxu0 0.0
  %1454 = vmatprep.subr.mxu0 0.0
  %1455 = vmatpush1.msra.mxu0 0.0
  %1456 = vmatprep.subr.mxu0 0.0
  %1457 = vmatpush1.msra.mxu0 0.0
  %1458 = vmatprep.subr.mxu0 0.0
  %1459 = vmatpush1.msra.mxu0 0.0
  %1460 = vmatprep.subr.mxu0 0.0
  %1461 = vmatpush1.msra.mxu0 0.0
  %1462 = vmatprep.mubr.f32.mxu0 0.0
  %v1463 = vand.u32 %v1008, 4294901760
  %1464 = vmatmul.mubr.f32.gmra.mrb[0].mxu0 %v1463
  %v1465 = vpop.f32.mrb[0].mxu0
  %v1466 = vadd.f32 %v1393, %v1465
  %v1467 = vpop.f32.mrb[0].mxu0
  %1468 = vdwg.mxu0
  %s1469 = scalar_lea.vmem [#allocation2], 8
  %1470 = vst.msk [vmem:[%s1469] sm:$0xff] %vm55, %v1466
  %1471 = vmatprep.subr.mxu0 0.0
  %v1472 = vand.u32 %v16, 4294901760
  %1473 = vmatpush1.msra.mxu0 %v1472
  %1474 = vmatprep.subr.mxu0 0.0
  %v1475 = vand.u32 %v17, 4294901760
  %1476 = vmatpush1.msra.mxu0 %v1475
  %1477 = vmatprep.subr.mxu0 0.0
  %1478 = vmatpush1.msra.mxu0 0.0
  %1479 = vmatprep.subr.mxu0 0.0
  %1480 = vmatpush1.msra.mxu0 0.0
  %1481 = vmatprep.subr.mxu0 0.0
  %1482 = vmatpush1.msra.mxu0 0.0
  %1483 = vmatprep.subr.mxu0 0.0
  %1484 = vmatpush1.msra.mxu0 0.0
  %1485 = vmatprep.subr.mxu0 0.0
  %1486 = vmatpush1.msra.mxu0 0.0
  %1487 = vmatprep.subr.mxu0 0.0
  %1488 = vmatpush1.msra.mxu0 0.0
  %1489 = vmatprep.subr.mxu0 0.0
  %1490 = vmatpush1.msra.mxu0 0.0
  %1491 = vmatprep.subr.mxu0 0.0
  %1492 = vmatpush1.msra.mxu0 0.0
  %1493 = vmatprep.subr.mxu0 0.0
  %1494 = vmatpush1.msra.mxu0 0.0
  %1495 = vmatprep.subr.mxu0 0.0
  %1496 = vmatpush1.msra.mxu0 0.0
  %1497 = vmatprep.subr.mxu0 0.0
  %1498 = vmatpush1.msra.mxu0 0.0
  %1499 = vmatprep.subr.mxu0 0.0
  %1500 = vmatpush1.msra.mxu0 0.0
  %1501 = vmatprep.subr.mxu0 0.0
  %1502 = vmatpush1.msra.mxu0 0.0
  %1503 = vmatprep.subr.mxu0 0.0
  %1504 = vmatpush1.msra.mxu0 0.0
  %1505 = vmatprep.subr.mxu0 0.0
  %1506 = vmatpush1.msra.mxu0 0.0
  %1507 = vmatprep.subr.mxu0 0.0
  %1508 = vmatpush1.msra.mxu0 0.0
  %1509 = vmatprep.subr.mxu0 0.0
  %1510 = vmatpush1.msra.mxu0 0.0
  %1511 = vmatprep.subr.mxu0 0.0
  %1512 = vmatpush1.msra.mxu0 0.0
  %1513 = vmatprep.subr.mxu0 0.0
  %1514 = vmatpush1.msra.mxu0 0.0
  %1515 = vmatprep.subr.mxu0 0.0
  %1516 = vmatpush1.msra.mxu0 0.0
  %1517 = vmatprep.subr.mxu0 0.0
  %1518 = vmatpush1.msra.mxu0 0.0
  %1519 = vmatprep.subr.mxu0 0.0
  %1520 = vmatpush1.msra.mxu0 0.0
  %1521 = vmatprep.subr.mxu0 0.0
  %1522 = vmatpush1.msra.mxu0 0.0
  %1523 = vmatprep.subr.mxu0 0.0
  %1524 = vmatpush1.msra.mxu0 0.0
  %1525 = vmatprep.subr.mxu0 0.0
  %1526 = vmatpush1.msra.mxu0 0.0
  %1527 = vmatprep.subr.mxu0 0.0
  %1528 = vmatpush1.msra.mxu0 0.0
  %1529 = vmatprep.subr.mxu0 0.0
  %1530 = vmatpush1.msra.mxu0 0.0
  %1531 = vmatprep.subr.mxu0 0.0
  %1532 = vmatpush1.msra.mxu0 0.0
  %1533 = vmatprep.subr.mxu0 0.0
  %1534 = vmatpush1.msra.mxu0 0.0
  %1535 = vmatprep.subr.mxu0 0.0
  %1536 = vmatpush1.msra.mxu0 0.0
  %1537 = vmatprep.mubr.f32.mxu0 0.0
  %v1538 = vand.u32 %v1008, 4294901760
  %v1539 = vsub.f32 %v1008, %v1538
  %v1540 = vand.u32 %v1539, 4294901760
  %v1541 = vsub.f32 %v1539, %v1540
  %v1542 = vand.u32 %v1541, 4294901760
  %1543 = vmatmul.mubr.f32.gmra.mrb[0].mxu0 %v1542
  %v1544 = vpop.f32.mrb[0].mxu0
  %v1545 = vadd.f32 0.0, %v1544
  %v1546 = vpop.f32.mrb[0].mxu0
  %1547 = vdwg.mxu0
  %1548 = vmatprep.subr.mxu0 0.0
  %v1549 = vand.u32 %v16, 4294901760
  %v1550 = vsub.f32 %v16, %v1549
  %v1551 = vand.u32 %v1550, 4294901760
  %v1552 = vsub.f32 %v1550, %v1551
  %v1553 = vand.u32 %v1552, 4294901760
  %1554 = vmatpush1.msra.mxu0 %v1553
  %1555 = vmatprep.subr.mxu0 0.0
  %v1556 = vand.u32 %v17, 4294901760
  %v1557 = vsub.f32 %v17, %v1556
  %v1558 = vand.u32 %v1557, 4294901760
  %v1559 = vsub.f32 %v1557, %v1558
  %v1560 = vand.u32 %v1559, 4294901760
  %1561 = vmatpush1.msra.mxu0 %v1560
  %1562 = vmatprep.subr.mxu0 0.0
  %1563 = vmatpush1.msra.mxu0 0.0
  %1564 = vmatprep.subr.mxu0 0.0
  %1565 = vmatpush1.msra.mxu0 0.0
  %1566 = vmatprep.subr.mxu0 0.0
  %1567 = vmatpush1.msra.mxu0 0.0
  %1568 = vmatprep.subr.mxu0 0.0
  %1569 = vmatpush1.msra.mxu0 0.0
  %1570 = vmatprep.subr.mxu0 0.0
  %1571 = vmatpush1.msra.mxu0 0.0
  %1572 = vmatprep.subr.mxu0 0.0
  %1573 = vmatpush1.msra.mxu0 0.0
  %1574 = vmatprep.subr.mxu0 0.0
  %1575 = vmatpush1.msra.mxu0 0.0
  %1576 = vmatprep.subr.mxu0 0.0
  %1577 = vmatpush1.msra.mxu0 0.0
  %1578 = vmatprep.subr.mxu0 0.0
  %1579 = vmatpush1.msra.mxu0 0.0
  %1580 = vmatprep.subr.mxu0 0.0
  %1581 = vmatpush1.msra.mxu0 0.0
  %1582 = vmatprep.subr.mxu0 0.0
  %1583 = vmatpush1.msra.mxu0 0.0
  %1584 = vmatprep.subr.mxu0 0.0
  %1585 = vmatpush1.msra.mxu0 0.0
  %1586 = vmatprep.subr.mxu0 0.0
  %1587 = vmatpush1.msra.mxu0 0.0
  %1588 = vmatprep.subr.mxu0 0.0
  %1589 = vmatpush1.msra.mxu0 0.0
  %1590 = vmatprep.subr.mxu0 0.0
  %1591 = vmatpush1.msra.mxu0 0.0
  %1592 = vmatprep.subr.mxu0 0.0
  %1593 = vmatpush1.msra.mxu0 0.0
  %1594 = vmatprep.subr.mxu0 0.0
  %1595 = vmatpush1.msra.mxu0 0.0
  %1596 = vmatprep.subr.mxu0 0.0
  %1597 = vmatpush1.msra.mxu0 0.0
  %1598 = vmatprep.subr.mxu0 0.0
  %1599 = vmatpush1.msra.mxu0 0.0
  %1600 = vmatprep.subr.mxu0 0.0
  %1601 = vmatpush1.msra.mxu0 0.0
  %1602 = vmatprep.subr.mxu0 0.0
  %1603 = vmatpush1.msra.mxu0 0.0
  %1604 = vmatprep.subr.mxu0 0.0
  %1605 = vmatpush1.msra.mxu0 0.0
  %1606 = vmatprep.subr.mxu0 0.0
  %1607 = vmatpush1.msra.mxu0 0.0
  %1608 = vmatprep.subr.mxu0 0.0
  %1609 = vmatpush1.msra.mxu0 0.0
  %1610 = vmatprep.subr.mxu0 0.0
  %1611 = vmatpush1.msra.mxu0 0.0
  %1612 = vmatprep.subr.mxu0 0.0
  %1613 = vmatpush1.msra.mxu0 0.0
  %1614 = vmatprep.subr.mxu0 0.0
  %1615 = vmatpush1.msra.mxu0 0.0
  %1616 = vmatprep.subr.mxu0 0.0
  %1617 = vmatpush1.msra.mxu0 0.0
  %1618 = vmatprep.subr.mxu0 0.0
  %1619 = vmatpush1.msra.mxu0 0.0
  %1620 = vmatprep.subr.mxu0 0.0
  %1621 = vmatpush1.msra.mxu0 0.0
  %1622 = vmatprep.mubr.f32.mxu0 0.0
  %v1623 = vand.u32 %v1008, 4294901760
  %1624 = vmatmul.mubr.f32.gmra.mrb[0].mxu0 %v1623
  %v1625 = vpop.f32.mrb[0].mxu0
  %v1626 = vadd.f32 %v1545, %v1625
  %v1627 = vpop.f32.mrb[0].mxu0
  %1628 = vdwg.mxu0
  %1629 = vmatprep.subr.mxu0 0.0
  %v1630 = vand.u32 %v16, 4294901760
  %v1631 = vsub.f32 %v16, %v1630
  %1632 = vmatpush1.msra.mxu0 %v1631
  %1633 = vmatprep.subr.mxu0 0.0
  %v1634 = vand.u32 %v17, 4294901760
  %v1635 = vsub.f32 %v17, %v1634
  %1636 = vmatpush1.msra.mxu0 %v1635
  %1637 = vmatprep.subr.mxu0 0.0
  %1638 = vmatpush1.msra.mxu0 0.0
  %1639 = vmatprep.subr.mxu0 0.0
  %1640 = vmatpush1.msra.mxu0 0.0
  %1641 = vmatprep.subr.mxu0 0.0
  %1642 = vmatpush1.msra.mxu0 0.0
  %1643 = vmatprep.subr.mxu0 0.0
  %1644 = vmatpush1.msra.mxu0 0.0
  %1645 = vmatprep.subr.mxu0 0.0
  %1646 = vmatpush1.msra.mxu0 0.0
  %1647 = vmatprep.subr.mxu0 0.0
  %1648 = vmatpush1.msra.mxu0 0.0
  %1649 = vmatprep.subr.mxu0 0.0
  %1650 = vmatpush1.msra.mxu0 0.0
  %1651 = vmatprep.subr.mxu0 0.0
  %1652 = vmatpush1.msra.mxu0 0.0
  %1653 = vmatprep.subr.mxu0 0.0
  %1654 = vmatpush1.msra.mxu0 0.0
  %1655 = vmatprep.subr.mxu0 0.0
  %1656 = vmatpush1.msra.mxu0 0.0
  %1657 = vmatprep.subr.mxu0 0.0
  %1658 = vmatpush1.msra.mxu0 0.0
  %1659 = vmatprep.subr.mxu0 0.0
  %1660 = vmatpush1.msra.mxu0 0.0
  %1661 = vmatprep.subr.mxu0 0.0
  %1662 = vmatpush1.msra.mxu0 0.0
  %1663 = vmatprep.subr.mxu0 0.0
  %1664 = vmatpush1.msra.mxu0 0.0
  %1665 = vmatprep.subr.mxu0 0.0
  %1666 = vmatpush1.msra.mxu0 0.0
  %1667 = vmatprep.subr.mxu0 0.0
  %1668 = vmatpush1.msra.mxu0 0.0
  %1669 = vmatprep.subr.mxu0 0.0
  %1670 = vmatpush1.msra.mxu0 0.0
  %1671 = vmatprep.subr.mxu0 0.0
  %1672 = vmatpush1.msra.mxu0 0.0
  %1673 = vmatprep.subr.mxu0 0.0
  %1674 = vmatpush1.msra.mxu0 0.0
  %1675 = vmatprep.subr.mxu0 0.0
  %1676 = vmatpush1.msra.mxu0 0.0
  %1677 = vmatprep.subr.mxu0 0.0
  %1678 = vmatpush1.msra.mxu0 0.0
  %1679 = vmatprep.subr.mxu0 0.0
  %1680 = vmatpush1.msra.mxu0 0.0
  %1681 = vmatprep.subr.mxu0 0.0
  %1682 = vmatpush1.msra.mxu0 0.0
  %1683 = vmatprep.subr.mxu0 0.0
  %1684 = vmatpush1.msra.mxu0 0.0
  %1685 = vmatprep.subr.mxu0 0.0
  %1686 = vmatpush1.msra.mxu0 0.0
  %1687 = vmatprep.subr.mxu0 0.0
  %1688 = vmatpush1.msra.mxu0 0.0
  %1689 = vmatprep.subr.mxu0 0.0
  %1690 = vmatpush1.msra.mxu0 0.0
  %1691 = vmatprep.subr.mxu0 0.0
  %1692 = vmatpush1.msra.mxu0 0.0
  %1693 = vmatprep.subr.mxu0 0.0
  %1694 = vmatpush1.msra.mxu0 0.0
  %1695 = vmatprep.subr.mxu0 0.0
  %1696 = vmatpush1.msra.mxu0 0.0
  %1697 = vmatprep.mubr.f32.mxu0 0.0
  %v1698 = vand.u32 %v1008, 4294901760
  %v1699 = vsub.f32 %v1008, %v1698
  %1700 = vmatmul.mubr.f32.gmra.mrb[0].mxu0 %v1699
  %v1701 = vpop.f32.mrb[0].mxu0
  %v1702 = vadd.f32 %v1626, %v1701
  %v1703 = vpop.f32.mrb[0].mxu0
  %1704 = vdwg.mxu0
  %1705 = vmatprep.subr.mxu0 0.0
  %v1706 = vand.u32 %v16, 4294901760
  %1707 = vmatpush1.msra.mxu0 %v1706
  %1708 = vmatprep.subr.mxu0 0.0
  %v1709 = vand.u32 %v17, 4294901760
  %1710 = vmatpush1.msra.mxu0 %v1709
  %1711 = vmatprep.subr.mxu0 0.0
  %1712 = vmatpush1.msra.mxu0 0.0
  %1713 = vmatprep.subr.mxu0 0.0
  %1714 = vmatpush1.msra.mxu0 0.0
  %1715 = vmatprep.subr.mxu0 0.0
  %1716 = vmatpush1.msra.mxu0 0.0
  %1717 = vmatprep.subr.mxu0 0.0
  %1718 = vmatpush1.msra.mxu0 0.0
  %1719 = vmatprep.subr.mxu0 0.0
  %1720 = vmatpush1.msra.mxu0 0.0
  %1721 = vmatprep.subr.mxu0 0.0
  %1722 = vmatpush1.msra.mxu0 0.0
  %1723 = vmatprep.subr.mxu0 0.0
  %1724 = vmatpush1.msra.mxu0 0.0
  %1725 = vmatprep.subr.mxu0 0.0
  %1726 = vmatpush1.msra.mxu0 0.0
  %1727 = vmatprep.subr.mxu0 0.0
  %1728 = vmatpush1.msra.mxu0 0.0
  %1729 = vmatprep.subr.mxu0 0.0
  %1730 = vmatpush1.msra.mxu0 0.0
  %1731 = vmatprep.subr.mxu0 0.0
  %1732 = vmatpush1.msra.mxu0 0.0
  %1733 = vmatprep.subr.mxu0 0.0
  %1734 = vmatpush1.msra.mxu0 0.0
  %1735 = vmatprep.subr.mxu0 0.0
  %1736 = vmatpush1.msra.mxu0 0.0
  %1737 = vmatprep.subr.mxu0 0.0
  %1738 = vmatpush1.msra.mxu0 0.0
  %1739 = vmatprep.subr.mxu0 0.0
  %1740 = vmatpush1.msra.mxu0 0.0
  %1741 = vmatprep.subr.mxu0 0.0
  %1742 = vmatpush1.msra.mxu0 0.0
  %1743 = vmatprep.subr.mxu0 0.0
  %1744 = vmatpush1.msra.mxu0 0.0
  %1745 = vmatprep.subr.mxu0 0.0
  %1746 = vmatpush1.msra.mxu0 0.0
  %1747 = vmatprep.subr.mxu0 0.0
  %1748 = vmatpush1.msra.mxu0 0.0
  %1749 = vmatprep.subr.mxu0 0.0
  %1750 = vmatpush1.msra.mxu0 0.0
  %1751 = vmatprep.subr.mxu0 0.0
  %1752 = vmatpush1.msra.mxu0 0.0
  %1753 = vmatprep.subr.mxu0 0.0
  %1754 = vmatpush1.msra.mxu0 0.0
  %1755 = vmatprep.subr.mxu0 0.0
  %1756 = vmatpush1.msra.mxu0 0.0
  %1757 = vmatprep.subr.mxu0 0.0
  %1758 = vmatpush1.msra.mxu0 0.0
  %1759 = vmatprep.subr.mxu0 0.0
  %1760 = vmatpush1.msra.mxu0 0.0
  %1761 = vmatprep.subr.mxu0 0.0
  %1762 = vmatpush1.msra.mxu0 0.0
  %1763 = vmatprep.subr.mxu0 0.0
  %1764 = vmatpush1.msra.mxu0 0.0
  %1765 = vmatprep.subr.mxu0 0.0
  %1766 = vmatpush1.msra.mxu0 0.0
  %1767 = vmatprep.subr.mxu0 0.0
  %1768 = vmatpush1.msra.mxu0 0.0
  %1769 = vmatprep.subr.mxu0 0.0
  %1770 = vmatpush1.msra.mxu0 0.0
  %1771 = vmatprep.mubr.f32.mxu0 0.0
  %v1772 = vand.u32 %v1008, 4294901760
  %v1773 = vsub.f32 %v1008, %v1772
  %v1774 = vand.u32 %v1773, 4294901760
  %1775 = vmatmul.mubr.f32.gmra.mrb[0].mxu0 %v1774
  %v1776 = vpop.f32.mrb[0].mxu0
  %v1777 = vadd.f32 %v1702, %v1776
  %v1778 = vpop.f32.mrb[0].mxu0
  %1779 = vdwg.mxu0
  %1780 = vmatprep.subr.mxu0 0.0
  %v1781 = vand.u32 %v16, 4294901760
  %v1782 = vsub.f32 %v16, %v1781
  %v1783 = vand.u32 %v1782, 4294901760
  %1784 = vmatpush1.msra.mxu0 %v1783
  %1785 = vmatprep.subr.mxu0 0.0
  %v1786 = vand.u32 %v17, 4294901760
  %v1787 = vsub.f32 %v17, %v1786
  %v1788 = vand.u32 %v1787, 4294901760
  %1789 = vmatpush1.msra.mxu0 %v1788
  %1790 = vmatprep.subr.mxu0 0.0
  %1791 = vmatpush1.msra.mxu0 0.0
  %1792 = vmatprep.subr.mxu0 0.0
  %1793 = vmatpush1.msra.mxu0 0.0
  %1794 = vmatprep.subr.mxu0 0.0
  %1795 = vmatpush1.msra.mxu0 0.0
  %1796 = vmatprep.subr.mxu0 0.0
  %1797 = vmatpush1.msra.mxu0 0.0
  %1798 = vmatprep.subr.mxu0 0.0
  %1799 = vmatpush1.msra.mxu0 0.0
  %1800 = vmatprep.subr.mxu0 0.0
  %1801 = vmatpush1.msra.mxu0 0.0
  %1802 = vmatprep.subr.mxu0 0.0
  %1803 = vmatpush1.msra.mxu0 0.0
  %1804 = vmatprep.subr.mxu0 0.0
  %1805 = vmatpush1.msra.mxu0 0.0
  %1806 = vmatprep.subr.mxu0 0.0
  %1807 = vmatpush1.msra.mxu0 0.0
  %1808 = vmatprep.subr.mxu0 0.0
  %1809 = vmatpush1.msra.mxu0 0.0
  %1810 = vmatprep.subr.mxu0 0.0
  %1811 = vmatpush1.msra.mxu0 0.0
  %1812 = vmatprep.subr.mxu0 0.0
  %1813 = vmatpush1.msra.mxu0 0.0
  %1814 = vmatprep.subr.mxu0 0.0
  %1815 = vmatpush1.msra.mxu0 0.0
  %1816 = vmatprep.subr.mxu0 0.0
  %1817 = vmatpush1.msra.mxu0 0.0
  %1818 = vmatprep.subr.mxu0 0.0
  %1819 = vmatpush1.msra.mxu0 0.0
  %1820 = vmatprep.subr.mxu0 0.0
  %1821 = vmatpush1.msra.mxu0 0.0
  %1822 = vmatprep.subr.mxu0 0.0
  %1823 = vmatpush1.msra.mxu0 0.0
  %1824 = vmatprep.subr.mxu0 0.0
  %1825 = vmatpush1.msra.mxu0 0.0
  %1826 = vmatprep.subr.mxu0 0.0
  %1827 = vmatpush1.msra.mxu0 0.0
  %1828 = vmatprep.subr.mxu0 0.0
  %1829 = vmatpush1.msra.mxu0 0.0
  %1830 = vmatprep.subr.mxu0 0.0
  %1831 = vmatpush1.msra.mxu0 0.0
  %1832 = vmatprep.subr.mxu0 0.0
  %1833 = vmatpush1.msra.mxu0 0.0
  %1834 = vmatprep.subr.mxu0 0.0
  %1835 = vmatpush1.msra.mxu0 0.0
  %1836 = vmatprep.subr.mxu0 0.0
  %1837 = vmatpush1.msra.mxu0 0.0
  %1838 = vmatprep.subr.mxu0 0.0
  %1839 = vmatpush1.msra.mxu0 0.0
  %1840 = vmatprep.subr.mxu0 0.0
  %1841 = vmatpush1.msra.mxu0 0.0
  %1842 = vmatprep.subr.mxu0 0.0
  %1843 = vmatpush1.msra.mxu0 0.0
  %1844 = vmatprep.subr.mxu0 0.0
  %1845 = vmatpush1.msra.mxu0 0.0
  %1846 = vmatprep.subr.mxu0 0.0
  %1847 = vmatpush1.msra.mxu0 0.0
  %1848 = vmatprep.subr.mxu0 0.0
  %1849 = vmatpush1.msra.mxu0 0.0
  %1850 = vmatprep.mubr.f32.mxu0 0.0
  %v1851 = vand.u32 %v1008, 4294901760
  %1852 = vmatmul.mubr.f32.gmra.mrb[0].mxu0 %v1851
  %v1853 = vpop.f32.mrb[0].mxu0
  %v1854 = vadd.f32 %v1777, %v1853
  %v1855 = vpop.f32.mrb[0].mxu0
  %1856 = vdwg.mxu0
  %1857 = vmatprep.subr.mxu0 0.0
  %v1858 = vand.u32 %v16, 4294901760
  %1859 = vmatpush1.msra.mxu0 %v1858
  %1860 = vmatprep.subr.mxu0 0.0
  %v1861 = vand.u32 %v17, 4294901760
  %1862 = vmatpush1.msra.mxu0 %v1861
  %1863 = vmatprep.subr.mxu0 0.0
  %1864 = vmatpush1.msra.mxu0 0.0
  %1865 = vmatprep.subr.mxu0 0.0
  %1866 = vmatpush1.msra.mxu0 0.0
  %1867 = vmatprep.subr.mxu0 0.0
  %1868 = vmatpush1.msra.mxu0 0.0
  %1869 = vmatprep.subr.mxu0 0.0
  %1870 = vmatpush1.msra.mxu0 0.0
  %1871 = vmatprep.subr.mxu0 0.0
  %1872 = vmatpush1.msra.mxu0 0.0
  %1873 = vmatprep.subr.mxu0 0.0
  %1874 = vmatpush1.msra.mxu0 0.0
  %1875 = vmatprep.subr.mxu0 0.0
  %1876 = vmatpush1.msra.mxu0 0.0
  %1877 = vmatprep.subr.mxu0 0.0
  %1878 = vmatpush1.msra.mxu0 0.0
  %1879 = vmatprep.subr.mxu0 0.0
  %1880 = vmatpush1.msra.mxu0 0.0
  %1881 = vmatprep.subr.mxu0 0.0
  %1882 = vmatpush1.msra.mxu0 0.0
  %1883 = vmatprep.subr.mxu0 0.0
  %1884 = vmatpush1.msra.mxu0 0.0
  %1885 = vmatprep.subr.mxu0 0.0
  %1886 = vmatpush1.msra.mxu0 0.0
  %1887 = vmatprep.subr.mxu0 0.0
  %1888 = vmatpush1.msra.mxu0 0.0
  %1889 = vmatprep.subr.mxu0 0.0
  %1890 = vmatpush1.msra.mxu0 0.0
  %1891 = vmatprep.subr.mxu0 0.0
  %1892 = vmatpush1.msra.mxu0 0.0
  %1893 = vmatprep.subr.mxu0 0.0
  %1894 = vmatpush1.msra.mxu0 0.0
  %1895 = vmatprep.subr.mxu0 0.0
  %1896 = vmatpush1.msra.mxu0 0.0
  %1897 = vmatprep.subr.mxu0 0.0
  %1898 = vmatpush1.msra.mxu0 0.0
  %1899 = vmatprep.subr.mxu0 0.0
  %1900 = vmatpush1.msra.mxu0 0.0
  %1901 = vmatprep.subr.mxu0 0.0
  %1902 = vmatpush1.msra.mxu0 0.0
  %1903 = vmatprep.subr.mxu0 0.0
  %1904 = vmatpush1.msra.mxu0 0.0
  %1905 = vmatprep.subr.mxu0 0.0
  %1906 = vmatpush1.msra.mxu0 0.0
  %1907 = vmatprep.subr.mxu0 0.0
  %1908 = vmatpush1.msra.mxu0 0.0
  %1909 = vmatprep.subr.mxu0 0.0
  %1910 = vmatpush1.msra.mxu0 0.0
  %1911 = vmatprep.subr.mxu0 0.0
  %1912 = vmatpush1.msra.mxu0 0.0
  %1913 = vmatprep.subr.mxu0 0.0
  %1914 = vmatpush1.msra.mxu0 0.0
  %1915 = vmatprep.subr.mxu0 0.0
  %1916 = vmatpush1.msra.mxu0 0.0
  %1917 = vmatprep.subr.mxu0 0.0
  %1918 = vmatpush1.msra.mxu0 0.0
  %1919 = vmatprep.subr.mxu0 0.0
  %1920 = vmatpush1.msra.mxu0 0.0
  %1921 = vmatprep.subr.mxu0 0.0
  %1922 = vmatpush1.msra.mxu0 0.0
  %1923 = vmatprep.mubr.f32.mxu0 0.0
  %v1924 = vand.u32 %v1008, 4294901760
  %1925 = vmatmul.mubr.f32.gmra.mrb[0].mxu0 %v1924
  %v1926 = vpop.f32.mrb[0].mxu0
  %v1927 = vadd.f32 %v1854, %v1926
  %v1928 = vpop.f32.mrb[0].mxu0
  %1929 = vdwg.mxu0
  %s1930 = scalar_lea.vmem [#allocation3], 8
  %1931 = vst.msk [vmem:[%s1930] sm:$0xff] %vm55, %v1927
  %v1932 = vld [vmem:[%s0 + $0x2] sm:$0x1]
  %v1933 = vld [vmem:[%s0 + $0x6] sm:$0x1]
  %v1934 = vld [vmem:[%s0 + $0xa] sm:$0x1]
  %v1935 = vld [vmem:[%s0 + $0xe] sm:$0x1]
  %v1936 = vld [vmem:[%s0 + $0x12] sm:$0x1]
  %v1937 = vld [vmem:[%s0 + $0x16] sm:$0x1]
  %v1938 = vld [vmem:[%s0 + $0x1a] sm:$0x1]
  %v1939 = vld [vmem:[%s0 + $0x1e] sm:$0x1]
  %v1948 = vrot.slane %v1933, 7
  %v1949 = vsel %vm35, %v1948, %v1932
  %v1950 = vrot.slane %v1934, 6
  %v1951 = vsel %vm38, %v1950, %v1949
  %v1952 = vrot.slane %v1935, 5
  %v1953 = vsel %vm41, %v1952, %v1951
  %v1954 = vrot.slane %v1936, 4
  %v1955 = vsel %vm44, %v1954, %v1953
  %v1956 = vrot.slane %v1937, 3
  %v1957 = vsel %vm47, %v1956, %v1955
  %v1958 = vrot.slane %v1938, 2
  %v1959 = vsel %vm50, %v1958, %v1957
  %v1960 = vrot.slane %v1939, 1
  %v1961 = vsel %vm53, %v1960, %v1959
  %v1962 = vsel %vm55, %v1961, 0
  %1964 = vmatprep.subr.mxu0 0.0
  %v1965 = vand.u32 %v14, 4294901760
  %1966 = vmatpush1.msra.mxu0 %v1965
  %1967 = vmatprep.subr.mxu0 0.0
  %v1968 = vand.u32 %v15, 4294901760
  %1969 = vmatpush1.msra.mxu0 %v1968
  %1970 = vmatprep.subr.mxu0 0.0
  %1971 = vmatpush1.msra.mxu0 0.0
  %1972 = vmatprep.subr.mxu0 0.0
  %1973 = vmatpush1.msra.mxu0 0.0
  %1974 = vmatprep.subr.mxu0 0.0
  %1975 = vmatpush1.msra.mxu0 0.0
  %1976 = vmatprep.subr.mxu0 0.0
  %1977 = vmatpush1.msra.mxu0 0.0
  %1978 = vmatprep.subr.mxu0 0.0
  %1979 = vmatpush1.msra.mxu0 0.0
  %1980 = vmatprep.subr.mxu0 0.0
  %1981 = vmatpush1.msra.mxu0 0.0
  %1982 = vmatprep.subr.mxu0 0.0
  %1983 = vmatpush1.msra.mxu0 0.0
  %1984 = vmatprep.subr.mxu0 0.0
  %1985 = vmatpush1.msra.mxu0 0.0
  %1986 = vmatprep.subr.mxu0 0.0
  %1987 = vmatpush1.msra.mxu0 0.0
  %1988 = vmatprep.subr.mxu0 0.0
  %1989 = vmatpush1.msra.mxu0 0.0
  %1990 = vmatprep.subr.mxu0 0.0
  %1991 = vmatpush1.msra.mxu0 0.0
  %1992 = vmatprep.subr.mxu0 0.0
  %1993 = vmatpush1.msra.mxu0 0.0
  %1994 = vmatprep.subr.mxu0 0.0
  %1995 = vmatpush1.msra.mxu0 0.0
  %1996 = vmatprep.subr.mxu0 0.0
  %1997 = vmatpush1.msra.mxu0 0.0
  %1998 = vmatprep.subr.mxu0 0.0
  %1999 = vmatpush1.msra.mxu0 0.0
  %2000 = vmatprep.subr.mxu0 0.0
  %2001 = vmatpush1.msra.mxu0 0.0
  %2002 = vmatprep.subr.mxu0 0.0
  %2003 = vmatpush1.msra.mxu0 0.0
  %2004 = vmatprep.subr.mxu0 0.0
  %2005 = vmatpush1.msra.mxu0 0.0
  %2006 = vmatprep.subr.mxu0 0.0
  %2007 = vmatpush1.msra.mxu0 0.0
  %2008 = vmatprep.subr.mxu0 0.0
  %2009 = vmatpush1.msra.mxu0 0.0
  %2010 = vmatprep.subr.mxu0 0.0
  %2011 = vmatpush1.msra.mxu0 0.0
  %2012 = vmatprep.subr.mxu0 0.0
  %2013 = vmatpush1.msra.mxu0 0.0
  %2014 = vmatprep.subr.mxu0 0.0
  %2015 = vmatpush1.msra.mxu0 0.0
  %2016 = vmatprep.subr.mxu0 0.0
  %2017 = vmatpush1.msra.mxu0 0.0
  %2018 = vmatprep.subr.mxu0 0.0
  %2019 = vmatpush1.msra.mxu0 0.0
  %2020 = vmatprep.subr.mxu0 0.0
  %2021 = vmatpush1.msra.mxu0 0.0
  %2022 = vmatprep.subr.mxu0 0.0
  %2023 = vmatpush1.msra.mxu0 0.0
  %2024 = vmatprep.subr.mxu0 0.0
  %2025 = vmatpush1.msra.mxu0 0.0
  %2026 = vmatprep.subr.mxu0 0.0
  %2027 = vmatpush1.msra.mxu0 0.0
  %2028 = vmatprep.subr.mxu0 0.0
  %2029 = vmatpush1.msra.mxu0 0.0
  %2030 = vmatprep.mubr.f32.mxu0 0.0
  %v2031 = vand.u32 %v1962, 4294901760
  %v2032 = vsub.f32 %v1962, %v2031
  %v2033 = vand.u32 %v2032, 4294901760
  %v2034 = vsub.f32 %v2032, %v2033
  %v2035 = vand.u32 %v2034, 4294901760
  %2036 = vmatmul.mubr.f32.gmra.mrb[0].mxu0 %v2035
  %v2037 = vpop.f32.mrb[0].mxu0
  %v2038 = vadd.f32 0.0, %v2037
  %v2039 = vpop.f32.mrb[0].mxu0
  %2040 = vdwg.mxu0
  %2041 = vmatprep.subr.mxu0 0.0
  %v2042 = vand.u32 %v14, 4294901760
  %v2043 = vsub.f32 %v14, %v2042
  %v2044 = vand.u32 %v2043, 4294901760
  %v2045 = vsub.f32 %v2043, %v2044
  %v2046 = vand.u32 %v2045, 4294901760
  %2047 = vmatpush1.msra.mxu0 %v2046
  %2048 = vmatprep.subr.mxu0 0.0
  %v2049 = vand.u32 %v15, 4294901760
  %v2050 = vsub.f32 %v15, %v2049
  %v2051 = vand.u32 %v2050, 4294901760
  %v2052 = vsub.f32 %v2050, %v2051
  %v2053 = vand.u32 %v2052, 4294901760
  %2054 = vmatpush1.msra.mxu0 %v2053
  %2055 = vmatprep.subr.mxu0 0.0
  %2056 = vmatpush1.msra.mxu0 0.0
  %2057 = vmatprep.subr.mxu0 0.0
  %2058 = vmatpush1.msra.mxu0 0.0
  %2059 = vmatprep.subr.mxu0 0.0
  %2060 = vmatpush1.msra.mxu0 0.0
  %2061 = vmatprep.subr.mxu0 0.0
  %2062 = vmatpush1.msra.mxu0 0.0
  %2063 = vmatprep.subr.mxu0 0.0
  %2064 = vmatpush1.msra.mxu0 0.0
  %2065 = vmatprep.subr.mxu0 0.0
  %2066 = vmatpush1.msra.mxu0 0.0
  %2067 = vmatprep.subr.mxu0 0.0
  %2068 = vmatpush1.msra.mxu0 0.0
  %2069 = vmatprep.subr.mxu0 0.0
  %2070 = vmatpush1.msra.mxu0 0.0
  %2071 = vmatprep.subr.mxu0 0.0
  %2072 = vmatpush1.msra.mxu0 0.0
  %2073 = vmatprep.subr.mxu0 0.0
  %2074 = vmatpush1.msra.mxu0 0.0
  %2075 = vmatprep.subr.mxu0 0.0
  %2076 = vmatpush1.msra.mxu0 0.0
  %2077 = vmatprep.subr.mxu0 0.0
  %2078 = vmatpush1.msra.mxu0 0.0
  %2079 = vmatprep.subr.mxu0 0.0
  %2080 = vmatpush1.msra.mxu0 0.0
  %2081 = vmatprep.subr.mxu0 0.0
  %2082 = vmatpush1.msra.mxu0 0.0
  %2083 = vmatprep.subr.mxu0 0.0
  %2084 = vmatpush1.msra.mxu0 0.0
  %2085 = vmatprep.subr.mxu0 0.0
  %2086 = vmatpush1.msra.mxu0 0.0
  %2087 = vmatprep.subr.mxu0 0.0
  %2088 = vmatpush1.msra.mxu0 0.0
  %2089 = vmatprep.subr.mxu0 0.0
  %2090 = vmatpush1.msra.mxu0 0.0
  %2091 = vmatprep.subr.mxu0 0.0
  %2092 = vmatpush1.msra.mxu0 0.0
  %2093 = vmatprep.subr.mxu0 0.0
  %2094 = vmatpush1.msra.mxu0 0.0
  %2095 = vmatprep.subr.mxu0 0.0
  %2096 = vmatpush1.msra.mxu0 0.0
  %2097 = vmatprep.subr.mxu0 0.0
  %2098 = vmatpush1.msra.mxu0 0.0
  %2099 = vmatprep.subr.mxu0 0.0
  %2100 = vmatpush1.msra.mxu0 0.0
  %2101 = vmatprep.subr.mxu0 0.0
  %2102 = vmatpush1.msra.mxu0 0.0
  %2103 = vmatprep.subr.mxu0 0.0
  %2104 = vmatpush1.msra.mxu0 0.0
  %2105 = vmatprep.subr.mxu0 0.0
  %2106 = vmatpush1.msra.mxu0 0.0
  %2107 = vmatprep.subr.mxu0 0.0
  %2108 = vmatpush1.msra.mxu0 0.0
  %2109 = vmatprep.subr.mxu0 0.0
  %2110 = vmatpush1.msra.mxu0 0.0
  %2111 = vmatprep.subr.mxu0 0.0
  %2112 = vmatpush1.msra.mxu0 0.0
  %2113 = vmatprep.subr.mxu0 0.0
  %2114 = vmatpush1.msra.mxu0 0.0
  %2115 = vmatprep.mubr.f32.mxu0 0.0
  %v2116 = vand.u32 %v1962, 4294901760
  %2117 = vmatmul.mubr.f32.gmra.mrb[0].mxu0 %v2116
  %v2118 = vpop.f32.mrb[0].mxu0
  %v2119 = vadd.f32 %v2038, %v2118
  %v2120 = vpop.f32.mrb[0].mxu0
  %2121 = vdwg.mxu0
  %2122 = vmatprep.subr.mxu0 0.0
  %v2123 = vand.u32 %v14, 4294901760
  %v2124 = vsub.f32 %v14, %v2123
  %2125 = vmatpush1.msra.mxu0 %v2124
  %2126 = vmatprep.subr.mxu0 0.0
  %v2127 = vand.u32 %v15, 4294901760
  %v2128 = vsub.f32 %v15, %v2127
  %2129 = vmatpush1.msra.mxu0 %v2128
  %2130 = vmatprep.subr.mxu0 0.0
  %2131 = vmatpush1.msra.mxu0 0.0
  %2132 = vmatprep.subr.mxu0 0.0
  %2133 = vmatpush1.msra.mxu0 0.0
  %2134 = vmatprep.subr.mxu0 0.0
  %2135 = vmatpush1.msra.mxu0 0.0
  %2136 = vmatprep.subr.mxu0 0.0
  %2137 = vmatpush1.msra.mxu0 0.0
  %2138 = vmatprep.subr.mxu0 0.0
  %2139 = vmatpush1.msra.mxu0 0.0
  %2140 = vmatprep.subr.mxu0 0.0
  %2141 = vmatpush1.msra.mxu0 0.0
  %2142 = vmatprep.subr.mxu0 0.0
  %2143 = vmatpush1.msra.mxu0 0.0
  %2144 = vmatprep.subr.mxu0 0.0
  %2145 = vmatpush1.msra.mxu0 0.0
  %2146 = vmatprep.subr.mxu0 0.0
  %2147 = vmatpush1.msra.mxu0 0.0
  %2148 = vmatprep.subr.mxu0 0.0
  %2149 = vmatpush1.msra.mxu0 0.0
  %2150 = vmatprep.subr.mxu0 0.0
  %2151 = vmatpush1.msra.mxu0 0.0
  %2152 = vmatprep.subr.mxu0 0.0
  %2153 = vmatpush1.msra.mxu0 0.0
  %2154 = vmatprep.subr.mxu0 0.0
  %2155 = vmatpush1.msra.mxu0 0.0
  %2156 = vmatprep.subr.mxu0 0.0
  %2157 = vmatpush1.msra.mxu0 0.0
  %2158 = vmatprep.subr.mxu0 0.0
  %2159 = vmatpush1.msra.mxu0 0.0
  %2160 = vmatprep.subr.mxu0 0.0
  %2161 = vmatpush1.msra.mxu0 0.0
  %2162 = vmatprep.subr.mxu0 0.0
  %2163 = vmatpush1.msra.mxu0 0.0
  %2164 = vmatprep.subr.mxu0 0.0
  %2165 = vmatpush1.msra.mxu0 0.0
  %2166 = vmatprep.subr.mxu0 0.0
  %2167 = vmatpush1.msra.mxu0 0.0
  %2168 = vmatprep.subr.mxu0 0.0
  %2169 = vmatpush1.msra.mxu0 0.0
  %2170 = vmatprep.subr.mxu0 0.0
  %2171 = vmatpush1.msra.mxu0 0.0
  %2172 = vmatprep.subr.mxu0 0.0
  %2173 = vmatpush1.msra.mxu0 0.0
  %2174 = vmatprep.subr.mxu0 0.0
  %2175 = vmatpush1.msra.mxu0 0.0
  %2176 = vmatprep.subr.mxu0 0.0
  %2177 = vmatpush1.msra.mxu0 0.0
  %2178 = vmatprep.subr.mxu0 0.0
  %2179 = vmatpush1.msra.mxu0 0.0
  %2180 = vmatprep.subr.mxu0 0.0
  %2181 = vmatpush1.msra.mxu0 0.0
  %2182 = vmatprep.subr.mxu0 0.0
  %2183 = vmatpush1.msra.mxu0 0.0
  %2184 = vmatprep.subr.mxu0 0.0
  %2185 = vmatpush1.msra.mxu0 0.0
  %2186 = vmatprep.subr.mxu0 0.0
  %2187 = vmatpush1.msra.mxu0 0.0
  %2188 = vmatprep.subr.mxu0 0.0
  %2189 = vmatpush1.msra.mxu0 0.0
  %2190 = vmatprep.mubr.f32.mxu0 0.0
  %v2191 = vand.u32 %v1962, 4294901760
  %v2192 = vsub.f32 %v1962, %v2191
  %2193 = vmatmul.mubr.f32.gmra.mrb[0].mxu0 %v2192
  %v2194 = vpop.f32.mrb[0].mxu0
  %v2195 = vadd.f32 %v2119, %v2194
  %v2196 = vpop.f32.mrb[0].mxu0
  %2197 = vdwg.mxu0
  %2198 = vmatprep.subr.mxu0 0.0
  %v2199 = vand.u32 %v14, 4294901760
  %2200 = vmatpush1.msra.mxu0 %v2199
  %2201 = vmatprep.subr.mxu0 0.0
  %v2202 = vand.u32 %v15, 4294901760
  %2203 = vmatpush1.msra.mxu0 %v2202
  %2204 = vmatprep.subr.mxu0 0.0
  %2205 = vmatpush1.msra.mxu0 0.0
  %2206 = vmatprep.subr.mxu0 0.0
  %2207 = vmatpush1.msra.mxu0 0.0
  %2208 = vmatprep.subr.mxu0 0.0
  %2209 = vmatpush1.msra.mxu0 0.0
  %2210 = vmatprep.subr.mxu0 0.0
  %2211 = vmatpush1.msra.mxu0 0.0
  %2212 = vmatprep.subr.mxu0 0.0
  %2213 = vmatpush1.msra.mxu0 0.0
  %2214 = vmatprep.subr.mxu0 0.0
  %2215 = vmatpush1.msra.mxu0 0.0
  %2216 = vmatprep.subr.mxu0 0.0
  %2217 = vmatpush1.msra.mxu0 0.0
  %2218 = vmatprep.subr.mxu0 0.0
  %2219 = vmatpush1.msra.mxu0 0.0
  %2220 = vmatprep.subr.mxu0 0.0
  %2221 = vmatpush1.msra.mxu0 0.0
  %2222 = vmatprep.subr.mxu0 0.0
  %2223 = vmatpush1.msra.mxu0 0.0
  %2224 = vmatprep.subr.mxu0 0.0
  %2225 = vmatpush1.msra.mxu0 0.0
  %2226 = vmatprep.subr.mxu0 0.0
  %2227 = vmatpush1.msra.mxu0 0.0
  %2228 = vmatprep.subr.mxu0 0.0
  %2229 = vmatpush1.msra.mxu0 0.0
  %2230 = vmatprep.subr.mxu0 0.0
  %2231 = vmatpush1.msra.mxu0 0.0
  %2232 = vmatprep.subr.mxu0 0.0
  %2233 = vmatpush1.msra.mxu0 0.0
  %2234 = vmatprep.subr.mxu0 0.0
  %2235 = vmatpush1.msra.mxu0 0.0
  %2236 = vmatprep.subr.mxu0 0.0
  %2237 = vmatpush1.msra.mxu0 0.0
  %2238 = vmatprep.subr.mxu0 0.0
  %2239 = vmatpush1.msra.mxu0 0.0
  %2240 = vmatprep.subr.mxu0 0.0
  %2241 = vmatpush1.msra.mxu0 0.0
  %2242 = vmatprep.subr.mxu0 0.0
  %2243 = vmatpush1.msra.mxu0 0.0
  %2244 = vmatprep.subr.mxu0 0.0
  %2245 = vmatpush1.msra.mxu0 0.0
  %2246 = vmatprep.subr.mxu0 0.0
  %2247 = vmatpush1.msra.mxu0 0.0
  %2248 = vmatprep.subr.mxu0 0.0
  %2249 = vmatpush1.msra.mxu0 0.0
  %2250 = vmatprep.subr.mxu0 0.0
  %2251 = vmatpush1.msra.mxu0 0.0
  %2252 = vmatprep.subr.mxu0 0.0
  %2253 = vmatpush1.msra.mxu0 0.0
  %2254 = vmatprep.subr.mxu0 0.0
  %2255 = vmatpush1.msra.mxu0 0.0
  %2256 = vmatprep.subr.mxu0 0.0
  %2257 = vmatpush1.msra.mxu0 0.0
  %2258 = vmatprep.subr.mxu0 0.0
  %2259 = vmatpush1.msra.mxu0 0.0
  %2260 = vmatprep.subr.mxu0 0.0
  %2261 = vmatpush1.msra.mxu0 0.0
  %2262 = vmatprep.subr.mxu0 0.0
  %2263 = vmatpush1.msra.mxu0 0.0
  %2264 = vmatprep.mubr.f32.mxu0 0.0
  %v2265 = vand.u32 %v1962, 4294901760
  %v2266 = vsub.f32 %v1962, %v2265
  %v2267 = vand.u32 %v2266, 4294901760
  %2268 = vmatmul.mubr.f32.gmra.mrb[0].mxu0 %v2267
  %v2269 = vpop.f32.mrb[0].mxu0
  %v2270 = vadd.f32 %v2195, %v2269
  %v2271 = vpop.f32.mrb[0].mxu0
  %2272 = vdwg.mxu0
  %2273 = vmatprep.subr.mxu0 0.0
  %v2274 = vand.u32 %v14, 4294901760
  %v2275 = vsub.f32 %v14, %v2274
  %v2276 = vand.u32 %v2275, 4294901760
  %2277 = vmatpush1.msra.mxu0 %v2276
  %2278 = vmatprep.subr.mxu0 0.0
  %v2279 = vand.u32 %v15, 4294901760
  %v2280 = vsub.f32 %v15, %v2279
  %v2281 = vand.u32 %v2280, 4294901760
  %2282 = vmatpush1.msra.mxu0 %v2281
  %2283 = vmatprep.subr.mxu0 0.0
  %2284 = vmatpush1.msra.mxu0 0.0
  %2285 = vmatprep.subr.mxu0 0.0
  %2286 = vmatpush1.msra.mxu0 0.0
  %2287 = vmatprep.subr.mxu0 0.0
  %2288 = vmatpush1.msra.mxu0 0.0
  %2289 = vmatprep.subr.mxu0 0.0
  %2290 = vmatpush1.msra.mxu0 0.0
  %2291 = vmatprep.subr.mxu0 0.0
  %2292 = vmatpush1.msra.mxu0 0.0
  %2293 = vmatprep.subr.mxu0 0.0
  %2294 = vmatpush1.msra.mxu0 0.0
  %2295 = vmatprep.subr.mxu0 0.0
  %2296 = vmatpush1.msra.mxu0 0.0
  %2297 = vmatprep.subr.mxu0 0.0
  %2298 = vmatpush1.msra.mxu0 0.0
  %2299 = vmatprep.subr.mxu0 0.0
  %2300 = vmatpush1.msra.mxu0 0.0
  %2301 = vmatprep.subr.mxu0 0.0
  %2302 = vmatpush1.msra.mxu0 0.0
  %2303 = vmatprep.subr.mxu0 0.0
  %2304 = vmatpush1.msra.mxu0 0.0
  %2305 = vmatprep.subr.mxu0 0.0
  %2306 = vmatpush1.msra.mxu0 0.0
  %2307 = vmatprep.subr.mxu0 0.0
  %2308 = vmatpush1.msra.mxu0 0.0
  %2309 = vmatprep.subr.mxu0 0.0
  %2310 = vmatpush1.msra.mxu0 0.0
  %2311 = vmatprep.subr.mxu0 0.0
  %2312 = vmatpush1.msra.mxu0 0.0
  %2313 = vmatprep.subr.mxu0 0.0
  %2314 = vmatpush1.msra.mxu0 0.0
  %2315 = vmatprep.subr.mxu0 0.0
  %2316 = vmatpush1.msra.mxu0 0.0
  %2317 = vmatprep.subr.mxu0 0.0
  %2318 = vmatpush1.msra.mxu0 0.0
  %2319 = vmatprep.subr.mxu0 0.0
  %2320 = vmatpush1.msra.mxu0 0.0
  %2321 = vmatprep.subr.mxu0 0.0
  %2322 = vmatpush1.msra.mxu0 0.0
  %2323 = vmatprep.subr.mxu0 0.0
  %2324 = vmatpush1.msra.mxu0 0.0
  %2325 = vmatprep.subr.mxu0 0.0
  %2326 = vmatpush1.msra.mxu0 0.0
  %2327 = vmatprep.subr.mxu0 0.0
  %2328 = vmatpush1.msra.mxu0 0.0
  %2329 = vmatprep.subr.mxu0 0.0
  %2330 = vmatpush1.msra.mxu0 0.0
  %2331 = vmatprep.subr.mxu0 0.0
  %2332 = vmatpush1.msra.mxu0 0.0
  %2333 = vmatprep.subr.mxu0 0.0
  %2334 = vmatpush1.msra.mxu0 0.0
  %2335 = vmatprep.subr.mxu0 0.0
  %2336 = vmatpush1.msra.mxu0 0.0
  %2337 = vmatprep.subr.mxu0 0.0
  %2338 = vmatpush1.msra.mxu0 0.0
  %2339 = vmatprep.subr.mxu0 0.0
  %2340 = vmatpush1.msra.mxu0 0.0
  %2341 = vmatprep.subr.mxu0 0.0
  %2342 = vmatpush1.msra.mxu0 0.0
  %2343 = vmatprep.mubr.f32.mxu0 0.0
  %v2344 = vand.u32 %v1962, 4294901760
  %2345 = vmatmul.mubr.f32.gmra.mrb[0].mxu0 %v2344
  %v2346 = vpop.f32.mrb[0].mxu0
  %v2347 = vadd.f32 %v2270, %v2346
  %v2348 = vpop.f32.mrb[0].mxu0
  %2349 = vdwg.mxu0
  %2350 = vmatprep.subr.mxu0 0.0
  %v2351 = vand.u32 %v14, 4294901760
  %2352 = vmatpush1.msra.mxu0 %v2351
  %2353 = vmatprep.subr.mxu0 0.0
  %v2354 = vand.u32 %v15, 4294901760
  %2355 = vmatpush1.msra.mxu0 %v2354
  %2356 = vmatprep.subr.mxu0 0.0
  %2357 = vmatpush1.msra.mxu0 0.0
  %2358 = vmatprep.subr.mxu0 0.0
  %2359 = vmatpush1.msra.mxu0 0.0
  %2360 = vmatprep.subr.mxu0 0.0
  %2361 = vmatpush1.msra.mxu0 0.0
  %2362 = vmatprep.subr.mxu0 0.0
  %2363 = vmatpush1.msra.mxu0 0.0
  %2364 = vmatprep.subr.mxu0 0.0
  %2365 = vmatpush1.msra.mxu0 0.0
  %2366 = vmatprep.subr.mxu0 0.0
  %2367 = vmatpush1.msra.mxu0 0.0
  %2368 = vmatprep.subr.mxu0 0.0
  %2369 = vmatpush1.msra.mxu0 0.0
  %2370 = vmatprep.subr.mxu0 0.0
  %2371 = vmatpush1.msra.mxu0 0.0
  %2372 = vmatprep.subr.mxu0 0.0
  %2373 = vmatpush1.msra.mxu0 0.0
  %2374 = vmatprep.subr.mxu0 0.0
  %2375 = vmatpush1.msra.mxu0 0.0
  %2376 = vmatprep.subr.mxu0 0.0
  %2377 = vmatpush1.msra.mxu0 0.0
  %2378 = vmatprep.subr.mxu0 0.0
  %2379 = vmatpush1.msra.mxu0 0.0
  %2380 = vmatprep.subr.mxu0 0.0
  %2381 = vmatpush1.msra.mxu0 0.0
  %2382 = vmatprep.subr.mxu0 0.0
  %2383 = vmatpush1.msra.mxu0 0.0
  %2384 = vmatprep.subr.mxu0 0.0
  %2385 = vmatpush1.msra.mxu0 0.0
  %2386 = vmatprep.subr.mxu0 0.0
  %2387 = vmatpush1.msra.mxu0 0.0
  %2388 = vmatprep.subr.mxu0 0.0
  %2389 = vmatpush1.msra.mxu0 0.0
  %2390 = vmatprep.subr.mxu0 0.0
  %2391 = vmatpush1.msra.mxu0 0.0
  %2392 = vmatprep.subr.mxu0 0.0
  %2393 = vmatpush1.msra.mxu0 0.0
  %2394 = vmatprep.subr.mxu0 0.0
  %2395 = vmatpush1.msra.mxu0 0.0
  %2396 = vmatprep.subr.mxu0 0.0
  %2397 = vmatpush1.msra.mxu0 0.0
  %2398 = vmatprep.subr.mxu0 0.0
  %2399 = vmatpush1.msra.mxu0 0.0
  %2400 = vmatprep.subr.mxu0 0.0
  %2401 = vmatpush1.msra.mxu0 0.0
  %2402 = vmatprep.subr.mxu0 0.0
  %2403 = vmatpush1.msra.mxu0 0.0
  %2404 = vmatprep.subr.mxu0 0.0
  %2405 = vmatpush1.msra.mxu0 0.0
  %2406 = vmatprep.subr.mxu0 0.0
  %2407 = vmatpush1.msra.mxu0 0.0
  %2408 = vmatprep.subr.mxu0 0.0
  %2409 = vmatpush1.msra.mxu0 0.0
  %2410 = vmatprep.subr.mxu0 0.0
  %2411 = vmatpush1.msra.mxu0 0.0
  %2412 = vmatprep.subr.mxu0 0.0
  %2413 = vmatpush1.msra.mxu0 0.0
  %2414 = vmatprep.subr.mxu0 0.0
  %2415 = vmatpush1.msra.mxu0 0.0
  %2416 = vmatprep.mubr.f32.mxu0 0.0
  %v2417 = vand.u32 %v1962, 4294901760
  %2418 = vmatmul.mubr.f32.gmra.mrb[0].mxu0 %v2417
  %v2419 = vpop.f32.mrb[0].mxu0
  %v2420 = vadd.f32 %v2347, %v2419
  %v2421 = vpop.f32.mrb[0].mxu0
  %2422 = vdwg.mxu0
  %s2423 = scalar_lea.vmem [#allocation2], 16
  %2424 = vst.msk [vmem:[%s2423] sm:$0xff] %vm55, %v2420
  %2425 = vmatprep.subr.mxu0 0.0
  %v2426 = vand.u32 %v16, 4294901760
  %2427 = vmatpush1.msra.mxu0 %v2426
  %2428 = vmatprep.subr.mxu0 0.0
  %v2429 = vand.u32 %v17, 4294901760
  %2430 = vmatpush1.msra.mxu0 %v2429
  %2431 = vmatprep.subr.mxu0 0.0
  %2432 = vmatpush1.msra.mxu0 0.0
  %2433 = vmatprep.subr.mxu0 0.0
  %2434 = vmatpush1.msra.mxu0 0.0
  %2435 = vmatprep.subr.mxu0 0.0
  %2436 = vmatpush1.msra.mxu0 0.0
  %2437 = vmatprep.subr.mxu0 0.0
  %2438 = vmatpush1.msra.mxu0 0.0
  %2439 = vmatprep.subr.mxu0 0.0
  %2440 = vmatpush1.msra.mxu0 0.0
  %2441 = vmatprep.subr.mxu0 0.0
  %2442 = vmatpush1.msra.mxu0 0.0
  %2443 = vmatprep.subr.mxu0 0.0
  %2444 = vmatpush1.msra.mxu0 0.0
  %2445 = vmatprep.subr.mxu0 0.0
  %2446 = vmatpush1.msra.mxu0 0.0
  %2447 = vmatprep.subr.mxu0 0.0
  %2448 = vmatpush1.msra.mxu0 0.0
  %2449 = vmatprep.subr.mxu0 0.0
  %2450 = vmatpush1.msra.mxu0 0.0
  %2451 = vmatprep.subr.mxu0 0.0
  %2452 = vmatpush1.msra.mxu0 0.0
  %2453 = vmatprep.subr.mxu0 0.0
  %2454 = vmatpush1.msra.mxu0 0.0
  %2455 = vmatprep.subr.mxu0 0.0
  %2456 = vmatpush1.msra.mxu0 0.0
  %2457 = vmatprep.subr.mxu0 0.0
  %2458 = vmatpush1.msra.mxu0 0.0
  %2459 = vmatprep.subr.mxu0 0.0
  %2460 = vmatpush1.msra.mxu0 0.0
  %2461 = vmatprep.subr.mxu0 0.0
  %2462 = vmatpush1.msra.mxu0 0.0
  %2463 = vmatprep.subr.mxu0 0.0
  %2464 = vmatpush1.msra.mxu0 0.0
  %2465 = vmatprep.subr.mxu0 0.0
  %2466 = vmatpush1.msra.mxu0 0.0
  %2467 = vmatprep.subr.mxu0 0.0
  %2468 = vmatpush1.msra.mxu0 0.0
  %2469 = vmatprep.subr.mxu0 0.0
  %2470 = vmatpush1.msra.mxu0 0.0
  %2471 = vmatprep.subr.mxu0 0.0
  %2472 = vmatpush1.msra.mxu0 0.0
  %2473 = vmatprep.subr.mxu0 0.0
  %2474 = vmatpush1.msra.mxu0 0.0
  %2475 = vmatprep.subr.mxu0 0.0
  %2476 = vmatpush1.msra.mxu0 0.0
  %2477 = vmatprep.subr.mxu0 0.0
  %2478 = vmatpush1.msra.mxu0 0.0
  %2479 = vmatprep.subr.mxu0 0.0
  %2480 = vmatpush1.msra.mxu0 0.0
  %2481 = vmatprep.subr.mxu0 0.0
  %2482 = vmatpush1.msra.mxu0 0.0
  %2483 = vmatprep.subr.mxu0 0.0
  %2484 = vmatpush1.msra.mxu0 0.0
  %2485 = vmatprep.subr.mxu0 0.0
  %2486 = vmatpush1.msra.mxu0 0.0
  %2487 = vmatprep.subr.mxu0 0.0
  %2488 = vmatpush1.msra.mxu0 0.0
  %2489 = vmatprep.subr.mxu0 0.0
  %2490 = vmatpush1.msra.mxu0 0.0
  %2491 = vmatprep.mubr.f32.mxu0 0.0
  %v2492 = vand.u32 %v1962, 4294901760
  %v2493 = vsub.f32 %v1962, %v2492
  %v2494 = vand.u32 %v2493, 4294901760
  %v2495 = vsub.f32 %v2493, %v2494
  %v2496 = vand.u32 %v2495, 4294901760
  %2497 = vmatmul.mubr.f32.gmra.mrb[0].mxu0 %v2496
  %v2498 = vpop.f32.mrb[0].mxu0
  %v2499 = vadd.f32 0.0, %v2498
  %v2500 = vpop.f32.mrb[0].mxu0
  %2501 = vdwg.mxu0
  %2502 = vmatprep.subr.mxu0 0.0
  %v2503 = vand.u32 %v16, 4294901760
  %v2504 = vsub.f32 %v16, %v2503
  %v2505 = vand.u32 %v2504, 4294901760
  %v2506 = vsub.f32 %v2504, %v2505
  %v2507 = vand.u32 %v2506, 4294901760
  %2508 = vmatpush1.msra.mxu0 %v2507
  %2509 = vmatprep.subr.mxu0 0.0
  %v2510 = vand.u32 %v17, 4294901760
  %v2511 = vsub.f32 %v17, %v2510
  %v2512 = vand.u32 %v2511, 4294901760
  %v2513 = vsub.f32 %v2511, %v2512
  %v2514 = vand.u32 %v2513, 4294901760
  %2515 = vmatpush1.msra.mxu0 %v2514
  %2516 = vmatprep.subr.mxu0 0.0
  %2517 = vmatpush1.msra.mxu0 0.0
  %2518 = vmatprep.subr.mxu0 0.0
  %2519 = vmatpush1.msra.mxu0 0.0
  %2520 = vmatprep.subr.mxu0 0.0
  %2521 = vmatpush1.msra.mxu0 0.0
  %2522 = vmatprep.subr.mxu0 0.0
  %2523 = vmatpush1.msra.mxu0 0.0
  %2524 = vmatprep.subr.mxu0 0.0
  %2525 = vmatpush1.msra.mxu0 0.0
  %2526 = vmatprep.subr.mxu0 0.0
  %2527 = vmatpush1.msra.mxu0 0.0
  %2528 = vmatprep.subr.mxu0 0.0
  %2529 = vmatpush1.msra.mxu0 0.0
  %2530 = vmatprep.subr.mxu0 0.0
  %2531 = vmatpush1.msra.mxu0 0.0
  %2532 = vmatprep.subr.mxu0 0.0
  %2533 = vmatpush1.msra.mxu0 0.0
  %2534 = vmatprep.subr.mxu0 0.0
  %2535 = vmatpush1.msra.mxu0 0.0
  %2536 = vmatprep.subr.mxu0 0.0
  %2537 = vmatpush1.msra.mxu0 0.0
  %2538 = vmatprep.subr.mxu0 0.0
  %2539 = vmatpush1.msra.mxu0 0.0
  %2540 = vmatprep.subr.mxu0 0.0
  %2541 = vmatpush1.msra.mxu0 0.0
  %2542 = vmatprep.subr.mxu0 0.0
  %2543 = vmatpush1.msra.mxu0 0.0
  %2544 = vmatprep.subr.mxu0 0.0
  %2545 = vmatpush1.msra.mxu0 0.0
  %2546 = vmatprep.subr.mxu0 0.0
  %2547 = vmatpush1.msra.mxu0 0.0
  %2548 = vmatprep.subr.mxu0 0.0
  %2549 = vmatpush1.msra.mxu0 0.0
  %2550 = vmatprep.subr.mxu0 0.0
  %2551 = vmatpush1.msra.mxu0 0.0
  %2552 = vmatprep.subr.mxu0 0.0
  %2553 = vmatpush1.msra.mxu0 0.0
  %2554 = vmatprep.subr.mxu0 0.0
  %2555 = vmatpush1.msra.mxu0 0.0
  %2556 = vmatprep.subr.mxu0 0.0
  %2557 = vmatpush1.msra.mxu0 0.0
  %2558 = vmatprep.subr.mxu0 0.0
  %2559 = vmatpush1.msra.mxu0 0.0
  %2560 = vmatprep.subr.mxu0 0.0
  %2561 = vmatpush1.msra.mxu0 0.0
  %2562 = vmatprep.subr.mxu0 0.0
  %2563 = vmatpush1.msra.mxu0 0.0
  %2564 = vmatprep.subr.mxu0 0.0
  %2565 = vmatpush1.msra.mxu0 0.0
  %2566 = vmatprep.subr.mxu0 0.0
  %2567 = vmatpush1.msra.mxu0 0.0
  %2568 = vmatprep.subr.mxu0 0.0
  %2569 = vmatpush1.msra.mxu0 0.0
  %2570 = vmatprep.subr.mxu0 0.0
  %2571 = vmatpush1.msra.mxu0 0.0
  %2572 = vmatprep.subr.mxu0 0.0
  %2573 = vmatpush1.msra.mxu0 0.0
  %2574 = vmatprep.subr.mxu0 0.0
  %2575 = vmatpush1.msra.mxu0 0.0
  %2576 = vmatprep.mubr.f32.mxu0 0.0
  %v2577 = vand.u32 %v1962, 4294901760
  %2578 = vmatmul.mubr.f32.gmra.mrb[0].mxu0 %v2577
  %v2579 = vpop.f32.mrb[0].mxu0
  %v2580 = vadd.f32 %v2499, %v2579
  %v2581 = vpop.f32.mrb[0].mxu0
  %2582 = vdwg.mxu0
  %2583 = vmatprep.subr.mxu0 0.0
  %v2584 = vand.u32 %v16, 4294901760
  %v2585 = vsub.f32 %v16, %v2584
  %2586 = vmatpush1.msra.mxu0 %v2585
  %2587 = vmatprep.subr.mxu0 0.0
  %v2588 = vand.u32 %v17, 4294901760
  %v2589 = vsub.f32 %v17, %v2588
  %2590 = vmatpush1.msra.mxu0 %v2589
  %2591 = vmatprep.subr.mxu0 0.0
  %2592 = vmatpush1.msra.mxu0 0.0
  %2593 = vmatprep.subr.mxu0 0.0
  %2594 = vmatpush1.msra.mxu0 0.0
  %2595 = vmatprep.subr.mxu0 0.0
  %2596 = vmatpush1.msra.mxu0 0.0
  %2597 = vmatprep.subr.mxu0 0.0
  %2598 = vmatpush1.msra.mxu0 0.0
  %2599 = vmatprep.subr.mxu0 0.0
  %2600 = vmatpush1.msra.mxu0 0.0
  %2601 = vmatprep.subr.mxu0 0.0
  %2602 = vmatpush1.msra.mxu0 0.0
  %2603 = vmatprep.subr.mxu0 0.0
  %2604 = vmatpush1.msra.mxu0 0.0
  %2605 = vmatprep.subr.mxu0 0.0
  %2606 = vmatpush1.msra.mxu0 0.0
  %2607 = vmatprep.subr.mxu0 0.0
  %2608 = vmatpush1.msra.mxu0 0.0
  %2609 = vmatprep.subr.mxu0 0.0
  %2610 = vmatpush1.msra.mxu0 0.0
  %2611 = vmatprep.subr.mxu0 0.0
  %2612 = vmatpush1.msra.mxu0 0.0
  %2613 = vmatprep.subr.mxu0 0.0
  %2614 = vmatpush1.msra.mxu0 0.0
  %2615 = vmatprep.subr.mxu0 0.0
  %2616 = vmatpush1.msra.mxu0 0.0
  %2617 = vmatprep.subr.mxu0 0.0
  %2618 = vmatpush1.msra.mxu0 0.0
  %2619 = vmatprep.subr.mxu0 0.0
  %2620 = vmatpush1.msra.mxu0 0.0
  %2621 = vmatprep.subr.mxu0 0.0
  %2622 = vmatpush1.msra.mxu0 0.0
  %2623 = vmatprep.subr.mxu0 0.0
  %2624 = vmatpush1.msra.mxu0 0.0
  %2625 = vmatprep.subr.mxu0 0.0
  %2626 = vmatpush1.msra.mxu0 0.0
  %2627 = vmatprep.subr.mxu0 0.0
  %2628 = vmatpush1.msra.mxu0 0.0
  %2629 = vmatprep.subr.mxu0 0.0
  %2630 = vmatpush1.msra.mxu0 0.0
  %2631 = vmatprep.subr.mxu0 0.0
  %2632 = vmatpush1.msra.mxu0 0.0
  %2633 = vmatprep.subr.mxu0 0.0
  %2634 = vmatpush1.msra.mxu0 0.0
  %2635 = vmatprep.subr.mxu0 0.0
  %2636 = vmatpush1.msra.mxu0 0.0
  %2637 = vmatprep.subr.mxu0 0.0
  %2638 = vmatpush1.msra.mxu0 0.0
  %2639 = vmatprep.subr.mxu0 0.0
  %2640 = vmatpush1.msra.mxu0 0.0
  %2641 = vmatprep.subr.mxu0 0.0
  %2642 = vmatpush1.msra.mxu0 0.0
  %2643 = vmatprep.subr.mxu0 0.0
  %2644 = vmatpush1.msra.mxu0 0.0
  %2645 = vmatprep.subr.mxu0 0.0
  %2646 = vmatpush1.msra.mxu0 0.0
  %2647 = vmatprep.subr.mxu0 0.0
  %2648 = vmatpush1.msra.mxu0 0.0
  %2649 = vmatprep.subr.mxu0 0.0
  %2650 = vmatpush1.msra.mxu0 0.0
  %2651 = vmatprep.mubr.f32.mxu0 0.0
  %v2652 = vand.u32 %v1962, 4294901760
  %v2653 = vsub.f32 %v1962, %v2652
  %2654 = vmatmul.mubr.f32.gmra.mrb[0].mxu0 %v2653
  %v2655 = vpop.f32.mrb[0].mxu0
  %v2656 = vadd.f32 %v2580, %v2655
  %v2657 = vpop.f32.mrb[0].mxu0
  %2658 = vdwg.mxu0
  %2659 = vmatprep.subr.mxu0 0.0
  %v2660 = vand.u32 %v16, 4294901760
  %2661 = vmatpush1.msra.mxu0 %v2660
  %2662 = vmatprep.subr.mxu0 0.0
  %v2663 = vand.u32 %v17, 4294901760
  %2664 = vmatpush1.msra.mxu0 %v2663
  %2665 = vmatprep.subr.mxu0 0.0
  %2666 = vmatpush1.msra.mxu0 0.0
  %2667 = vmatprep.subr.mxu0 0.0
  %2668 = vmatpush1.msra.mxu0 0.0
  %2669 = vmatprep.subr.mxu0 0.0
  %2670 = vmatpush1.msra.mxu0 0.0
  %2671 = vmatprep.subr.mxu0 0.0
  %2672 = vmatpush1.msra.mxu0 0.0
  %2673 = vmatprep.subr.mxu0 0.0
  %2674 = vmatpush1.msra.mxu0 0.0
  %2675 = vmatprep.subr.mxu0 0.0
  %2676 = vmatpush1.msra.mxu0 0.0
  %2677 = vmatprep.subr.mxu0 0.0
  %2678 = vmatpush1.msra.mxu0 0.0
  %2679 = vmatprep.subr.mxu0 0.0
  %2680 = vmatpush1.msra.mxu0 0.0
  %2681 = vmatprep.subr.mxu0 0.0
  %2682 = vmatpush1.msra.mxu0 0.0
  %2683 = vmatprep.subr.mxu0 0.0
  %2684 = vmatpush1.msra.mxu0 0.0
  %2685 = vmatprep.subr.mxu0 0.0
  %2686 = vmatpush1.msra.mxu0 0.0
  %2687 = vmatprep.subr.mxu0 0.0
  %2688 = vmatpush1.msra.mxu0 0.0
  %2689 = vmatprep.subr.mxu0 0.0
  %2690 = vmatpush1.msra.mxu0 0.0
  %2691 = vmatprep.subr.mxu0 0.0
  %2692 = vmatpush1.msra.mxu0 0.0
  %2693 = vmatprep.subr.mxu0 0.0
  %2694 = vmatpush1.msra.mxu0 0.0
  %2695 = vmatprep.subr.mxu0 0.0
  %2696 = vmatpush1.msra.mxu0 0.0
  %2697 = vmatprep.subr.mxu0 0.0
  %2698 = vmatpush1.msra.mxu0 0.0
  %2699 = vmatprep.subr.mxu0 0.0
  %2700 = vmatpush1.msra.mxu0 0.0
  %2701 = vmatprep.subr.mxu0 0.0
  %2702 = vmatpush1.msra.mxu0 0.0
  %2703 = vmatprep.subr.mxu0 0.0
  %2704 = vmatpush1.msra.mxu0 0.0
  %2705 = vmatprep.subr.mxu0 0.0
  %2706 = vmatpush1.msra.mxu0 0.0
  %2707 = vmatprep.subr.mxu0 0.0
  %2708 = vmatpush1.msra.mxu0 0.0
  %2709 = vmatprep.subr.mxu0 0.0
  %2710 = vmatpush1.msra.mxu0 0.0
  %2711 = vmatprep.subr.mxu0 0.0
  %2712 = vmatpush1.msra.mxu0 0.0
  %2713 = vmatprep.subr.mxu0 0.0
  %2714 = vmatpush1.msra.mxu0 0.0
  %2715 = vmatprep.subr.mxu0 0.0
  %2716 = vmatpush1.msra.mxu0 0.0
  %2717 = vmatprep.subr.mxu0 0.0
  %2718 = vmatpush1.msra.mxu0 0.0
  %2719 = vmatprep.subr.mxu0 0.0
  %2720 = vmatpush1.msra.mxu0 0.0
  %2721 = vmatprep.subr.mxu0 0.0
  %2722 = vmatpush1.msra.mxu0 0.0
  %2723 = vmatprep.subr.mxu0 0.0
  %2724 = vmatpush1.msra.mxu0 0.0
  %2725 = vmatprep.mubr.f32.mxu0 0.0
  %v2726 = vand.u32 %v1962, 4294901760
  %v2727 = vsub.f32 %v1962, %v2726
  %v2728 = vand.u32 %v2727, 4294901760
  %2729 = vmatmul.mubr.f32.gmra.mrb[0].mxu0 %v2728
  %v2730 = vpop.f32.mrb[0].mxu0
  %v2731 = vadd.f32 %v2656, %v2730
  %v2732 = vpop.f32.mrb[0].mxu0
  %2733 = vdwg.mxu0
  %2734 = vmatprep.subr.mxu0 0.0
  %v2735 = vand.u32 %v16, 4294901760
  %v2736 = vsub.f32 %v16, %v2735
  %v2737 = vand.u32 %v2736, 4294901760
  %2738 = vmatpush1.msra.mxu0 %v2737
  %2739 = vmatprep.subr.mxu0 0.0
  %v2740 = vand.u32 %v17, 4294901760
  %v2741 = vsub.f32 %v17, %v2740
  %v2742 = vand.u32 %v2741, 4294901760
  %2743 = vmatpush1.msra.mxu0 %v2742
  %2744 = vmatprep.subr.mxu0 0.0
  %2745 = vmatpush1.msra.mxu0 0.0
  %2746 = vmatprep.subr.mxu0 0.0
  %2747 = vmatpush1.msra.mxu0 0.0
  %2748 = vmatprep.subr.mxu0 0.0
  %2749 = vmatpush1.msra.mxu0 0.0
  %2750 = vmatprep.subr.mxu0 0.0
  %2751 = vmatpush1.msra.mxu0 0.0
  %2752 = vmatprep.subr.mxu0 0.0
  %2753 = vmatpush1.msra.mxu0 0.0
  %2754 = vmatprep.subr.mxu0 0.0
  %2755 = vmatpush1.msra.mxu0 0.0
  %2756 = vmatprep.subr.mxu0 0.0
  %2757 = vmatpush1.msra.mxu0 0.0
  %2758 = vmatprep.subr.mxu0 0.0
  %2759 = vmatpush1.msra.mxu0 0.0
  %2760 = vmatprep.subr.mxu0 0.0
  %2761 = vmatpush1.msra.mxu0 0.0
  %2762 = vmatprep.subr.mxu0 0.0
  %2763 = vmatpush1.msra.mxu0 0.0
  %2764 = vmatprep.subr.mxu0 0.0
  %2765 = vmatpush1.msra.mxu0 0.0
  %2766 = vmatprep.subr.mxu0 0.0
  %2767 = vmatpush1.msra.mxu0 0.0
  %2768 = vmatprep.subr.mxu0 0.0
  %2769 = vmatpush1.msra.mxu0 0.0
  %2770 = vmatprep.subr.mxu0 0.0
  %2771 = vmatpush1.msra.mxu0 0.0
  %2772 = vmatprep.subr.mxu0 0.0
  %2773 = vmatpush1.msra.mxu0 0.0
  %2774 = vmatprep.subr.mxu0 0.0
  %2775 = vmatpush1.msra.mxu0 0.0
  %2776 = vmatprep.subr.mxu0 0.0
  %2777 = vmatpush1.msra.mxu0 0.0
  %2778 = vmatprep.subr.mxu0 0.0
  %2779 = vmatpush1.msra.mxu0 0.0
  %2780 = vmatprep.subr.mxu0 0.0
  %2781 = vmatpush1.msra.mxu0 0.0
  %2782 = vmatprep.subr.mxu0 0.0
  %2783 = vmatpush1.msra.mxu0 0.0
  %2784 = vmatprep.subr.mxu0 0.0
  %2785 = vmatpush1.msra.mxu0 0.0
  %2786 = vmatprep.subr.mxu0 0.0
  %2787 = vmatpush1.msra.mxu0 0.0
  %2788 = vmatprep.subr.mxu0 0.0
  %2789 = vmatpush1.msra.mxu0 0.0
  %2790 = vmatprep.subr.mxu0 0.0
  %2791 = vmatpush1.msra.mxu0 0.0
  %2792 = vmatprep.subr.mxu0 0.0
  %2793 = vmatpush1.msra.mxu0 0.0
  %2794 = vmatprep.subr.mxu0 0.0
  %2795 = vmatpush1.msra.mxu0 0.0
  %2796 = vmatprep.subr.mxu0 0.0
  %2797 = vmatpush1.msra.mxu0 0.0
  %2798 = vmatprep.subr.mxu0 0.0
  %2799 = vmatpush1.msra.mxu0 0.0
  %2800 = vmatprep.subr.mxu0 0.0
  %2801 = vmatpush1.msra.mxu0 0.0
  %2802 = vmatprep.subr.mxu0 0.0
  %2803 = vmatpush1.msra.mxu0 0.0
  %2804 = vmatprep.mubr.f32.mxu0 0.0
  %v2805 = vand.u32 %v1962, 4294901760
  %2806 = vmatmul.mubr.f32.gmra.mrb[0].mxu0 %v2805
  %v2807 = vpop.f32.mrb[0].mxu0
  %v2808 = vadd.f32 %v2731, %v2807
  %v2809 = vpop.f32.mrb[0].mxu0
  %2810 = vdwg.mxu0
  %2811 = vmatprep.subr.mxu0 0.0
  %v2812 = vand.u32 %v16, 4294901760
  %2813 = vmatpush1.msra.mxu0 %v2812
  %2814 = vmatprep.subr.mxu0 0.0
  %v2815 = vand.u32 %v17, 4294901760
  %2816 = vmatpush1.msra.mxu0 %v2815
  %2817 = vmatprep.subr.mxu0 0.0
  %2818 = vmatpush1.msra.mxu0 0.0
  %2819 = vmatprep.subr.mxu0 0.0
  %2820 = vmatpush1.msra.mxu0 0.0
  %2821 = vmatprep.subr.mxu0 0.0
  %2822 = vmatpush1.msra.mxu0 0.0
  %2823 = vmatprep.subr.mxu0 0.0
  %2824 = vmatpush1.msra.mxu0 0.0
  %2825 = vmatprep.subr.mxu0 0.0
  %2826 = vmatpush1.msra.mxu0 0.0
  %2827 = vmatprep.subr.mxu0 0.0
  %2828 = vmatpush1.msra.mxu0 0.0
  %2829 = vmatprep.subr.mxu0 0.0
  %2830 = vmatpush1.msra.mxu0 0.0
  %2831 = vmatprep.subr.mxu0 0.0
  %2832 = vmatpush1.msra.mxu0 0.0
  %2833 = vmatprep.subr.mxu0 0.0
  %2834 = vmatpush1.msra.mxu0 0.0
  %2835 = vmatprep.subr.mxu0 0.0
  %2836 = vmatpush1.msra.mxu0 0.0
  %2837 = vmatprep.subr.mxu0 0.0
  %2838 = vmatpush1.msra.mxu0 0.0
  %2839 = vmatprep.subr.mxu0 0.0
  %2840 = vmatpush1.msra.mxu0 0.0
  %2841 = vmatprep.subr.mxu0 0.0
  %2842 = vmatpush1.msra.mxu0 0.0
  %2843 = vmatprep.subr.mxu0 0.0
  %2844 = vmatpush1.msra.mxu0 0.0
  %2845 = vmatprep.subr.mxu0 0.0
  %2846 = vmatpush1.msra.mxu0 0.0
  %2847 = vmatprep.subr.mxu0 0.0
  %2848 = vmatpush1.msra.mxu0 0.0
  %2849 = vmatprep.subr.mxu0 0.0
  %2850 = vmatpush1.msra.mxu0 0.0
  %2851 = vmatprep.subr.mxu0 0.0
  %2852 = vmatpush1.msra.mxu0 0.0
  %2853 = vmatprep.subr.mxu0 0.0
  %2854 = vmatpush1.msra.mxu0 0.0
  %2855 = vmatprep.subr.mxu0 0.0
  %2856 = vmatpush1.msra.mxu0 0.0
  %2857 = vmatprep.subr.mxu0 0.0
  %2858 = vmatpush1.msra.mxu0 0.0
  %2859 = vmatprep.subr.mxu0 0.0
  %2860 = vmatpush1.msra.mxu0 0.0
  %2861 = vmatprep.subr.mxu0 0.0
  %2862 = vmatpush1.msra.mxu0 0.0
  %2863 = vmatprep.subr.mxu0 0.0
  %2864 = vmatpush1.msra.mxu0 0.0
  %2865 = vmatprep.subr.mxu0 0.0
  %2866 = vmatpush1.msra.mxu0 0.0
  %2867 = vmatprep.subr.mxu0 0.0
  %2868 = vmatpush1.msra.mxu0 0.0
  %2869 = vmatprep.subr.mxu0 0.0
  %2870 = vmatpush1.msra.mxu0 0.0
  %2871 = vmatprep.subr.mxu0 0.0
  %2872 = vmatpush1.msra.mxu0 0.0
  %2873 = vmatprep.subr.mxu0 0.0
  %2874 = vmatpush1.msra.mxu0 0.0
  %2875 = vmatprep.subr.mxu0 0.0
  %2876 = vmatpush1.msra.mxu0 0.0
  %2877 = vmatprep.mubr.f32.mxu0 0.0
  %v2878 = vand.u32 %v1962, 4294901760
  %2879 = vmatmul.mubr.f32.gmra.mrb[0].mxu0 %v2878
  %v2880 = vpop.f32.mrb[0].mxu0
  %v2881 = vadd.f32 %v2808, %v2880
  %v2882 = vpop.f32.mrb[0].mxu0
  %2883 = vdwg.mxu0
  %s2884 = scalar_lea.vmem [#allocation3], 16
  %2885 = vst.msk [vmem:[%s2884] sm:$0xff] %vm55, %v2881
  %v2886 = vld [vmem:[%s0 + $0x3] sm:$0x1]
  %v2887 = vld [vmem:[%s0 + $0x7] sm:$0x1]
  %v2888 = vld [vmem:[%s0 + $0xb] sm:$0x1]
  %v2889 = vld [vmem:[%s0 + $0xf] sm:$0x1]
  %v2890 = vld [vmem:[%s0 + $0x13] sm:$0x1]
  %v2891 = vld [vmem:[%s0 + $0x17] sm:$0x1]
  %v2892 = vld [vmem:[%s0 + $0x1b] sm:$0x1]
  %v2893 = vld [vmem:[%s0 + $0x1f] sm:$0x1]
  %v2902 = vrot.slane %v2887, 7
  %v2903 = vsel %vm35, %v2902, %v2886
  %v2904 = vrot.slane %v2888, 6
  %v2905 = vsel %vm38, %v2904, %v2903
  %v2906 = vrot.slane %v2889, 5
  %v2907 = vsel %vm41, %v2906, %v2905
  %v2908 = vrot.slane %v2890, 4
  %v2909 = vsel %vm44, %v2908, %v2907
  %v2910 = vrot.slane %v2891, 3
  %v2911 = vsel %vm47, %v2910, %v2909
  %v2912 = vrot.slane %v2892, 2
  %v2913 = vsel %vm50, %v2912, %v2911
  %v2914 = vrot.slane %v2893, 1
  %v2915 = vsel %vm53, %v2914, %v2913
  %v2916 = vsel %vm55, %v2915, 0
  %2918 = vmatprep.subr.mxu0 0.0
  %v2919 = vand.u32 %v14, 4294901760
  %2920 = vmatpush1.msra.mxu0 %v2919
  %2921 = vmatprep.subr.mxu0 0.0
  %v2922 = vand.u32 %v15, 4294901760
  %2923 = vmatpush1.msra.mxu0 %v2922
  %2924 = vmatprep.subr.mxu0 0.0
  %2925 = vmatpush1.msra.mxu0 0.0
  %2926 = vmatprep.subr.mxu0 0.0
  %2927 = vmatpush1.msra.mxu0 0.0
  %2928 = vmatprep.subr.mxu0 0.0
  %2929 = vmatpush1.msra.mxu0 0.0
  %2930 = vmatprep.subr.mxu0 0.0
  %2931 = vmatpush1.msra.mxu0 0.0
  %2932 = vmatprep.subr.mxu0 0.0
  %2933 = vmatpush1.msra.mxu0 0.0
  %2934 = vmatprep.subr.mxu0 0.0
  %2935 = vmatpush1.msra.mxu0 0.0
  %2936 = vmatprep.subr.mxu0 0.0
  %2937 = vmatpush1.msra.mxu0 0.0
  %2938 = vmatprep.subr.mxu0 0.0
  %2939 = vmatpush1.msra.mxu0 0.0
  %2940 = vmatprep.subr.mxu0 0.0
  %2941 = vmatpush1.msra.mxu0 0.0
  %2942 = vmatprep.subr.mxu0 0.0
  %2943 = vmatpush1.msra.mxu0 0.0
  %2944 = vmatprep.subr.mxu0 0.0
  %2945 = vmatpush1.msra.mxu0 0.0
  %2946 = vmatprep.subr.mxu0 0.0
  %2947 = vmatpush1.msra.mxu0 0.0
  %2948 = vmatprep.subr.mxu0 0.0
  %2949 = vmatpush1.msra.mxu0 0.0
  %2950 = vmatprep.subr.mxu0 0.0
  %2951 = vmatpush1.msra.mxu0 0.0
  %2952 = vmatprep.subr.mxu0 0.0
  %2953 = vmatpush1.msra.mxu0 0.0
  %2954 = vmatprep.subr.mxu0 0.0
  %2955 = vmatpush1.msra.mxu0 0.0
  %2956 = vmatprep.subr.mxu0 0.0
  %2957 = vmatpush1.msra.mxu0 0.0
  %2958 = vmatprep.subr.mxu0 0.0
  %2959 = vmatpush1.msra.mxu0 0.0
  %2960 = vmatprep.subr.mxu0 0.0
  %2961 = vmatpush1.msra.mxu0 0.0
  %2962 = vmatprep.subr.mxu0 0.0
  %2963 = vmatpush1.msra.mxu0 0.0
  %2964 = vmatprep.subr.mxu0 0.0
  %2965 = vmatpush1.msra.mxu0 0.0
  %2966 = vmatprep.subr.mxu0 0.0
  %2967 = vmatpush1.msra.mxu0 0.0
  %2968 = vmatprep.subr.mxu0 0.0
  %2969 = vmatpush1.msra.mxu0 0.0
  %2970 = vmatprep.subr.mxu0 0.0
  %2971 = vmatpush1.msra.mxu0 0.0
  %2972 = vmatprep.subr.mxu0 0.0
  %2973 = vmatpush1.msra.mxu0 0.0
  %2974 = vmatprep.subr.mxu0 0.0
  %2975 = vmatpush1.msra.mxu0 0.0
  %2976 = vmatprep.subr.mxu0 0.0
  %2977 = vmatpush1.msra.mxu0 0.0
  %2978 = vmatprep.subr.mxu0 0.0
  %2979 = vmatpush1.msra.mxu0 0.0
  %2980 = vmatprep.subr.mxu0 0.0
  %2981 = vmatpush1.msra.mxu0 0.0
  %2982 = vmatprep.subr.mxu0 0.0
  %2983 = vmatpush1.msra.mxu0 0.0
  %2984 = vmatprep.mubr.f32.mxu0 0.0
  %v2985 = vand.u32 %v2916, 4294901760
  %v2986 = vsub.f32 %v2916, %v2985
  %v2987 = vand.u32 %v2986, 4294901760
  %v2988 = vsub.f32 %v2986, %v2987
  %v2989 = vand.u32 %v2988, 4294901760
  %2990 = vmatmul.mubr.f32.gmra.mrb[0].mxu0 %v2989
  %v2991 = vpop.f32.mrb[0].mxu0
  %v2992 = vadd.f32 0.0, %v2991
  %v2993 = vpop.f32.mrb[0].mxu0
  %2994 = vdwg.mxu0
  %2995 = vmatprep.subr.mxu0 0.0
  %v2996 = vand.u32 %v14, 4294901760
  %v2997 = vsub.f32 %v14, %v2996
  %v2998 = vand.u32 %v2997, 4294901760
  %v2999 = vsub.f32 %v2997, %v2998
  %v3000 = vand.u32 %v2999, 4294901760
  %3001 = vmatpush1.msra.mxu0 %v3000
  %3002 = vmatprep.subr.mxu0 0.0
  %v3003 = vand.u32 %v15, 4294901760
  %v3004 = vsub.f32 %v15, %v3003
  %v3005 = vand.u32 %v3004, 4294901760
  %v3006 = vsub.f32 %v3004, %v3005
  %v3007 = vand.u32 %v3006, 4294901760
  %3008 = vmatpush1.msra.mxu0 %v3007
  %3009 = vmatprep.subr.mxu0 0.0
  %3010 = vmatpush1.msra.mxu0 0.0
  %3011 = vmatprep.subr.mxu0 0.0
  %3012 = vmatpush1.msra.mxu0 0.0
  %3013 = vmatprep.subr.mxu0 0.0
  %3014 = vmatpush1.msra.mxu0 0.0
  %3015 = vmatprep.subr.mxu0 0.0
  %3016 = vmatpush1.msra.mxu0 0.0
  %3017 = vmatprep.subr.mxu0 0.0
  %3018 = vmatpush1.msra.mxu0 0.0
  %3019 = vmatprep.subr.mxu0 0.0
  %3020 = vmatpush1.msra.mxu0 0.0
  %3021 = vmatprep.subr.mxu0 0.0
  %3022 = vmatpush1.msra.mxu0 0.0
  %3023 = vmatprep.subr.mxu0 0.0
  %3024 = vmatpush1.msra.mxu0 0.0
  %3025 = vmatprep.subr.mxu0 0.0
  %3026 = vmatpush1.msra.mxu0 0.0
  %3027 = vmatprep.subr.mxu0 0.0
  %3028 = vmatpush1.msra.mxu0 0.0
  %3029 = vmatprep.subr.mxu0 0.0
  %3030 = vmatpush1.msra.mxu0 0.0
  %3031 = vmatprep.subr.mxu0 0.0
  %3032 = vmatpush1.msra.mxu0 0.0
  %3033 = vmatprep.subr.mxu0 0.0
  %3034 = vmatpush1.msra.mxu0 0.0
  %3035 = vmatprep.subr.mxu0 0.0
  %3036 = vmatpush1.msra.mxu0 0.0
  %3037 = vmatprep.subr.mxu0 0.0
  %3038 = vmatpush1.msra.mxu0 0.0
  %3039 = vmatprep.subr.mxu0 0.0
  %3040 = vmatpush1.msra.mxu0 0.0
  %3041 = vmatprep.subr.mxu0 0.0
  %3042 = vmatpush1.msra.mxu0 0.0
  %3043 = vmatprep.subr.mxu0 0.0
  %3044 = vmatpush1.msra.mxu0 0.0
  %3045 = vmatprep.subr.mxu0 0.0
  %3046 = vmatpush1.msra.mxu0 0.0
  %3047 = vmatprep.subr.mxu0 0.0
  %3048 = vmatpush1.msra.mxu0 0.0
  %3049 = vmatprep.subr.mxu0 0.0
  %3050 = vmatpush1.msra.mxu0 0.0
  %3051 = vmatprep.subr.mxu0 0.0
  %3052 = vmatpush1.msra.mxu0 0.0
  %3053 = vmatprep.subr.mxu0 0.0
  %3054 = vmatpush1.msra.mxu0 0.0
  %3055 = vmatprep.subr.mxu0 0.0
  %3056 = vmatpush1.msra.mxu0 0.0
  %3057 = vmatprep.subr.mxu0 0.0
  %3058 = vmatpush1.msra.mxu0 0.0
  %3059 = vmatprep.subr.mxu0 0.0
  %3060 = vmatpush1.msra.mxu0 0.0
  %3061 = vmatprep.subr.mxu0 0.0
  %3062 = vmatpush1.msra.mxu0 0.0
  %3063 = vmatprep.subr.mxu0 0.0
  %3064 = vmatpush1.msra.mxu0 0.0
  %3065 = vmatprep.subr.mxu0 0.0
  %3066 = vmatpush1.msra.mxu0 0.0
  %3067 = vmatprep.subr.mxu0 0.0
  %3068 = vmatpush1.msra.mxu0 0.0
  %3069 = vmatprep.mubr.f32.mxu0 0.0
  %v3070 = vand.u32 %v2916, 4294901760
  %3071 = vmatmul.mubr.f32.gmra.mrb[0].mxu0 %v3070
  %v3072 = vpop.f32.mrb[0].mxu0
  %v3073 = vadd.f32 %v2992, %v3072
  %v3074 = vpop.f32.mrb[0].mxu0
  %3075 = vdwg.mxu0
  %3076 = vmatprep.subr.mxu0 0.0
  %v3077 = vand.u32 %v14, 4294901760
  %v3078 = vsub.f32 %v14, %v3077
  %3079 = vmatpush1.msra.mxu0 %v3078
  %3080 = vmatprep.subr.mxu0 0.0
  %v3081 = vand.u32 %v15, 4294901760
  %v3082 = vsub.f32 %v15, %v3081
  %3083 = vmatpush1.msra.mxu0 %v3082
  %3084 = vmatprep.subr.mxu0 0.0
  %3085 = vmatpush1.msra.mxu0 0.0
  %3086 = vmatprep.subr.mxu0 0.0
  %3087 = vmatpush1.msra.mxu0 0.0
  %3088 = vmatprep.subr.mxu0 0.0
  %3089 = vmatpush1.msra.mxu0 0.0
  %3090 = vmatprep.subr.mxu0 0.0
  %3091 = vmatpush1.msra.mxu0 0.0
  %3092 = vmatprep.subr.mxu0 0.0
  %3093 = vmatpush1.msra.mxu0 0.0
  %3094 = vmatprep.subr.mxu0 0.0
  %3095 = vmatpush1.msra.mxu0 0.0
  %3096 = vmatprep.subr.mxu0 0.0
  %3097 = vmatpush1.msra.mxu0 0.0
  %3098 = vmatprep.subr.mxu0 0.0
  %3099 = vmatpush1.msra.mxu0 0.0
  %3100 = vmatprep.subr.mxu0 0.0
  %3101 = vmatpush1.msra.mxu0 0.0
  %3102 = vmatprep.subr.mxu0 0.0
  %3103 = vmatpush1.msra.mxu0 0.0
  %3104 = vmatprep.subr.mxu0 0.0
  %3105 = vmatpush1.msra.mxu0 0.0
  %3106 = vmatprep.subr.mxu0 0.0
  %3107 = vmatpush1.msra.mxu0 0.0
  %3108 = vmatprep.subr.mxu0 0.0
  %3109 = vmatpush1.msra.mxu0 0.0
  %3110 = vmatprep.subr.mxu0 0.0
  %3111 = vmatpush1.msra.mxu0 0.0
  %3112 = vmatprep.subr.mxu0 0.0
  %3113 = vmatpush1.msra.mxu0 0.0
  %3114 = vmatprep.subr.mxu0 0.0
  %3115 = vmatpush1.msra.mxu0 0.0
  %3116 = vmatprep.subr.mxu0 0.0
  %3117 = vmatpush1.msra.mxu0 0.0
  %3118 = vmatprep.subr.mxu0 0.0
  %3119 = vmatpush1.msra.mxu0 0.0
  %3120 = vmatprep.subr.mxu0 0.0
  %3121 = vmatpush1.msra.mxu0 0.0
  %3122 = vmatprep.subr.mxu0 0.0
  %3123 = vmatpush1.msra.mxu0 0.0
  %3124 = vmatprep.subr.mxu0 0.0
  %3125 = vmatpush1.msra.mxu0 0.0
  %3126 = vmatprep.subr.mxu0 0.0
  %3127 = vmatpush1.msra.mxu0 0.0
  %3128 = vmatprep.subr.mxu0 0.0
  %3129 = vmatpush1.msra.mxu0 0.0
  %3130 = vmatprep.subr.mxu0 0.0
  %3131 = vmatpush1.msra.mxu0 0.0
  %3132 = vmatprep.subr.mxu0 0.0
  %3133 = vmatpush1.msra.mxu0 0.0
  %3134 = vmatprep.subr.mxu0 0.0
  %3135 = vmatpush1.msra.mxu0 0.0
  %3136 = vmatprep.subr.mxu0 0.0
  %3137 = vmatpush1.msra.mxu0 0.0
  %3138 = vmatprep.subr.mxu0 0.0
  %3139 = vmatpush1.msra.mxu0 0.0
  %3140 = vmatprep.subr.mxu0 0.0
  %3141 = vmatpush1.msra.mxu0 0.0
  %3142 = vmatprep.subr.mxu0 0.0
  %3143 = vmatpush1.msra.mxu0 0.0
  %3144 = vmatprep.mubr.f32.mxu0 0.0
  %v3145 = vand.u32 %v2916, 4294901760
  %v3146 = vsub.f32 %v2916, %v3145
  %3147 = vmatmul.mubr.f32.gmra.mrb[0].mxu0 %v3146
  %v3148 = vpop.f32.mrb[0].mxu0
  %v3149 = vadd.f32 %v3073, %v3148
  %v3150 = vpop.f32.mrb[0].mxu0
  %3151 = vdwg.mxu0
  %3152 = vmatprep.subr.mxu0 0.0
  %v3153 = vand.u32 %v14, 4294901760
  %3154 = vmatpush1.msra.mxu0 %v3153
  %3155 = vmatprep.subr.mxu0 0.0
  %v3156 = vand.u32 %v15, 4294901760
  %3157 = vmatpush1.msra.mxu0 %v3156
  %3158 = vmatprep.subr.mxu0 0.0
  %3159 = vmatpush1.msra.mxu0 0.0
  %3160 = vmatprep.subr.mxu0 0.0
  %3161 = vmatpush1.msra.mxu0 0.0
  %3162 = vmatprep.subr.mxu0 0.0
  %3163 = vmatpush1.msra.mxu0 0.0
  %3164 = vmatprep.subr.mxu0 0.0
  %3165 = vmatpush1.msra.mxu0 0.0
  %3166 = vmatprep.subr.mxu0 0.0
  %3167 = vmatpush1.msra.mxu0 0.0
  %3168 = vmatprep.subr.mxu0 0.0
  %3169 = vmatpush1.msra.mxu0 0.0
  %3170 = vmatprep.subr.mxu0 0.0
  %3171 = vmatpush1.msra.mxu0 0.0
  %3172 = vmatprep.subr.mxu0 0.0
  %3173 = vmatpush1.msra.mxu0 0.0
  %3174 = vmatprep.subr.mxu0 0.0
  %3175 = vmatpush1.msra.mxu0 0.0
  %3176 = vmatprep.subr.mxu0 0.0
  %3177 = vmatpush1.msra.mxu0 0.0
  %3178 = vmatprep.subr.mxu0 0.0
  %3179 = vmatpush1.msra.mxu0 0.0
  %3180 = vmatprep.subr.mxu0 0.0
  %3181 = vmatpush1.msra.mxu0 0.0
  %3182 = vmatprep.subr.mxu0 0.0
  %3183 = vmatpush1.msra.mxu0 0.0
  %3184 = vmatprep.subr.mxu0 0.0
  %3185 = vmatpush1.msra.mxu0 0.0
  %3186 = vmatprep.subr.mxu0 0.0
  %3187 = vmatpush1.msra.mxu0 0.0
  %3188 = vmatprep.subr.mxu0 0.0
  %3189 = vmatpush1.msra.mxu0 0.0
  %3190 = vmatprep.subr.mxu0 0.0
  %3191 = vmatpush1.msra.mxu0 0.0
  %3192 = vmatprep.subr.mxu0 0.0
  %3193 = vmatpush1.msra.mxu0 0.0
  %3194 = vmatprep.subr.mxu0 0.0
  %3195 = vmatpush1.msra.mxu0 0.0
  %3196 = vmatprep.subr.mxu0 0.0
  %3197 = vmatpush1.msra.mxu0 0.0
  %3198 = vmatprep.subr.mxu0 0.0
  %3199 = vmatpush1.msra.mxu0 0.0
  %3200 = vmatprep.subr.mxu0 0.0
  %3201 = vmatpush1.msra.mxu0 0.0
  %3202 = vmatprep.subr.mxu0 0.0
  %3203 = vmatpush1.msra.mxu0 0.0
  %3204 = vmatprep.subr.mxu0 0.0
  %3205 = vmatpush1.msra.mxu0 0.0
  %3206 = vmatprep.subr.mxu0 0.0
  %3207 = vmatpush1.msra.mxu0 0.0
  %3208 = vmatprep.subr.mxu0 0.0
  %3209 = vmatpush1.msra.mxu0 0.0
  %3210 = vmatprep.subr.mxu0 0.0
  %3211 = vmatpush1.msra.mxu0 0.0
  %3212 = vmatprep.subr.mxu0 0.0
  %3213 = vmatpush1.msra.mxu0 0.0
  %3214 = vmatprep.subr.mxu0 0.0
  %3215 = vmatpush1.msra.mxu0 0.0
  %3216 = vmatprep.subr.mxu0 0.0
  %3217 = vmatpush1.msra.mxu0 0.0
  %3218 = vmatprep.mubr.f32.mxu0 0.0
  %v3219 = vand.u32 %v2916, 4294901760
  %v3220 = vsub.f32 %v2916, %v3219
  %v3221 = vand.u32 %v3220, 4294901760
  %3222 = vmatmul.mubr.f32.gmra.mrb[0].mxu0 %v3221
  %v3223 = vpop.f32.mrb[0].mxu0
  %v3224 = vadd.f32 %v3149, %v3223
  %v3225 = vpop.f32.mrb[0].mxu0
  %3226 = vdwg.mxu0
  %3227 = vmatprep.subr.mxu0 0.0
  %v3228 = vand.u32 %v14, 4294901760
  %v3229 = vsub.f32 %v14, %v3228
  %v3230 = vand.u32 %v3229, 4294901760
  %3231 = vmatpush1.msra.mxu0 %v3230
  %3232 = vmatprep.subr.mxu0 0.0
  %v3233 = vand.u32 %v15, 4294901760
  %v3234 = vsub.f32 %v15, %v3233
  %v3235 = vand.u32 %v3234, 4294901760
  %3236 = vmatpush1.msra.mxu0 %v3235
  %3237 = vmatprep.subr.mxu0 0.0
  %3238 = vmatpush1.msra.mxu0 0.0
  %3239 = vmatprep.subr.mxu0 0.0
  %3240 = vmatpush1.msra.mxu0 0.0
  %3241 = vmatprep.subr.mxu0 0.0
  %3242 = vmatpush1.msra.mxu0 0.0
  %3243 = vmatprep.subr.mxu0 0.0
  %3244 = vmatpush1.msra.mxu0 0.0
  %3245 = vmatprep.subr.mxu0 0.0
  %3246 = vmatpush1.msra.mxu0 0.0
  %3247 = vmatprep.subr.mxu0 0.0
  %3248 = vmatpush1.msra.mxu0 0.0
  %3249 = vmatprep.subr.mxu0 0.0
  %3250 = vmatpush1.msra.mxu0 0.0
  %3251 = vmatprep.subr.mxu0 0.0
  %3252 = vmatpush1.msra.mxu0 0.0
  %3253 = vmatprep.subr.mxu0 0.0
  %3254 = vmatpush1.msra.mxu0 0.0
  %3255 = vmatprep.subr.mxu0 0.0
  %3256 = vmatpush1.msra.mxu0 0.0
  %3257 = vmatprep.subr.mxu0 0.0
  %3258 = vmatpush1.msra.mxu0 0.0
  %3259 = vmatprep.subr.mxu0 0.0
  %3260 = vmatpush1.msra.mxu0 0.0
  %3261 = vmatprep.subr.mxu0 0.0
  %3262 = vmatpush1.msra.mxu0 0.0
  %3263 = vmatprep.subr.mxu0 0.0
  %3264 = vmatpush1.msra.mxu0 0.0
  %3265 = vmatprep.subr.mxu0 0.0
  %3266 = vmatpush1.msra.mxu0 0.0
  %3267 = vmatprep.subr.mxu0 0.0
  %3268 = vmatpush1.msra.mxu0 0.0
  %3269 = vmatprep.subr.mxu0 0.0
  %3270 = vmatpush1.msra.mxu0 0.0
  %3271 = vmatprep.subr.mxu0 0.0
  %3272 = vmatpush1.msra.mxu0 0.0
  %3273 = vmatprep.subr.mxu0 0.0
  %3274 = vmatpush1.msra.mxu0 0.0
  %3275 = vmatprep.subr.mxu0 0.0
  %3276 = vmatpush1.msra.mxu0 0.0
  %3277 = vmatprep.subr.mxu0 0.0
  %3278 = vmatpush1.msra.mxu0 0.0
  %3279 = vmatprep.subr.mxu0 0.0
  %3280 = vmatpush1.msra.mxu0 0.0
  %3281 = vmatprep.subr.mxu0 0.0
  %3282 = vmatpush1.msra.mxu0 0.0
  %3283 = vmatprep.subr.mxu0 0.0
  %3284 = vmatpush1.msra.mxu0 0.0
  %3285 = vmatprep.subr.mxu0 0.0
  %3286 = vmatpush1.msra.mxu0 0.0
  %3287 = vmatprep.subr.mxu0 0.0
  %3288 = vmatpush1.msra.mxu0 0.0
  %3289 = vmatprep.subr.mxu0 0.0
  %3290 = vmatpush1.msra.mxu0 0.0
  %3291 = vmatprep.subr.mxu0 0.0
  %3292 = vmatpush1.msra.mxu0 0.0
  %3293 = vmatprep.subr.mxu0 0.0
  %3294 = vmatpush1.msra.mxu0 0.0
  %3295 = vmatprep.subr.mxu0 0.0
  %3296 = vmatpush1.msra.mxu0 0.0
  %3297 = vmatprep.mubr.f32.mxu0 0.0
  %v3298 = vand.u32 %v2916, 4294901760
  %3299 = vmatmul.mubr.f32.gmra.mrb[0].mxu0 %v3298
  %v3300 = vpop.f32.mrb[0].mxu0
  %v3301 = vadd.f32 %v3224, %v3300
  %v3302 = vpop.f32.mrb[0].mxu0
  %3303 = vdwg.mxu0
  %3304 = vmatprep.subr.mxu0 0.0
  %v3305 = vand.u32 %v14, 4294901760
  %3306 = vmatpush1.msra.mxu0 %v3305
  %3307 = vmatprep.subr.mxu0 0.0
  %v3308 = vand.u32 %v15, 4294901760
  %3309 = vmatpush1.msra.mxu0 %v3308
  %3310 = vmatprep.subr.mxu0 0.0
  %3311 = vmatpush1.msra.mxu0 0.0
  %3312 = vmatprep.subr.mxu0 0.0
  %3313 = vmatpush1.msra.mxu0 0.0
  %3314 = vmatprep.subr.mxu0 0.0
  %3315 = vmatpush1.msra.mxu0 0.0
  %3316 = vmatprep.subr.mxu0 0.0
  %3317 = vmatpush1.msra.mxu0 0.0
  %3318 = vmatprep.subr.mxu0 0.0
  %3319 = vmatpush1.msra.mxu0 0.0
  %3320 = vmatprep.subr.mxu0 0.0
  %3321 = vmatpush1.msra.mxu0 0.0
  %3322 = vmatprep.subr.mxu0 0.0
  %3323 = vmatpush1.msra.mxu0 0.0
  %3324 = vmatprep.subr.mxu0 0.0
  %3325 = vmatpush1.msra.mxu0 0.0
  %3326 = vmatprep.subr.mxu0 0.0
  %3327 = vmatpush1.msra.mxu0 0.0
  %3328 = vmatprep.subr.mxu0 0.0
  %3329 = vmatpush1.msra.mxu0 0.0
  %3330 = vmatprep.subr.mxu0 0.0
  %3331 = vmatpush1.msra.mxu0 0.0
  %3332 = vmatprep.subr.mxu0 0.0
  %3333 = vmatpush1.msra.mxu0 0.0
  %3334 = vmatprep.subr.mxu0 0.0
  %3335 = vmatpush1.msra.mxu0 0.0
  %3336 = vmatprep.subr.mxu0 0.0
  %3337 = vmatpush1.msra.mxu0 0.0
  %3338 = vmatprep.subr.mxu0 0.0
  %3339 = vmatpush1.msra.mxu0 0.0
  %3340 = vmatprep.subr.mxu0 0.0
  %3341 = vmatpush1.msra.mxu0 0.0
  %3342 = vmatprep.subr.mxu0 0.0
  %3343 = vmatpush1.msra.mxu0 0.0
  %3344 = vmatprep.subr.mxu0 0.0
  %3345 = vmatpush1.msra.mxu0 0.0
  %3346 = vmatprep.subr.mxu0 0.0
  %3347 = vmatpush1.msra.mxu0 0.0
  %3348 = vmatprep.subr.mxu0 0.0
  %3349 = vmatpush1.msra.mxu0 0.0
  %3350 = vmatprep.subr.mxu0 0.0
  %3351 = vmatpush1.msra.mxu0 0.0
  %3352 = vmatprep.subr.mxu0 0.0
  %3353 = vmatpush1.msra.mxu0 0.0
  %3354 = vmatprep.subr.mxu0 0.0
  %3355 = vmatpush1.msra.mxu0 0.0
  %3356 = vmatprep.subr.mxu0 0.0
  %3357 = vmatpush1.msra.mxu0 0.0
  %3358 = vmatprep.subr.mxu0 0.0
  %3359 = vmatpush1.msra.mxu0 0.0
  %3360 = vmatprep.subr.mxu0 0.0
  %3361 = vmatpush1.msra.mxu0 0.0
  %3362 = vmatprep.subr.mxu0 0.0
  %3363 = vmatpush1.msra.mxu0 0.0
  %3364 = vmatprep.subr.mxu0 0.0
  %3365 = vmatpush1.msra.mxu0 0.0
  %3366 = vmatprep.subr.mxu0 0.0
  %3367 = vmatpush1.msra.mxu0 0.0
  %3368 = vmatprep.subr.mxu0 0.0
  %3369 = vmatpush1.msra.mxu0 0.0
  %3370 = vmatprep.mubr.f32.mxu0 0.0
  %v3371 = vand.u32 %v2916, 4294901760
  %3372 = vmatmul.mubr.f32.gmra.mrb[0].mxu0 %v3371
  %v3373 = vpop.f32.mrb[0].mxu0
  %v3374 = vadd.f32 %v3301, %v3373
  %v3375 = vpop.f32.mrb[0].mxu0
  %3376 = vdwg.mxu0
  %s3377 = scalar_lea.vmem [#allocation2], 24
  %3378 = vst.msk [vmem:[%s3377] sm:$0xff] %vm55, %v3374
  %3379 = vmatprep.subr.mxu0 0.0
  %v3380 = vand.u32 %v16, 4294901760
  %3381 = vmatpush1.msra.mxu0 %v3380
  %3382 = vmatprep.subr.mxu0 0.0
  %v3383 = vand.u32 %v17, 4294901760
  %3384 = vmatpush1.msra.mxu0 %v3383
  %3385 = vmatprep.subr.mxu0 0.0
  %3386 = vmatpush1.msra.mxu0 0.0
  %3387 = vmatprep.subr.mxu0 0.0
  %3388 = vmatpush1.msra.mxu0 0.0
  %3389 = vmatprep.subr.mxu0 0.0
  %3390 = vmatpush1.msra.mxu0 0.0
  %3391 = vmatprep.subr.mxu0 0.0
  %3392 = vmatpush1.msra.mxu0 0.0
  %3393 = vmatprep.subr.mxu0 0.0
  %3394 = vmatpush1.msra.mxu0 0.0
  %3395 = vmatprep.subr.mxu0 0.0
  %3396 = vmatpush1.msra.mxu0 0.0
  %3397 = vmatprep.subr.mxu0 0.0
  %3398 = vmatpush1.msra.mxu0 0.0
  %3399 = vmatprep.subr.mxu0 0.0
  %3400 = vmatpush1.msra.mxu0 0.0
  %3401 = vmatprep.subr.mxu0 0.0
  %3402 = vmatpush1.msra.mxu0 0.0
  %3403 = vmatprep.subr.mxu0 0.0
  %3404 = vmatpush1.msra.mxu0 0.0
  %3405 = vmatprep.subr.mxu0 0.0
  %3406 = vmatpush1.msra.mxu0 0.0
  %3407 = vmatprep.subr.mxu0 0.0
  %3408 = vmatpush1.msra.mxu0 0.0
  %3409 = vmatprep.subr.mxu0 0.0
  %3410 = vmatpush1.msra.mxu0 0.0
  %3411 = vmatprep.subr.mxu0 0.0
  %3412 = vmatpush1.msra.mxu0 0.0
  %3413 = vmatprep.subr.mxu0 0.0
  %3414 = vmatpush1.msra.mxu0 0.0
  %3415 = vmatprep.subr.mxu0 0.0
  %3416 = vmatpush1.msra.mxu0 0.0
  %3417 = vmatprep.subr.mxu0 0.0
  %3418 = vmatpush1.msra.mxu0 0.0
  %3419 = vmatprep.subr.mxu0 0.0
  %3420 = vmatpush1.msra.mxu0 0.0
  %3421 = vmatprep.subr.mxu0 0.0
  %3422 = vmatpush1.msra.mxu0 0.0
  %3423 = vmatprep.subr.mxu0 0.0
  %3424 = vmatpush1.msra.mxu0 0.0
  %3425 = vmatprep.subr.mxu0 0.0
  %3426 = vmatpush1.msra.mxu0 0.0
  %3427 = vmatprep.subr.mxu0 0.0
  %3428 = vmatpush1.msra.mxu0 0.0
  %3429 = vmatprep.subr.mxu0 0.0
  %3430 = vmatpush1.msra.mxu0 0.0
  %3431 = vmatprep.subr.mxu0 0.0
  %3432 = vmatpush1.msra.mxu0 0.0
  %3433 = vmatprep.subr.mxu0 0.0
  %3434 = vmatpush1.msra.mxu0 0.0
  %3435 = vmatprep.subr.mxu0 0.0
  %3436 = vmatpush1.msra.mxu0 0.0
  %3437 = vmatprep.subr.mxu0 0.0
  %3438 = vmatpush1.msra.mxu0 0.0
  %3439 = vmatprep.subr.mxu0 0.0
  %3440 = vmatpush1.msra.mxu0 0.0
  %3441 = vmatprep.subr.mxu0 0.0
  %3442 = vmatpush1.msra.mxu0 0.0
  %3443 = vmatprep.subr.mxu0 0.0
  %3444 = vmatpush1.msra.mxu0 0.0
  %3445 = vmatprep.mubr.f32.mxu0 0.0
  %v3446 = vand.u32 %v2916, 4294901760
  %v3447 = vsub.f32 %v2916, %v3446
  %v3448 = vand.u32 %v3447, 4294901760
  %v3449 = vsub.f32 %v3447, %v3448
  %v3450 = vand.u32 %v3449, 4294901760
  %3451 = vmatmul.mubr.f32.gmra.mrb[0].mxu0 %v3450
  %v3452 = vpop.f32.mrb[0].mxu0
  %v3453 = vadd.f32 0.0, %v3452
  %v3454 = vpop.f32.mrb[0].mxu0
  %3455 = vdwg.mxu0
  %3456 = vmatprep.subr.mxu0 0.0
  %v3457 = vand.u32 %v16, 4294901760
  %v3458 = vsub.f32 %v16, %v3457
  %v3459 = vand.u32 %v3458, 4294901760
  %v3460 = vsub.f32 %v3458, %v3459
  %v3461 = vand.u32 %v3460, 4294901760
  %3462 = vmatpush1.msra.mxu0 %v3461
  %3463 = vmatprep.subr.mxu0 0.0
  %v3464 = vand.u32 %v17, 4294901760
  %v3465 = vsub.f32 %v17, %v3464
  %v3466 = vand.u32 %v3465, 4294901760
  %v3467 = vsub.f32 %v3465, %v3466
  %v3468 = vand.u32 %v3467, 4294901760
  %3469 = vmatpush1.msra.mxu0 %v3468
  %3470 = vmatprep.subr.mxu0 0.0
  %3471 = vmatpush1.msra.mxu0 0.0
  %3472 = vmatprep.subr.mxu0 0.0
  %3473 = vmatpush1.msra.mxu0 0.0
  %3474 = vmatprep.subr.mxu0 0.0
  %3475 = vmatpush1.msra.mxu0 0.0
  %3476 = vmatprep.subr.mxu0 0.0
  %3477 = vmatpush1.msra.mxu0 0.0
  %3478 = vmatprep.subr.mxu0 0.0
  %3479 = vmatpush1.msra.mxu0 0.0
  %3480 = vmatprep.subr.mxu0 0.0
  %3481 = vmatpush1.msra.mxu0 0.0
  %3482 = vmatprep.subr.mxu0 0.0
  %3483 = vmatpush1.msra.mxu0 0.0
  %3484 = vmatprep.subr.mxu0 0.0
  %3485 = vmatpush1.msra.mxu0 0.0
  %3486 = vmatprep.subr.mxu0 0.0
  %3487 = vmatpush1.msra.mxu0 0.0
  %3488 = vmatprep.subr.mxu0 0.0
  %3489 = vmatpush1.msra.mxu0 0.0
  %3490 = vmatprep.subr.mxu0 0.0
  %3491 = vmatpush1.msra.mxu0 0.0
  %3492 = vmatprep.subr.mxu0 0.0
  %3493 = vmatpush1.msra.mxu0 0.0
  %3494 = vmatprep.subr.mxu0 0.0
  %3495 = vmatpush1.msra.mxu0 0.0
  %3496 = vmatprep.subr.mxu0 0.0
  %3497 = vmatpush1.msra.mxu0 0.0
  %3498 = vmatprep.subr.mxu0 0.0
  %3499 = vmatpush1.msra.mxu0 0.0
  %3500 = vmatprep.subr.mxu0 0.0
  %3501 = vmatpush1.msra.mxu0 0.0
  %3502 = vmatprep.subr.mxu0 0.0
  %3503 = vmatpush1.msra.mxu0 0.0
  %3504 = vmatprep.subr.mxu0 0.0
  %3505 = vmatpush1.msra.mxu0 0.0
  %3506 = vmatprep.subr.mxu0 0.0
  %3507 = vmatpush1.msra.mxu0 0.0
  %3508 = vmatprep.subr.mxu0 0.0
  %3509 = vmatpush1.msra.mxu0 0.0
  %3510 = vmatprep.subr.mxu0 0.0
  %3511 = vmatpush1.msra.mxu0 0.0
  %3512 = vmatprep.subr.mxu0 0.0
  %3513 = vmatpush1.msra.mxu0 0.0
  %3514 = vmatprep.subr.mxu0 0.0
  %3515 = vmatpush1.msra.mxu0 0.0
  %3516 = vmatprep.subr.mxu0 0.0
  %3517 = vmatpush1.msra.mxu0 0.0
  %3518 = vmatprep.subr.mxu0 0.0
  %3519 = vmatpush1.msra.mxu0 0.0
  %3520 = vmatprep.subr.mxu0 0.0
  %3521 = vmatpush1.msra.mxu0 0.0
  %3522 = vmatprep.subr.mxu0 0.0
  %3523 = vmatpush1.msra.mxu0 0.0
  %3524 = vmatprep.subr.mxu0 0.0
  %3525 = vmatpush1.msra.mxu0 0.0
  %3526 = vmatprep.subr.mxu0 0.0
  %3527 = vmatpush1.msra.mxu0 0.0
  %3528 = vmatprep.subr.mxu0 0.0
  %3529 = vmatpush1.msra.mxu0 0.0
  %3530 = vmatprep.mubr.f32.mxu0 0.0
  %v3531 = vand.u32 %v2916, 4294901760
  %3532 = vmatmul.mubr.f32.gmra.mrb[0].mxu0 %v3531
  %v3533 = vpop.f32.mrb[0].mxu0
  %v3534 = vadd.f32 %v3453, %v3533
  %v3535 = vpop.f32.mrb[0].mxu0
  %3536 = vdwg.mxu0
  %3537 = vmatprep.subr.mxu0 0.0
  %v3538 = vand.u32 %v16, 4294901760
  %v3539 = vsub.f32 %v16, %v3538
  %3540 = vmatpush1.msra.mxu0 %v3539
  %3541 = vmatprep.subr.mxu0 0.0
  %v3542 = vand.u32 %v17, 4294901760
  %v3543 = vsub.f32 %v17, %v3542
  %3544 = vmatpush1.msra.mxu0 %v3543
  %3545 = vmatprep.subr.mxu0 0.0
  %3546 = vmatpush1.msra.mxu0 0.0
  %3547 = vmatprep.subr.mxu0 0.0
  %3548 = vmatpush1.msra.mxu0 0.0
  %3549 = vmatprep.subr.mxu0 0.0
  %3550 = vmatpush1.msra.mxu0 0.0
  %3551 = vmatprep.subr.mxu0 0.0
  %3552 = vmatpush1.msra.mxu0 0.0
  %3553 = vmatprep.subr.mxu0 0.0
  %3554 = vmatpush1.msra.mxu0 0.0
  %3555 = vmatprep.subr.mxu0 0.0
  %3556 = vmatpush1.msra.mxu0 0.0
  %3557 = vmatprep.subr.mxu0 0.0
  %3558 = vmatpush1.msra.mxu0 0.0
  %3559 = vmatprep.subr.mxu0 0.0
  %3560 = vmatpush1.msra.mxu0 0.0
  %3561 = vmatprep.subr.mxu0 0.0
  %3562 = vmatpush1.msra.mxu0 0.0
  %3563 = vmatprep.subr.mxu0 0.0
  %3564 = vmatpush1.msra.mxu0 0.0
  %3565 = vmatprep.subr.mxu0 0.0
  %3566 = vmatpush1.msra.mxu0 0.0
  %3567 = vmatprep.subr.mxu0 0.0
  %3568 = vmatpush1.msra.mxu0 0.0
  %3569 = vmatprep.subr.mxu0 0.0
  %3570 = vmatpush1.msra.mxu0 0.0
  %3571 = vmatprep.subr.mxu0 0.0
  %3572 = vmatpush1.msra.mxu0 0.0
  %3573 = vmatprep.subr.mxu0 0.0
  %3574 = vmatpush1.msra.mxu0 0.0
  %3575 = vmatprep.subr.mxu0 0.0
  %3576 = vmatpush1.msra.mxu0 0.0
  %3577 = vmatprep.subr.mxu0 0.0
  %3578 = vmatpush1.msra.mxu0 0.0
  %3579 = vmatprep.subr.mxu0 0.0
  %3580 = vmatpush1.msra.mxu0 0.0
  %3581 = vmatprep.subr.mxu0 0.0
  %3582 = vmatpush1.msra.mxu0 0.0
  %3583 = vmatprep.subr.mxu0 0.0
  %3584 = vmatpush1.msra.mxu0 0.0
  %3585 = vmatprep.subr.mxu0 0.0
  %3586 = vmatpush1.msra.mxu0 0.0
  %3587 = vmatprep.subr.mxu0 0.0
  %3588 = vmatpush1.msra.mxu0 0.0
  %3589 = vmatprep.subr.mxu0 0.0
  %3590 = vmatpush1.msra.mxu0 0.0
  %3591 = vmatprep.subr.mxu0 0.0
  %3592 = vmatpush1.msra.mxu0 0.0
  %3593 = vmatprep.subr.mxu0 0.0
  %3594 = vmatpush1.msra.mxu0 0.0
  %3595 = vmatprep.subr.mxu0 0.0
  %3596 = vmatpush1.msra.mxu0 0.0
  %3597 = vmatprep.subr.mxu0 0.0
  %3598 = vmatpush1.msra.mxu0 0.0
  %3599 = vmatprep.subr.mxu0 0.0
  %3600 = vmatpush1.msra.mxu0 0.0
  %3601 = vmatprep.subr.mxu0 0.0
  %3602 = vmatpush1.msra.mxu0 0.0
  %3603 = vmatprep.subr.mxu0 0.0
  %3604 = vmatpush1.msra.mxu0 0.0
  %3605 = vmatprep.mubr.f32.mxu0 0.0
  %v3606 = vand.u32 %v2916, 4294901760
  %v3607 = vsub.f32 %v2916, %v3606
  %3608 = vmatmul.mubr.f32.gmra.mrb[0].mxu0 %v3607
  %v3609 = vpop.f32.mrb[0].mxu0
  %v3610 = vadd.f32 %v3534, %v3609
  %v3611 = vpop.f32.mrb[0].mxu0
  %3612 = vdwg.mxu0
  %3613 = vmatprep.subr.mxu0 0.0
  %v3614 = vand.u32 %v16, 4294901760
  %3615 = vmatpush1.msra.mxu0 %v3614
  %3616 = vmatprep.subr.mxu0 0.0
  %v3617 = vand.u32 %v17, 4294901760
  %3618 = vmatpush1.msra.mxu0 %v3617
  %3619 = vmatprep.subr.mxu0 0.0
  %3620 = vmatpush1.msra.mxu0 0.0
  %3621 = vmatprep.subr.mxu0 0.0
  %3622 = vmatpush1.msra.mxu0 0.0
  %3623 = vmatprep.subr.mxu0 0.0
  %3624 = vmatpush1.msra.mxu0 0.0
  %3625 = vmatprep.subr.mxu0 0.0
  %3626 = vmatpush1.msra.mxu0 0.0
  %3627 = vmatprep.subr.mxu0 0.0
  %3628 = vmatpush1.msra.mxu0 0.0
  %3629 = vmatprep.subr.mxu0 0.0
  %3630 = vmatpush1.msra.mxu0 0.0
  %3631 = vmatprep.subr.mxu0 0.0
  %3632 = vmatpush1.msra.mxu0 0.0
  %3633 = vmatprep.subr.mxu0 0.0
  %3634 = vmatpush1.msra.mxu0 0.0
  %3635 = vmatprep.subr.mxu0 0.0
  %3636 = vmatpush1.msra.mxu0 0.0
  %3637 = vmatprep.subr.mxu0 0.0
  %3638 = vmatpush1.msra.mxu0 0.0
  %3639 = vmatprep.subr.mxu0 0.0
  %3640 = vmatpush1.msra.mxu0 0.0
  %3641 = vmatprep.subr.mxu0 0.0
  %3642 = vmatpush1.msra.mxu0 0.0
  %3643 = vmatprep.subr.mxu0 0.0
  %3644 = vmatpush1.msra.mxu0 0.0
  %3645 = vmatprep.subr.mxu0 0.0
  %3646 = vmatpush1.msra.mxu0 0.0
  %3647 = vmatprep.subr.mxu0 0.0
  %3648 = vmatpush1.msra.mxu0 0.0
  %3649 = vmatprep.subr.mxu0 0.0
  %3650 = vmatpush1.msra.mxu0 0.0
  %3651 = vmatprep.subr.mxu0 0.0
  %3652 = vmatpush1.msra.mxu0 0.0
  %3653 = vmatprep.subr.mxu0 0.0
  %3654 = vmatpush1.msra.mxu0 0.0
  %3655 = vmatprep.subr.mxu0 0.0
  %3656 = vmatpush1.msra.mxu0 0.0
  %3657 = vmatprep.subr.mxu0 0.0
  %3658 = vmatpush1.msra.mxu0 0.0
  %3659 = vmatprep.subr.mxu0 0.0
  %3660 = vmatpush1.msra.mxu0 0.0
  %3661 = vmatprep.subr.mxu0 0.0
  %3662 = vmatpush1.msra.mxu0 0.0
  %3663 = vmatprep.subr.mxu0 0.0
  %3664 = vmatpush1.msra.mxu0 0.0
  %3665 = vmatprep.subr.mxu0 0.0
  %3666 = vmatpush1.msra.mxu0 0.0
  %3667 = vmatprep.subr.mxu0 0.0
  %3668 = vmatpush1.msra.mxu0 0.0
  %3669 = vmatprep.subr.mxu0 0.0
  %3670 = vmatpush1.msra.mxu0 0.0
  %3671 = vmatprep.subr.mxu0 0.0
  %3672 = vmatpush1.msra.mxu0 0.0
  %3673 = vmatprep.subr.mxu0 0.0
  %3674 = vmatpush1.msra.mxu0 0.0
  %3675 = vmatprep.subr.mxu0 0.0
  %3676 = vmatpush1.msra.mxu0 0.0
  %3677 = vmatprep.subr.mxu0 0.0
  %3678 = vmatpush1.msra.mxu0 0.0
  %3679 = vmatprep.mubr.f32.mxu0 0.0
  %v3680 = vand.u32 %v2916, 4294901760
  %v3681 = vsub.f32 %v2916, %v3680
  %v3682 = vand.u32 %v3681, 4294901760
  %3683 = vmatmul.mubr.f32.gmra.mrb[0].mxu0 %v3682
  %v3684 = vpop.f32.mrb[0].mxu0
  %v3685 = vadd.f32 %v3610, %v3684
  %v3686 = vpop.f32.mrb[0].mxu0
  %3687 = vdwg.mxu0
  %3688 = vmatprep.subr.mxu0 0.0
  %v3689 = vand.u32 %v16, 4294901760
  %v3690 = vsub.f32 %v16, %v3689
  %v3691 = vand.u32 %v3690, 4294901760
  %3692 = vmatpush1.msra.mxu0 %v3691
  %3693 = vmatprep.subr.mxu0 0.0
  %v3694 = vand.u32 %v17, 4294901760
  %v3695 = vsub.f32 %v17, %v3694
  %v3696 = vand.u32 %v3695, 4294901760
  %3697 = vmatpush1.msra.mxu0 %v3696
  %3698 = vmatprep.subr.mxu0 0.0
  %3699 = vmatpush1.msra.mxu0 0.0
  %3700 = vmatprep.subr.mxu0 0.0
  %3701 = vmatpush1.msra.mxu0 0.0
  %3702 = vmatprep.subr.mxu0 0.0
  %3703 = vmatpush1.msra.mxu0 0.0
  %3704 = vmatprep.subr.mxu0 0.0
  %3705 = vmatpush1.msra.mxu0 0.0
  %3706 = vmatprep.subr.mxu0 0.0
  %3707 = vmatpush1.msra.mxu0 0.0
  %3708 = vmatprep.subr.mxu0 0.0
  %3709 = vmatpush1.msra.mxu0 0.0
  %3710 = vmatprep.subr.mxu0 0.0
  %3711 = vmatpush1.msra.mxu0 0.0
  %3712 = vmatprep.subr.mxu0 0.0
  %3713 = vmatpush1.msra.mxu0 0.0
  %3714 = vmatprep.subr.mxu0 0.0
  %3715 = vmatpush1.msra.mxu0 0.0
  %3716 = vmatprep.subr.mxu0 0.0
  %3717 = vmatpush1.msra.mxu0 0.0
  %3718 = vmatprep.subr.mxu0 0.0
  %3719 = vmatpush1.msra.mxu0 0.0
  %3720 = vmatprep.subr.mxu0 0.0
  %3721 = vmatpush1.msra.mxu0 0.0
  %3722 = vmatprep.subr.mxu0 0.0
  %3723 = vmatpush1.msra.mxu0 0.0
  %3724 = vmatprep.subr.mxu0 0.0
  %3725 = vmatpush1.msra.mxu0 0.0
  %3726 = vmatprep.subr.mxu0 0.0
  %3727 = vmatpush1.msra.mxu0 0.0
  %3728 = vmatprep.subr.mxu0 0.0
  %3729 = vmatpush1.msra.mxu0 0.0
  %3730 = vmatprep.subr.mxu0 0.0
  %3731 = vmatpush1.msra.mxu0 0.0
  %3732 = vmatprep.subr.mxu0 0.0
  %3733 = vmatpush1.msra.mxu0 0.0
  %3734 = vmatprep.subr.mxu0 0.0
  %3735 = vmatpush1.msra.mxu0 0.0
  %3736 = vmatprep.subr.mxu0 0.0
  %3737 = vmatpush1.msra.mxu0 0.0
  %3738 = vmatprep.subr.mxu0 0.0
  %3739 = vmatpush1.msra.mxu0 0.0
  %3740 = vmatprep.subr.mxu0 0.0
  %3741 = vmatpush1.msra.mxu0 0.0
  %3742 = vmatprep.subr.mxu0 0.0
  %3743 = vmatpush1.msra.mxu0 0.0
  %3744 = vmatprep.subr.mxu0 0.0
  %3745 = vmatpush1.msra.mxu0 0.0
  %3746 = vmatprep.subr.mxu0 0.0
  %3747 = vmatpush1.msra.mxu0 0.0
  %3748 = vmatprep.subr.mxu0 0.0
  %3749 = vmatpush1.msra.mxu0 0.0
  %3750 = vmatprep.subr.mxu0 0.0
  %3751 = vmatpush1.msra.mxu0 0.0
  %3752 = vmatprep.subr.mxu0 0.0
  %3753 = vmatpush1.msra.mxu0 0.0
  %3754 = vmatprep.subr.mxu0 0.0
  %3755 = vmatpush1.msra.mxu0 0.0
  %3756 = vmatprep.subr.mxu0 0.0
  %3757 = vmatpush1.msra.mxu0 0.0
  %3758 = vmatprep.mubr.f32.mxu0 0.0
  %v3759 = vand.u32 %v2916, 4294901760
  %3760 = vmatmul.mubr.f32.gmra.mrb[0].mxu0 %v3759
  %v3761 = vpop.f32.mrb[0].mxu0
  %v3762 = vadd.f32 %v3685, %v3761
  %v3763 = vpop.f32.mrb[0].mxu0
  %3764 = vdwg.mxu0
  %3765 = vmatprep.subr.mxu0 0.0
  %v3766 = vand.u32 %v16, 4294901760
  %3767 = vmatpush1.msra.mxu0 %v3766
  %3768 = vmatprep.subr.mxu0 0.0
  %v3769 = vand.u32 %v17, 4294901760
  %3770 = vmatpush1.msra.mxu0 %v3769
  %3771 = vmatprep.subr.mxu0 0.0
  %3772 = vmatpush1.msra.mxu0 0.0
  %3773 = vmatprep.subr.mxu0 0.0
  %3774 = vmatpush1.msra.mxu0 0.0
  %3775 = vmatprep.subr.mxu0 0.0
  %3776 = vmatpush1.msra.mxu0 0.0
  %3777 = vmatprep.subr.mxu0 0.0
  %3778 = vmatpush1.msra.mxu0 0.0
  %3779 = vmatprep.subr.mxu0 0.0
  %3780 = vmatpush1.msra.mxu0 0.0
  %3781 = vmatprep.subr.mxu0 0.0
  %3782 = vmatpush1.msra.mxu0 0.0
  %3783 = vmatprep.subr.mxu0 0.0
  %3784 = vmatpush1.msra.mxu0 0.0
  %3785 = vmatprep.subr.mxu0 0.0
  %3786 = vmatpush1.msra.mxu0 0.0
  %3787 = vmatprep.subr.mxu0 0.0
  %3788 = vmatpush1.msra.mxu0 0.0
  %3789 = vmatprep.subr.mxu0 0.0
  %3790 = vmatpush1.msra.mxu0 0.0
  %3791 = vmatprep.subr.mxu0 0.0
  %3792 = vmatpush1.msra.mxu0 0.0
  %3793 = vmatprep.subr.mxu0 0.0
  %3794 = vmatpush1.msra.mxu0 0.0
  %3795 = vmatprep.subr.mxu0 0.0
  %3796 = vmatpush1.msra.mxu0 0.0
  %3797 = vmatprep.subr.mxu0 0.0
  %3798 = vmatpush1.msra.mxu0 0.0
  %3799 = vmatprep.subr.mxu0 0.0
  %3800 = vmatpush1.msra.mxu0 0.0
  %3801 = vmatprep.subr.mxu0 0.0
  %3802 = vmatpush1.msra.mxu0 0.0
  %3803 = vmatprep.subr.mxu0 0.0
  %3804 = vmatpush1.msra.mxu0 0.0
  %3805 = vmatprep.subr.mxu0 0.0
  %3806 = vmatpush1.msra.mxu0 0.0
  %3807 = vmatprep.subr.mxu0 0.0
  %3808 = vmatpush1.msra.mxu0 0.0
  %3809 = vmatprep.subr.mxu0 0.0
  %3810 = vmatpush1.msra.mxu0 0.0
  %3811 = vmatprep.subr.mxu0 0.0
  %3812 = vmatpush1.msra.mxu0 0.0
  %3813 = vmatprep.subr.mxu0 0.0
  %3814 = vmatpush1.msra.mxu0 0.0
  %3815 = vmatprep.subr.mxu0 0.0
  %3816 = vmatpush1.msra.mxu0 0.0
  %3817 = vmatprep.subr.mxu0 0.0
  %3818 = vmatpush1.msra.mxu0 0.0
  %3819 = vmatprep.subr.mxu0 0.0
  %3820 = vmatpush1.msra.mxu0 0.0
  %3821 = vmatprep.subr.mxu0 0.0
  %3822 = vmatpush1.msra.mxu0 0.0
  %3823 = vmatprep.subr.mxu0 0.0
  %3824 = vmatpush1.msra.mxu0 0.0
  %3825 = vmatprep.subr.mxu0 0.0
  %3826 = vmatpush1.msra.mxu0 0.0
  %3827 = vmatprep.subr.mxu0 0.0
  %3828 = vmatpush1.msra.mxu0 0.0
  %3829 = vmatprep.subr.mxu0 0.0
  %3830 = vmatpush1.msra.mxu0 0.0
  %3831 = vmatprep.mubr.f32.mxu0 0.0
  %v3832 = vand.u32 %v2916, 4294901760
  %3833 = vmatmul.mubr.f32.gmra.mrb[0].mxu0 %v3832
  %v3834 = vpop.f32.mrb[0].mxu0
  %v3835 = vadd.f32 %v3762, %v3834
  %v3836 = vpop.f32.mrb[0].mxu0
  %3837 = vdwg.mxu0
  %s3838 = scalar_lea.vmem [#allocation3], 24
  %3839 = vst.msk [vmem:[%s3838] sm:$0xff] %vm55, %v3835
  %v3840 = vld [vmem:[#allocation2] sm:$0xff]
  %v3841 = vld [vmem:[#allocation3] sm:$0xff]
  %v3842 = vld [vmem:[%s1469] sm:$0xff]
  %v3843 = vld [vmem:[%s1930] sm:$0xff]
  %v3844 = vmul.f32 %v3840, %v3842
  %v3845 = vmul.f32 %v3841, %v3843
  %v3846 = vsub.f32 %v3844, %v3845
  %v3847 = vmul.f32 %v3840, %v3843
  %v3848 = vmul.f32 %v3841, %v3842
  %v3849 = vadd.f32 %v3847, %v3848
  %v3851 = vsel %vm55, %v3849, 0
  %3853 = vmatprep.subr.mxu0 0.0
  %v3854 = vand.u32 %v16, 4294901760
  %3855 = vmatpush1.msra.mxu0 %v3854
  %3856 = vmatprep.subr.mxu0 0.0
  %v3857 = vand.u32 %v17, 4294901760
  %3858 = vmatpush1.msra.mxu0 %v3857
  %3859 = vmatprep.subr.mxu0 0.0
  %3860 = vmatpush1.msra.mxu0 0.0
  %3861 = vmatprep.subr.mxu0 0.0
  %3862 = vmatpush1.msra.mxu0 0.0
  %3863 = vmatprep.subr.mxu0 0.0
  %3864 = vmatpush1.msra.mxu0 0.0
  %3865 = vmatprep.subr.mxu0 0.0
  %3866 = vmatpush1.msra.mxu0 0.0
  %3867 = vmatprep.subr.mxu0 0.0
  %3868 = vmatpush1.msra.mxu0 0.0
  %3869 = vmatprep.subr.mxu0 0.0
  %3870 = vmatpush1.msra.mxu0 0.0
  %3871 = vmatprep.subr.mxu0 0.0
  %3872 = vmatpush1.msra.mxu0 0.0
  %3873 = vmatprep.subr.mxu0 0.0
  %3874 = vmatpush1.msra.mxu0 0.0
  %3875 = vmatprep.subr.mxu0 0.0
  %3876 = vmatpush1.msra.mxu0 0.0
  %3877 = vmatprep.subr.mxu0 0.0
  %3878 = vmatpush1.msra.mxu0 0.0
  %3879 = vmatprep.subr.mxu0 0.0
  %3880 = vmatpush1.msra.mxu0 0.0
  %3881 = vmatprep.subr.mxu0 0.0
  %3882 = vmatpush1.msra.mxu0 0.0
  %3883 = vmatprep.subr.mxu0 0.0
  %3884 = vmatpush1.msra.mxu0 0.0
  %3885 = vmatprep.subr.mxu0 0.0
  %3886 = vmatpush1.msra.mxu0 0.0
  %3887 = vmatprep.subr.mxu0 0.0
  %3888 = vmatpush1.msra.mxu0 0.0
  %3889 = vmatprep.subr.mxu0 0.0
  %3890 = vmatpush1.msra.mxu0 0.0
  %3891 = vmatprep.subr.mxu0 0.0
  %3892 = vmatpush1.msra.mxu0 0.0
  %3893 = vmatprep.subr.mxu0 0.0
  %3894 = vmatpush1.msra.mxu0 0.0
  %3895 = vmatprep.subr.mxu0 0.0
  %3896 = vmatpush1.msra.mxu0 0.0
  %3897 = vmatprep.subr.mxu0 0.0
  %3898 = vmatpush1.msra.mxu0 0.0
  %3899 = vmatprep.subr.mxu0 0.0
  %3900 = vmatpush1.msra.mxu0 0.0
  %3901 = vmatprep.subr.mxu0 0.0
  %3902 = vmatpush1.msra.mxu0 0.0
  %3903 = vmatprep.subr.mxu0 0.0
  %3904 = vmatpush1.msra.mxu0 0.0
  %3905 = vmatprep.subr.mxu0 0.0
  %3906 = vmatpush1.msra.mxu0 0.0
  %3907 = vmatprep.subr.mxu0 0.0
  %3908 = vmatpush1.msra.mxu0 0.0
  %3909 = vmatprep.subr.mxu0 0.0
  %3910 = vmatpush1.msra.mxu0 0.0
  %3911 = vmatprep.subr.mxu0 0.0
  %3912 = vmatpush1.msra.mxu0 0.0
  %3913 = vmatprep.subr.mxu0 0.0
  %3914 = vmatpush1.msra.mxu0 0.0
  %3915 = vmatprep.subr.mxu0 0.0
  %3916 = vmatpush1.msra.mxu0 0.0
  %3917 = vmatprep.subr.mxu0 0.0
  %3918 = vmatpush1.msra.mxu0 0.0
  %3919 = vmatprep.mubr.f32.mxu0 0.0
  %v3920 = vand.u32 %v3851, 4294901760
  %v3921 = vsub.f32 %v3851, %v3920
  %v3922 = vand.u32 %v3921, 4294901760
  %v3923 = vsub.f32 %v3921, %v3922
  %v3924 = vand.u32 %v3923, 4294901760
  %3925 = vmatmul.mubr.f32.gmra.mrb[0].mxu0 %v3924
  %v3926 = vpop.f32.mrb[0].mxu0
  %v3927 = vadd.f32 0.0, %v3926
  %v3928 = vpop.f32.mrb[0].mxu0
  %3929 = vdwg.mxu0
  %3930 = vmatprep.subr.mxu0 0.0
  %v3931 = vand.u32 %v16, 4294901760
  %v3932 = vsub.f32 %v16, %v3931
  %v3933 = vand.u32 %v3932, 4294901760
  %v3934 = vsub.f32 %v3932, %v3933
  %v3935 = vand.u32 %v3934, 4294901760
  %3936 = vmatpush1.msra.mxu0 %v3935
  %3937 = vmatprep.subr.mxu0 0.0
  %v3938 = vand.u32 %v17, 4294901760
  %v3939 = vsub.f32 %v17, %v3938
  %v3940 = vand.u32 %v3939, 4294901760
  %v3941 = vsub.f32 %v3939, %v3940
  %v3942 = vand.u32 %v3941, 4294901760
  %3943 = vmatpush1.msra.mxu0 %v3942
  %3944 = vmatprep.subr.mxu0 0.0
  %3945 = vmatpush1.msra.mxu0 0.0
  %3946 = vmatprep.subr.mxu0 0.0
  %3947 = vmatpush1.msra.mxu0 0.0
  %3948 = vmatprep.subr.mxu0 0.0
  %3949 = vmatpush1.msra.mxu0 0.0
  %3950 = vmatprep.subr.mxu0 0.0
  %3951 = vmatpush1.msra.mxu0 0.0
  %3952 = vmatprep.subr.mxu0 0.0
  %3953 = vmatpush1.msra.mxu0 0.0
  %3954 = vmatprep.subr.mxu0 0.0
  %3955 = vmatpush1.msra.mxu0 0.0
  %3956 = vmatprep.subr.mxu0 0.0
  %3957 = vmatpush1.msra.mxu0 0.0
  %3958 = vmatprep.subr.mxu0 0.0
  %3959 = vmatpush1.msra.mxu0 0.0
  %3960 = vmatprep.subr.mxu0 0.0
  %3961 = vmatpush1.msra.mxu0 0.0
  %3962 = vmatprep.subr.mxu0 0.0
  %3963 = vmatpush1.msra.mxu0 0.0
  %3964 = vmatprep.subr.mxu0 0.0
  %3965 = vmatpush1.msra.mxu0 0.0
  %3966 = vmatprep.subr.mxu0 0.0
  %3967 = vmatpush1.msra.mxu0 0.0
  %3968 = vmatprep.subr.mxu0 0.0
  %3969 = vmatpush1.msra.mxu0 0.0
  %3970 = vmatprep.subr.mxu0 0.0
  %3971 = vmatpush1.msra.mxu0 0.0
  %3972 = vmatprep.subr.mxu0 0.0
  %3973 = vmatpush1.msra.mxu0 0.0
  %3974 = vmatprep.subr.mxu0 0.0
  %3975 = vmatpush1.msra.mxu0 0.0
  %3976 = vmatprep.subr.mxu0 0.0
  %3977 = vmatpush1.msra.mxu0 0.0
  %3978 = vmatprep.subr.mxu0 0.0
  %3979 = vmatpush1.msra.mxu0 0.0
  %3980 = vmatprep.subr.mxu0 0.0
  %3981 = vmatpush1.msra.mxu0 0.0
  %3982 = vmatprep.subr.mxu0 0.0
  %3983 = vmatpush1.msra.mxu0 0.0
  %3984 = vmatprep.subr.mxu0 0.0
  %3985 = vmatpush1.msra.mxu0 0.0
  %3986 = vmatprep.subr.mxu0 0.0
  %3987 = vmatpush1.msra.mxu0 0.0
  %3988 = vmatprep.subr.mxu0 0.0
  %3989 = vmatpush1.msra.mxu0 0.0
  %3990 = vmatprep.subr.mxu0 0.0
  %3991 = vmatpush1.msra.mxu0 0.0
  %3992 = vmatprep.subr.mxu0 0.0
  %3993 = vmatpush1.msra.mxu0 0.0
  %3994 = vmatprep.subr.mxu0 0.0
  %3995 = vmatpush1.msra.mxu0 0.0
  %3996 = vmatprep.subr.mxu0 0.0
  %3997 = vmatpush1.msra.mxu0 0.0
  %3998 = vmatprep.subr.mxu0 0.0
  %3999 = vmatpush1.msra.mxu0 0.0
  %4000 = vmatprep.subr.mxu0 0.0
  %4001 = vmatpush1.msra.mxu0 0.0
  %4002 = vmatprep.subr.mxu0 0.0
  %4003 = vmatpush1.msra.mxu0 0.0
  %4004 = vmatprep.mubr.f32.mxu0 0.0
  %v4005 = vand.u32 %v3851, 4294901760
  %4006 = vmatmul.mubr.f32.gmra.mrb[0].mxu0 %v4005
  %v4007 = vpop.f32.mrb[0].mxu0
  %v4008 = vadd.f32 %v3927, %v4007
  %v4009 = vpop.f32.mrb[0].mxu0
  %4010 = vdwg.mxu0
  %4011 = vmatprep.subr.mxu0 0.0
  %v4012 = vand.u32 %v16, 4294901760
  %v4013 = vsub.f32 %v16, %v4012
  %4014 = vmatpush1.msra.mxu0 %v4013
  %4015 = vmatprep.subr.mxu0 0.0
  %v4016 = vand.u32 %v17, 4294901760
  %v4017 = vsub.f32 %v17, %v4016
  %4018 = vmatpush1.msra.mxu0 %v4017
  %4019 = vmatprep.subr.mxu0 0.0
  %4020 = vmatpush1.msra.mxu0 0.0
  %4021 = vmatprep.subr.mxu0 0.0
  %4022 = vmatpush1.msra.mxu0 0.0
  %4023 = vmatprep.subr.mxu0 0.0
  %4024 = vmatpush1.msra.mxu0 0.0
  %4025 = vmatprep.subr.mxu0 0.0
  %4026 = vmatpush1.msra.mxu0 0.0
  %4027 = vmatprep.subr.mxu0 0.0
  %4028 = vmatpush1.msra.mxu0 0.0
  %4029 = vmatprep.subr.mxu0 0.0
  %4030 = vmatpush1.msra.mxu0 0.0
  %4031 = vmatprep.subr.mxu0 0.0
  %4032 = vmatpush1.msra.mxu0 0.0
  %4033 = vmatprep.subr.mxu0 0.0
  %4034 = vmatpush1.msra.mxu0 0.0
  %4035 = vmatprep.subr.mxu0 0.0
  %4036 = vmatpush1.msra.mxu0 0.0
  %4037 = vmatprep.subr.mxu0 0.0
  %4038 = vmatpush1.msra.mxu0 0.0
  %4039 = vmatprep.subr.mxu0 0.0
  %4040 = vmatpush1.msra.mxu0 0.0
  %4041 = vmatprep.subr.mxu0 0.0
  %4042 = vmatpush1.msra.mxu0 0.0
  %4043 = vmatprep.subr.mxu0 0.0
  %4044 = vmatpush1.msra.mxu0 0.0
  %4045 = vmatprep.subr.mxu0 0.0
  %4046 = vmatpush1.msra.mxu0 0.0
  %4047 = vmatprep.subr.mxu0 0.0
  %4048 = vmatpush1.msra.mxu0 0.0
  %4049 = vmatprep.subr.mxu0 0.0
  %4050 = vmatpush1.msra.mxu0 0.0
  %4051 = vmatprep.subr.mxu0 0.0
  %4052 = vmatpush1.msra.mxu0 0.0
  %4053 = vmatprep.subr.mxu0 0.0
  %4054 = vmatpush1.msra.mxu0 0.0
  %4055 = vmatprep.subr.mxu0 0.0
  %4056 = vmatpush1.msra.mxu0 0.0
  %4057 = vmatprep.subr.mxu0 0.0
  %4058 = vmatpush1.msra.mxu0 0.0
  %4059 = vmatprep.subr.mxu0 0.0
  %4060 = vmatpush1.msra.mxu0 0.0
  %4061 = vmatprep.subr.mxu0 0.0
  %4062 = vmatpush1.msra.mxu0 0.0
  %4063 = vmatprep.subr.mxu0 0.0
  %4064 = vmatpush1.msra.mxu0 0.0
  %4065 = vmatprep.subr.mxu0 0.0
  %4066 = vmatpush1.msra.mxu0 0.0
  %4067 = vmatprep.subr.mxu0 0.0
  %4068 = vmatpush1.msra.mxu0 0.0
  %4069 = vmatprep.subr.mxu0 0.0
  %4070 = vmatpush1.msra.mxu0 0.0
  %4071 = vmatprep.subr.mxu0 0.0
  %4072 = vmatpush1.msra.mxu0 0.0
  %4073 = vmatprep.subr.mxu0 0.0
  %4074 = vmatpush1.msra.mxu0 0.0
  %4075 = vmatprep.subr.mxu0 0.0
  %4076 = vmatpush1.msra.mxu0 0.0
  %4077 = vmatprep.subr.mxu0 0.0
  %4078 = vmatpush1.msra.mxu0 0.0
  %4079 = vmatprep.mubr.f32.mxu0 0.0
  %v4080 = vand.u32 %v3851, 4294901760
  %v4081 = vsub.f32 %v3851, %v4080
  %4082 = vmatmul.mubr.f32.gmra.mrb[0].mxu0 %v4081
  %v4083 = vpop.f32.mrb[0].mxu0
  %v4084 = vadd.f32 %v4008, %v4083
  %v4085 = vpop.f32.mrb[0].mxu0
  %4086 = vdwg.mxu0
  %4087 = vmatprep.subr.mxu0 0.0
  %v4088 = vand.u32 %v16, 4294901760
  %4089 = vmatpush1.msra.mxu0 %v4088
  %4090 = vmatprep.subr.mxu0 0.0
  %v4091 = vand.u32 %v17, 4294901760
  %4092 = vmatpush1.msra.mxu0 %v4091
  %4093 = vmatprep.subr.mxu0 0.0
  %4094 = vmatpush1.msra.mxu0 0.0
  %4095 = vmatprep.subr.mxu0 0.0
  %4096 = vmatpush1.msra.mxu0 0.0
  %4097 = vmatprep.subr.mxu0 0.0
  %4098 = vmatpush1.msra.mxu0 0.0
  %4099 = vmatprep.subr.mxu0 0.0
  %4100 = vmatpush1.msra.mxu0 0.0
  %4101 = vmatprep.subr.mxu0 0.0
  %4102 = vmatpush1.msra.mxu0 0.0
  %4103 = vmatprep.subr.mxu0 0.0
  %4104 = vmatpush1.msra.mxu0 0.0
  %4105 = vmatprep.subr.mxu0 0.0
  %4106 = vmatpush1.msra.mxu0 0.0
  %4107 = vmatprep.subr.mxu0 0.0
  %4108 = vmatpush1.msra.mxu0 0.0
  %4109 = vmatprep.subr.mxu0 0.0
  %4110 = vmatpush1.msra.mxu0 0.0
  %4111 = vmatprep.subr.mxu0 0.0
  %4112 = vmatpush1.msra.mxu0 0.0
  %4113 = vmatprep.subr.mxu0 0.0
  %4114 = vmatpush1.msra.mxu0 0.0
  %4115 = vmatprep.subr.mxu0 0.0
  %4116 = vmatpush1.msra.mxu0 0.0
  %4117 = vmatprep.subr.mxu0 0.0
  %4118 = vmatpush1.msra.mxu0 0.0
  %4119 = vmatprep.subr.mxu0 0.0
  %4120 = vmatpush1.msra.mxu0 0.0
  %4121 = vmatprep.subr.mxu0 0.0
  %4122 = vmatpush1.msra.mxu0 0.0
  %4123 = vmatprep.subr.mxu0 0.0
  %4124 = vmatpush1.msra.mxu0 0.0
  %4125 = vmatprep.subr.mxu0 0.0
  %4126 = vmatpush1.msra.mxu0 0.0
  %4127 = vmatprep.subr.mxu0 0.0
  %4128 = vmatpush1.msra.mxu0 0.0
  %4129 = vmatprep.subr.mxu0 0.0
  %4130 = vmatpush1.msra.mxu0 0.0
  %4131 = vmatprep.subr.mxu0 0.0
  %4132 = vmatpush1.msra.mxu0 0.0
  %4133 = vmatprep.subr.mxu0 0.0
  %4134 = vmatpush1.msra.mxu0 0.0
  %4135 = vmatprep.subr.mxu0 0.0
  %4136 = vmatpush1.msra.mxu0 0.0
  %4137 = vmatprep.subr.mxu0 0.0
  %4138 = vmatpush1.msra.mxu0 0.0
  %4139 = vmatprep.subr.mxu0 0.0
  %4140 = vmatpush1.msra.mxu0 0.0
  %4141 = vmatprep.subr.mxu0 0.0
  %4142 = vmatpush1.msra.mxu0 0.0
  %4143 = vmatprep.subr.mxu0 0.0
  %4144 = vmatpush1.msra.mxu0 0.0
  %4145 = vmatprep.subr.mxu0 0.0
  %4146 = vmatpush1.msra.mxu0 0.0
  %4147 = vmatprep.subr.mxu0 0.0
  %4148 = vmatpush1.msra.mxu0 0.0
  %4149 = vmatprep.subr.mxu0 0.0
  %4150 = vmatpush1.msra.mxu0 0.0
  %4151 = vmatprep.subr.mxu0 0.0
  %4152 = vmatpush1.msra.mxu0 0.0
  %4153 = vmatprep.mubr.f32.mxu0 0.0
  %v4154 = vand.u32 %v3851, 4294901760
  %v4155 = vsub.f32 %v3851, %v4154
  %v4156 = vand.u32 %v4155, 4294901760
  %4157 = vmatmul.mubr.f32.gmra.mrb[0].mxu0 %v4156
  %v4158 = vpop.f32.mrb[0].mxu0
  %v4159 = vadd.f32 %v4084, %v4158
  %v4160 = vpop.f32.mrb[0].mxu0
  %4161 = vdwg.mxu0
  %4162 = vmatprep.subr.mxu0 0.0
  %v4163 = vand.u32 %v16, 4294901760
  %v4164 = vsub.f32 %v16, %v4163
  %v4165 = vand.u32 %v4164, 4294901760
  %4166 = vmatpush1.msra.mxu0 %v4165
  %4167 = vmatprep.subr.mxu0 0.0
  %v4168 = vand.u32 %v17, 4294901760
  %v4169 = vsub.f32 %v17, %v4168
  %v4170 = vand.u32 %v4169, 4294901760
  %4171 = vmatpush1.msra.mxu0 %v4170
  %4172 = vmatprep.subr.mxu0 0.0
  %4173 = vmatpush1.msra.mxu0 0.0
  %4174 = vmatprep.subr.mxu0 0.0
  %4175 = vmatpush1.msra.mxu0 0.0
  %4176 = vmatprep.subr.mxu0 0.0
  %4177 = vmatpush1.msra.mxu0 0.0
  %4178 = vmatprep.subr.mxu0 0.0
  %4179 = vmatpush1.msra.mxu0 0.0
  %4180 = vmatprep.subr.mxu0 0.0
  %4181 = vmatpush1.msra.mxu0 0.0
  %4182 = vmatprep.subr.mxu0 0.0
  %4183 = vmatpush1.msra.mxu0 0.0
  %4184 = vmatprep.subr.mxu0 0.0
  %4185 = vmatpush1.msra.mxu0 0.0
  %4186 = vmatprep.subr.mxu0 0.0
  %4187 = vmatpush1.msra.mxu0 0.0
  %4188 = vmatprep.subr.mxu0 0.0
  %4189 = vmatpush1.msra.mxu0 0.0
  %4190 = vmatprep.subr.mxu0 0.0
  %4191 = vmatpush1.msra.mxu0 0.0
  %4192 = vmatprep.subr.mxu0 0.0
  %4193 = vmatpush1.msra.mxu0 0.0
  %4194 = vmatprep.subr.mxu0 0.0
  %4195 = vmatpush1.msra.mxu0 0.0
  %4196 = vmatprep.subr.mxu0 0.0
  %4197 = vmatpush1.msra.mxu0 0.0
  %4198 = vmatprep.subr.mxu0 0.0
  %4199 = vmatpush1.msra.mxu0 0.0
  %4200 = vmatprep.subr.mxu0 0.0
  %4201 = vmatpush1.msra.mxu0 0.0
  %4202 = vmatprep.subr.mxu0 0.0
  %4203 = vmatpush1.msra.mxu0 0.0
  %4204 = vmatprep.subr.mxu0 0.0
  %4205 = vmatpush1.msra.mxu0 0.0
  %4206 = vmatprep.subr.mxu0 0.0
  %4207 = vmatpush1.msra.mxu0 0.0
  %4208 = vmatprep.subr.mxu0 0.0
  %4209 = vmatpush1.msra.mxu0 0.0
  %4210 = vmatprep.subr.mxu0 0.0
  %4211 = vmatpush1.msra.mxu0 0.0
  %4212 = vmatprep.subr.mxu0 0.0
  %4213 = vmatpush1.msra.mxu0 0.0
  %4214 = vmatprep.subr.mxu0 0.0
  %4215 = vmatpush1.msra.mxu0 0.0
  %4216 = vmatprep.subr.mxu0 0.0
  %4217 = vmatpush1.msra.mxu0 0.0
  %4218 = vmatprep.subr.mxu0 0.0
  %4219 = vmatpush1.msra.mxu0 0.0
  %4220 = vmatprep.subr.mxu0 0.0
  %4221 = vmatpush1.msra.mxu0 0.0
  %4222 = vmatprep.subr.mxu0 0.0
  %4223 = vmatpush1.msra.mxu0 0.0
  %4224 = vmatprep.subr.mxu0 0.0
  %4225 = vmatpush1.msra.mxu0 0.0
  %4226 = vmatprep.subr.mxu0 0.0
  %4227 = vmatpush1.msra.mxu0 0.0
  %4228 = vmatprep.subr.mxu0 0.0
  %4229 = vmatpush1.msra.mxu0 0.0
  %4230 = vmatprep.subr.mxu0 0.0
  %4231 = vmatpush1.msra.mxu0 0.0
  %4232 = vmatprep.mubr.f32.mxu0 0.0
  %v4233 = vand.u32 %v3851, 4294901760
  %4234 = vmatmul.mubr.f32.gmra.mrb[0].mxu0 %v4233
  %v4235 = vpop.f32.mrb[0].mxu0
  %v4236 = vadd.f32 %v4159, %v4235
  %v4237 = vpop.f32.mrb[0].mxu0
  %4238 = vdwg.mxu0
  %4239 = vmatprep.subr.mxu0 0.0
  %v4240 = vand.u32 %v16, 4294901760
  %4241 = vmatpush1.msra.mxu0 %v4240
  %4242 = vmatprep.subr.mxu0 0.0
  %v4243 = vand.u32 %v17, 4294901760
  %4244 = vmatpush1.msra.mxu0 %v4243
  %4245 = vmatprep.subr.mxu0 0.0
  %4246 = vmatpush1.msra.mxu0 0.0
  %4247 = vmatprep.subr.mxu0 0.0
  %4248 = vmatpush1.msra.mxu0 0.0
  %4249 = vmatprep.subr.mxu0 0.0
  %4250 = vmatpush1.msra.mxu0 0.0
  %4251 = vmatprep.subr.mxu0 0.0
  %4252 = vmatpush1.msra.mxu0 0.0
  %4253 = vmatprep.subr.mxu0 0.0
  %4254 = vmatpush1.msra.mxu0 0.0
  %4255 = vmatprep.subr.mxu0 0.0
  %4256 = vmatpush1.msra.mxu0 0.0
  %4257 = vmatprep.subr.mxu0 0.0
  %4258 = vmatpush1.msra.mxu0 0.0
  %4259 = vmatprep.subr.mxu0 0.0
  %4260 = vmatpush1.msra.mxu0 0.0
  %4261 = vmatprep.subr.mxu0 0.0
  %4262 = vmatpush1.msra.mxu0 0.0
  %4263 = vmatprep.subr.mxu0 0.0
  %4264 = vmatpush1.msra.mxu0 0.0
  %4265 = vmatprep.subr.mxu0 0.0
  %4266 = vmatpush1.msra.mxu0 0.0
  %4267 = vmatprep.subr.mxu0 0.0
  %4268 = vmatpush1.msra.mxu0 0.0
  %4269 = vmatprep.subr.mxu0 0.0
  %4270 = vmatpush1.msra.mxu0 0.0
  %4271 = vmatprep.subr.mxu0 0.0
  %4272 = vmatpush1.msra.mxu0 0.0
  %4273 = vmatprep.subr.mxu0 0.0
  %4274 = vmatpush1.msra.mxu0 0.0
  %4275 = vmatprep.subr.mxu0 0.0
  %4276 = vmatpush1.msra.mxu0 0.0
  %4277 = vmatprep.subr.mxu0 0.0
  %4278 = vmatpush1.msra.mxu0 0.0
  %4279 = vmatprep.subr.mxu0 0.0
  %4280 = vmatpush1.msra.mxu0 0.0
  %4281 = vmatprep.subr.mxu0 0.0
  %4282 = vmatpush1.msra.mxu0 0.0
  %4283 = vmatprep.subr.mxu0 0.0
  %4284 = vmatpush1.msra.mxu0 0.0
  %4285 = vmatprep.subr.mxu0 0.0
  %4286 = vmatpush1.msra.mxu0 0.0
  %4287 = vmatprep.subr.mxu0 0.0
  %4288 = vmatpush1.msra.mxu0 0.0
  %4289 = vmatprep.subr.mxu0 0.0
  %4290 = vmatpush1.msra.mxu0 0.0
  %4291 = vmatprep.subr.mxu0 0.0
  %4292 = vmatpush1.msra.mxu0 0.0
  %4293 = vmatprep.subr.mxu0 0.0
  %4294 = vmatpush1.msra.mxu0 0.0
  %4295 = vmatprep.subr.mxu0 0.0
  %4296 = vmatpush1.msra.mxu0 0.0
  %4297 = vmatprep.subr.mxu0 0.0
  %4298 = vmatpush1.msra.mxu0 0.0
  %4299 = vmatprep.subr.mxu0 0.0
  %4300 = vmatpush1.msra.mxu0 0.0
  %4301 = vmatprep.subr.mxu0 0.0
  %4302 = vmatpush1.msra.mxu0 0.0
  %4303 = vmatprep.subr.mxu0 0.0
  %4304 = vmatpush1.msra.mxu0 0.0
  %4305 = vmatprep.mubr.f32.mxu0 0.0
  %v4306 = vand.u32 %v3851, 4294901760
  %4307 = vmatmul.mubr.f32.gmra.mrb[0].mxu0 %v4306
  %v4308 = vpop.f32.mrb[0].mxu0
  %v4309 = vadd.f32 %v4236, %v4308
  %v4310 = vpop.f32.mrb[0].mxu0
  %4311 = vdwg.mxu0
  %v4313 = vsel %vm55, %v3846, 0
  %4315 = vmatprep.subr.mxu0 0.0
  %v4316 = vand.u32 %v14, 4294901760
  %4317 = vmatpush1.msra.mxu0 %v4316
  %4318 = vmatprep.subr.mxu0 0.0
  %v4319 = vand.u32 %v15, 4294901760
  %4320 = vmatpush1.msra.mxu0 %v4319
  %4321 = vmatprep.subr.mxu0 0.0
  %4322 = vmatpush1.msra.mxu0 0.0
  %4323 = vmatprep.subr.mxu0 0.0
  %4324 = vmatpush1.msra.mxu0 0.0
  %4325 = vmatprep.subr.mxu0 0.0
  %4326 = vmatpush1.msra.mxu0 0.0
  %4327 = vmatprep.subr.mxu0 0.0
  %4328 = vmatpush1.msra.mxu0 0.0
  %4329 = vmatprep.subr.mxu0 0.0
  %4330 = vmatpush1.msra.mxu0 0.0
  %4331 = vmatprep.subr.mxu0 0.0
  %4332 = vmatpush1.msra.mxu0 0.0
  %4333 = vmatprep.subr.mxu0 0.0
  %4334 = vmatpush1.msra.mxu0 0.0
  %4335 = vmatprep.subr.mxu0 0.0
  %4336 = vmatpush1.msra.mxu0 0.0
  %4337 = vmatprep.subr.mxu0 0.0
  %4338 = vmatpush1.msra.mxu0 0.0
  %4339 = vmatprep.subr.mxu0 0.0
  %4340 = vmatpush1.msra.mxu0 0.0
  %4341 = vmatprep.subr.mxu0 0.0
  %4342 = vmatpush1.msra.mxu0 0.0
  %4343 = vmatprep.subr.mxu0 0.0
  %4344 = vmatpush1.msra.mxu0 0.0
  %4345 = vmatprep.subr.mxu0 0.0
  %4346 = vmatpush1.msra.mxu0 0.0
  %4347 = vmatprep.subr.mxu0 0.0
  %4348 = vmatpush1.msra.mxu0 0.0
  %4349 = vmatprep.subr.mxu0 0.0
  %4350 = vmatpush1.msra.mxu0 0.0
  %4351 = vmatprep.subr.mxu0 0.0
  %4352 = vmatpush1.msra.mxu0 0.0
  %4353 = vmatprep.subr.mxu0 0.0
  %4354 = vmatpush1.msra.mxu0 0.0
  %4355 = vmatprep.subr.mxu0 0.0
  %4356 = vmatpush1.msra.mxu0 0.0
  %4357 = vmatprep.subr.mxu0 0.0
  %4358 = vmatpush1.msra.mxu0 0.0
  %4359 = vmatprep.subr.mxu0 0.0
  %4360 = vmatpush1.msra.mxu0 0.0
  %4361 = vmatprep.subr.mxu0 0.0
  %4362 = vmatpush1.msra.mxu0 0.0
  %4363 = vmatprep.subr.mxu0 0.0
  %4364 = vmatpush1.msra.mxu0 0.0
  %4365 = vmatprep.subr.mxu0 0.0
  %4366 = vmatpush1.msra.mxu0 0.0
  %4367 = vmatprep.subr.mxu0 0.0
  %4368 = vmatpush1.msra.mxu0 0.0
  %4369 = vmatprep.subr.mxu0 0.0
  %4370 = vmatpush1.msra.mxu0 0.0
  %4371 = vmatprep.subr.mxu0 0.0
  %4372 = vmatpush1.msra.mxu0 0.0
  %4373 = vmatprep.subr.mxu0 0.0
  %4374 = vmatpush1.msra.mxu0 0.0
  %4375 = vmatprep.subr.mxu0 0.0
  %4376 = vmatpush1.msra.mxu0 0.0
  %4377 = vmatprep.subr.mxu0 0.0
  %4378 = vmatpush1.msra.mxu0 0.0
  %4379 = vmatprep.subr.mxu0 0.0
  %4380 = vmatpush1.msra.mxu0 0.0
  %4381 = vmatprep.mubr.f32.mxu0 0.0
  %v4382 = vand.u32 %v4313, 4294901760
  %v4383 = vsub.f32 %v4313, %v4382
  %v4384 = vand.u32 %v4383, 4294901760
  %v4385 = vsub.f32 %v4383, %v4384
  %v4386 = vand.u32 %v4385, 4294901760
  %4387 = vmatmul.mubr.f32.gmra.mrb[0].mxu0 %v4386
  %v4388 = vpop.f32.mrb[0].mxu0
  %v4389 = vadd.f32 %v4309, %v4388
  %v4390 = vpop.f32.mrb[0].mxu0
  %4391 = vdwg.mxu0
  %4392 = vmatprep.subr.mxu0 0.0
  %v4393 = vand.u32 %v14, 4294901760
  %v4394 = vsub.f32 %v14, %v4393
  %v4395 = vand.u32 %v4394, 4294901760
  %v4396 = vsub.f32 %v4394, %v4395
  %v4397 = vand.u32 %v4396, 4294901760
  %4398 = vmatpush1.msra.mxu0 %v4397
  %4399 = vmatprep.subr.mxu0 0.0
  %v4400 = vand.u32 %v15, 4294901760
  %v4401 = vsub.f32 %v15, %v4400
  %v4402 = vand.u32 %v4401, 4294901760
  %v4403 = vsub.f32 %v4401, %v4402
  %v4404 = vand.u32 %v4403, 4294901760
  %4405 = vmatpush1.msra.mxu0 %v4404
  %4406 = vmatprep.subr.mxu0 0.0
  %4407 = vmatpush1.msra.mxu0 0.0
  %4408 = vmatprep.subr.mxu0 0.0
  %4409 = vmatpush1.msra.mxu0 0.0
  %4410 = vmatprep.subr.mxu0 0.0
  %4411 = vmatpush1.msra.mxu0 0.0
  %4412 = vmatprep.subr.mxu0 0.0
  %4413 = vmatpush1.msra.mxu0 0.0
  %4414 = vmatprep.subr.mxu0 0.0
  %4415 = vmatpush1.msra.mxu0 0.0
  %4416 = vmatprep.subr.mxu0 0.0
  %4417 = vmatpush1.msra.mxu0 0.0
  %4418 = vmatprep.subr.mxu0 0.0
  %4419 = vmatpush1.msra.mxu0 0.0
  %4420 = vmatprep.subr.mxu0 0.0
  %4421 = vmatpush1.msra.mxu0 0.0
  %4422 = vmatprep.subr.mxu0 0.0
  %4423 = vmatpush1.msra.mxu0 0.0
  %4424 = vmatprep.subr.mxu0 0.0
  %4425 = vmatpush1.msra.mxu0 0.0
  %4426 = vmatprep.subr.mxu0 0.0
  %4427 = vmatpush1.msra.mxu0 0.0
  %4428 = vmatprep.subr.mxu0 0.0
  %4429 = vmatpush1.msra.mxu0 0.0
  %4430 = vmatprep.subr.mxu0 0.0
  %4431 = vmatpush1.msra.mxu0 0.0
  %4432 = vmatprep.subr.mxu0 0.0
  %4433 = vmatpush1.msra.mxu0 0.0
  %4434 = vmatprep.subr.mxu0 0.0
  %4435 = vmatpush1.msra.mxu0 0.0
  %4436 = vmatprep.subr.mxu0 0.0
  %4437 = vmatpush1.msra.mxu0 0.0
  %4438 = vmatprep.subr.mxu0 0.0
  %4439 = vmatpush1.msra.mxu0 0.0
  %4440 = vmatprep.subr.mxu0 0.0
  %4441 = vmatpush1.msra.mxu0 0.0
  %4442 = vmatprep.subr.mxu0 0.0
  %4443 = vmatpush1.msra.mxu0 0.0
  %4444 = vmatprep.subr.mxu0 0.0
  %4445 = vmatpush1.msra.mxu0 0.0
  %4446 = vmatprep.subr.mxu0 0.0
  %4447 = vmatpush1.msra.mxu0 0.0
  %4448 = vmatprep.subr.mxu0 0.0
  %4449 = vmatpush1.msra.mxu0 0.0
  %4450 = vmatprep.subr.mxu0 0.0
  %4451 = vmatpush1.msra.mxu0 0.0
  %4452 = vmatprep.subr.mxu0 0.0
  %4453 = vmatpush1.msra.mxu0 0.0
  %4454 = vmatprep.subr.mxu0 0.0
  %4455 = vmatpush1.msra.mxu0 0.0
  %4456 = vmatprep.subr.mxu0 0.0
  %4457 = vmatpush1.msra.mxu0 0.0
  %4458 = vmatprep.subr.mxu0 0.0
  %4459 = vmatpush1.msra.mxu0 0.0
  %4460 = vmatprep.subr.mxu0 0.0
  %4461 = vmatpush1.msra.mxu0 0.0
  %4462 = vmatprep.subr.mxu0 0.0
  %4463 = vmatpush1.msra.mxu0 0.0
  %4464 = vmatprep.subr.mxu0 0.0
  %4465 = vmatpush1.msra.mxu0 0.0
  %4466 = vmatprep.mubr.f32.mxu0 0.0
  %v4467 = vand.u32 %v4313, 4294901760
  %4468 = vmatmul.mubr.f32.gmra.mrb[0].mxu0 %v4467
  %v4469 = vpop.f32.mrb[0].mxu0
  %v4470 = vadd.f32 %v4389, %v4469
  %v4471 = vpop.f32.mrb[0].mxu0
  %4472 = vdwg.mxu0
  %4473 = vmatprep.subr.mxu0 0.0
  %v4474 = vand.u32 %v14, 4294901760
  %v4475 = vsub.f32 %v14, %v4474
  %4476 = vmatpush1.msra.mxu0 %v4475
  %4477 = vmatprep.subr.mxu0 0.0
  %v4478 = vand.u32 %v15, 4294901760
  %v4479 = vsub.f32 %v15, %v4478
  %4480 = vmatpush1.msra.mxu0 %v4479
  %4481 = vmatprep.subr.mxu0 0.0
  %4482 = vmatpush1.msra.mxu0 0.0
  %4483 = vmatprep.subr.mxu0 0.0
  %4484 = vmatpush1.msra.mxu0 0.0
  %4485 = vmatprep.subr.mxu0 0.0
  %4486 = vmatpush1.msra.mxu0 0.0
  %4487 = vmatprep.subr.mxu0 0.0
  %4488 = vmatpush1.msra.mxu0 0.0
  %4489 = vmatprep.subr.mxu0 0.0
  %4490 = vmatpush1.msra.mxu0 0.0
  %4491 = vmatprep.subr.mxu0 0.0
  %4492 = vmatpush1.msra.mxu0 0.0
  %4493 = vmatprep.subr.mxu0 0.0
  %4494 = vmatpush1.msra.mxu0 0.0
  %4495 = vmatprep.subr.mxu0 0.0
  %4496 = vmatpush1.msra.mxu0 0.0
  %4497 = vmatprep.subr.mxu0 0.0
  %4498 = vmatpush1.msra.mxu0 0.0
  %4499 = vmatprep.subr.mxu0 0.0
  %4500 = vmatpush1.msra.mxu0 0.0
  %4501 = vmatprep.subr.mxu0 0.0
  %4502 = vmatpush1.msra.mxu0 0.0
  %4503 = vmatprep.subr.mxu0 0.0
  %4504 = vmatpush1.msra.mxu0 0.0
  %4505 = vmatprep.subr.mxu0 0.0
  %4506 = vmatpush1.msra.mxu0 0.0
  %4507 = vmatprep.subr.mxu0 0.0
  %4508 = vmatpush1.msra.mxu0 0.0
  %4509 = vmatprep.subr.mxu0 0.0
  %4510 = vmatpush1.msra.mxu0 0.0
  %4511 = vmatprep.subr.mxu0 0.0
  %4512 = vmatpush1.msra.mxu0 0.0
  %4513 = vmatprep.subr.mxu0 0.0
  %4514 = vmatpush1.msra.mxu0 0.0
  %4515 = vmatprep.subr.mxu0 0.0
  %4516 = vmatpush1.msra.mxu0 0.0
  %4517 = vmatprep.subr.mxu0 0.0
  %4518 = vmatpush1.msra.mxu0 0.0
  %4519 = vmatprep.subr.mxu0 0.0
  %4520 = vmatpush1.msra.mxu0 0.0
  %4521 = vmatprep.subr.mxu0 0.0
  %4522 = vmatpush1.msra.mxu0 0.0
  %4523 = vmatprep.subr.mxu0 0.0
  %4524 = vmatpush1.msra.mxu0 0.0
  %4525 = vmatprep.subr.mxu0 0.0
  %4526 = vmatpush1.msra.mxu0 0.0
  %4527 = vmatprep.subr.mxu0 0.0
  %4528 = vmatpush1.msra.mxu0 0.0
  %4529 = vmatprep.subr.mxu0 0.0
  %4530 = vmatpush1.msra.mxu0 0.0
  %4531 = vmatprep.subr.mxu0 0.0
  %4532 = vmatpush1.msra.mxu0 0.0
  %4533 = vmatprep.subr.mxu0 0.0
  %4534 = vmatpush1.msra.mxu0 0.0
  %4535 = vmatprep.subr.mxu0 0.0
  %4536 = vmatpush1.msra.mxu0 0.0
  %4537 = vmatprep.subr.mxu0 0.0
  %4538 = vmatpush1.msra.mxu0 0.0
  %4539 = vmatprep.subr.mxu0 0.0
  %4540 = vmatpush1.msra.mxu0 0.0
  %4541 = vmatprep.mubr.f32.mxu0 0.0
  %v4542 = vand.u32 %v4313, 4294901760
  %v4543 = vsub.f32 %v4313, %v4542
  %4544 = vmatmul.mubr.f32.gmra.mrb[0].mxu0 %v4543
  %v4545 = vpop.f32.mrb[0].mxu0
  %v4546 = vadd.f32 %v4470, %v4545
  %v4547 = vpop.f32.mrb[0].mxu0
  %4548 = vdwg.mxu0
  %4549 = vmatprep.subr.mxu0 0.0
  %v4550 = vand.u32 %v14, 4294901760
  %4551 = vmatpush1.msra.mxu0 %v4550
  %4552 = vmatprep.subr.mxu0 0.0
  %v4553 = vand.u32 %v15, 4294901760
  %4554 = vmatpush1.msra.mxu0 %v4553
  %4555 = vmatprep.subr.mxu0 0.0
  %4556 = vmatpush1.msra.mxu0 0.0
  %4557 = vmatprep.subr.mxu0 0.0
  %4558 = vmatpush1.msra.mxu0 0.0
  %4559 = vmatprep.subr.mxu0 0.0
  %4560 = vmatpush1.msra.mxu0 0.0
  %4561 = vmatprep.subr.mxu0 0.0
  %4562 = vmatpush1.msra.mxu0 0.0
  %4563 = vmatprep.subr.mxu0 0.0
  %4564 = vmatpush1.msra.mxu0 0.0
  %4565 = vmatprep.subr.mxu0 0.0
  %4566 = vmatpush1.msra.mxu0 0.0
  %4567 = vmatprep.subr.mxu0 0.0
  %4568 = vmatpush1.msra.mxu0 0.0
  %4569 = vmatprep.subr.mxu0 0.0
  %4570 = vmatpush1.msra.mxu0 0.0
  %4571 = vmatprep.subr.mxu0 0.0
  %4572 = vmatpush1.msra.mxu0 0.0
  %4573 = vmatprep.subr.mxu0 0.0
  %4574 = vmatpush1.msra.mxu0 0.0
  %4575 = vmatprep.subr.mxu0 0.0
  %4576 = vmatpush1.msra.mxu0 0.0
  %4577 = vmatprep.subr.mxu0 0.0
  %4578 = vmatpush1.msra.mxu0 0.0
  %4579 = vmatprep.subr.mxu0 0.0
  %4580 = vmatpush1.msra.mxu0 0.0
  %4581 = vmatprep.subr.mxu0 0.0
  %4582 = vmatpush1.msra.mxu0 0.0
  %4583 = vmatprep.subr.mxu0 0.0
  %4584 = vmatpush1.msra.mxu0 0.0
  %4585 = vmatprep.subr.mxu0 0.0
  %4586 = vmatpush1.msra.mxu0 0.0
  %4587 = vmatprep.subr.mxu0 0.0
  %4588 = vmatpush1.msra.mxu0 0.0
  %4589 = vmatprep.subr.mxu0 0.0
  %4590 = vmatpush1.msra.mxu0 0.0
  %4591 = vmatprep.subr.mxu0 0.0
  %4592 = vmatpush1.msra.mxu0 0.0
  %4593 = vmatprep.subr.mxu0 0.0
  %4594 = vmatpush1.msra.mxu0 0.0
  %4595 = vmatprep.subr.mxu0 0.0
  %4596 = vmatpush1.msra.mxu0 0.0
  %4597 = vmatprep.subr.mxu0 0.0
  %4598 = vmatpush1.msra.mxu0 0.0
  %4599 = vmatprep.subr.mxu0 0.0
  %4600 = vmatpush1.msra.mxu0 0.0
  %4601 = vmatprep.subr.mxu0 0.0
  %4602 = vmatpush1.msra.mxu0 0.0
  %4603 = vmatprep.subr.mxu0 0.0
  %4604 = vmatpush1.msra.mxu0 0.0
  %4605 = vmatprep.subr.mxu0 0.0
  %4606 = vmatpush1.msra.mxu0 0.0
  %4607 = vmatprep.subr.mxu0 0.0
  %4608 = vmatpush1.msra.mxu0 0.0
  %4609 = vmatprep.subr.mxu0 0.0
  %4610 = vmatpush1.msra.mxu0 0.0
  %4611 = vmatprep.subr.mxu0 0.0
  %4612 = vmatpush1.msra.mxu0 0.0
  %4613 = vmatprep.subr.mxu0 0.0
  %4614 = vmatpush1.msra.mxu0 0.0
  %4615 = vmatprep.mubr.f32.mxu0 0.0
  %v4616 = vand.u32 %v4313, 4294901760
  %v4617 = vsub.f32 %v4313, %v4616
  %v4618 = vand.u32 %v4617, 4294901760
  %4619 = vmatmul.mubr.f32.gmra.mrb[0].mxu0 %v4618
  %v4620 = vpop.f32.mrb[0].mxu0
  %v4621 = vadd.f32 %v4546, %v4620
  %v4622 = vpop.f32.mrb[0].mxu0
  %4623 = vdwg.mxu0
  %4624 = vmatprep.subr.mxu0 0.0
  %v4625 = vand.u32 %v14, 4294901760
  %v4626 = vsub.f32 %v14, %v4625
  %v4627 = vand.u32 %v4626, 4294901760
  %4628 = vmatpush1.msra.mxu0 %v4627
  %4629 = vmatprep.subr.mxu0 0.0
  %v4630 = vand.u32 %v15, 4294901760
  %v4631 = vsub.f32 %v15, %v4630
  %v4632 = vand.u32 %v4631, 4294901760
  %4633 = vmatpush1.msra.mxu0 %v4632
  %4634 = vmatprep.subr.mxu0 0.0
  %4635 = vmatpush1.msra.mxu0 0.0
  %4636 = vmatprep.subr.mxu0 0.0
  %4637 = vmatpush1.msra.mxu0 0.0
  %4638 = vmatprep.subr.mxu0 0.0
  %4639 = vmatpush1.msra.mxu0 0.0
  %4640 = vmatprep.subr.mxu0 0.0
  %4641 = vmatpush1.msra.mxu0 0.0
  %4642 = vmatprep.subr.mxu0 0.0
  %4643 = vmatpush1.msra.mxu0 0.0
  %4644 = vmatprep.subr.mxu0 0.0
  %4645 = vmatpush1.msra.mxu0 0.0
  %4646 = vmatprep.subr.mxu0 0.0
  %4647 = vmatpush1.msra.mxu0 0.0
  %4648 = vmatprep.subr.mxu0 0.0
  %4649 = vmatpush1.msra.mxu0 0.0
  %4650 = vmatprep.subr.mxu0 0.0
  %4651 = vmatpush1.msra.mxu0 0.0
  %4652 = vmatprep.subr.mxu0 0.0
  %4653 = vmatpush1.msra.mxu0 0.0
  %4654 = vmatprep.subr.mxu0 0.0
  %4655 = vmatpush1.msra.mxu0 0.0
  %4656 = vmatprep.subr.mxu0 0.0
  %4657 = vmatpush1.msra.mxu0 0.0
  %4658 = vmatprep.subr.mxu0 0.0
  %4659 = vmatpush1.msra.mxu0 0.0
  %4660 = vmatprep.subr.mxu0 0.0
  %4661 = vmatpush1.msra.mxu0 0.0
  %4662 = vmatprep.subr.mxu0 0.0
  %4663 = vmatpush1.msra.mxu0 0.0
  %4664 = vmatprep.subr.mxu0 0.0
  %4665 = vmatpush1.msra.mxu0 0.0
  %4666 = vmatprep.subr.mxu0 0.0
  %4667 = vmatpush1.msra.mxu0 0.0
  %4668 = vmatprep.subr.mxu0 0.0
  %4669 = vmatpush1.msra.mxu0 0.0
  %4670 = vmatprep.subr.mxu0 0.0
  %4671 = vmatpush1.msra.mxu0 0.0
  %4672 = vmatprep.subr.mxu0 0.0
  %4673 = vmatpush1.msra.mxu0 0.0
  %4674 = vmatprep.subr.mxu0 0.0
  %4675 = vmatpush1.msra.mxu0 0.0
  %4676 = vmatprep.subr.mxu0 0.0
  %4677 = vmatpush1.msra.mxu0 0.0
  %4678 = vmatprep.subr.mxu0 0.0
  %4679 = vmatpush1.msra.mxu0 0.0
  %4680 = vmatprep.subr.mxu0 0.0
  %4681 = vmatpush1.msra.mxu0 0.0
  %4682 = vmatprep.subr.mxu0 0.0
  %4683 = vmatpush1.msra.mxu0 0.0
  %4684 = vmatprep.subr.mxu0 0.0
  %4685 = vmatpush1.msra.mxu0 0.0
  %4686 = vmatprep.subr.mxu0 0.0
  %4687 = vmatpush1.msra.mxu0 0.0
  %4688 = vmatprep.subr.mxu0 0.0
  %4689 = vmatpush1.msra.mxu0 0.0
  %4690 = vmatprep.subr.mxu0 0.0
  %4691 = vmatpush1.msra.mxu0 0.0
  %4692 = vmatprep.subr.mxu0 0.0
  %4693 = vmatpush1.msra.mxu0 0.0
  %4694 = vmatprep.mubr.f32.mxu0 0.0
  %v4695 = vand.u32 %v4313, 4294901760
  %4696 = vmatmul.mubr.f32.gmra.mrb[0].mxu0 %v4695
  %v4697 = vpop.f32.mrb[0].mxu0
  %v4698 = vadd.f32 %v4621, %v4697
  %v4699 = vpop.f32.mrb[0].mxu0
  %4700 = vdwg.mxu0
  %4701 = vmatprep.subr.mxu0 0.0
  %v4702 = vand.u32 %v14, 4294901760
  %4703 = vmatpush1.msra.mxu0 %v4702
  %4704 = vmatprep.subr.mxu0 0.0
  %v4705 = vand.u32 %v15, 4294901760
  %4706 = vmatpush1.msra.mxu0 %v4705
  %4707 = vmatprep.subr.mxu0 0.0
  %4708 = vmatpush1.msra.mxu0 0.0
  %4709 = vmatprep.subr.mxu0 0.0
  %4710 = vmatpush1.msra.mxu0 0.0
  %4711 = vmatprep.subr.mxu0 0.0
  %4712 = vmatpush1.msra.mxu0 0.0
  %4713 = vmatprep.subr.mxu0 0.0
  %4714 = vmatpush1.msra.mxu0 0.0
  %4715 = vmatprep.subr.mxu0 0.0
  %4716 = vmatpush1.msra.mxu0 0.0
  %4717 = vmatprep.subr.mxu0 0.0
  %4718 = vmatpush1.msra.mxu0 0.0
  %4719 = vmatprep.subr.mxu0 0.0
  %4720 = vmatpush1.msra.mxu0 0.0
  %4721 = vmatprep.subr.mxu0 0.0
  %4722 = vmatpush1.msra.mxu0 0.0
  %4723 = vmatprep.subr.mxu0 0.0
  %4724 = vmatpush1.msra.mxu0 0.0
  %4725 = vmatprep.subr.mxu0 0.0
  %4726 = vmatpush1.msra.mxu0 0.0
  %4727 = vmatprep.subr.mxu0 0.0
  %4728 = vmatpush1.msra.mxu0 0.0
  %4729 = vmatprep.subr.mxu0 0.0
  %4730 = vmatpush1.msra.mxu0 0.0
  %4731 = vmatprep.subr.mxu0 0.0
  %4732 = vmatpush1.msra.mxu0 0.0
  %4733 = vmatprep.subr.mxu0 0.0
  %4734 = vmatpush1.msra.mxu0 0.0
  %4735 = vmatprep.subr.mxu0 0.0
  %4736 = vmatpush1.msra.mxu0 0.0
  %4737 = vmatprep.subr.mxu0 0.0
  %4738 = vmatpush1.msra.mxu0 0.0
  %4739 = vmatprep.subr.mxu0 0.0
  %4740 = vmatpush1.msra.mxu0 0.0
  %4741 = vmatprep.subr.mxu0 0.0
  %4742 = vmatpush1.msra.mxu0 0.0
  %4743 = vmatprep.subr.mxu0 0.0
  %4744 = vmatpush1.msra.mxu0 0.0
  %4745 = vmatprep.subr.mxu0 0.0
  %4746 = vmatpush1.msra.mxu0 0.0
  %4747 = vmatprep.subr.mxu0 0.0
  %4748 = vmatpush1.msra.mxu0 0.0
  %4749 = vmatprep.subr.mxu0 0.0
  %4750 = vmatpush1.msra.mxu0 0.0
  %4751 = vmatprep.subr.mxu0 0.0
  %4752 = vmatpush1.msra.mxu0 0.0
  %4753 = vmatprep.subr.mxu0 0.0
  %4754 = vmatpush1.msra.mxu0 0.0
  %4755 = vmatprep.subr.mxu0 0.0
  %4756 = vmatpush1.msra.mxu0 0.0
  %4757 = vmatprep.subr.mxu0 0.0
  %4758 = vmatpush1.msra.mxu0 0.0
  %4759 = vmatprep.subr.mxu0 0.0
  %4760 = vmatpush1.msra.mxu0 0.0
  %4761 = vmatprep.subr.mxu0 0.0
  %4762 = vmatpush1.msra.mxu0 0.0
  %4763 = vmatprep.subr.mxu0 0.0
  %4764 = vmatpush1.msra.mxu0 0.0
  %4765 = vmatprep.subr.mxu0 0.0
  %4766 = vmatpush1.msra.mxu0 0.0
  %4767 = vmatprep.mubr.f32.mxu0 0.0
  %v4768 = vand.u32 %v4313, 4294901760
  %4769 = vmatmul.mubr.f32.gmra.mrb[0].mxu0 %v4768
  %v4770 = vpop.f32.mrb[0].mxu0
  %v4771 = vadd.f32 %v4698, %v4770
  %v4772 = vpop.f32.mrb[0].mxu0
  %4773 = vdwg.mxu0
  %v4774 = vmul.f32 %v4771, 0.0625
  %v4776 = vcombine.high %v4774, %v4774
  %v4778 = vunpack.c.l.s4 1966171168
  %v4779 = vunpack.c.0.s8 %v4778
  %v4780 = vlaneseq
  %v4781 = vshrl.u32 %v4780, 7
  %v4782 = vsub.s32 %v4779, %v4781
  %v4783 = vrot.slane %v4774, %v4782
  %v4785 = vunpack.c.l.s4 1966171168
  %v4786 = vunpack.c.0.s8 %v4785
  %v4787 = vlaneseq
  %v4788 = vshrl.u32 %v4787, 7
  %v4789 = vsub.s32 %v4786, %v4788
  %v4790 = vrot.slane %v4776, %v4789
  %v4791 = vcombine.high %v4783, %v4783
  %v4792 = vcombine.high %v4790, %v4790
  %v4794 = vunpack.c.l.s4 1966171168
  %v4795 = vunpack.c.0.s8 %v4794
  %v4796 = vlaneseq
  %v4797 = vshrl.u32 %v4796, 7
  %v4798 = vsub.s32 %v4795, %v4797
  %v4799 = vrot.slane %v4783, %v4798
  %v4801 = vunpack.c.l.s4 1966171168
  %v4802 = vunpack.c.0.s8 %v4801
  %v4803 = vlaneseq
  %v4804 = vshrl.u32 %v4803, 7
  %v4805 = vsub.s32 %v4802, %v4804
  %v4806 = vrot.slane %v4790, %v4805
  %v4808 = vunpack.c.l.s4 1966171168
  %v4809 = vunpack.c.0.s8 %v4808
  %v4810 = vlaneseq
  %v4811 = vshrl.u32 %v4810, 7
  %v4812 = vsub.s32 %v4809, %v4811
  %v4813 = vrot.slane %v4791, %v4812
  %v4815 = vunpack.c.l.s4 1966171168
  %v4816 = vunpack.c.0.s8 %v4815
  %v4817 = vlaneseq
  %v4818 = vshrl.u32 %v4817, 7
  %v4819 = vsub.s32 %v4816, %v4818
  %v4820 = vrot.slane %v4792, %v4819
  %v4821 = vcombine.high %v4799, %v4799
  %v4822 = vcombine.high %v4806, %v4806
  %v4823 = vcombine.high %v4813, %v4813
  %v4824 = vcombine.high %v4820, %v4820
  %vm4833 = vcmask 122880
  %4834 = vst.msk [vmem:[%s3] sm:$0x1] %vm4833, %v4799
  %4835 = vst.msk [vmem:[%s3 + $0x8] sm:$0x1] %vm4833, %v4813
  %4836 = vst.msk [vmem:[%s3 + $0x10] sm:$0x1] %vm4833, %v4821
  %4837 = vst.msk [vmem:[%s3 + $0x18] sm:$0x1] %vm4833, %v4823
  %4838 = vst.msk [vmem:[%s3 + $0x20] sm:$0x1] %vm4833, %v4806
  %4839 = vst.msk [vmem:[%s3 + $0x28] sm:$0x1] %vm4833, %v4820
  %4840 = vst.msk [vmem:[%s3 + $0x30] sm:$0x1] %vm4833, %v4822
  %4841 = vst.msk [vmem:[%s3 + $0x38] sm:$0x1] %vm4833, %v4824
  %v4842 = vld [vmem:[#allocation2] sm:$0xff]
  %v4843 = vld [vmem:[#allocation3] sm:$0xff]
  %v4844 = vld [vmem:[%s2423] sm:$0xff]
  %v4845 = vld [vmem:[%s2884] sm:$0xff]
  %v4846 = vmul.f32 %v4842, %v4844
  %v4847 = vmul.f32 %v4843, %v4845
  %v4848 = vsub.f32 %v4846, %v4847
  %v4849 = vmul.f32 %v4842, %v4845
  %v4850 = vmul.f32 %v4843, %v4844
  %v4851 = vadd.f32 %v4849, %v4850
  %v4853 = vsel %vm55, %v4851, 0
  %4855 = vmatprep.subr.mxu0 0.0
  %v4856 = vand.u32 %v16, 4294901760
  %4857 = vmatpush1.msra.mxu0 %v4856
  %4858 = vmatprep.subr.mxu0 0.0
  %v4859 = vand.u32 %v17, 4294901760
  %4860 = vmatpush1.msra.mxu0 %v4859
  %4861 = vmatprep.subr.mxu0 0.0
  %4862 = vmatpush1.msra.mxu0 0.0
  %4863 = vmatprep.subr.mxu0 0.0
  %4864 = vmatpush1.msra.mxu0 0.0
  %4865 = vmatprep.subr.mxu0 0.0
  %4866 = vmatpush1.msra.mxu0 0.0
  %4867 = vmatprep.subr.mxu0 0.0
  %4868 = vmatpush1.msra.mxu0 0.0
  %4869 = vmatprep.subr.mxu0 0.0
  %4870 = vmatpush1.msra.mxu0 0.0
  %4871 = vmatprep.subr.mxu0 0.0
  %4872 = vmatpush1.msra.mxu0 0.0
  %4873 = vmatprep.subr.mxu0 0.0
  %4874 = vmatpush1.msra.mxu0 0.0
  %4875 = vmatprep.subr.mxu0 0.0
  %4876 = vmatpush1.msra.mxu0 0.0
  %4877 = vmatprep.subr.mxu0 0.0
  %4878 = vmatpush1.msra.mxu0 0.0
  %4879 = vmatprep.subr.mxu0 0.0
  %4880 = vmatpush1.msra.mxu0 0.0
  %4881 = vmatprep.subr.mxu0 0.0
  %4882 = vmatpush1.msra.mxu0 0.0
  %4883 = vmatprep.subr.mxu0 0.0
  %4884 = vmatpush1.msra.mxu0 0.0
  %4885 = vmatprep.subr.mxu0 0.0
  %4886 = vmatpush1.msra.mxu0 0.0
  %4887 = vmatprep.subr.mxu0 0.0
  %4888 = vmatpush1.msra.mxu0 0.0
  %4889 = vmatprep.subr.mxu0 0.0
  %4890 = vmatpush1.msra.mxu0 0.0
  %4891 = vmatprep.subr.mxu0 0.0
  %4892 = vmatpush1.msra.mxu0 0.0
  %4893 = vmatprep.subr.mxu0 0.0
  %4894 = vmatpush1.msra.mxu0 0.0
  %4895 = vmatprep.subr.mxu0 0.0
  %4896 = vmatpush1.msra.mxu0 0.0
  %4897 = vmatprep.subr.mxu0 0.0
  %4898 = vmatpush1.msra.mxu0 0.0
  %4899 = vmatprep.subr.mxu0 0.0
  %4900 = vmatpush1.msra.mxu0 0.0
  %4901 = vmatprep.subr.mxu0 0.0
  %4902 = vmatpush1.msra.mxu0 0.0
  %4903 = vmatprep.subr.mxu0 0.0
  %4904 = vmatpush1.msra.mxu0 0.0
  %4905 = vmatprep.subr.mxu0 0.0
  %4906 = vmatpush1.msra.mxu0 0.0
  %4907 = vmatprep.subr.mxu0 0.0
  %4908 = vmatpush1.msra.mxu0 0.0
  %4909 = vmatprep.subr.mxu0 0.0
  %4910 = vmatpush1.msra.mxu0 0.0
  %4911 = vmatprep.subr.mxu0 0.0
  %4912 = vmatpush1.msra.mxu0 0.0
  %4913 = vmatprep.subr.mxu0 0.0
  %4914 = vmatpush1.msra.mxu0 0.0
  %4915 = vmatprep.subr.mxu0 0.0
  %4916 = vmatpush1.msra.mxu0 0.0
  %4917 = vmatprep.subr.mxu0 0.0
  %4918 = vmatpush1.msra.mxu0 0.0
  %4919 = vmatprep.subr.mxu0 0.0
  %4920 = vmatpush1.msra.mxu0 0.0
  %4921 = vmatprep.mubr.f32.mxu0 0.0
  %v4922 = vand.u32 %v4853, 4294901760
  %v4923 = vsub.f32 %v4853, %v4922
  %v4924 = vand.u32 %v4923, 4294901760
  %v4925 = vsub.f32 %v4923, %v4924
  %v4926 = vand.u32 %v4925, 4294901760
  %4927 = vmatmul.mubr.f32.gmra.mrb[0].mxu0 %v4926
  %v4928 = vpop.f32.mrb[0].mxu0
  %v4929 = vadd.f32 0.0, %v4928
  %v4930 = vpop.f32.mrb[0].mxu0
  %4931 = vdwg.mxu0
  %4932 = vmatprep.subr.mxu0 0.0
  %v4933 = vand.u32 %v16, 4294901760
  %v4934 = vsub.f32 %v16, %v4933
  %v4935 = vand.u32 %v4934, 4294901760
  %v4936 = vsub.f32 %v4934, %v4935
  %v4937 = vand.u32 %v4936, 4294901760
  %4938 = vmatpush1.msra.mxu0 %v4937
  %4939 = vmatprep.subr.mxu0 0.0
  %v4940 = vand.u32 %v17, 4294901760
  %v4941 = vsub.f32 %v17, %v4940
  %v4942 = vand.u32 %v4941, 4294901760
  %v4943 = vsub.f32 %v4941, %v4942
  %v4944 = vand.u32 %v4943, 4294901760
  %4945 = vmatpush1.msra.mxu0 %v4944
  %4946 = vmatprep.subr.mxu0 0.0
  %4947 = vmatpush1.msra.mxu0 0.0
  %4948 = vmatprep.subr.mxu0 0.0
  %4949 = vmatpush1.msra.mxu0 0.0
  %4950 = vmatprep.subr.mxu0 0.0
  %4951 = vmatpush1.msra.mxu0 0.0
  %4952 = vmatprep.subr.mxu0 0.0
  %4953 = vmatpush1.msra.mxu0 0.0
  %4954 = vmatprep.subr.mxu0 0.0
  %4955 = vmatpush1.msra.mxu0 0.0
  %4956 = vmatprep.subr.mxu0 0.0
  %4957 = vmatpush1.msra.mxu0 0.0
  %4958 = vmatprep.subr.mxu0 0.0
  %4959 = vmatpush1.msra.mxu0 0.0
  %4960 = vmatprep.subr.mxu0 0.0
  %4961 = vmatpush1.msra.mxu0 0.0
  %4962 = vmatprep.subr.mxu0 0.0
  %4963 = vmatpush1.msra.mxu0 0.0
  %4964 = vmatprep.subr.mxu0 0.0
  %4965 = vmatpush1.msra.mxu0 0.0
  %4966 = vmatprep.subr.mxu0 0.0
  %4967 = vmatpush1.msra.mxu0 0.0
  %4968 = vmatprep.subr.mxu0 0.0
  %4969 = vmatpush1.msra.mxu0 0.0
  %4970 = vmatprep.subr.mxu0 0.0
  %4971 = vmatpush1.msra.mxu0 0.0
  %4972 = vmatprep.subr.mxu0 0.0
  %4973 = vmatpush1.msra.mxu0 0.0
  %4974 = vmatprep.subr.mxu0 0.0
  %4975 = vmatpush1.msra.mxu0 0.0
  %4976 = vmatprep.subr.mxu0 0.0
  %4977 = vmatpush1.msra.mxu0 0.0
  %4978 = vmatprep.subr.mxu0 0.0
  %4979 = vmatpush1.msra.mxu0 0.0
  %4980 = vmatprep.subr.mxu0 0.0
  %4981 = vmatpush1.msra.mxu0 0.0
  %4982 = vmatprep.subr.mxu0 0.0
  %4983 = vmatpush1.msra.mxu0 0.0
  %4984 = vmatprep.subr.mxu0 0.0
  %4985 = vmatpush1.msra.mxu0 0.0
  %4986 = vmatprep.subr.mxu0 0.0
  %4987 = vmatpush1.msra.mxu0 0.0
  %4988 = vmatprep.subr.mxu0 0.0
  %4989 = vmatpush1.msra.mxu0 0.0
  %4990 = vmatprep.subr.mxu0 0.0
  %4991 = vmatpush1.msra.mxu0 0.0
  %4992 = vmatprep.subr.mxu0 0.0
  %4993 = vmatpush1.msra.mxu0 0.0
  %4994 = vmatprep.subr.mxu0 0.0
  %4995 = vmatpush1.msra.mxu0 0.0
  %4996 = vmatprep.subr.mxu0 0.0
  %4997 = vmatpush1.msra.mxu0 0.0
  %4998 = vmatprep.subr.mxu0 0.0
  %4999 = vmatpush1.msra.mxu0 0.0
  %5000 = vmatprep.subr.mxu0 0.0
  %5001 = vmatpush1.msra.mxu0 0.0
  %5002 = vmatprep.subr.mxu0 0.0
  %5003 = vmatpush1.msra.mxu0 0.0
  %5004 = vmatprep.subr.mxu0 0.0
  %5005 = vmatpush1.msra.mxu0 0.0
  %5006 = vmatprep.mubr.f32.mxu0 0.0
  %v5007 = vand.u32 %v4853, 4294901760
  %5008 = vmatmul.mubr.f32.gmra.mrb[0].mxu0 %v5007
  %v5009 = vpop.f32.mrb[0].mxu0
  %v5010 = vadd.f32 %v4929, %v5009
  %v5011 = vpop.f32.mrb[0].mxu0
  %5012 = vdwg.mxu0
  %5013 = vmatprep.subr.mxu0 0.0
  %v5014 = vand.u32 %v16, 4294901760
  %v5015 = vsub.f32 %v16, %v5014
  %5016 = vmatpush1.msra.mxu0 %v5015
  %5017 = vmatprep.subr.mxu0 0.0
  %v5018 = vand.u32 %v17, 4294901760
  %v5019 = vsub.f32 %v17, %v5018
  %5020 = vmatpush1.msra.mxu0 %v5019
  %5021 = vmatprep.subr.mxu0 0.0
  %5022 = vmatpush1.msra.mxu0 0.0
  %5023 = vmatprep.subr.mxu0 0.0
  %5024 = vmatpush1.msra.mxu0 0.0
  %5025 = vmatprep.subr.mxu0 0.0
  %5026 = vmatpush1.msra.mxu0 0.0
  %5027 = vmatprep.subr.mxu0 0.0
  %5028 = vmatpush1.msra.mxu0 0.0
  %5029 = vmatprep.subr.mxu0 0.0
  %5030 = vmatpush1.msra.mxu0 0.0
  %5031 = vmatprep.subr.mxu0 0.0
  %5032 = vmatpush1.msra.mxu0 0.0
  %5033 = vmatprep.subr.mxu0 0.0
  %5034 = vmatpush1.msra.mxu0 0.0
  %5035 = vmatprep.subr.mxu0 0.0
  %5036 = vmatpush1.msra.mxu0 0.0
  %5037 = vmatprep.subr.mxu0 0.0
  %5038 = vmatpush1.msra.mxu0 0.0
  %5039 = vmatprep.subr.mxu0 0.0
  %5040 = vmatpush1.msra.mxu0 0.0
  %5041 = vmatprep.subr.mxu0 0.0
  %5042 = vmatpush1.msra.mxu0 0.0
  %5043 = vmatprep.subr.mxu0 0.0
  %5044 = vmatpush1.msra.mxu0 0.0
  %5045 = vmatprep.subr.mxu0 0.0
  %5046 = vmatpush1.msra.mxu0 0.0
  %5047 = vmatprep.subr.mxu0 0.0
  %5048 = vmatpush1.msra.mxu0 0.0
  %5049 = vmatprep.subr.mxu0 0.0
  %5050 = vmatpush1.msra.mxu0 0.0
  %5051 = vmatprep.subr.mxu0 0.0
  %5052 = vmatpush1.msra.mxu0 0.0
  %5053 = vmatprep.subr.mxu0 0.0
  %5054 = vmatpush1.msra.mxu0 0.0
  %5055 = vmatprep.subr.mxu0 0.0
  %5056 = vmatpush1.msra.mxu0 0.0
  %5057 = vmatprep.subr.mxu0 0.0
  %5058 = vmatpush1.msra.mxu0 0.0
  %5059 = vmatprep.subr.mxu0 0.0
  %5060 = vmatpush1.msra.mxu0 0.0
  %5061 = vmatprep.subr.mxu0 0.0
  %5062 = vmatpush1.msra.mxu0 0.0
  %5063 = vmatprep.subr.mxu0 0.0
  %5064 = vmatpush1.msra.mxu0 0.0
  %5065 = vmatprep.subr.mxu0 0.0
  %5066 = vmatpush1.msra.mxu0 0.0
  %5067 = vmatprep.subr.mxu0 0.0
  %5068 = vmatpush1.msra.mxu0 0.0
  %5069 = vmatprep.subr.mxu0 0.0
  %5070 = vmatpush1.msra.mxu0 0.0
  %5071 = vmatprep.subr.mxu0 0.0
  %5072 = vmatpush1.msra.mxu0 0.0
  %5073 = vmatprep.subr.mxu0 0.0
  %5074 = vmatpush1.msra.mxu0 0.0
  %5075 = vmatprep.subr.mxu0 0.0
  %5076 = vmatpush1.msra.mxu0 0.0
  %5077 = vmatprep.subr.mxu0 0.0
  %5078 = vmatpush1.msra.mxu0 0.0
  %5079 = vmatprep.subr.mxu0 0.0
  %5080 = vmatpush1.msra.mxu0 0.0
  %5081 = vmatprep.mubr.f32.mxu0 0.0
  %v5082 = vand.u32 %v4853, 4294901760
  %v5083 = vsub.f32 %v4853, %v5082
  %5084 = vmatmul.mubr.f32.gmra.mrb[0].mxu0 %v5083
  %v5085 = vpop.f32.mrb[0].mxu0
  %v5086 = vadd.f32 %v5010, %v5085
  %v5087 = vpop.f32.mrb[0].mxu0
  %5088 = vdwg.mxu0
  %5089 = vmatprep.subr.mxu0 0.0
  %v5090 = vand.u32 %v16, 4294901760
  %5091 = vmatpush1.msra.mxu0 %v5090
  %5092 = vmatprep.subr.mxu0 0.0
  %v5093 = vand.u32 %v17, 4294901760
  %5094 = vmatpush1.msra.mxu0 %v5093
  %5095 = vmatprep.subr.mxu0 0.0
  %5096 = vmatpush1.msra.mxu0 0.0
  %5097 = vmatprep.subr.mxu0 0.0
  %5098 = vmatpush1.msra.mxu0 0.0
  %5099 = vmatprep.subr.mxu0 0.0
  %5100 = vmatpush1.msra.mxu0 0.0
  %5101 = vmatprep.subr.mxu0 0.0
  %5102 = vmatpush1.msra.mxu0 0.0
  %5103 = vmatprep.subr.mxu0 0.0
  %5104 = vmatpush1.msra.mxu0 0.0
  %5105 = vmatprep.subr.mxu0 0.0
  %5106 = vmatpush1.msra.mxu0 0.0
  %5107 = vmatprep.subr.mxu0 0.0
  %5108 = vmatpush1.msra.mxu0 0.0
  %5109 = vmatprep.subr.mxu0 0.0
  %5110 = vmatpush1.msra.mxu0 0.0
  %5111 = vmatprep.subr.mxu0 0.0
  %5112 = vmatpush1.msra.mxu0 0.0
  %5113 = vmatprep.subr.mxu0 0.0
  %5114 = vmatpush1.msra.mxu0 0.0
  %5115 = vmatprep.subr.mxu0 0.0
  %5116 = vmatpush1.msra.mxu0 0.0
  %5117 = vmatprep.subr.mxu0 0.0
  %5118 = vmatpush1.msra.mxu0 0.0
  %5119 = vmatprep.subr.mxu0 0.0
  %5120 = vmatpush1.msra.mxu0 0.0
  %5121 = vmatprep.subr.mxu0 0.0
  %5122 = vmatpush1.msra.mxu0 0.0
  %5123 = vmatprep.subr.mxu0 0.0
  %5124 = vmatpush1.msra.mxu0 0.0
  %5125 = vmatprep.subr.mxu0 0.0
  %5126 = vmatpush1.msra.mxu0 0.0
  %5127 = vmatprep.subr.mxu0 0.0
  %5128 = vmatpush1.msra.mxu0 0.0
  %5129 = vmatprep.subr.mxu0 0.0
  %5130 = vmatpush1.msra.mxu0 0.0
  %5131 = vmatprep.subr.mxu0 0.0
  %5132 = vmatpush1.msra.mxu0 0.0
  %5133 = vmatprep.subr.mxu0 0.0
  %5134 = vmatpush1.msra.mxu0 0.0
  %5135 = vmatprep.subr.mxu0 0.0
  %5136 = vmatpush1.msra.mxu0 0.0
  %5137 = vmatprep.subr.mxu0 0.0
  %5138 = vmatpush1.msra.mxu0 0.0
  %5139 = vmatprep.subr.mxu0 0.0
  %5140 = vmatpush1.msra.mxu0 0.0
  %5141 = vmatprep.subr.mxu0 0.0
  %5142 = vmatpush1.msra.mxu0 0.0
  %5143 = vmatprep.subr.mxu0 0.0
  %5144 = vmatpush1.msra.mxu0 0.0
  %5145 = vmatprep.subr.mxu0 0.0
  %5146 = vmatpush1.msra.mxu0 0.0
  %5147 = vmatprep.subr.mxu0 0.0
  %5148 = vmatpush1.msra.mxu0 0.0
  %5149 = vmatprep.subr.mxu0 0.0
  %5150 = vmatpush1.msra.mxu0 0.0
  %5151 = vmatprep.subr.mxu0 0.0
  %5152 = vmatpush1.msra.mxu0 0.0
  %5153 = vmatprep.subr.mxu0 0.0
  %5154 = vmatpush1.msra.mxu0 0.0
  %5155 = vmatprep.mubr.f32.mxu0 0.0
  %v5156 = vand.u32 %v4853, 4294901760
  %v5157 = vsub.f32 %v4853, %v5156
  %v5158 = vand.u32 %v5157, 4294901760
  %5159 = vmatmul.mubr.f32.gmra.mrb[0].mxu0 %v5158
  %v5160 = vpop.f32.mrb[0].mxu0
  %v5161 = vadd.f32 %v5086, %v5160
  %v5162 = vpop.f32.mrb[0].mxu0
  %5163 = vdwg.mxu0
  %5164 = vmatprep.subr.mxu0 0.0
  %v5165 = vand.u32 %v16, 4294901760
  %v5166 = vsub.f32 %v16, %v5165
  %v5167 = vand.u32 %v5166, 4294901760
  %5168 = vmatpush1.msra.mxu0 %v5167
  %5169 = vmatprep.subr.mxu0 0.0
  %v5170 = vand.u32 %v17, 4294901760
  %v5171 = vsub.f32 %v17, %v5170
  %v5172 = vand.u32 %v5171, 4294901760
  %5173 = vmatpush1.msra.mxu0 %v5172
  %5174 = vmatprep.subr.mxu0 0.0
  %5175 = vmatpush1.msra.mxu0 0.0
  %5176 = vmatprep.subr.mxu0 0.0
  %5177 = vmatpush1.msra.mxu0 0.0
  %5178 = vmatprep.subr.mxu0 0.0
  %5179 = vmatpush1.msra.mxu0 0.0
  %5180 = vmatprep.subr.mxu0 0.0
  %5181 = vmatpush1.msra.mxu0 0.0
  %5182 = vmatprep.subr.mxu0 0.0
  %5183 = vmatpush1.msra.mxu0 0.0
  %5184 = vmatprep.subr.mxu0 0.0
  %5185 = vmatpush1.msra.mxu0 0.0
  %5186 = vmatprep.subr.mxu0 0.0
  %5187 = vmatpush1.msra.mxu0 0.0
  %5188 = vmatprep.subr.mxu0 0.0
  %5189 = vmatpush1.msra.mxu0 0.0
  %5190 = vmatprep.subr.mxu0 0.0
  %5191 = vmatpush1.msra.mxu0 0.0
  %5192 = vmatprep.subr.mxu0 0.0
  %5193 = vmatpush1.msra.mxu0 0.0
  %5194 = vmatprep.subr.mxu0 0.0
  %5195 = vmatpush1.msra.mxu0 0.0
  %5196 = vmatprep.subr.mxu0 0.0
  %5197 = vmatpush1.msra.mxu0 0.0
  %5198 = vmatprep.subr.mxu0 0.0
  %5199 = vmatpush1.msra.mxu0 0.0
  %5200 = vmatprep.subr.mxu0 0.0
  %5201 = vmatpush1.msra.mxu0 0.0
  %5202 = vmatprep.subr.mxu0 0.0
  %5203 = vmatpush1.msra.mxu0 0.0
  %5204 = vmatprep.subr.mxu0 0.0
  %5205 = vmatpush1.msra.mxu0 0.0
  %5206 = vmatprep.subr.mxu0 0.0
  %5207 = vmatpush1.msra.mxu0 0.0
  %5208 = vmatprep.subr.mxu0 0.0
  %5209 = vmatpush1.msra.mxu0 0.0
  %5210 = vmatprep.subr.mxu0 0.0
  %5211 = vmatpush1.msra.mxu0 0.0
  %5212 = vmatprep.subr.mxu0 0.0
  %5213 = vmatpush1.msra.mxu0 0.0
  %5214 = vmatprep.subr.mxu0 0.0
  %5215 = vmatpush1.msra.mxu0 0.0
  %5216 = vmatprep.subr.mxu0 0.0
  %5217 = vmatpush1.msra.mxu0 0.0
  %5218 = vmatprep.subr.mxu0 0.0
  %5219 = vmatpush1.msra.mxu0 0.0
  %5220 = vmatprep.subr.mxu0 0.0
  %5221 = vmatpush1.msra.mxu0 0.0
  %5222 = vmatprep.subr.mxu0 0.0
  %5223 = vmatpush1.msra.mxu0 0.0
  %5224 = vmatprep.subr.mxu0 0.0
  %5225 = vmatpush1.msra.mxu0 0.0
  %5226 = vmatprep.subr.mxu0 0.0
  %5227 = vmatpush1.msra.mxu0 0.0
  %5228 = vmatprep.subr.mxu0 0.0
  %5229 = vmatpush1.msra.mxu0 0.0
  %5230 = vmatprep.subr.mxu0 0.0
  %5231 = vmatpush1.msra.mxu0 0.0
  %5232 = vmatprep.subr.mxu0 0.0
  %5233 = vmatpush1.msra.mxu0 0.0
  %5234 = vmatprep.mubr.f32.mxu0 0.0
  %v5235 = vand.u32 %v4853, 4294901760
  %5236 = vmatmul.mubr.f32.gmra.mrb[0].mxu0 %v5235
  %v5237 = vpop.f32.mrb[0].mxu0
  %v5238 = vadd.f32 %v5161, %v5237
  %v5239 = vpop.f32.mrb[0].mxu0
  %5240 = vdwg.mxu0
  %5241 = vmatprep.subr.mxu0 0.0
  %v5242 = vand.u32 %v16, 4294901760
  %5243 = vmatpush1.msra.mxu0 %v5242
  %5244 = vmatprep.subr.mxu0 0.0
  %v5245 = vand.u32 %v17, 4294901760
  %5246 = vmatpush1.msra.mxu0 %v5245
  %5247 = vmatprep.subr.mxu0 0.0
  %5248 = vmatpush1.msra.mxu0 0.0
  %5249 = vmatprep.subr.mxu0 0.0
  %5250 = vmatpush1.msra.mxu0 0.0
  %5251 = vmatprep.subr.mxu0 0.0
  %5252 = vmatpush1.msra.mxu0 0.0
  %5253 = vmatprep.subr.mxu0 0.0
  %5254 = vmatpush1.msra.mxu0 0.0
  %5255 = vmatprep.subr.mxu0 0.0
  %5256 = vmatpush1.msra.mxu0 0.0
  %5257 = vmatprep.subr.mxu0 0.0
  %5258 = vmatpush1.msra.mxu0 0.0
  %5259 = vmatprep.subr.mxu0 0.0
  %5260 = vmatpush1.msra.mxu0 0.0
  %5261 = vmatprep.subr.mxu0 0.0
  %5262 = vmatpush1.msra.mxu0 0.0
  %5263 = vmatprep.subr.mxu0 0.0
  %5264 = vmatpush1.msra.mxu0 0.0
  %5265 = vmatprep.subr.mxu0 0.0
  %5266 = vmatpush1.msra.mxu0 0.0
  %5267 = vmatprep.subr.mxu0 0.0
  %5268 = vmatpush1.msra.mxu0 0.0
  %5269 = vmatprep.subr.mxu0 0.0
  %5270 = vmatpush1.msra.mxu0 0.0
  %5271 = vmatprep.subr.mxu0 0.0
  %5272 = vmatpush1.msra.mxu0 0.0
  %5273 = vmatprep.subr.mxu0 0.0
  %5274 = vmatpush1.msra.mxu0 0.0
  %5275 = vmatprep.subr.mxu0 0.0
  %5276 = vmatpush1.msra.mxu0 0.0
  %5277 = vmatprep.subr.mxu0 0.0
  %5278 = vmatpush1.msra.mxu0 0.0
  %5279 = vmatprep.subr.mxu0 0.0
  %5280 = vmatpush1.msra.mxu0 0.0
  %5281 = vmatprep.subr.mxu0 0.0
  %5282 = vmatpush1.msra.mxu0 0.0
  %5283 = vmatprep.subr.mxu0 0.0
  %5284 = vmatpush1.msra.mxu0 0.0
  %5285 = vmatprep.subr.mxu0 0.0
  %5286 = vmatpush1.msra.mxu0 0.0
  %5287 = vmatprep.subr.mxu0 0.0
  %5288 = vmatpush1.msra.mxu0 0.0
  %5289 = vmatprep.subr.mxu0 0.0
  %5290 = vmatpush1.msra.mxu0 0.0
  %5291 = vmatprep.subr.mxu0 0.0
  %5292 = vmatpush1.msra.mxu0 0.0
  %5293 = vmatprep.subr.mxu0 0.0
  %5294 = vmatpush1.msra.mxu0 0.0
  %5295 = vmatprep.subr.mxu0 0.0
  %5296 = vmatpush1.msra.mxu0 0.0
  %5297 = vmatprep.subr.mxu0 0.0
  %5298 = vmatpush1.msra.mxu0 0.0
  %5299 = vmatprep.subr.mxu0 0.0
  %5300 = vmatpush1.msra.mxu0 0.0
  %5301 = vmatprep.subr.mxu0 0.0
  %5302 = vmatpush1.msra.mxu0 0.0
  %5303 = vmatprep.subr.mxu0 0.0
  %5304 = vmatpush1.msra.mxu0 0.0
  %5305 = vmatprep.subr.mxu0 0.0
  %5306 = vmatpush1.msra.mxu0 0.0
  %5307 = vmatprep.mubr.f32.mxu0 0.0
  %v5308 = vand.u32 %v4853, 4294901760
  %5309 = vmatmul.mubr.f32.gmra.mrb[0].mxu0 %v5308
  %v5310 = vpop.f32.mrb[0].mxu0
  %v5311 = vadd.f32 %v5238, %v5310
  %v5312 = vpop.f32.mrb[0].mxu0
  %5313 = vdwg.mxu0
  %v5315 = vsel %vm55, %v4848, 0
  %5317 = vmatprep.subr.mxu0 0.0
  %v5318 = vand.u32 %v14, 4294901760
  %5319 = vmatpush1.msra.mxu0 %v5318
  %5320 = vmatprep.subr.mxu0 0.0
  %v5321 = vand.u32 %v15, 4294901760
  %5322 = vmatpush1.msra.mxu0 %v5321
  %5323 = vmatprep.subr.mxu0 0.0
  %5324 = vmatpush1.msra.mxu0 0.0
  %5325 = vmatprep.subr.mxu0 0.0
  %5326 = vmatpush1.msra.mxu0 0.0
  %5327 = vmatprep.subr.mxu0 0.0
  %5328 = vmatpush1.msra.mxu0 0.0
  %5329 = vmatprep.subr.mxu0 0.0
  %5330 = vmatpush1.msra.mxu0 0.0
  %5331 = vmatprep.subr.mxu0 0.0
  %5332 = vmatpush1.msra.mxu0 0.0
  %5333 = vmatprep.subr.mxu0 0.0
  %5334 = vmatpush1.msra.mxu0 0.0
  %5335 = vmatprep.subr.mxu0 0.0
  %5336 = vmatpush1.msra.mxu0 0.0
  %5337 = vmatprep.subr.mxu0 0.0
  %5338 = vmatpush1.msra.mxu0 0.0
  %5339 = vmatprep.subr.mxu0 0.0
  %5340 = vmatpush1.msra.mxu0 0.0
  %5341 = vmatprep.subr.mxu0 0.0
  %5342 = vmatpush1.msra.mxu0 0.0
  %5343 = vmatprep.subr.mxu0 0.0
  %5344 = vmatpush1.msra.mxu0 0.0
  %5345 = vmatprep.subr.mxu0 0.0
  %5346 = vmatpush1.msra.mxu0 0.0
  %5347 = vmatprep.subr.mxu0 0.0
  %5348 = vmatpush1.msra.mxu0 0.0
  %5349 = vmatprep.subr.mxu0 0.0
  %5350 = vmatpush1.msra.mxu0 0.0
  %5351 = vmatprep.subr.mxu0 0.0
  %5352 = vmatpush1.msra.mxu0 0.0
  %5353 = vmatprep.subr.mxu0 0.0
  %5354 = vmatpush1.msra.mxu0 0.0
  %5355 = vmatprep.subr.mxu0 0.0
  %5356 = vmatpush1.msra.mxu0 0.0
  %5357 = vmatprep.subr.mxu0 0.0
  %5358 = vmatpush1.msra.mxu0 0.0
  %5359 = vmatprep.subr.mxu0 0.0
  %5360 = vmatpush1.msra.mxu0 0.0
  %5361 = vmatprep.subr.mxu0 0.0
  %5362 = vmatpush1.msra.mxu0 0.0
  %5363 = vmatprep.subr.mxu0 0.0
  %5364 = vmatpush1.msra.mxu0 0.0
  %5365 = vmatprep.subr.mxu0 0.0
  %5366 = vmatpush1.msra.mxu0 0.0
  %5367 = vmatprep.subr.mxu0 0.0
  %5368 = vmatpush1.msra.mxu0 0.0
  %5369 = vmatprep.subr.mxu0 0.0
  %5370 = vmatpush1.msra.mxu0 0.0
  %5371 = vmatprep.subr.mxu0 0.0
  %5372 = vmatpush1.msra.mxu0 0.0
  %5373 = vmatprep.subr.mxu0 0.0
  %5374 = vmatpush1.msra.mxu0 0.0
  %5375 = vmatprep.subr.mxu0 0.0
  %5376 = vmatpush1.msra.mxu0 0.0
  %5377 = vmatprep.subr.mxu0 0.0
  %5378 = vmatpush1.msra.mxu0 0.0
  %5379 = vmatprep.subr.mxu0 0.0
  %5380 = vmatpush1.msra.mxu0 0.0
  %5381 = vmatprep.subr.mxu0 0.0
  %5382 = vmatpush1.msra.mxu0 0.0
  %5383 = vmatprep.mubr.f32.mxu0 0.0
  %v5384 = vand.u32 %v5315, 4294901760
  %v5385 = vsub.f32 %v5315, %v5384
  %v5386 = vand.u32 %v5385, 4294901760
  %v5387 = vsub.f32 %v5385, %v5386
  %v5388 = vand.u32 %v5387, 4294901760
  %5389 = vmatmul.mubr.f32.gmra.mrb[0].mxu0 %v5388
  %v5390 = vpop.f32.mrb[0].mxu0
  %v5391 = vadd.f32 %v5311, %v5390
  %v5392 = vpop.f32.mrb[0].mxu0
  %5393 = vdwg.mxu0
  %5394 = vmatprep.subr.mxu0 0.0
  %v5395 = vand.u32 %v14, 4294901760
  %v5396 = vsub.f32 %v14, %v5395
  %v5397 = vand.u32 %v5396, 4294901760
  %v5398 = vsub.f32 %v5396, %v5397
  %v5399 = vand.u32 %v5398, 4294901760
  %5400 = vmatpush1.msra.mxu0 %v5399
  %5401 = vmatprep.subr.mxu0 0.0
  %v5402 = vand.u32 %v15, 4294901760
  %v5403 = vsub.f32 %v15, %v5402
  %v5404 = vand.u32 %v5403, 4294901760
  %v5405 = vsub.f32 %v5403, %v5404
  %v5406 = vand.u32 %v5405, 4294901760
  %5407 = vmatpush1.msra.mxu0 %v5406
  %5408 = vmatprep.subr.mxu0 0.0
  %5409 = vmatpush1.msra.mxu0 0.0
  %5410 = vmatprep.subr.mxu0 0.0
  %5411 = vmatpush1.msra.mxu0 0.0
  %5412 = vmatprep.subr.mxu0 0.0
  %5413 = vmatpush1.msra.mxu0 0.0
  %5414 = vmatprep.subr.mxu0 0.0
  %5415 = vmatpush1.msra.mxu0 0.0
  %5416 = vmatprep.subr.mxu0 0.0
  %5417 = vmatpush1.msra.mxu0 0.0
  %5418 = vmatprep.subr.mxu0 0.0
  %5419 = vmatpush1.msra.mxu0 0.0
  %5420 = vmatprep.subr.mxu0 0.0
  %5421 = vmatpush1.msra.mxu0 0.0
  %5422 = vmatprep.subr.mxu0 0.0
  %5423 = vmatpush1.msra.mxu0 0.0
  %5424 = vmatprep.subr.mxu0 0.0
  %5425 = vmatpush1.msra.mxu0 0.0
  %5426 = vmatprep.subr.mxu0 0.0
  %5427 = vmatpush1.msra.mxu0 0.0
  %5428 = vmatprep.subr.mxu0 0.0
  %5429 = vmatpush1.msra.mxu0 0.0
  %5430 = vmatprep.subr.mxu0 0.0
  %5431 = vmatpush1.msra.mxu0 0.0
  %5432 = vmatprep.subr.mxu0 0.0
  %5433 = vmatpush1.msra.mxu0 0.0
  %5434 = vmatprep.subr.mxu0 0.0
  %5435 = vmatpush1.msra.mxu0 0.0
  %5436 = vmatprep.subr.mxu0 0.0
  %5437 = vmatpush1.msra.mxu0 0.0
  %5438 = vmatprep.subr.mxu0 0.0
  %5439 = vmatpush1.msra.mxu0 0.0
  %5440 = vmatprep.subr.mxu0 0.0
  %5441 = vmatpush1.msra.mxu0 0.0
  %5442 = vmatprep.subr.mxu0 0.0
  %5443 = vmatpush1.msra.mxu0 0.0
  %5444 = vmatprep.subr.mxu0 0.0
  %5445 = vmatpush1.msra.mxu0 0.0
  %5446 = vmatprep.subr.mxu0 0.0
  %5447 = vmatpush1.msra.mxu0 0.0
  %5448 = vmatprep.subr.mxu0 0.0
  %5449 = vmatpush1.msra.mxu0 0.0
  %5450 = vmatprep.subr.mxu0 0.0
  %5451 = vmatpush1.msra.mxu0 0.0
  %5452 = vmatprep.subr.mxu0 0.0
  %5453 = vmatpush1.msra.mxu0 0.0
  %5454 = vmatprep.subr.mxu0 0.0
  %5455 = vmatpush1.msra.mxu0 0.0
  %5456 = vmatprep.subr.mxu0 0.0
  %5457 = vmatpush1.msra.mxu0 0.0
  %5458 = vmatprep.subr.mxu0 0.0
  %5459 = vmatpush1.msra.mxu0 0.0
  %5460 = vmatprep.subr.mxu0 0.0
  %5461 = vmatpush1.msra.mxu0 0.0
  %5462 = vmatprep.subr.mxu0 0.0
  %5463 = vmatpush1.msra.mxu0 0.0
  %5464 = vmatprep.subr.mxu0 0.0
  %5465 = vmatpush1.msra.mxu0 0.0
  %5466 = vmatprep.subr.mxu0 0.0
  %5467 = vmatpush1.msra.mxu0 0.0
  %5468 = vmatprep.mubr.f32.mxu0 0.0
  %v5469 = vand.u32 %v5315, 4294901760
  %5470 = vmatmul.mubr.f32.gmra.mrb[0].mxu0 %v5469
  %v5471 = vpop.f32.mrb[0].mxu0
  %v5472 = vadd.f32 %v5391, %v5471
  %v5473 = vpop.f32.mrb[0].mxu0
  %5474 = vdwg.mxu0
  %5475 = vmatprep.subr.mxu0 0.0
  %v5476 = vand.u32 %v14, 4294901760
  %v5477 = vsub.f32 %v14, %v5476
  %5478 = vmatpush1.msra.mxu0 %v5477
  %5479 = vmatprep.subr.mxu0 0.0
  %v5480 = vand.u32 %v15, 4294901760
  %v5481 = vsub.f32 %v15, %v5480
  %5482 = vmatpush1.msra.mxu0 %v5481
  %5483 = vmatprep.subr.mxu0 0.0
  %5484 = vmatpush1.msra.mxu0 0.0
  %5485 = vmatprep.subr.mxu0 0.0
  %5486 = vmatpush1.msra.mxu0 0.0
  %5487 = vmatprep.subr.mxu0 0.0
  %5488 = vmatpush1.msra.mxu0 0.0
  %5489 = vmatprep.subr.mxu0 0.0
  %5490 = vmatpush1.msra.mxu0 0.0
  %5491 = vmatprep.subr.mxu0 0.0
  %5492 = vmatpush1.msra.mxu0 0.0
  %5493 = vmatprep.subr.mxu0 0.0
  %5494 = vmatpush1.msra.mxu0 0.0
  %5495 = vmatprep.subr.mxu0 0.0
  %5496 = vmatpush1.msra.mxu0 0.0
  %5497 = vmatprep.subr.mxu0 0.0
  %5498 = vmatpush1.msra.mxu0 0.0
  %5499 = vmatprep.subr.mxu0 0.0
  %5500 = vmatpush1.msra.mxu0 0.0
  %5501 = vmatprep.subr.mxu0 0.0
  %5502 = vmatpush1.msra.mxu0 0.0
  %5503 = vmatprep.subr.mxu0 0.0
  %5504 = vmatpush1.msra.mxu0 0.0
  %5505 = vmatprep.subr.mxu0 0.0
  %5506 = vmatpush1.msra.mxu0 0.0
  %5507 = vmatprep.subr.mxu0 0.0
  %5508 = vmatpush1.msra.mxu0 0.0
  %5509 = vmatprep.subr.mxu0 0.0
  %5510 = vmatpush1.msra.mxu0 0.0
  %5511 = vmatprep.subr.mxu0 0.0
  %5512 = vmatpush1.msra.mxu0 0.0
  %5513 = vmatprep.subr.mxu0 0.0
  %5514 = vmatpush1.msra.mxu0 0.0
  %5515 = vmatprep.subr.mxu0 0.0
  %5516 = vmatpush1.msra.mxu0 0.0
  %5517 = vmatprep.subr.mxu0 0.0
  %5518 = vmatpush1.msra.mxu0 0.0
  %5519 = vmatprep.subr.mxu0 0.0
  %5520 = vmatpush1.msra.mxu0 0.0
  %5521 = vmatprep.subr.mxu0 0.0
  %5522 = vmatpush1.msra.mxu0 0.0
  %5523 = vmatprep.subr.mxu0 0.0
  %5524 = vmatpush1.msra.mxu0 0.0
  %5525 = vmatprep.subr.mxu0 0.0
  %5526 = vmatpush1.msra.mxu0 0.0
  %5527 = vmatprep.subr.mxu0 0.0
  %5528 = vmatpush1.msra.mxu0 0.0
  %5529 = vmatprep.subr.mxu0 0.0
  %5530 = vmatpush1.msra.mxu0 0.0
  %5531 = vmatprep.subr.mxu0 0.0
  %5532 = vmatpush1.msra.mxu0 0.0
  %5533 = vmatprep.subr.mxu0 0.0
  %5534 = vmatpush1.msra.mxu0 0.0
  %5535 = vmatprep.subr.mxu0 0.0
  %5536 = vmatpush1.msra.mxu0 0.0
  %5537 = vmatprep.subr.mxu0 0.0
  %5538 = vmatpush1.msra.mxu0 0.0
  %5539 = vmatprep.subr.mxu0 0.0
  %5540 = vmatpush1.msra.mxu0 0.0
  %5541 = vmatprep.subr.mxu0 0.0
  %5542 = vmatpush1.msra.mxu0 0.0
  %5543 = vmatprep.mubr.f32.mxu0 0.0
  %v5544 = vand.u32 %v5315, 4294901760
  %v5545 = vsub.f32 %v5315, %v5544
  %5546 = vmatmul.mubr.f32.gmra.mrb[0].mxu0 %v5545
  %v5547 = vpop.f32.mrb[0].mxu0
  %v5548 = vadd.f32 %v5472, %v5547
  %v5549 = vpop.f32.mrb[0].mxu0
  %5550 = vdwg.mxu0
  %5551 = vmatprep.subr.mxu0 0.0
  %v5552 = vand.u32 %v14, 4294901760
  %5553 = vmatpush1.msra.mxu0 %v5552
  %5554 = vmatprep.subr.mxu0 0.0
  %v5555 = vand.u32 %v15, 4294901760
  %5556 = vmatpush1.msra.mxu0 %v5555
  %5557 = vmatprep.subr.mxu0 0.0
  %5558 = vmatpush1.msra.mxu0 0.0
  %5559 = vmatprep.subr.mxu0 0.0
  %5560 = vmatpush1.msra.mxu0 0.0
  %5561 = vmatprep.subr.mxu0 0.0
  %5562 = vmatpush1.msra.mxu0 0.0
  %5563 = vmatprep.subr.mxu0 0.0
  %5564 = vmatpush1.msra.mxu0 0.0
  %5565 = vmatprep.subr.mxu0 0.0
  %5566 = vmatpush1.msra.mxu0 0.0
  %5567 = vmatprep.subr.mxu0 0.0
  %5568 = vmatpush1.msra.mxu0 0.0
  %5569 = vmatprep.subr.mxu0 0.0
  %5570 = vmatpush1.msra.mxu0 0.0
  %5571 = vmatprep.subr.mxu0 0.0
  %5572 = vmatpush1.msra.mxu0 0.0
  %5573 = vmatprep.subr.mxu0 0.0
  %5574 = vmatpush1.msra.mxu0 0.0
  %5575 = vmatprep.subr.mxu0 0.0
  %5576 = vmatpush1.msra.mxu0 0.0
  %5577 = vmatprep.subr.mxu0 0.0
  %5578 = vmatpush1.msra.mxu0 0.0
  %5579 = vmatprep.subr.mxu0 0.0
  %5580 = vmatpush1.msra.mxu0 0.0
  %5581 = vmatprep.subr.mxu0 0.0
  %5582 = vmatpush1.msra.mxu0 0.0
  %5583 = vmatprep.subr.mxu0 0.0
  %5584 = vmatpush1.msra.mxu0 0.0
  %5585 = vmatprep.subr.mxu0 0.0
  %5586 = vmatpush1.msra.mxu0 0.0
  %5587 = vmatprep.subr.mxu0 0.0
  %5588 = vmatpush1.msra.mxu0 0.0
  %5589 = vmatprep.subr.mxu0 0.0
  %5590 = vmatpush1.msra.mxu0 0.0
  %5591 = vmatprep.subr.mxu0 0.0
  %5592 = vmatpush1.msra.mxu0 0.0
  %5593 = vmatprep.subr.mxu0 0.0
  %5594 = vmatpush1.msra.mxu0 0.0
  %5595 = vmatprep.subr.mxu0 0.0
  %5596 = vmatpush1.msra.mxu0 0.0
  %5597 = vmatprep.subr.mxu0 0.0
  %5598 = vmatpush1.msra.mxu0 0.0
  %5599 = vmatprep.subr.mxu0 0.0
  %5600 = vmatpush1.msra.mxu0 0.0
  %5601 = vmatprep.subr.mxu0 0.0
  %5602 = vmatpush1.msra.mxu0 0.0
  %5603 = vmatprep.subr.mxu0 0.0
  %5604 = vmatpush1.msra.mxu0 0.0
  %5605 = vmatprep.subr.mxu0 0.0
  %5606 = vmatpush1.msra.mxu0 0.0
  %5607 = vmatprep.subr.mxu0 0.0
  %5608 = vmatpush1.msra.mxu0 0.0
  %5609 = vmatprep.subr.mxu0 0.0
  %5610 = vmatpush1.msra.mxu0 0.0
  %5611 = vmatprep.subr.mxu0 0.0
  %5612 = vmatpush1.msra.mxu0 0.0
  %5613 = vmatprep.subr.mxu0 0.0
  %5614 = vmatpush1.msra.mxu0 0.0
  %5615 = vmatprep.subr.mxu0 0.0
  %5616 = vmatpush1.msra.mxu0 0.0
  %5617 = vmatprep.mubr.f32.mxu0 0.0
  %v5618 = vand.u32 %v5315, 4294901760
  %v5619 = vsub.f32 %v5315, %v5618
  %v5620 = vand.u32 %v5619, 4294901760
  %5621 = vmatmul.mubr.f32.gmra.mrb[0].mxu0 %v5620
  %v5622 = vpop.f32.mrb[0].mxu0
  %v5623 = vadd.f32 %v5548, %v5622
  %v5624 = vpop.f32.mrb[0].mxu0
  %5625 = vdwg.mxu0
  %5626 = vmatprep.subr.mxu0 0.0
  %v5627 = vand.u32 %v14, 4294901760
  %v5628 = vsub.f32 %v14, %v5627
  %v5629 = vand.u32 %v5628, 4294901760
  %5630 = vmatpush1.msra.mxu0 %v5629
  %5631 = vmatprep.subr.mxu0 0.0
  %v5632 = vand.u32 %v15, 4294901760
  %v5633 = vsub.f32 %v15, %v5632
  %v5634 = vand.u32 %v5633, 4294901760
  %5635 = vmatpush1.msra.mxu0 %v5634
  %5636 = vmatprep.subr.mxu0 0.0
  %5637 = vmatpush1.msra.mxu0 0.0
  %5638 = vmatprep.subr.mxu0 0.0
  %5639 = vmatpush1.msra.mxu0 0.0
  %5640 = vmatprep.subr.mxu0 0.0
  %5641 = vmatpush1.msra.mxu0 0.0
  %5642 = vmatprep.subr.mxu0 0.0
  %5643 = vmatpush1.msra.mxu0 0.0
  %5644 = vmatprep.subr.mxu0 0.0
  %5645 = vmatpush1.msra.mxu0 0.0
  %5646 = vmatprep.subr.mxu0 0.0
  %5647 = vmatpush1.msra.mxu0 0.0
  %5648 = vmatprep.subr.mxu0 0.0
  %5649 = vmatpush1.msra.mxu0 0.0
  %5650 = vmatprep.subr.mxu0 0.0
  %5651 = vmatpush1.msra.mxu0 0.0
  %5652 = vmatprep.subr.mxu0 0.0
  %5653 = vmatpush1.msra.mxu0 0.0
  %5654 = vmatprep.subr.mxu0 0.0
  %5655 = vmatpush1.msra.mxu0 0.0
  %5656 = vmatprep.subr.mxu0 0.0
  %5657 = vmatpush1.msra.mxu0 0.0
  %5658 = vmatprep.subr.mxu0 0.0
  %5659 = vmatpush1.msra.mxu0 0.0
  %5660 = vmatprep.subr.mxu0 0.0
  %5661 = vmatpush1.msra.mxu0 0.0
  %5662 = vmatprep.subr.mxu0 0.0
  %5663 = vmatpush1.msra.mxu0 0.0
  %5664 = vmatprep.subr.mxu0 0.0
  %5665 = vmatpush1.msra.mxu0 0.0
  %5666 = vmatprep.subr.mxu0 0.0
  %5667 = vmatpush1.msra.mxu0 0.0
  %5668 = vmatprep.subr.mxu0 0.0
  %5669 = vmatpush1.msra.mxu0 0.0
  %5670 = vmatprep.subr.mxu0 0.0
  %5671 = vmatpush1.msra.mxu0 0.0
  %5672 = vmatprep.subr.mxu0 0.0
  %5673 = vmatpush1.msra.mxu0 0.0
  %5674 = vmatprep.subr.mxu0 0.0
  %5675 = vmatpush1.msra.mxu0 0.0
  %5676 = vmatprep.subr.mxu0 0.0
  %5677 = vmatpush1.msra.mxu0 0.0
  %5678 = vmatprep.subr.mxu0 0.0
  %5679 = vmatpush1.msra.mxu0 0.0
  %5680 = vmatprep.subr.mxu0 0.0
  %5681 = vmatpush1.msra.mxu0 0.0
  %5682 = vmatprep.subr.mxu0 0.0
  %5683 = vmatpush1.msra.mxu0 0.0
  %5684 = vmatprep.subr.mxu0 0.0
  %5685 = vmatpush1.msra.mxu0 0.0
  %5686 = vmatprep.subr.mxu0 0.0
  %5687 = vmatpush1.msra.mxu0 0.0
  %5688 = vmatprep.subr.mxu0 0.0
  %5689 = vmatpush1.msra.mxu0 0.0
  %5690 = vmatprep.subr.mxu0 0.0
  %5691 = vmatpush1.msra.mxu0 0.0
  %5692 = vmatprep.subr.mxu0 0.0
  %5693 = vmatpush1.msra.mxu0 0.0
  %5694 = vmatprep.subr.mxu0 0.0
  %5695 = vmatpush1.msra.mxu0 0.0
  %5696 = vmatprep.mubr.f32.mxu0 0.0
  %v5697 = vand.u32 %v5315, 4294901760
  %5698 = vmatmul.mubr.f32.gmra.mrb[0].mxu0 %v5697
  %v5699 = vpop.f32.mrb[0].mxu0
  %v5700 = vadd.f32 %v5623, %v5699
  %v5701 = vpop.f32.mrb[0].mxu0
  %5702 = vdwg.mxu0
  %5703 = vmatprep.subr.mxu0 0.0
  %v5704 = vand.u32 %v14, 4294901760
  %5705 = vmatpush1.msra.mxu0 %v5704
  %5706 = vmatprep.subr.mxu0 0.0
  %v5707 = vand.u32 %v15, 4294901760
  %5708 = vmatpush1.msra.mxu0 %v5707
  %5709 = vmatprep.subr.mxu0 0.0
  %5710 = vmatpush1.msra.mxu0 0.0
  %5711 = vmatprep.subr.mxu0 0.0
  %5712 = vmatpush1.msra.mxu0 0.0
  %5713 = vmatprep.subr.mxu0 0.0
  %5714 = vmatpush1.msra.mxu0 0.0
  %5715 = vmatprep.subr.mxu0 0.0
  %5716 = vmatpush1.msra.mxu0 0.0
  %5717 = vmatprep.subr.mxu0 0.0
  %5718 = vmatpush1.msra.mxu0 0.0
  %5719 = vmatprep.subr.mxu0 0.0
  %5720 = vmatpush1.msra.mxu0 0.0
  %5721 = vmatprep.subr.mxu0 0.0
  %5722 = vmatpush1.msra.mxu0 0.0
  %5723 = vmatprep.subr.mxu0 0.0
  %5724 = vmatpush1.msra.mxu0 0.0
  %5725 = vmatprep.subr.mxu0 0.0
  %5726 = vmatpush1.msra.mxu0 0.0
  %5727 = vmatprep.subr.mxu0 0.0
  %5728 = vmatpush1.msra.mxu0 0.0
  %5729 = vmatprep.subr.mxu0 0.0
  %5730 = vmatpush1.msra.mxu0 0.0
  %5731 = vmatprep.subr.mxu0 0.0
  %5732 = vmatpush1.msra.mxu0 0.0
  %5733 = vmatprep.subr.mxu0 0.0
  %5734 = vmatpush1.msra.mxu0 0.0
  %5735 = vmatprep.subr.mxu0 0.0
  %5736 = vmatpush1.msra.mxu0 0.0
  %5737 = vmatprep.subr.mxu0 0.0
  %5738 = vmatpush1.msra.mxu0 0.0
  %5739 = vmatprep.subr.mxu0 0.0
  %5740 = vmatpush1.msra.mxu0 0.0
  %5741 = vmatprep.subr.mxu0 0.0
  %5742 = vmatpush1.msra.mxu0 0.0
  %5743 = vmatprep.subr.mxu0 0.0
  %5744 = vmatpush1.msra.mxu0 0.0
  %5745 = vmatprep.subr.mxu0 0.0
  %5746 = vmatpush1.msra.mxu0 0.0
  %5747 = vmatprep.subr.mxu0 0.0
  %5748 = vmatpush1.msra.mxu0 0.0
  %5749 = vmatprep.subr.mxu0 0.0
  %5750 = vmatpush1.msra.mxu0 0.0
  %5751 = vmatprep.subr.mxu0 0.0
  %5752 = vmatpush1.msra.mxu0 0.0
  %5753 = vmatprep.subr.mxu0 0.0
  %5754 = vmatpush1.msra.mxu0 0.0
  %5755 = vmatprep.subr.mxu0 0.0
  %5756 = vmatpush1.msra.mxu0 0.0
  %5757 = vmatprep.subr.mxu0 0.0
  %5758 = vmatpush1.msra.mxu0 0.0
  %5759 = vmatprep.subr.mxu0 0.0
  %5760 = vmatpush1.msra.mxu0 0.0
  %5761 = vmatprep.subr.mxu0 0.0
  %5762 = vmatpush1.msra.mxu0 0.0
  %5763 = vmatprep.subr.mxu0 0.0
  %5764 = vmatpush1.msra.mxu0 0.0
  %5765 = vmatprep.subr.mxu0 0.0
  %5766 = vmatpush1.msra.mxu0 0.0
  %5767 = vmatprep.subr.mxu0 0.0
  %5768 = vmatpush1.msra.mxu0 0.0
  %5769 = vmatprep.mubr.f32.mxu0 0.0
  %v5770 = vand.u32 %v5315, 4294901760
  %5771 = vmatmul.mubr.f32.gmra.mrb[0].mxu0 %v5770
  %v5772 = vpop.f32.mrb[0].mxu0
  %v5773 = vadd.f32 %v5700, %v5772
  %v5774 = vpop.f32.mrb[0].mxu0
  %5775 = vdwg.mxu0
  %v5776 = vmul.f32 %v5773, 0.0625
  %v5778 = vcombine.high %v5776, %v5776
  %v5780 = vunpack.c.l.s4 1966171168
  %v5781 = vunpack.c.0.s8 %v5780
  %v5782 = vlaneseq
  %v5783 = vshrl.u32 %v5782, 7
  %v5784 = vsub.s32 %v5781, %v5783
  %v5785 = vrot.slane %v5776, %v5784
  %v5787 = vunpack.c.l.s4 1966171168
  %v5788 = vunpack.c.0.s8 %v5787
  %v5789 = vlaneseq
  %v5790 = vshrl.u32 %v5789, 7
  %v5791 = vsub.s32 %v5788, %v5790
  %v5792 = vrot.slane %v5778, %v5791
  %v5793 = vcombine.high %v5785, %v5785
  %v5794 = vcombine.high %v5792, %v5792
  %v5796 = vunpack.c.l.s4 1966171168
  %v5797 = vunpack.c.0.s8 %v5796
  %v5798 = vlaneseq
  %v5799 = vshrl.u32 %v5798, 7
  %v5800 = vsub.s32 %v5797, %v5799
  %v5801 = vrot.slane %v5785, %v5800
  %v5803 = vunpack.c.l.s4 1966171168
  %v5804 = vunpack.c.0.s8 %v5803
  %v5805 = vlaneseq
  %v5806 = vshrl.u32 %v5805, 7
  %v5807 = vsub.s32 %v5804, %v5806
  %v5808 = vrot.slane %v5792, %v5807
  %v5810 = vunpack.c.l.s4 1966171168
  %v5811 = vunpack.c.0.s8 %v5810
  %v5812 = vlaneseq
  %v5813 = vshrl.u32 %v5812, 7
  %v5814 = vsub.s32 %v5811, %v5813
  %v5815 = vrot.slane %v5793, %v5814
  %v5817 = vunpack.c.l.s4 1966171168
  %v5818 = vunpack.c.0.s8 %v5817
  %v5819 = vlaneseq
  %v5820 = vshrl.u32 %v5819, 7
  %v5821 = vsub.s32 %v5818, %v5820
  %v5822 = vrot.slane %v5794, %v5821
  %v5823 = vcombine.high %v5801, %v5801
  %v5824 = vcombine.high %v5808, %v5808
  %v5825 = vcombine.high %v5815, %v5815
  %v5826 = vcombine.high %v5822, %v5822
  %5835 = vst.msk [vmem:[%s3 + $0x1] sm:$0x1] %vm4833, %v5801
  %5836 = vst.msk [vmem:[%s3 + $0x9] sm:$0x1] %vm4833, %v5815
  %5837 = vst.msk [vmem:[%s3 + $0x11] sm:$0x1] %vm4833, %v5823
  %5838 = vst.msk [vmem:[%s3 + $0x19] sm:$0x1] %vm4833, %v5825
  %5839 = vst.msk [vmem:[%s3 + $0x21] sm:$0x1] %vm4833, %v5808
  %5840 = vst.msk [vmem:[%s3 + $0x29] sm:$0x1] %vm4833, %v5822
  %5841 = vst.msk [vmem:[%s3 + $0x31] sm:$0x1] %vm4833, %v5824
  %5842 = vst.msk [vmem:[%s3 + $0x39] sm:$0x1] %vm4833, %v5826
  %v5843 = vld [vmem:[#allocation2] sm:$0xff]
  %v5844 = vld [vmem:[#allocation3] sm:$0xff]
  %v5845 = vld [vmem:[%s3377] sm:$0xff]
  %v5846 = vld [vmem:[%s3838] sm:$0xff]
  %v5847 = vmul.f32 %v5843, %v5845
  %v5848 = vmul.f32 %v5844, %v5846
  %v5849 = vsub.f32 %v5847, %v5848
  %v5850 = vmul.f32 %v5843, %v5846
  %v5851 = vmul.f32 %v5844, %v5845
  %v5852 = vadd.f32 %v5850, %v5851
  %v5854 = vsel %vm55, %v5852, 0
  %5856 = vmatprep.subr.mxu0 0.0
  %v5857 = vand.u32 %v16, 4294901760
  %5858 = vmatpush1.msra.mxu0 %v5857
  %5859 = vmatprep.subr.mxu0 0.0
  %v5860 = vand.u32 %v17, 4294901760
  %5861 = vmatpush1.msra.mxu0 %v5860
  %5862 = vmatprep.subr.mxu0 0.0
  %5863 = vmatpush1.msra.mxu0 0.0
  %5864 = vmatprep.subr.mxu0 0.0
  %5865 = vmatpush1.msra.mxu0 0.0
  %5866 = vmatprep.subr.mxu0 0.0
  %5867 = vmatpush1.msra.mxu0 0.0
  %5868 = vmatprep.subr.mxu0 0.0
  %5869 = vmatpush1.msra.mxu0 0.0
  %5870 = vmatprep.subr.mxu0 0.0
  %5871 = vmatpush1.msra.mxu0 0.0
  %5872 = vmatprep.subr.mxu0 0.0
  %5873 = vmatpush1.msra.mxu0 0.0
  %5874 = vmatprep.subr.mxu0 0.0
  %5875 = vmatpush1.msra.mxu0 0.0
  %5876 = vmatprep.subr.mxu0 0.0
  %5877 = vmatpush1.msra.mxu0 0.0
  %5878 = vmatprep.subr.mxu0 0.0
  %5879 = vmatpush1.msra.mxu0 0.0
  %5880 = vmatprep.subr.mxu0 0.0
  %5881 = vmatpush1.msra.mxu0 0.0
  %5882 = vmatprep.subr.mxu0 0.0
  %5883 = vmatpush1.msra.mxu0 0.0
  %5884 = vmatprep.subr.mxu0 0.0
  %5885 = vmatpush1.msra.mxu0 0.0
  %5886 = vmatprep.subr.mxu0 0.0
  %5887 = vmatpush1.msra.mxu0 0.0
  %5888 = vmatprep.subr.mxu0 0.0
  %5889 = vmatpush1.msra.mxu0 0.0
  %5890 = vmatprep.subr.mxu0 0.0
  %5891 = vmatpush1.msra.mxu0 0.0
  %5892 = vmatprep.subr.mxu0 0.0
  %5893 = vmatpush1.msra.mxu0 0.0
  %5894 = vmatprep.subr.mxu0 0.0
  %5895 = vmatpush1.msra.mxu0 0.0
  %5896 = vmatprep.subr.mxu0 0.0
  %5897 = vmatpush1.msra.mxu0 0.0
  %5898 = vmatprep.subr.mxu0 0.0
  %5899 = vmatpush1.msra.mxu0 0.0
  %5900 = vmatprep.subr.mxu0 0.0
  %5901 = vmatpush1.msra.mxu0 0.0
  %5902 = vmatprep.subr.mxu0 0.0
  %5903 = vmatpush1.msra.mxu0 0.0
  %5904 = vmatprep.subr.mxu0 0.0
  %5905 = vmatpush1.msra.mxu0 0.0
  %5906 = vmatprep.subr.mxu0 0.0
  %5907 = vmatpush1.msra.mxu0 0.0
  %5908 = vmatprep.subr.mxu0 0.0
  %5909 = vmatpush1.msra.mxu0 0.0
  %5910 = vmatprep.subr.mxu0 0.0
  %5911 = vmatpush1.msra.mxu0 0.0
  %5912 = vmatprep.subr.mxu0 0.0
  %5913 = vmatpush1.msra.mxu0 0.0
  %5914 = vmatprep.subr.mxu0 0.0
  %5915 = vmatpush1.msra.mxu0 0.0
  %5916 = vmatprep.subr.mxu0 0.0
  %5917 = vmatpush1.msra.mxu0 0.0
  %5918 = vmatprep.subr.mxu0 0.0
  %5919 = vmatpush1.msra.mxu0 0.0
  %5920 = vmatprep.subr.mxu0 0.0
  %5921 = vmatpush1.msra.mxu0 0.0
  %5922 = vmatprep.mubr.f32.mxu0 0.0
  %v5923 = vand.u32 %v5854, 4294901760
  %v5924 = vsub.f32 %v5854, %v5923
  %v5925 = vand.u32 %v5924, 4294901760
  %v5926 = vsub.f32 %v5924, %v5925
  %v5927 = vand.u32 %v5926, 4294901760
  %5928 = vmatmul.mubr.f32.gmra.mrb[0].mxu0 %v5927
  %v5929 = vpop.f32.mrb[0].mxu0
  %v5930 = vadd.f32 0.0, %v5929
  %v5931 = vpop.f32.mrb[0].mxu0
  %5932 = vdwg.mxu0
  %5933 = vmatprep.subr.mxu0 0.0
  %v5934 = vand.u32 %v16, 4294901760
  %v5935 = vsub.f32 %v16, %v5934
  %v5936 = vand.u32 %v5935, 4294901760
  %v5937 = vsub.f32 %v5935, %v5936
  %v5938 = vand.u32 %v5937, 4294901760
  %5939 = vmatpush1.msra.mxu0 %v5938
  %5940 = vmatprep.subr.mxu0 0.0
  %v5941 = vand.u32 %v17, 4294901760
  %v5942 = vsub.f32 %v17, %v5941
  %v5943 = vand.u32 %v5942, 4294901760
  %v5944 = vsub.f32 %v5942, %v5943
  %v5945 = vand.u32 %v5944, 4294901760
  %5946 = vmatpush1.msra.mxu0 %v5945
  %5947 = vmatprep.subr.mxu0 0.0
  %5948 = vmatpush1.msra.mxu0 0.0
  %5949 = vmatprep.subr.mxu0 0.0
  %5950 = vmatpush1.msra.mxu0 0.0
  %5951 = vmatprep.subr.mxu0 0.0
  %5952 = vmatpush1.msra.mxu0 0.0
  %5953 = vmatprep.subr.mxu0 0.0
  %5954 = vmatpush1.msra.mxu0 0.0
  %5955 = vmatprep.subr.mxu0 0.0
  %5956 = vmatpush1.msra.mxu0 0.0
  %5957 = vmatprep.subr.mxu0 0.0
  %5958 = vmatpush1.msra.mxu0 0.0
  %5959 = vmatprep.subr.mxu0 0.0
  %5960 = vmatpush1.msra.mxu0 0.0
  %5961 = vmatprep.subr.mxu0 0.0
  %5962 = vmatpush1.msra.mxu0 0.0
  %5963 = vmatprep.subr.mxu0 0.0
  %5964 = vmatpush1.msra.mxu0 0.0
  %5965 = vmatprep.subr.mxu0 0.0
  %5966 = vmatpush1.msra.mxu0 0.0
  %5967 = vmatprep.subr.mxu0 0.0
  %5968 = vmatpush1.msra.mxu0 0.0
  %5969 = vmatprep.subr.mxu0 0.0
  %5970 = vmatpush1.msra.mxu0 0.0
  %5971 = vmatprep.subr.mxu0 0.0
  %5972 = vmatpush1.msra.mxu0 0.0
  %5973 = vmatprep.subr.mxu0 0.0
  %5974 = vmatpush1.msra.mxu0 0.0
  %5975 = vmatprep.subr.mxu0 0.0
  %5976 = vmatpush1.msra.mxu0 0.0
  %5977 = vmatprep.subr.mxu0 0.0
  %5978 = vmatpush1.msra.mxu0 0.0
  %5979 = vmatprep.subr.mxu0 0.0
  %5980 = vmatpush1.msra.mxu0 0.0
  %5981 = vmatprep.subr.mxu0 0.0
  %5982 = vmatpush1.msra.mxu0 0.0
  %5983 = vmatprep.subr.mxu0 0.0
  %5984 = vmatpush1.msra.mxu0 0.0
  %5985 = vmatprep.subr.mxu0 0.0
  %5986 = vmatpush1.msra.mxu0 0.0
  %5987 = vmatprep.subr.mxu0 0.0
  %5988 = vmatpush1.msra.mxu0 0.0
  %5989 = vmatprep.subr.mxu0 0.0
  %5990 = vmatpush1.msra.mxu0 0.0
  %5991 = vmatprep.subr.mxu0 0.0
  %5992 = vmatpush1.msra.mxu0 0.0
  %5993 = vmatprep.subr.mxu0 0.0
  %5994 = vmatpush1.msra.mxu0 0.0
  %5995 = vmatprep.subr.mxu0 0.0
  %5996 = vmatpush1.msra.mxu0 0.0
  %5997 = vmatprep.subr.mxu0 0.0
  %5998 = vmatpush1.msra.mxu0 0.0
  %5999 = vmatprep.subr.mxu0 0.0
  %6000 = vmatpush1.msra.mxu0 0.0
  %6001 = vmatprep.subr.mxu0 0.0
  %6002 = vmatpush1.msra.mxu0 0.0
  %6003 = vmatprep.subr.mxu0 0.0
  %6004 = vmatpush1.msra.mxu0 0.0
  %6005 = vmatprep.subr.mxu0 0.0
  %6006 = vmatpush1.msra.mxu0 0.0
  %6007 = vmatprep.mubr.f32.mxu0 0.0
  %v6008 = vand.u32 %v5854, 4294901760
  %6009 = vmatmul.mubr.f32.gmra.mrb[0].mxu0 %v6008
  %v6010 = vpop.f32.mrb[0].mxu0
  %v6011 = vadd.f32 %v5930, %v6010
  %v6012 = vpop.f32.mrb[0].mxu0
  %6013 = vdwg.mxu0
  %6014 = vmatprep.subr.mxu0 0.0
  %v6015 = vand.u32 %v16, 4294901760
  %v6016 = vsub.f32 %v16, %v6015
  %6017 = vmatpush1.msra.mxu0 %v6016
  %6018 = vmatprep.subr.mxu0 0.0
  %v6019 = vand.u32 %v17, 4294901760
  %v6020 = vsub.f32 %v17, %v6019
  %6021 = vmatpush1.msra.mxu0 %v6020
  %6022 = vmatprep.subr.mxu0 0.0
  %6023 = vmatpush1.msra.mxu0 0.0
  %6024 = vmatprep.subr.mxu0 0.0
  %6025 = vmatpush1.msra.mxu0 0.0
  %6026 = vmatprep.subr.mxu0 0.0
  %6027 = vmatpush1.msra.mxu0 0.0
  %6028 = vmatprep.subr.mxu0 0.0
  %6029 = vmatpush1.msra.mxu0 0.0
  %6030 = vmatprep.subr.mxu0 0.0
  %6031 = vmatpush1.msra.mxu0 0.0
  %6032 = vmatprep.subr.mxu0 0.0
  %6033 = vmatpush1.msra.mxu0 0.0
  %6034 = vmatprep.subr.mxu0 0.0
  %6035 = vmatpush1.msra.mxu0 0.0
  %6036 = vmatprep.subr.mxu0 0.0
  %6037 = vmatpush1.msra.mxu0 0.0
  %6038 = vmatprep.subr.mxu0 0.0
  %6039 = vmatpush1.msra.mxu0 0.0
  %6040 = vmatprep.subr.mxu0 0.0
  %6041 = vmatpush1.msra.mxu0 0.0
  %6042 = vmatprep.subr.mxu0 0.0
  %6043 = vmatpush1.msra.mxu0 0.0
  %6044 = vmatprep.subr.mxu0 0.0
  %6045 = vmatpush1.msra.mxu0 0.0
  %6046 = vmatprep.subr.mxu0 0.0
  %6047 = vmatpush1.msra.mxu0 0.0
  %6048 = vmatprep.subr.mxu0 0.0
  %6049 = vmatpush1.msra.mxu0 0.0
  %6050 = vmatprep.subr.mxu0 0.0
  %6051 = vmatpush1.msra.mxu0 0.0
  %6052 = vmatprep.subr.mxu0 0.0
  %6053 = vmatpush1.msra.mxu0 0.0
  %6054 = vmatprep.subr.mxu0 0.0
  %6055 = vmatpush1.msra.mxu0 0.0
  %6056 = vmatprep.subr.mxu0 0.0
  %6057 = vmatpush1.msra.mxu0 0.0
  %6058 = vmatprep.subr.mxu0 0.0
  %6059 = vmatpush1.msra.mxu0 0.0
  %6060 = vmatprep.subr.mxu0 0.0
  %6061 = vmatpush1.msra.mxu0 0.0
  %6062 = vmatprep.subr.mxu0 0.0
  %6063 = vmatpush1.msra.mxu0 0.0
  %6064 = vmatprep.subr.mxu0 0.0
  %6065 = vmatpush1.msra.mxu0 0.0
  %6066 = vmatprep.subr.mxu0 0.0
  %6067 = vmatpush1.msra.mxu0 0.0
  %6068 = vmatprep.subr.mxu0 0.0
  %6069 = vmatpush1.msra.mxu0 0.0
  %6070 = vmatprep.subr.mxu0 0.0
  %6071 = vmatpush1.msra.mxu0 0.0
  %6072 = vmatprep.subr.mxu0 0.0
  %6073 = vmatpush1.msra.mxu0 0.0
  %6074 = vmatprep.subr.mxu0 0.0
  %6075 = vmatpush1.msra.mxu0 0.0
  %6076 = vmatprep.subr.mxu0 0.0
  %6077 = vmatpush1.msra.mxu0 0.0
  %6078 = vmatprep.subr.mxu0 0.0
  %6079 = vmatpush1.msra.mxu0 0.0
  %6080 = vmatprep.subr.mxu0 0.0
  %6081 = vmatpush1.msra.mxu0 0.0
  %6082 = vmatprep.mubr.f32.mxu0 0.0
  %v6083 = vand.u32 %v5854, 4294901760
  %v6084 = vsub.f32 %v5854, %v6083
  %6085 = vmatmul.mubr.f32.gmra.mrb[0].mxu0 %v6084
  %v6086 = vpop.f32.mrb[0].mxu0
  %v6087 = vadd.f32 %v6011, %v6086
  %v6088 = vpop.f32.mrb[0].mxu0
  %6089 = vdwg.mxu0
  %6090 = vmatprep.subr.mxu0 0.0
  %v6091 = vand.u32 %v16, 4294901760
  %6092 = vmatpush1.msra.mxu0 %v6091
  %6093 = vmatprep.subr.mxu0 0.0
  %v6094 = vand.u32 %v17, 4294901760
  %6095 = vmatpush1.msra.mxu0 %v6094
  %6096 = vmatprep.subr.mxu0 0.0
  %6097 = vmatpush1.msra.mxu0 0.0
  %6098 = vmatprep.subr.mxu0 0.0
  %6099 = vmatpush1.msra.mxu0 0.0
  %6100 = vmatprep.subr.mxu0 0.0
  %6101 = vmatpush1.msra.mxu0 0.0
  %6102 = vmatprep.subr.mxu0 0.0
  %6103 = vmatpush1.msra.mxu0 0.0
  %6104 = vmatprep.subr.mxu0 0.0
  %6105 = vmatpush1.msra.mxu0 0.0
  %6106 = vmatprep.subr.mxu0 0.0
  %6107 = vmatpush1.msra.mxu0 0.0
  %6108 = vmatprep.subr.mxu0 0.0
  %6109 = vmatpush1.msra.mxu0 0.0
  %6110 = vmatprep.subr.mxu0 0.0
  %6111 = vmatpush1.msra.mxu0 0.0
  %6112 = vmatprep.subr.mxu0 0.0
  %6113 = vmatpush1.msra.mxu0 0.0
  %6114 = vmatprep.subr.mxu0 0.0
  %6115 = vmatpush1.msra.mxu0 0.0
  %6116 = vmatprep.subr.mxu0 0.0
  %6117 = vmatpush1.msra.mxu0 0.0
  %6118 = vmatprep.subr.mxu0 0.0
  %6119 = vmatpush1.msra.mxu0 0.0
  %6120 = vmatprep.subr.mxu0 0.0
  %6121 = vmatpush1.msra.mxu0 0.0
  %6122 = vmatprep.subr.mxu0 0.0
  %6123 = vmatpush1.msra.mxu0 0.0
  %6124 = vmatprep.subr.mxu0 0.0
  %6125 = vmatpush1.msra.mxu0 0.0
  %6126 = vmatprep.subr.mxu0 0.0
  %6127 = vmatpush1.msra.mxu0 0.0
  %6128 = vmatprep.subr.mxu0 0.0
  %6129 = vmatpush1.msra.mxu0 0.0
  %6130 = vmatprep.subr.mxu0 0.0
  %6131 = vmatpush1.msra.mxu0 0.0
  %6132 = vmatprep.subr.mxu0 0.0
  %6133 = vmatpush1.msra.mxu0 0.0
  %6134 = vmatprep.subr.mxu0 0.0
  %6135 = vmatpush1.msra.mxu0 0.0
  %6136 = vmatprep.subr.mxu0 0.0
  %6137 = vmatpush1.msra.mxu0 0.0
  %6138 = vmatprep.subr.mxu0 0.0
  %6139 = vmatpush1.msra.mxu0 0.0
  %6140 = vmatprep.subr.mxu0 0.0
  %6141 = vmatpush1.msra.mxu0 0.0
  %6142 = vmatprep.subr.mxu0 0.0
  %6143 = vmatpush1.msra.mxu0 0.0
  %6144 = vmatprep.subr.mxu0 0.0
  %6145 = vmatpush1.msra.mxu0 0.0
  %6146 = vmatprep.subr.mxu0 0.0
  %6147 = vmatpush1.msra.mxu0 0.0
  %6148 = vmatprep.subr.mxu0 0.0
  %6149 = vmatpush1.msra.mxu0 0.0
  %6150 = vmatprep.subr.mxu0 0.0
  %6151 = vmatpush1.msra.mxu0 0.0
  %6152 = vmatprep.subr.mxu0 0.0
  %6153 = vmatpush1.msra.mxu0 0.0
  %6154 = vmatprep.subr.mxu0 0.0
  %6155 = vmatpush1.msra.mxu0 0.0
  %6156 = vmatprep.mubr.f32.mxu0 0.0
  %v6157 = vand.u32 %v5854, 4294901760
  %v6158 = vsub.f32 %v5854, %v6157
  %v6159 = vand.u32 %v6158, 4294901760
  %6160 = vmatmul.mubr.f32.gmra.mrb[0].mxu0 %v6159
  %v6161 = vpop.f32.mrb[0].mxu0
  %v6162 = vadd.f32 %v6087, %v6161
  %v6163 = vpop.f32.mrb[0].mxu0
  %6164 = vdwg.mxu0
  %6165 = vmatprep.subr.mxu0 0.0
  %v6166 = vand.u32 %v16, 4294901760
  %v6167 = vsub.f32 %v16, %v6166
  %v6168 = vand.u32 %v6167, 4294901760
  %6169 = vmatpush1.msra.mxu0 %v6168
  %6170 = vmatprep.subr.mxu0 0.0
  %v6171 = vand.u32 %v17, 4294901760
  %v6172 = vsub.f32 %v17, %v6171
  %v6173 = vand.u32 %v6172, 4294901760
  %6174 = vmatpush1.msra.mxu0 %v6173
  %6175 = vmatprep.subr.mxu0 0.0
  %6176 = vmatpush1.msra.mxu0 0.0
  %6177 = vmatprep.subr.mxu0 0.0
  %6178 = vmatpush1.msra.mxu0 0.0
  %6179 = vmatprep.subr.mxu0 0.0
  %6180 = vmatpush1.msra.mxu0 0.0
  %6181 = vmatprep.subr.mxu0 0.0
  %6182 = vmatpush1.msra.mxu0 0.0
  %6183 = vmatprep.subr.mxu0 0.0
  %6184 = vmatpush1.msra.mxu0 0.0
  %6185 = vmatprep.subr.mxu0 0.0
  %6186 = vmatpush1.msra.mxu0 0.0
  %6187 = vmatprep.subr.mxu0 0.0
  %6188 = vmatpush1.msra.mxu0 0.0
  %6189 = vmatprep.subr.mxu0 0.0
  %6190 = vmatpush1.msra.mxu0 0.0
  %6191 = vmatprep.subr.mxu0 0.0
  %6192 = vmatpush1.msra.mxu0 0.0
  %6193 = vmatprep.subr.mxu0 0.0
  %6194 = vmatpush1.msra.mxu0 0.0
  %6195 = vmatprep.subr.mxu0 0.0
  %6196 = vmatpush1.msra.mxu0 0.0
  %6197 = vmatprep.subr.mxu0 0.0
  %6198 = vmatpush1.msra.mxu0 0.0
  %6199 = vmatprep.subr.mxu0 0.0
  %6200 = vmatpush1.msra.mxu0 0.0
  %6201 = vmatprep.subr.mxu0 0.0
  %6202 = vmatpush1.msra.mxu0 0.0
  %6203 = vmatprep.subr.mxu0 0.0
  %6204 = vmatpush1.msra.mxu0 0.0
  %6205 = vmatprep.subr.mxu0 0.0
  %6206 = vmatpush1.msra.mxu0 0.0
  %6207 = vmatprep.subr.mxu0 0.0
  %6208 = vmatpush1.msra.mxu0 0.0
  %6209 = vmatprep.subr.mxu0 0.0
  %6210 = vmatpush1.msra.mxu0 0.0
  %6211 = vmatprep.subr.mxu0 0.0
  %6212 = vmatpush1.msra.mxu0 0.0
  %6213 = vmatprep.subr.mxu0 0.0
  %6214 = vmatpush1.msra.mxu0 0.0
  %6215 = vmatprep.subr.mxu0 0.0
  %6216 = vmatpush1.msra.mxu0 0.0
  %6217 = vmatprep.subr.mxu0 0.0
  %6218 = vmatpush1.msra.mxu0 0.0
  %6219 = vmatprep.subr.mxu0 0.0
  %6220 = vmatpush1.msra.mxu0 0.0
  %6221 = vmatprep.subr.mxu0 0.0
  %6222 = vmatpush1.msra.mxu0 0.0
  %6223 = vmatprep.subr.mxu0 0.0
  %6224 = vmatpush1.msra.mxu0 0.0
  %6225 = vmatprep.subr.mxu0 0.0
  %6226 = vmatpush1.msra.mxu0 0.0
  %6227 = vmatprep.subr.mxu0 0.0
  %6228 = vmatpush1.msra.mxu0 0.0
  %6229 = vmatprep.subr.mxu0 0.0
  %6230 = vmatpush1.msra.mxu0 0.0
  %6231 = vmatprep.subr.mxu0 0.0
  %6232 = vmatpush1.msra.mxu0 0.0
  %6233 = vmatprep.subr.mxu0 0.0
  %6234 = vmatpush1.msra.mxu0 0.0
  %6235 = vmatprep.mubr.f32.mxu0 0.0
  %v6236 = vand.u32 %v5854, 4294901760
  %6237 = vmatmul.mubr.f32.gmra.mrb[0].mxu0 %v6236
  %v6238 = vpop.f32.mrb[0].mxu0
  %v6239 = vadd.f32 %v6162, %v6238
  %v6240 = vpop.f32.mrb[0].mxu0
  %6241 = vdwg.mxu0
  %6242 = vmatprep.subr.mxu0 0.0
  %v6243 = vand.u32 %v16, 4294901760
  %6244 = vmatpush1.msra.mxu0 %v6243
  %6245 = vmatprep.subr.mxu0 0.0
  %v6246 = vand.u32 %v17, 4294901760
  %6247 = vmatpush1.msra.mxu0 %v6246
  %6248 = vmatprep.subr.mxu0 0.0
  %6249 = vmatpush1.msra.mxu0 0.0
  %6250 = vmatprep.subr.mxu0 0.0
  %6251 = vmatpush1.msra.mxu0 0.0
  %6252 = vmatprep.subr.mxu0 0.0
  %6253 = vmatpush1.msra.mxu0 0.0
  %6254 = vmatprep.subr.mxu0 0.0
  %6255 = vmatpush1.msra.mxu0 0.0
  %6256 = vmatprep.subr.mxu0 0.0
  %6257 = vmatpush1.msra.mxu0 0.0
  %6258 = vmatprep.subr.mxu0 0.0
  %6259 = vmatpush1.msra.mxu0 0.0
  %6260 = vmatprep.subr.mxu0 0.0
  %6261 = vmatpush1.msra.mxu0 0.0
  %6262 = vmatprep.subr.mxu0 0.0
  %6263 = vmatpush1.msra.mxu0 0.0
  %6264 = vmatprep.subr.mxu0 0.0
  %6265 = vmatpush1.msra.mxu0 0.0
  %6266 = vmatprep.subr.mxu0 0.0
  %6267 = vmatpush1.msra.mxu0 0.0
  %6268 = vmatprep.subr.mxu0 0.0
  %6269 = vmatpush1.msra.mxu0 0.0
  %6270 = vmatprep.subr.mxu0 0.0
  %6271 = vmatpush1.msra.mxu0 0.0
  %6272 = vmatprep.subr.mxu0 0.0
  %6273 = vmatpush1.msra.mxu0 0.0
  %6274 = vmatprep.subr.mxu0 0.0
  %6275 = vmatpush1.msra.mxu0 0.0
  %6276 = vmatprep.subr.mxu0 0.0
  %6277 = vmatpush1.msra.mxu0 0.0
  %6278 = vmatprep.subr.mxu0 0.0
  %6279 = vmatpush1.msra.mxu0 0.0
  %6280 = vmatprep.subr.mxu0 0.0
  %6281 = vmatpush1.msra.mxu0 0.0
  %6282 = vmatprep.subr.mxu0 0.0
  %6283 = vmatpush1.msra.mxu0 0.0
  %6284 = vmatprep.subr.mxu0 0.0
  %6285 = vmatpush1.msra.mxu0 0.0
  %6286 = vmatprep.subr.mxu0 0.0
  %6287 = vmatpush1.msra.mxu0 0.0
  %6288 = vmatprep.subr.mxu0 0.0
  %6289 = vmatpush1.msra.mxu0 0.0
  %6290 = vmatprep.subr.mxu0 0.0
  %6291 = vmatpush1.msra.mxu0 0.0
  %6292 = vmatprep.subr.mxu0 0.0
  %6293 = vmatpush1.msra.mxu0 0.0
  %6294 = vmatprep.subr.mxu0 0.0
  %6295 = vmatpush1.msra.mxu0 0.0
  %6296 = vmatprep.subr.mxu0 0.0
  %6297 = vmatpush1.msra.mxu0 0.0
  %6298 = vmatprep.subr.mxu0 0.0
  %6299 = vmatpush1.msra.mxu0 0.0
  %6300 = vmatprep.subr.mxu0 0.0
  %6301 = vmatpush1.msra.mxu0 0.0
  %6302 = vmatprep.subr.mxu0 0.0
  %6303 = vmatpush1.msra.mxu0 0.0
  %6304 = vmatprep.subr.mxu0 0.0
  %6305 = vmatpush1.msra.mxu0 0.0
  %6306 = vmatprep.subr.mxu0 0.0
  %6307 = vmatpush1.msra.mxu0 0.0
  %6308 = vmatprep.mubr.f32.mxu0 0.0
  %v6309 = vand.u32 %v5854, 4294901760
  %6310 = vmatmul.mubr.f32.gmra.mrb[0].mxu0 %v6309
  %v6311 = vpop.f32.mrb[0].mxu0
  %v6312 = vadd.f32 %v6239, %v6311
  %v6313 = vpop.f32.mrb[0].mxu0
  %6314 = vdwg.mxu0
  %v6316 = vsel %vm55, %v5849, 0
  %6318 = vmatprep.subr.mxu0 0.0
  %v6319 = vand.u32 %v14, 4294901760
  %6320 = vmatpush1.msra.mxu0 %v6319
  %6321 = vmatprep.subr.mxu0 0.0
  %v6322 = vand.u32 %v15, 4294901760
  %6323 = vmatpush1.msra.mxu0 %v6322
  %6324 = vmatprep.subr.mxu0 0.0
  %6325 = vmatpush1.msra.mxu0 0.0
  %6326 = vmatprep.subr.mxu0 0.0
  %6327 = vmatpush1.msra.mxu0 0.0
  %6328 = vmatprep.subr.mxu0 0.0
  %6329 = vmatpush1.msra.mxu0 0.0
  %6330 = vmatprep.subr.mxu0 0.0
  %6331 = vmatpush1.msra.mxu0 0.0
  %6332 = vmatprep.subr.mxu0 0.0
  %6333 = vmatpush1.msra.mxu0 0.0
  %6334 = vmatprep.subr.mxu0 0.0
  %6335 = vmatpush1.msra.mxu0 0.0
  %6336 = vmatprep.subr.mxu0 0.0
  %6337 = vmatpush1.msra.mxu0 0.0
  %6338 = vmatprep.subr.mxu0 0.0
  %6339 = vmatpush1.msra.mxu0 0.0
  %6340 = vmatprep.subr.mxu0 0.0
  %6341 = vmatpush1.msra.mxu0 0.0
  %6342 = vmatprep.subr.mxu0 0.0
  %6343 = vmatpush1.msra.mxu0 0.0
  %6344 = vmatprep.subr.mxu0 0.0
  %6345 = vmatpush1.msra.mxu0 0.0
  %6346 = vmatprep.subr.mxu0 0.0
  %6347 = vmatpush1.msra.mxu0 0.0
  %6348 = vmatprep.subr.mxu0 0.0
  %6349 = vmatpush1.msra.mxu0 0.0
  %6350 = vmatprep.subr.mxu0 0.0
  %6351 = vmatpush1.msra.mxu0 0.0
  %6352 = vmatprep.subr.mxu0 0.0
  %6353 = vmatpush1.msra.mxu0 0.0
  %6354 = vmatprep.subr.mxu0 0.0
  %6355 = vmatpush1.msra.mxu0 0.0
  %6356 = vmatprep.subr.mxu0 0.0
  %6357 = vmatpush1.msra.mxu0 0.0
  %6358 = vmatprep.subr.mxu0 0.0
  %6359 = vmatpush1.msra.mxu0 0.0
  %6360 = vmatprep.subr.mxu0 0.0
  %6361 = vmatpush1.msra.mxu0 0.0
  %6362 = vmatprep.subr.mxu0 0.0
  %6363 = vmatpush1.msra.mxu0 0.0
  %6364 = vmatprep.subr.mxu0 0.0
  %6365 = vmatpush1.msra.mxu0 0.0
  %6366 = vmatprep.subr.mxu0 0.0
  %6367 = vmatpush1.msra.mxu0 0.0
  %6368 = vmatprep.subr.mxu0 0.0
  %6369 = vmatpush1.msra.mxu0 0.0
  %6370 = vmatprep.subr.mxu0 0.0
  %6371 = vmatpush1.msra.mxu0 0.0
  %6372 = vmatprep.subr.mxu0 0.0
  %6373 = vmatpush1.msra.mxu0 0.0
  %6374 = vmatprep.subr.mxu0 0.0
  %6375 = vmatpush1.msra.mxu0 0.0
  %6376 = vmatprep.subr.mxu0 0.0
  %6377 = vmatpush1.msra.mxu0 0.0
  %6378 = vmatprep.subr.mxu0 0.0
  %6379 = vmatpush1.msra.mxu0 0.0
  %6380 = vmatprep.subr.mxu0 0.0
  %6381 = vmatpush1.msra.mxu0 0.0
  %6382 = vmatprep.subr.mxu0 0.0
  %6383 = vmatpush1.msra.mxu0 0.0
  %6384 = vmatprep.mubr.f32.mxu0 0.0
  %v6385 = vand.u32 %v6316, 4294901760
  %v6386 = vsub.f32 %v6316, %v6385
  %v6387 = vand.u32 %v6386, 4294901760
  %v6388 = vsub.f32 %v6386, %v6387
  %v6389 = vand.u32 %v6388, 4294901760
  %6390 = vmatmul.mubr.f32.gmra.mrb[0].mxu0 %v6389
  %v6391 = vpop.f32.mrb[0].mxu0
  %v6392 = vadd.f32 %v6312, %v6391
  %v6393 = vpop.f32.mrb[0].mxu0
  %6394 = vdwg.mxu0
  %6395 = vmatprep.subr.mxu0 0.0
  %v6396 = vand.u32 %v14, 4294901760
  %v6397 = vsub.f32 %v14, %v6396
  %v6398 = vand.u32 %v6397, 4294901760
  %v6399 = vsub.f32 %v6397, %v6398
  %v6400 = vand.u32 %v6399, 4294901760
  %6401 = vmatpush1.msra.mxu0 %v6400
  %6402 = vmatprep.subr.mxu0 0.0
  %v6403 = vand.u32 %v15, 4294901760
  %v6404 = vsub.f32 %v15, %v6403
  %v6405 = vand.u32 %v6404, 4294901760
  %v6406 = vsub.f32 %v6404, %v6405
  %v6407 = vand.u32 %v6406, 4294901760
  %6408 = vmatpush1.msra.mxu0 %v6407
  %6409 = vmatprep.subr.mxu0 0.0
  %6410 = vmatpush1.msra.mxu0 0.0
  %6411 = vmatprep.subr.mxu0 0.0
  %6412 = vmatpush1.msra.mxu0 0.0
  %6413 = vmatprep.subr.mxu0 0.0
  %6414 = vmatpush1.msra.mxu0 0.0
  %6415 = vmatprep.subr.mxu0 0.0
  %6416 = vmatpush1.msra.mxu0 0.0
  %6417 = vmatprep.subr.mxu0 0.0
  %6418 = vmatpush1.msra.mxu0 0.0
  %6419 = vmatprep.subr.mxu0 0.0
  %6420 = vmatpush1.msra.mxu0 0.0
  %6421 = vmatprep.subr.mxu0 0.0
  %6422 = vmatpush1.msra.mxu0 0.0
  %6423 = vmatprep.subr.mxu0 0.0
  %6424 = vmatpush1.msra.mxu0 0.0
  %6425 = vmatprep.subr.mxu0 0.0
  %6426 = vmatpush1.msra.mxu0 0.0
  %6427 = vmatprep.subr.mxu0 0.0
  %6428 = vmatpush1.msra.mxu0 0.0
  %6429 = vmatprep.subr.mxu0 0.0
  %6430 = vmatpush1.msra.mxu0 0.0
  %6431 = vmatprep.subr.mxu0 0.0
  %6432 = vmatpush1.msra.mxu0 0.0
  %6433 = vmatprep.subr.mxu0 0.0
  %6434 = vmatpush1.msra.mxu0 0.0
  %6435 = vmatprep.subr.mxu0 0.0
  %6436 = vmatpush1.msra.mxu0 0.0
  %6437 = vmatprep.subr.mxu0 0.0
  %6438 = vmatpush1.msra.mxu0 0.0
  %6439 = vmatprep.subr.mxu0 0.0
  %6440 = vmatpush1.msra.mxu0 0.0
  %6441 = vmatprep.subr.mxu0 0.0
  %6442 = vmatpush1.msra.mxu0 0.0
  %6443 = vmatprep.subr.mxu0 0.0
  %6444 = vmatpush1.msra.mxu0 0.0
  %6445 = vmatprep.subr.mxu0 0.0
  %6446 = vmatpush1.msra.mxu0 0.0
  %6447 = vmatprep.subr.mxu0 0.0
  %6448 = vmatpush1.msra.mxu0 0.0
  %6449 = vmatprep.subr.mxu0 0.0
  %6450 = vmatpush1.msra.mxu0 0.0
  %6451 = vmatprep.subr.mxu0 0.0
  %6452 = vmatpush1.msra.mxu0 0.0
  %6453 = vmatprep.subr.mxu0 0.0
  %6454 = vmatpush1.msra.mxu0 0.0
  %6455 = vmatprep.subr.mxu0 0.0
  %6456 = vmatpush1.msra.mxu0 0.0
  %6457 = vmatprep.subr.mxu0 0.0
  %6458 = vmatpush1.msra.mxu0 0.0
  %6459 = vmatprep.subr.mxu0 0.0
  %6460 = vmatpush1.msra.mxu0 0.0
  %6461 = vmatprep.subr.mxu0 0.0
  %6462 = vmatpush1.msra.mxu0 0.0
  %6463 = vmatprep.subr.mxu0 0.0
  %6464 = vmatpush1.msra.mxu0 0.0
  %6465 = vmatprep.subr.mxu0 0.0
  %6466 = vmatpush1.msra.mxu0 0.0
  %6467 = vmatprep.subr.mxu0 0.0
  %6468 = vmatpush1.msra.mxu0 0.0
  %6469 = vmatprep.mubr.f32.mxu0 0.0
  %v6470 = vand.u32 %v6316, 4294901760
  %6471 = vmatmul.mubr.f32.gmra.mrb[0].mxu0 %v6470
  %v6472 = vpop.f32.mrb[0].mxu0
  %v6473 = vadd.f32 %v6392, %v6472
  %v6474 = vpop.f32.mrb[0].mxu0
  %6475 = vdwg.mxu0
  %6476 = vmatprep.subr.mxu0 0.0
  %v6477 = vand.u32 %v14, 4294901760
  %v6478 = vsub.f32 %v14, %v6477
  %6479 = vmatpush1.msra.mxu0 %v6478
  %6480 = vmatprep.subr.mxu0 0.0
  %v6481 = vand.u32 %v15, 4294901760
  %v6482 = vsub.f32 %v15, %v6481
  %6483 = vmatpush1.msra.mxu0 %v6482
  %6484 = vmatprep.subr.mxu0 0.0
  %6485 = vmatpush1.msra.mxu0 0.0
  %6486 = vmatprep.subr.mxu0 0.0
  %6487 = vmatpush1.msra.mxu0 0.0
  %6488 = vmatprep.subr.mxu0 0.0
  %6489 = vmatpush1.msra.mxu0 0.0
  %6490 = vmatprep.subr.mxu0 0.0
  %6491 = vmatpush1.msra.mxu0 0.0
  %6492 = vmatprep.subr.mxu0 0.0
  %6493 = vmatpush1.msra.mxu0 0.0
  %6494 = vmatprep.subr.mxu0 0.0
  %6495 = vmatpush1.msra.mxu0 0.0
  %6496 = vmatprep.subr.mxu0 0.0
  %6497 = vmatpush1.msra.mxu0 0.0
  %6498 = vmatprep.subr.mxu0 0.0
  %6499 = vmatpush1.msra.mxu0 0.0
  %6500 = vmatprep.subr.mxu0 0.0
  %6501 = vmatpush1.msra.mxu0 0.0
  %6502 = vmatprep.subr.mxu0 0.0
  %6503 = vmatpush1.msra.mxu0 0.0
  %6504 = vmatprep.subr.mxu0 0.0
  %6505 = vmatpush1.msra.mxu0 0.0
  %6506 = vmatprep.subr.mxu0 0.0
  %6507 = vmatpush1.msra.mxu0 0.0
  %6508 = vmatprep.subr.mxu0 0.0
  %6509 = vmatpush1.msra.mxu0 0.0
  %6510 = vmatprep.subr.mxu0 0.0
  %6511 = vmatpush1.msra.mxu0 0.0
  %6512 = vmatprep.subr.mxu0 0.0
  %6513 = vmatpush1.msra.mxu0 0.0
  %6514 = vmatprep.subr.mxu0 0.0
  %6515 = vmatpush1.msra.mxu0 0.0
  %6516 = vmatprep.subr.mxu0 0.0
  %6517 = vmatpush1.msra.mxu0 0.0
  %6518 = vmatprep.subr.mxu0 0.0
  %6519 = vmatpush1.msra.mxu0 0.0
  %6520 = vmatprep.subr.mxu0 0.0
  %6521 = vmatpush1.msra.mxu0 0.0
  %6522 = vmatprep.subr.mxu0 0.0
  %6523 = vmatpush1.msra.mxu0 0.0
  %6524 = vmatprep.subr.mxu0 0.0
  %6525 = vmatpush1.msra.mxu0 0.0
  %6526 = vmatprep.subr.mxu0 0.0
  %6527 = vmatpush1.msra.mxu0 0.0
  %6528 = vmatprep.subr.mxu0 0.0
  %6529 = vmatpush1.msra.mxu0 0.0
  %6530 = vmatprep.subr.mxu0 0.0
  %6531 = vmatpush1.msra.mxu0 0.0
  %6532 = vmatprep.subr.mxu0 0.0
  %6533 = vmatpush1.msra.mxu0 0.0
  %6534 = vmatprep.subr.mxu0 0.0
  %6535 = vmatpush1.msra.mxu0 0.0
  %6536 = vmatprep.subr.mxu0 0.0
  %6537 = vmatpush1.msra.mxu0 0.0
  %6538 = vmatprep.subr.mxu0 0.0
  %6539 = vmatpush1.msra.mxu0 0.0
  %6540 = vmatprep.subr.mxu0 0.0
  %6541 = vmatpush1.msra.mxu0 0.0
  %6542 = vmatprep.subr.mxu0 0.0
  %6543 = vmatpush1.msra.mxu0 0.0
  %6544 = vmatprep.mubr.f32.mxu0 0.0
  %v6545 = vand.u32 %v6316, 4294901760
  %v6546 = vsub.f32 %v6316, %v6545
  %6547 = vmatmul.mubr.f32.gmra.mrb[0].mxu0 %v6546
  %v6548 = vpop.f32.mrb[0].mxu0
  %v6549 = vadd.f32 %v6473, %v6548
  %v6550 = vpop.f32.mrb[0].mxu0
  %6551 = vdwg.mxu0
  %6552 = vmatprep.subr.mxu0 0.0
  %v6553 = vand.u32 %v14, 4294901760
  %6554 = vmatpush1.msra.mxu0 %v6553
  %6555 = vmatprep.subr.mxu0 0.0
  %v6556 = vand.u32 %v15, 4294901760
  %6557 = vmatpush1.msra.mxu0 %v6556
  %6558 = vmatprep.subr.mxu0 0.0
  %6559 = vmatpush1.msra.mxu0 0.0
  %6560 = vmatprep.subr.mxu0 0.0
  %6561 = vmatpush1.msra.mxu0 0.0
  %6562 = vmatprep.subr.mxu0 0.0
  %6563 = vmatpush1.msra.mxu0 0.0
  %6564 = vmatprep.subr.mxu0 0.0
  %6565 = vmatpush1.msra.mxu0 0.0
  %6566 = vmatprep.subr.mxu0 0.0
  %6567 = vmatpush1.msra.mxu0 0.0
  %6568 = vmatprep.subr.mxu0 0.0
  %6569 = vmatpush1.msra.mxu0 0.0
  %6570 = vmatprep.subr.mxu0 0.0
  %6571 = vmatpush1.msra.mxu0 0.0
  %6572 = vmatprep.subr.mxu0 0.0
  %6573 = vmatpush1.msra.mxu0 0.0
  %6574 = vmatprep.subr.mxu0 0.0
  %6575 = vmatpush1.msra.mxu0 0.0
  %6576 = vmatprep.subr.mxu0 0.0
  %6577 = vmatpush1.msra.mxu0 0.0
  %6578 = vmatprep.subr.mxu0 0.0
  %6579 = vmatpush1.msra.mxu0 0.0
  %6580 = vmatprep.subr.mxu0 0.0
  %6581 = vmatpush1.msra.mxu0 0.0
  %6582 = vmatprep.subr.mxu0 0.0
  %6583 = vmatpush1.msra.mxu0 0.0
  %6584 = vmatprep.subr.mxu0 0.0
  %6585 = vmatpush1.msra.mxu0 0.0
  %6586 = vmatprep.subr.mxu0 0.0
  %6587 = vmatpush1.msra.mxu0 0.0
  %6588 = vmatprep.subr.mxu0 0.0
  %6589 = vmatpush1.msra.mxu0 0.0
  %6590 = vmatprep.subr.mxu0 0.0
  %6591 = vmatpush1.msra.mxu0 0.0
  %6592 = vmatprep.subr.mxu0 0.0
  %6593 = vmatpush1.msra.mxu0 0.0
  %6594 = vmatprep.subr.mxu0 0.0
  %6595 = vmatpush1.msra.mxu0 0.0
  %6596 = vmatprep.subr.mxu0 0.0
  %6597 = vmatpush1.msra.mxu0 0.0
  %6598 = vmatprep.subr.mxu0 0.0
  %6599 = vmatpush1.msra.mxu0 0.0
  %6600 = vmatprep.subr.mxu0 0.0
  %6601 = vmatpush1.msra.mxu0 0.0
  %6602 = vmatprep.subr.mxu0 0.0
  %6603 = vmatpush1.msra.mxu0 0.0
  %6604 = vmatprep.subr.mxu0 0.0
  %6605 = vmatpush1.msra.mxu0 0.0
  %6606 = vmatprep.subr.mxu0 0.0
  %6607 = vmatpush1.msra.mxu0 0.0
  %6608 = vmatprep.subr.mxu0 0.0
  %6609 = vmatpush1.msra.mxu0 0.0
  %6610 = vmatprep.subr.mxu0 0.0
  %6611 = vmatpush1.msra.mxu0 0.0
  %6612 = vmatprep.subr.mxu0 0.0
  %6613 = vmatpush1.msra.mxu0 0.0
  %6614 = vmatprep.subr.mxu0 0.0
  %6615 = vmatpush1.msra.mxu0 0.0
  %6616 = vmatprep.subr.mxu0 0.0
  %6617 = vmatpush1.msra.mxu0 0.0
  %6618 = vmatprep.mubr.f32.mxu0 0.0
  %v6619 = vand.u32 %v6316, 4294901760
  %v6620 = vsub.f32 %v6316, %v6619
  %v6621 = vand.u32 %v6620, 4294901760
  %6622 = vmatmul.mubr.f32.gmra.mrb[0].mxu0 %v6621
  %v6623 = vpop.f32.mrb[0].mxu0
  %v6624 = vadd.f32 %v6549, %v6623
  %v6625 = vpop.f32.mrb[0].mxu0
  %6626 = vdwg.mxu0
  %6627 = vmatprep.subr.mxu0 0.0
  %v6628 = vand.u32 %v14, 4294901760
  %v6629 = vsub.f32 %v14, %v6628
  %v6630 = vand.u32 %v6629, 4294901760
  %6631 = vmatpush1.msra.mxu0 %v6630
  %6632 = vmatprep.subr.mxu0 0.0
  %v6633 = vand.u32 %v15, 4294901760
  %v6634 = vsub.f32 %v15, %v6633
  %v6635 = vand.u32 %v6634, 4294901760
  %6636 = vmatpush1.msra.mxu0 %v6635
  %6637 = vmatprep.subr.mxu0 0.0
  %6638 = vmatpush1.msra.mxu0 0.0
  %6639 = vmatprep.subr.mxu0 0.0
  %6640 = vmatpush1.msra.mxu0 0.0
  %6641 = vmatprep.subr.mxu0 0.0
  %6642 = vmatpush1.msra.mxu0 0.0
  %6643 = vmatprep.subr.mxu0 0.0
  %6644 = vmatpush1.msra.mxu0 0.0
  %6645 = vmatprep.subr.mxu0 0.0
  %6646 = vmatpush1.msra.mxu0 0.0
  %6647 = vmatprep.subr.mxu0 0.0
  %6648 = vmatpush1.msra.mxu0 0.0
  %6649 = vmatprep.subr.mxu0 0.0
  %6650 = vmatpush1.msra.mxu0 0.0
  %6651 = vmatprep.subr.mxu0 0.0
  %6652 = vmatpush1.msra.mxu0 0.0
  %6653 = vmatprep.subr.mxu0 0.0
  %6654 = vmatpush1.msra.mxu0 0.0
  %6655 = vmatprep.subr.mxu0 0.0
  %6656 = vmatpush1.msra.mxu0 0.0
  %6657 = vmatprep.subr.mxu0 0.0
  %6658 = vmatpush1.msra.mxu0 0.0
  %6659 = vmatprep.subr.mxu0 0.0
  %6660 = vmatpush1.msra.mxu0 0.0
  %6661 = vmatprep.subr.mxu0 0.0
  %6662 = vmatpush1.msra.mxu0 0.0
  %6663 = vmatprep.subr.mxu0 0.0
  %6664 = vmatpush1.msra.mxu0 0.0
  %6665 = vmatprep.subr.mxu0 0.0
  %6666 = vmatpush1.msra.mxu0 0.0
  %6667 = vmatprep.subr.mxu0 0.0
  %6668 = vmatpush1.msra.mxu0 0.0
  %6669 = vmatprep.subr.mxu0 0.0
  %6670 = vmatpush1.msra.mxu0 0.0
  %6671 = vmatprep.subr.mxu0 0.0
  %6672 = vmatpush1.msra.mxu0 0.0
  %6673 = vmatprep.subr.mxu0 0.0
  %6674 = vmatpush1.msra.mxu0 0.0
  %6675 = vmatprep.subr.mxu0 0.0
  %6676 = vmatpush1.msra.mxu0 0.0
  %6677 = vmatprep.subr.mxu0 0.0
  %6678 = vmatpush1.msra.mxu0 0.0
  %6679 = vmatprep.subr.mxu0 0.0
  %6680 = vmatpush1.msra.mxu0 0.0
  %6681 = vmatprep.subr.mxu0 0.0
  %6682 = vmatpush1.msra.mxu0 0.0
  %6683 = vmatprep.subr.mxu0 0.0
  %6684 = vmatpush1.msra.mxu0 0.0
  %6685 = vmatprep.subr.mxu0 0.0
  %6686 = vmatpush1.msra.mxu0 0.0
  %6687 = vmatprep.subr.mxu0 0.0
  %6688 = vmatpush1.msra.mxu0 0.0
  %6689 = vmatprep.subr.mxu0 0.0
  %6690 = vmatpush1.msra.mxu0 0.0
  %6691 = vmatprep.subr.mxu0 0.0
  %6692 = vmatpush1.msra.mxu0 0.0
  %6693 = vmatprep.subr.mxu0 0.0
  %6694 = vmatpush1.msra.mxu0 0.0
  %6695 = vmatprep.subr.mxu0 0.0
  %6696 = vmatpush1.msra.mxu0 0.0
  %6697 = vmatprep.mubr.f32.mxu0 0.0
  %v6698 = vand.u32 %v6316, 4294901760
  %6699 = vmatmul.mubr.f32.gmra.mrb[0].mxu0 %v6698
  %v6700 = vpop.f32.mrb[0].mxu0
  %v6701 = vadd.f32 %v6624, %v6700
  %v6702 = vpop.f32.mrb[0].mxu0
  %6703 = vdwg.mxu0
  %6704 = vmatprep.subr.mxu0 0.0
  %v6705 = vand.u32 %v14, 4294901760
  %6706 = vmatpush1.msra.mxu0 %v6705
  %6707 = vmatprep.subr.mxu0 0.0
  %v6708 = vand.u32 %v15, 4294901760
  %6709 = vmatpush1.msra.mxu0 %v6708
  %6710 = vmatprep.subr.mxu0 0.0
  %6711 = vmatpush1.msra.mxu0 0.0
  %6712 = vmatprep.subr.mxu0 0.0
  %6713 = vmatpush1.msra.mxu0 0.0
  %6714 = vmatprep.subr.mxu0 0.0
  %6715 = vmatpush1.msra.mxu0 0.0
  %6716 = vmatprep.subr.mxu0 0.0
  %6717 = vmatpush1.msra.mxu0 0.0
  %6718 = vmatprep.subr.mxu0 0.0
  %6719 = vmatpush1.msra.mxu0 0.0
  %6720 = vmatprep.subr.mxu0 0.0
  %6721 = vmatpush1.msra.mxu0 0.0
  %6722 = vmatprep.subr.mxu0 0.0
  %6723 = vmatpush1.msra.mxu0 0.0
  %6724 = vmatprep.subr.mxu0 0.0
  %6725 = vmatpush1.msra.mxu0 0.0
  %6726 = vmatprep.subr.mxu0 0.0
  %6727 = vmatpush1.msra.mxu0 0.0
  %6728 = vmatprep.subr.mxu0 0.0
  %6729 = vmatpush1.msra.mxu0 0.0
  %6730 = vmatprep.subr.mxu0 0.0
  %6731 = vmatpush1.msra.mxu0 0.0
  %6732 = vmatprep.subr.mxu0 0.0
  %6733 = vmatpush1.msra.mxu0 0.0
  %6734 = vmatprep.subr.mxu0 0.0
  %6735 = vmatpush1.msra.mxu0 0.0
  %6736 = vmatprep.subr.mxu0 0.0
  %6737 = vmatpush1.msra.mxu0 0.0
  %6738 = vmatprep.subr.mxu0 0.0
  %6739 = vmatpush1.msra.mxu0 0.0
  %6740 = vmatprep.subr.mxu0 0.0
  %6741 = vmatpush1.msra.mxu0 0.0
  %6742 = vmatprep.subr.mxu0 0.0
  %6743 = vmatpush1.msra.mxu0 0.0
  %6744 = vmatprep.subr.mxu0 0.0
  %6745 = vmatpush1.msra.mxu0 0.0
  %6746 = vmatprep.subr.mxu0 0.0
  %6747 = vmatpush1.msra.mxu0 0.0
  %6748 = vmatprep.subr.mxu0 0.0
  %6749 = vmatpush1.msra.mxu0 0.0
  %6750 = vmatprep.subr.mxu0 0.0
  %6751 = vmatpush1.msra.mxu0 0.0
  %6752 = vmatprep.subr.mxu0 0.0
  %6753 = vmatpush1.msra.mxu0 0.0
  %6754 = vmatprep.subr.mxu0 0.0
  %6755 = vmatpush1.msra.mxu0 0.0
  %6756 = vmatprep.subr.mxu0 0.0
  %6757 = vmatpush1.msra.mxu0 0.0
  %6758 = vmatprep.subr.mxu0 0.0
  %6759 = vmatpush1.msra.mxu0 0.0
  %6760 = vmatprep.subr.mxu0 0.0
  %6761 = vmatpush1.msra.mxu0 0.0
  %6762 = vmatprep.subr.mxu0 0.0
  %6763 = vmatpush1.msra.mxu0 0.0
  %6764 = vmatprep.subr.mxu0 0.0
  %6765 = vmatpush1.msra.mxu0 0.0
  %6766 = vmatprep.subr.mxu0 0.0
  %6767 = vmatpush1.msra.mxu0 0.0
  %6768 = vmatprep.subr.mxu0 0.0
  %6769 = vmatpush1.msra.mxu0 0.0
  %6770 = vmatprep.mubr.f32.mxu0 0.0
  %v6771 = vand.u32 %v6316, 4294901760
  %6772 = vmatmul.mubr.f32.gmra.mrb[0].mxu0 %v6771
  %v6773 = vpop.f32.mrb[0].mxu0
  %v6774 = vadd.f32 %v6701, %v6773
  %v6775 = vpop.f32.mrb[0].mxu0
  %6776 = vdwg.mxu0
  %v6777 = vmul.f32 %v6774, 0.0625
  %v6779 = vcombine.high %v6777, %v6777
  %v6781 = vunpack.c.l.s4 1966171168
  %v6782 = vunpack.c.0.s8 %v6781
  %v6783 = vlaneseq
  %v6784 = vshrl.u32 %v6783, 7
  %v6785 = vsub.s32 %v6782, %v6784
  %v6786 = vrot.slane %v6777, %v6785
  %v6788 = vunpack.c.l.s4 1966171168
  %v6789 = vunpack.c.0.s8 %v6788
  %v6790 = vlaneseq
  %v6791 = vshrl.u32 %v6790, 7
  %v6792 = vsub.s32 %v6789, %v6791
  %v6793 = vrot.slane %v6779, %v6792
  %v6794 = vcombine.high %v6786, %v6786
  %v6795 = vcombine.high %v6793, %v6793
  %v6797 = vunpack.c.l.s4 1966171168
  %v6798 = vunpack.c.0.s8 %v6797
  %v6799 = vlaneseq
  %v6800 = vshrl.u32 %v6799, 7
  %v6801 = vsub.s32 %v6798, %v6800
  %v6802 = vrot.slane %v6786, %v6801
  %v6804 = vunpack.c.l.s4 1966171168
  %v6805 = vunpack.c.0.s8 %v6804
  %v6806 = vlaneseq
  %v6807 = vshrl.u32 %v6806, 7
  %v6808 = vsub.s32 %v6805, %v6807
  %v6809 = vrot.slane %v6793, %v6808
  %v6811 = vunpack.c.l.s4 1966171168
  %v6812 = vunpack.c.0.s8 %v6811
  %v6813 = vlaneseq
  %v6814 = vshrl.u32 %v6813, 7
  %v6815 = vsub.s32 %v6812, %v6814
  %v6816 = vrot.slane %v6794, %v6815
  %v6818 = vunpack.c.l.s4 1966171168
  %v6819 = vunpack.c.0.s8 %v6818
  %v6820 = vlaneseq
  %v6821 = vshrl.u32 %v6820, 7
  %v6822 = vsub.s32 %v6819, %v6821
  %v6823 = vrot.slane %v6795, %v6822
  %v6824 = vcombine.high %v6802, %v6802
  %v6825 = vcombine.high %v6809, %v6809
  %v6826 = vcombine.high %v6816, %v6816
  %v6827 = vcombine.high %v6823, %v6823
  %6836 = vst.msk [vmem:[%s3 + $0x2] sm:$0x1] %vm4833, %v6802
  %6837 = vst.msk [vmem:[%s3 + $0xa] sm:$0x1] %vm4833, %v6816
  %6838 = vst.msk [vmem:[%s3 + $0x12] sm:$0x1] %vm4833, %v6824
  %6839 = vst.msk [vmem:[%s3 + $0x1a] sm:$0x1] %vm4833, %v6826
  %6840 = vst.msk [vmem:[%s3 + $0x22] sm:$0x1] %vm4833, %v6809
  %6841 = vst.msk [vmem:[%s3 + $0x2a] sm:$0x1] %vm4833, %v6823
  %6842 = vst.msk [vmem:[%s3 + $0x32] sm:$0x1] %vm4833, %v6825
  %6843 = vst.msk [vmem:[%s3 + $0x3a] sm:$0x1] %vm4833, %v6827
  %v6844 = vld [vmem:[%s1469] sm:$0xff]
  %v6845 = vld [vmem:[%s1930] sm:$0xff]
  %v6846 = vld [vmem:[%s2423] sm:$0xff]
  %v6847 = vld [vmem:[%s2884] sm:$0xff]
  %v6848 = vmul.f32 %v6844, %v6846
  %v6849 = vmul.f32 %v6845, %v6847
  %v6850 = vsub.f32 %v6848, %v6849
  %v6851 = vmul.f32 %v6844, %v6847
  %v6852 = vmul.f32 %v6845, %v6846
  %v6853 = vadd.f32 %v6851, %v6852
  %v6855 = vsel %vm55, %v6853, 0
  %6857 = vmatprep.subr.mxu0 0.0
  %v6858 = vand.u32 %v16, 4294901760
  %6859 = vmatpush1.msra.mxu0 %v6858
  %6860 = vmatprep.subr.mxu0 0.0
  %v6861 = vand.u32 %v17, 4294901760
  %6862 = vmatpush1.msra.mxu0 %v6861
  %6863 = vmatprep.subr.mxu0 0.0
  %6864 = vmatpush1.msra.mxu0 0.0
  %6865 = vmatprep.subr.mxu0 0.0
  %6866 = vmatpush1.msra.mxu0 0.0
  %6867 = vmatprep.subr.mxu0 0.0
  %6868 = vmatpush1.msra.mxu0 0.0
  %6869 = vmatprep.subr.mxu0 0.0
  %6870 = vmatpush1.msra.mxu0 0.0
  %6871 = vmatprep.subr.mxu0 0.0
  %6872 = vmatpush1.msra.mxu0 0.0
  %6873 = vmatprep.subr.mxu0 0.0
  %6874 = vmatpush1.msra.mxu0 0.0
  %6875 = vmatprep.subr.mxu0 0.0
  %6876 = vmatpush1.msra.mxu0 0.0
  %6877 = vmatprep.subr.mxu0 0.0
  %6878 = vmatpush1.msra.mxu0 0.0
  %6879 = vmatprep.subr.mxu0 0.0
  %6880 = vmatpush1.msra.mxu0 0.0
  %6881 = vmatprep.subr.mxu0 0.0
  %6882 = vmatpush1.msra.mxu0 0.0
  %6883 = vmatprep.subr.mxu0 0.0
  %6884 = vmatpush1.msra.mxu0 0.0
  %6885 = vmatprep.subr.mxu0 0.0
  %6886 = vmatpush1.msra.mxu0 0.0
  %6887 = vmatprep.subr.mxu0 0.0
  %6888 = vmatpush1.msra.mxu0 0.0
  %6889 = vmatprep.subr.mxu0 0.0
  %6890 = vmatpush1.msra.mxu0 0.0
  %6891 = vmatprep.subr.mxu0 0.0
  %6892 = vmatpush1.msra.mxu0 0.0
  %6893 = vmatprep.subr.mxu0 0.0
  %6894 = vmatpush1.msra.mxu0 0.0
  %6895 = vmatprep.subr.mxu0 0.0
  %6896 = vmatpush1.msra.mxu0 0.0
  %6897 = vmatprep.subr.mxu0 0.0
  %6898 = vmatpush1.msra.mxu0 0.0
  %6899 = vmatprep.subr.mxu0 0.0
  %6900 = vmatpush1.msra.mxu0 0.0
  %6901 = vmatprep.subr.mxu0 0.0
  %6902 = vmatpush1.msra.mxu0 0.0
  %6903 = vmatprep.subr.mxu0 0.0
  %6904 = vmatpush1.msra.mxu0 0.0
  %6905 = vmatprep.subr.mxu0 0.0
  %6906 = vmatpush1.msra.mxu0 0.0
  %6907 = vmatprep.subr.mxu0 0.0
  %6908 = vmatpush1.msra.mxu0 0.0
  %6909 = vmatprep.subr.mxu0 0.0
  %6910 = vmatpush1.msra.mxu0 0.0
  %6911 = vmatprep.subr.mxu0 0.0
  %6912 = vmatpush1.msra.mxu0 0.0
  %6913 = vmatprep.subr.mxu0 0.0
  %6914 = vmatpush1.msra.mxu0 0.0
  %6915 = vmatprep.subr.mxu0 0.0
  %6916 = vmatpush1.msra.mxu0 0.0
  %6917 = vmatprep.subr.mxu0 0.0
  %6918 = vmatpush1.msra.mxu0 0.0
  %6919 = vmatprep.subr.mxu0 0.0
  %6920 = vmatpush1.msra.mxu0 0.0
  %6921 = vmatprep.subr.mxu0 0.0
  %6922 = vmatpush1.msra.mxu0 0.0
  %6923 = vmatprep.mubr.f32.mxu0 0.0
  %v6924 = vand.u32 %v6855, 4294901760
  %v6925 = vsub.f32 %v6855, %v6924
  %v6926 = vand.u32 %v6925, 4294901760
  %v6927 = vsub.f32 %v6925, %v6926
  %v6928 = vand.u32 %v6927, 4294901760
  %6929 = vmatmul.mubr.f32.gmra.mrb[0].mxu0 %v6928
  %v6930 = vpop.f32.mrb[0].mxu0
  %v6931 = vadd.f32 0.0, %v6930
  %v6932 = vpop.f32.mrb[0].mxu0
  %6933 = vdwg.mxu0
  %6934 = vmatprep.subr.mxu0 0.0
  %v6935 = vand.u32 %v16, 4294901760
  %v6936 = vsub.f32 %v16, %v6935
  %v6937 = vand.u32 %v6936, 4294901760
  %v6938 = vsub.f32 %v6936, %v6937
  %v6939 = vand.u32 %v6938, 4294901760
  %6940 = vmatpush1.msra.mxu0 %v6939
  %6941 = vmatprep.subr.mxu0 0.0
  %v6942 = vand.u32 %v17, 4294901760
  %v6943 = vsub.f32 %v17, %v6942
  %v6944 = vand.u32 %v6943, 4294901760
  %v6945 = vsub.f32 %v6943, %v6944
  %v6946 = vand.u32 %v6945, 4294901760
  %6947 = vmatpush1.msra.mxu0 %v6946
  %6948 = vmatprep.subr.mxu0 0.0
  %6949 = vmatpush1.msra.mxu0 0.0
  %6950 = vmatprep.subr.mxu0 0.0
  %6951 = vmatpush1.msra.mxu0 0.0
  %6952 = vmatprep.subr.mxu0 0.0
  %6953 = vmatpush1.msra.mxu0 0.0
  %6954 = vmatprep.subr.mxu0 0.0
  %6955 = vmatpush1.msra.mxu0 0.0
  %6956 = vmatprep.subr.mxu0 0.0
  %6957 = vmatpush1.msra.mxu0 0.0
  %6958 = vmatprep.subr.mxu0 0.0
  %6959 = vmatpush1.msra.mxu0 0.0
  %6960 = vmatprep.subr.mxu0 0.0
  %6961 = vmatpush1.msra.mxu0 0.0
  %6962 = vmatprep.subr.mxu0 0.0
  %6963 = vmatpush1.msra.mxu0 0.0
  %6964 = vmatprep.subr.mxu0 0.0
  %6965 = vmatpush1.msra.mxu0 0.0
  %6966 = vmatprep.subr.mxu0 0.0
  %6967 = vmatpush1.msra.mxu0 0.0
  %6968 = vmatprep.subr.mxu0 0.0
  %6969 = vmatpush1.msra.mxu0 0.0
  %6970 = vmatprep.subr.mxu0 0.0
  %6971 = vmatpush1.msra.mxu0 0.0
  %6972 = vmatprep.subr.mxu0 0.0
  %6973 = vmatpush1.msra.mxu0 0.0
  %6974 = vmatprep.subr.mxu0 0.0
  %6975 = vmatpush1.msra.mxu0 0.0
  %6976 = vmatprep.subr.mxu0 0.0
  %6977 = vmatpush1.msra.mxu0 0.0
  %6978 = vmatprep.subr.mxu0 0.0
  %6979 = vmatpush1.msra.mxu0 0.0
  %6980 = vmatprep.subr.mxu0 0.0
  %6981 = vmatpush1.msra.mxu0 0.0
  %6982 = vmatprep.subr.mxu0 0.0
  %6983 = vmatpush1.msra.mxu0 0.0
  %6984 = vmatprep.subr.mxu0 0.0
  %6985 = vmatpush1.msra.mxu0 0.0
  %6986 = vmatprep.subr.mxu0 0.0
  %6987 = vmatpush1.msra.mxu0 0.0
  %6988 = vmatprep.subr.mxu0 0.0
  %6989 = vmatpush1.msra.mxu0 0.0
  %6990 = vmatprep.subr.mxu0 0.0
  %6991 = vmatpush1.msra.mxu0 0.0
  %6992 = vmatprep.subr.mxu0 0.0
  %6993 = vmatpush1.msra.mxu0 0.0
  %6994 = vmatprep.subr.mxu0 0.0
  %6995 = vmatpush1.msra.mxu0 0.0
  %6996 = vmatprep.subr.mxu0 0.0
  %6997 = vmatpush1.msra.mxu0 0.0
  %6998 = vmatprep.subr.mxu0 0.0
  %6999 = vmatpush1.msra.mxu0 0.0
  %7000 = vmatprep.subr.mxu0 0.0
  %7001 = vmatpush1.msra.mxu0 0.0
  %7002 = vmatprep.subr.mxu0 0.0
  %7003 = vmatpush1.msra.mxu0 0.0
  %7004 = vmatprep.subr.mxu0 0.0
  %7005 = vmatpush1.msra.mxu0 0.0
  %7006 = vmatprep.subr.mxu0 0.0
  %7007 = vmatpush1.msra.mxu0 0.0
  %7008 = vmatprep.mubr.f32.mxu0 0.0
  %v7009 = vand.u32 %v6855, 4294901760
  %7010 = vmatmul.mubr.f32.gmra.mrb[0].mxu0 %v7009
  %v7011 = vpop.f32.mrb[0].mxu0
  %v7012 = vadd.f32 %v6931, %v7011
  %v7013 = vpop.f32.mrb[0].mxu0
  %7014 = vdwg.mxu0
  %7015 = vmatprep.subr.mxu0 0.0
  %v7016 = vand.u32 %v16, 4294901760
  %v7017 = vsub.f32 %v16, %v7016
  %7018 = vmatpush1.msra.mxu0 %v7017
  %7019 = vmatprep.subr.mxu0 0.0
  %v7020 = vand.u32 %v17, 4294901760
  %v7021 = vsub.f32 %v17, %v7020
  %7022 = vmatpush1.msra.mxu0 %v7021
  %7023 = vmatprep.subr.mxu0 0.0
  %7024 = vmatpush1.msra.mxu0 0.0
  %7025 = vmatprep.subr.mxu0 0.0
  %7026 = vmatpush1.msra.mxu0 0.0
  %7027 = vmatprep.subr.mxu0 0.0
  %7028 = vmatpush1.msra.mxu0 0.0
  %7029 = vmatprep.subr.mxu0 0.0
  %7030 = vmatpush1.msra.mxu0 0.0
  %7031 = vmatprep.subr.mxu0 0.0
  %7032 = vmatpush1.msra.mxu0 0.0
  %7033 = vmatprep.subr.mxu0 0.0
  %7034 = vmatpush1.msra.mxu0 0.0
  %7035 = vmatprep.subr.mxu0 0.0
  %7036 = vmatpush1.msra.mxu0 0.0
  %7037 = vmatprep.subr.mxu0 0.0
  %7038 = vmatpush1.msra.mxu0 0.0
  %7039 = vmatprep.subr.mxu0 0.0
  %7040 = vmatpush1.msra.mxu0 0.0
  %7041 = vmatprep.subr.mxu0 0.0
  %7042 = vmatpush1.msra.mxu0 0.0
  %7043 = vmatprep.subr.mxu0 0.0
  %7044 = vmatpush1.msra.mxu0 0.0
  %7045 = vmatprep.subr.mxu0 0.0
  %7046 = vmatpush1.msra.mxu0 0.0
  %7047 = vmatprep.subr.mxu0 0.0
  %7048 = vmatpush1.msra.mxu0 0.0
  %7049 = vmatprep.subr.mxu0 0.0
  %7050 = vmatpush1.msra.mxu0 0.0
  %7051 = vmatprep.subr.mxu0 0.0
  %7052 = vmatpush1.msra.mxu0 0.0
  %7053 = vmatprep.subr.mxu0 0.0
  %7054 = vmatpush1.msra.mxu0 0.0
  %7055 = vmatprep.subr.mxu0 0.0
  %7056 = vmatpush1.msra.mxu0 0.0
  %7057 = vmatprep.subr.mxu0 0.0
  %7058 = vmatpush1.msra.mxu0 0.0
  %7059 = vmatprep.subr.mxu0 0.0
  %7060 = vmatpush1.msra.mxu0 0.0
  %7061 = vmatprep.subr.mxu0 0.0
  %7062 = vmatpush1.msra.mxu0 0.0
  %7063 = vmatprep.subr.mxu0 0.0
  %7064 = vmatpush1.msra.mxu0 0.0
  %7065 = vmatprep.subr.mxu0 0.0
  %7066 = vmatpush1.msra.mxu0 0.0
  %7067 = vmatprep.subr.mxu0 0.0
  %7068 = vmatpush1.msra.mxu0 0.0
  %7069 = vmatprep.subr.mxu0 0.0
  %7070 = vmatpush1.msra.mxu0 0.0
  %7071 = vmatprep.subr.mxu0 0.0
  %7072 = vmatpush1.msra.mxu0 0.0
  %7073 = vmatprep.subr.mxu0 0.0
  %7074 = vmatpush1.msra.mxu0 0.0
  %7075 = vmatprep.subr.mxu0 0.0
  %7076 = vmatpush1.msra.mxu0 0.0
  %7077 = vmatprep.subr.mxu0 0.0
  %7078 = vmatpush1.msra.mxu0 0.0
  %7079 = vmatprep.subr.mxu0 0.0
  %7080 = vmatpush1.msra.mxu0 0.0
  %7081 = vmatprep.subr.mxu0 0.0
  %7082 = vmatpush1.msra.mxu0 0.0
  %7083 = vmatprep.mubr.f32.mxu0 0.0
  %v7084 = vand.u32 %v6855, 4294901760
  %v7085 = vsub.f32 %v6855, %v7084
  %7086 = vmatmul.mubr.f32.gmra.mrb[0].mxu0 %v7085
  %v7087 = vpop.f32.mrb[0].mxu0
  %v7088 = vadd.f32 %v7012, %v7087
  %v7089 = vpop.f32.mrb[0].mxu0
  %7090 = vdwg.mxu0
  %7091 = vmatprep.subr.mxu0 0.0
  %v7092 = vand.u32 %v16, 4294901760
  %7093 = vmatpush1.msra.mxu0 %v7092
  %7094 = vmatprep.subr.mxu0 0.0
  %v7095 = vand.u32 %v17, 4294901760
  %7096 = vmatpush1.msra.mxu0 %v7095
  %7097 = vmatprep.subr.mxu0 0.0
  %7098 = vmatpush1.msra.mxu0 0.0
  %7099 = vmatprep.subr.mxu0 0.0
  %7100 = vmatpush1.msra.mxu0 0.0
  %7101 = vmatprep.subr.mxu0 0.0
  %7102 = vmatpush1.msra.mxu0 0.0
  %7103 = vmatprep.subr.mxu0 0.0
  %7104 = vmatpush1.msra.mxu0 0.0
  %7105 = vmatprep.subr.mxu0 0.0
  %7106 = vmatpush1.msra.mxu0 0.0
  %7107 = vmatprep.subr.mxu0 0.0
  %7108 = vmatpush1.msra.mxu0 0.0
  %7109 = vmatprep.subr.mxu0 0.0
  %7110 = vmatpush1.msra.mxu0 0.0
  %7111 = vmatprep.subr.mxu0 0.0
  %7112 = vmatpush1.msra.mxu0 0.0
  %7113 = vmatprep.subr.mxu0 0.0
  %7114 = vmatpush1.msra.mxu0 0.0
  %7115 = vmatprep.subr.mxu0 0.0
  %7116 = vmatpush1.msra.mxu0 0.0
  %7117 = vmatprep.subr.mxu0 0.0
  %7118 = vmatpush1.msra.mxu0 0.0
  %7119 = vmatprep.subr.mxu0 0.0
  %7120 = vmatpush1.msra.mxu0 0.0
  %7121 = vmatprep.subr.mxu0 0.0
  %7122 = vmatpush1.msra.mxu0 0.0
  %7123 = vmatprep.subr.mxu0 0.0
  %7124 = vmatpush1.msra.mxu0 0.0
  %7125 = vmatprep.subr.mxu0 0.0
  %7126 = vmatpush1.msra.mxu0 0.0
  %7127 = vmatprep.subr.mxu0 0.0
  %7128 = vmatpush1.msra.mxu0 0.0
  %7129 = vmatprep.subr.mxu0 0.0
  %7130 = vmatpush1.msra.mxu0 0.0
  %7131 = vmatprep.subr.mxu0 0.0
  %7132 = vmatpush1.msra.mxu0 0.0
  %7133 = vmatprep.subr.mxu0 0.0
  %7134 = vmatpush1.msra.mxu0 0.0
  %7135 = vmatprep.subr.mxu0 0.0
  %7136 = vmatpush1.msra.mxu0 0.0
  %7137 = vmatprep.subr.mxu0 0.0
  %7138 = vmatpush1.msra.mxu0 0.0
  %7139 = vmatprep.subr.mxu0 0.0
  %7140 = vmatpush1.msra.mxu0 0.0
  %7141 = vmatprep.subr.mxu0 0.0
  %7142 = vmatpush1.msra.mxu0 0.0
  %7143 = vmatprep.subr.mxu0 0.0
  %7144 = vmatpush1.msra.mxu0 0.0
  %7145 = vmatprep.subr.mxu0 0.0
  %7146 = vmatpush1.msra.mxu0 0.0
  %7147 = vmatprep.subr.mxu0 0.0
  %7148 = vmatpush1.msra.mxu0 0.0
  %7149 = vmatprep.subr.mxu0 0.0
  %7150 = vmatpush1.msra.mxu0 0.0
  %7151 = vmatprep.subr.mxu0 0.0
  %7152 = vmatpush1.msra.mxu0 0.0
  %7153 = vmatprep.subr.mxu0 0.0
  %7154 = vmatpush1.msra.mxu0 0.0
  %7155 = vmatprep.subr.mxu0 0.0
  %7156 = vmatpush1.msra.mxu0 0.0
  %7157 = vmatprep.mubr.f32.mxu0 0.0
  %v7158 = vand.u32 %v6855, 4294901760
  %v7159 = vsub.f32 %v6855, %v7158
  %v7160 = vand.u32 %v7159, 4294901760
  %7161 = vmatmul.mubr.f32.gmra.mrb[0].mxu0 %v7160
  %v7162 = vpop.f32.mrb[0].mxu0
  %v7163 = vadd.f32 %v7088, %v7162
  %v7164 = vpop.f32.mrb[0].mxu0
  %7165 = vdwg.mxu0
  %7166 = vmatprep.subr.mxu0 0.0
  %v7167 = vand.u32 %v16, 4294901760
  %v7168 = vsub.f32 %v16, %v7167
  %v7169 = vand.u32 %v7168, 4294901760
  %7170 = vmatpush1.msra.mxu0 %v7169
  %7171 = vmatprep.subr.mxu0 0.0
  %v7172 = vand.u32 %v17, 4294901760
  %v7173 = vsub.f32 %v17, %v7172
  %v7174 = vand.u32 %v7173, 4294901760
  %7175 = vmatpush1.msra.mxu0 %v7174
  %7176 = vmatprep.subr.mxu0 0.0
  %7177 = vmatpush1.msra.mxu0 0.0
  %7178 = vmatprep.subr.mxu0 0.0
  %7179 = vmatpush1.msra.mxu0 0.0
  %7180 = vmatprep.subr.mxu0 0.0
  %7181 = vmatpush1.msra.mxu0 0.0
  %7182 = vmatprep.subr.mxu0 0.0
  %7183 = vmatpush1.msra.mxu0 0.0
  %7184 = vmatprep.subr.mxu0 0.0
  %7185 = vmatpush1.msra.mxu0 0.0
  %7186 = vmatprep.subr.mxu0 0.0
  %7187 = vmatpush1.msra.mxu0 0.0
  %7188 = vmatprep.subr.mxu0 0.0
  %7189 = vmatpush1.msra.mxu0 0.0
  %7190 = vmatprep.subr.mxu0 0.0
  %7191 = vmatpush1.msra.mxu0 0.0
  %7192 = vmatprep.subr.mxu0 0.0
  %7193 = vmatpush1.msra.mxu0 0.0
  %7194 = vmatprep.subr.mxu0 0.0
  %7195 = vmatpush1.msra.mxu0 0.0
  %7196 = vmatprep.subr.mxu0 0.0
  %7197 = vmatpush1.msra.mxu0 0.0
  %7198 = vmatprep.subr.mxu0 0.0
  %7199 = vmatpush1.msra.mxu0 0.0
  %7200 = vmatprep.subr.mxu0 0.0
  %7201 = vmatpush1.msra.mxu0 0.0
  %7202 = vmatprep.subr.mxu0 0.0
  %7203 = vmatpush1.msra.mxu0 0.0
  %7204 = vmatprep.subr.mxu0 0.0
  %7205 = vmatpush1.msra.mxu0 0.0
  %7206 = vmatprep.subr.mxu0 0.0
  %7207 = vmatpush1.msra.mxu0 0.0
  %7208 = vmatprep.subr.mxu0 0.0
  %7209 = vmatpush1.msra.mxu0 0.0
  %7210 = vmatprep.subr.mxu0 0.0
  %7211 = vmatpush1.msra.mxu0 0.0
  %7212 = vmatprep.subr.mxu0 0.0
  %7213 = vmatpush1.msra.mxu0 0.0
  %7214 = vmatprep.subr.mxu0 0.0
  %7215 = vmatpush1.msra.mxu0 0.0
  %7216 = vmatprep.subr.mxu0 0.0
  %7217 = vmatpush1.msra.mxu0 0.0
  %7218 = vmatprep.subr.mxu0 0.0
  %7219 = vmatpush1.msra.mxu0 0.0
  %7220 = vmatprep.subr.mxu0 0.0
  %7221 = vmatpush1.msra.mxu0 0.0
  %7222 = vmatprep.subr.mxu0 0.0
  %7223 = vmatpush1.msra.mxu0 0.0
  %7224 = vmatprep.subr.mxu0 0.0
  %7225 = vmatpush1.msra.mxu0 0.0
  %7226 = vmatprep.subr.mxu0 0.0
  %7227 = vmatpush1.msra.mxu0 0.0
  %7228 = vmatprep.subr.mxu0 0.0
  %7229 = vmatpush1.msra.mxu0 0.0
  %7230 = vmatprep.subr.mxu0 0.0
  %7231 = vmatpush1.msra.mxu0 0.0
  %7232 = vmatprep.subr.mxu0 0.0
  %7233 = vmatpush1.msra.mxu0 0.0
  %7234 = vmatprep.subr.mxu0 0.0
  %7235 = vmatpush1.msra.mxu0 0.0
  %7236 = vmatprep.mubr.f32.mxu0 0.0
  %v7237 = vand.u32 %v6855, 4294901760
  %7238 = vmatmul.mubr.f32.gmra.mrb[0].mxu0 %v7237
  %v7239 = vpop.f32.mrb[0].mxu0
  %v7240 = vadd.f32 %v7163, %v7239
  %v7241 = vpop.f32.mrb[0].mxu0
  %7242 = vdwg.mxu0
  %7243 = vmatprep.subr.mxu0 0.0
  %v7244 = vand.u32 %v16, 4294901760
  %7245 = vmatpush1.msra.mxu0 %v7244
  %7246 = vmatprep.subr.mxu0 0.0
  %v7247 = vand.u32 %v17, 4294901760
  %7248 = vmatpush1.msra.mxu0 %v7247
  %7249 = vmatprep.subr.mxu0 0.0
  %7250 = vmatpush1.msra.mxu0 0.0
  %7251 = vmatprep.subr.mxu0 0.0
  %7252 = vmatpush1.msra.mxu0 0.0
  %7253 = vmatprep.subr.mxu0 0.0
  %7254 = vmatpush1.msra.mxu0 0.0
  %7255 = vmatprep.subr.mxu0 0.0
  %7256 = vmatpush1.msra.mxu0 0.0
  %7257 = vmatprep.subr.mxu0 0.0
  %7258 = vmatpush1.msra.mxu0 0.0
  %7259 = vmatprep.subr.mxu0 0.0
  %7260 = vmatpush1.msra.mxu0 0.0
  %7261 = vmatprep.subr.mxu0 0.0
  %7262 = vmatpush1.msra.mxu0 0.0
  %7263 = vmatprep.subr.mxu0 0.0
  %7264 = vmatpush1.msra.mxu0 0.0
  %7265 = vmatprep.subr.mxu0 0.0
  %7266 = vmatpush1.msra.mxu0 0.0
  %7267 = vmatprep.subr.mxu0 0.0
  %7268 = vmatpush1.msra.mxu0 0.0
  %7269 = vmatprep.subr.mxu0 0.0
  %7270 = vmatpush1.msra.mxu0 0.0
  %7271 = vmatprep.subr.mxu0 0.0
  %7272 = vmatpush1.msra.mxu0 0.0
  %7273 = vmatprep.subr.mxu0 0.0
  %7274 = vmatpush1.msra.mxu0 0.0
  %7275 = vmatprep.subr.mxu0 0.0
  %7276 = vmatpush1.msra.mxu0 0.0
  %7277 = vmatprep.subr.mxu0 0.0
  %7278 = vmatpush1.msra.mxu0 0.0
  %7279 = vmatprep.subr.mxu0 0.0
  %7280 = vmatpush1.msra.mxu0 0.0
  %7281 = vmatprep.subr.mxu0 0.0
  %7282 = vmatpush1.msra.mxu0 0.0
  %7283 = vmatprep.subr.mxu0 0.0
  %7284 = vmatpush1.msra.mxu0 0.0
  %7285 = vmatprep.subr.mxu0 0.0
  %7286 = vmatpush1.msra.mxu0 0.0
  %7287 = vmatprep.subr.mxu0 0.0
  %7288 = vmatpush1.msra.mxu0 0.0
  %7289 = vmatprep.subr.mxu0 0.0
  %7290 = vmatpush1.msra.mxu0 0.0
  %7291 = vmatprep.subr.mxu0 0.0
  %7292 = vmatpush1.msra.mxu0 0.0
  %7293 = vmatprep.subr.mxu0 0.0
  %7294 = vmatpush1.msra.mxu0 0.0
  %7295 = vmatprep.subr.mxu0 0.0
  %7296 = vmatpush1.msra.mxu0 0.0
  %7297 = vmatprep.subr.mxu0 0.0
  %7298 = vmatpush1.msra.mxu0 0.0
  %7299 = vmatprep.subr.mxu0 0.0
  %7300 = vmatpush1.msra.mxu0 0.0
  %7301 = vmatprep.subr.mxu0 0.0
  %7302 = vmatpush1.msra.mxu0 0.0
  %7303 = vmatprep.subr.mxu0 0.0
  %7304 = vmatpush1.msra.mxu0 0.0
  %7305 = vmatprep.subr.mxu0 0.0
  %7306 = vmatpush1.msra.mxu0 0.0
  %7307 = vmatprep.subr.mxu0 0.0
  %7308 = vmatpush1.msra.mxu0 0.0
  %7309 = vmatprep.mubr.f32.mxu0 0.0
  %v7310 = vand.u32 %v6855, 4294901760
  %7311 = vmatmul.mubr.f32.gmra.mrb[0].mxu0 %v7310
  %v7312 = vpop.f32.mrb[0].mxu0
  %v7313 = vadd.f32 %v7240, %v7312
  %v7314 = vpop.f32.mrb[0].mxu0
  %7315 = vdwg.mxu0
  %v7317 = vsel %vm55, %v6850, 0
  %7319 = vmatprep.subr.mxu0 0.0
  %v7320 = vand.u32 %v14, 4294901760
  %7321 = vmatpush1.msra.mxu0 %v7320
  %7322 = vmatprep.subr.mxu0 0.0
  %v7323 = vand.u32 %v15, 4294901760
  %7324 = vmatpush1.msra.mxu0 %v7323
  %7325 = vmatprep.subr.mxu0 0.0
  %7326 = vmatpush1.msra.mxu0 0.0
  %7327 = vmatprep.subr.mxu0 0.0
  %7328 = vmatpush1.msra.mxu0 0.0
  %7329 = vmatprep.subr.mxu0 0.0
  %7330 = vmatpush1.msra.mxu0 0.0
  %7331 = vmatprep.subr.mxu0 0.0
  %7332 = vmatpush1.msra.mxu0 0.0
  %7333 = vmatprep.subr.mxu0 0.0
  %7334 = vmatpush1.msra.mxu0 0.0
  %7335 = vmatprep.subr.mxu0 0.0
  %7336 = vmatpush1.msra.mxu0 0.0
  %7337 = vmatprep.subr.mxu0 0.0
  %7338 = vmatpush1.msra.mxu0 0.0
  %7339 = vmatprep.subr.mxu0 0.0
  %7340 = vmatpush1.msra.mxu0 0.0
  %7341 = vmatprep.subr.mxu0 0.0
  %7342 = vmatpush1.msra.mxu0 0.0
  %7343 = vmatprep.subr.mxu0 0.0
  %7344 = vmatpush1.msra.mxu0 0.0
  %7345 = vmatprep.subr.mxu0 0.0
  %7346 = vmatpush1.msra.mxu0 0.0
  %7347 = vmatprep.subr.mxu0 0.0
  %7348 = vmatpush1.msra.mxu0 0.0
  %7349 = vmatprep.subr.mxu0 0.0
  %7350 = vmatpush1.msra.mxu0 0.0
  %7351 = vmatprep.subr.mxu0 0.0
  %7352 = vmatpush1.msra.mxu0 0.0
  %7353 = vmatprep.subr.mxu0 0.0
  %7354 = vmatpush1.msra.mxu0 0.0
  %7355 = vmatprep.subr.mxu0 0.0
  %7356 = vmatpush1.msra.mxu0 0.0
  %7357 = vmatprep.subr.mxu0 0.0
  %7358 = vmatpush1.msra.mxu0 0.0
  %7359 = vmatprep.subr.mxu0 0.0
  %7360 = vmatpush1.msra.mxu0 0.0
  %7361 = vmatprep.subr.mxu0 0.0
  %7362 = vmatpush1.msra.mxu0 0.0
  %7363 = vmatprep.subr.mxu0 0.0
  %7364 = vmatpush1.msra.mxu0 0.0
  %7365 = vmatprep.subr.mxu0 0.0
  %7366 = vmatpush1.msra.mxu0 0.0
  %7367 = vmatprep.subr.mxu0 0.0
  %7368 = vmatpush1.msra.mxu0 0.0
  %7369 = vmatprep.subr.mxu0 0.0
  %7370 = vmatpush1.msra.mxu0 0.0
  %7371 = vmatprep.subr.mxu0 0.0
  %7372 = vmatpush1.msra.mxu0 0.0
  %7373 = vmatprep.subr.mxu0 0.0
  %7374 = vmatpush1.msra.mxu0 0.0
  %7375 = vmatprep.subr.mxu0 0.0
  %7376 = vmatpush1.msra.mxu0 0.0
  %7377 = vmatprep.subr.mxu0 0.0
  %7378 = vmatpush1.msra.mxu0 0.0
  %7379 = vmatprep.subr.mxu0 0.0
  %7380 = vmatpush1.msra.mxu0 0.0
  %7381 = vmatprep.subr.mxu0 0.0
  %7382 = vmatpush1.msra.mxu0 0.0
  %7383 = vmatprep.subr.mxu0 0.0
  %7384 = vmatpush1.msra.mxu0 0.0
  %7385 = vmatprep.mubr.f32.mxu0 0.0
  %v7386 = vand.u32 %v7317, 4294901760
  %v7387 = vsub.f32 %v7317, %v7386
  %v7388 = vand.u32 %v7387, 4294901760
  %v7389 = vsub.f32 %v7387, %v7388
  %v7390 = vand.u32 %v7389, 4294901760
  %7391 = vmatmul.mubr.f32.gmra.mrb[0].mxu0 %v7390
  %v7392 = vpop.f32.mrb[0].mxu0
  %v7393 = vadd.f32 %v7313, %v7392
  %v7394 = vpop.f32.mrb[0].mxu0
  %7395 = vdwg.mxu0
  %7396 = vmatprep.subr.mxu0 0.0
  %v7397 = vand.u32 %v14, 4294901760
  %v7398 = vsub.f32 %v14, %v7397
  %v7399 = vand.u32 %v7398, 4294901760
  %v7400 = vsub.f32 %v7398, %v7399
  %v7401 = vand.u32 %v7400, 4294901760
  %7402 = vmatpush1.msra.mxu0 %v7401
  %7403 = vmatprep.subr.mxu0 0.0
  %v7404 = vand.u32 %v15, 4294901760
  %v7405 = vsub.f32 %v15, %v7404
  %v7406 = vand.u32 %v7405, 4294901760
  %v7407 = vsub.f32 %v7405, %v7406
  %v7408 = vand.u32 %v7407, 4294901760
  %7409 = vmatpush1.msra.mxu0 %v7408
  %7410 = vmatprep.subr.mxu0 0.0
  %7411 = vmatpush1.msra.mxu0 0.0
  %7412 = vmatprep.subr.mxu0 0.0
  %7413 = vmatpush1.msra.mxu0 0.0
  %7414 = vmatprep.subr.mxu0 0.0
  %7415 = vmatpush1.msra.mxu0 0.0
  %7416 = vmatprep.subr.mxu0 0.0
  %7417 = vmatpush1.msra.mxu0 0.0
  %7418 = vmatprep.subr.mxu0 0.0
  %7419 = vmatpush1.msra.mxu0 0.0
  %7420 = vmatprep.subr.mxu0 0.0
  %7421 = vmatpush1.msra.mxu0 0.0
  %7422 = vmatprep.subr.mxu0 0.0
  %7423 = vmatpush1.msra.mxu0 0.0
  %7424 = vmatprep.subr.mxu0 0.0
  %7425 = vmatpush1.msra.mxu0 0.0
  %7426 = vmatprep.subr.mxu0 0.0
  %7427 = vmatpush1.msra.mxu0 0.0
  %7428 = vmatprep.subr.mxu0 0.0
  %7429 = vmatpush1.msra.mxu0 0.0
  %7430 = vmatprep.subr.mxu0 0.0
  %7431 = vmatpush1.msra.mxu0 0.0
  %7432 = vmatprep.subr.mxu0 0.0
  %7433 = vmatpush1.msra.mxu0 0.0
  %7434 = vmatprep.subr.mxu0 0.0
  %7435 = vmatpush1.msra.mxu0 0.0
  %7436 = vmatprep.subr.mxu0 0.0
  %7437 = vmatpush1.msra.mxu0 0.0
  %7438 = vmatprep.subr.mxu0 0.0
  %7439 = vmatpush1.msra.mxu0 0.0
  %7440 = vmatprep.subr.mxu0 0.0
  %7441 = vmatpush1.msra.mxu0 0.0
  %7442 = vmatprep.subr.mxu0 0.0
  %7443 = vmatpush1.msra.mxu0 0.0
  %7444 = vmatprep.subr.mxu0 0.0
  %7445 = vmatpush1.msra.mxu0 0.0
  %7446 = vmatprep.subr.mxu0 0.0
  %7447 = vmatpush1.msra.mxu0 0.0
  %7448 = vmatprep.subr.mxu0 0.0
  %7449 = vmatpush1.msra.mxu0 0.0
  %7450 = vmatprep.subr.mxu0 0.0
  %7451 = vmatpush1.msra.mxu0 0.0
  %7452 = vmatprep.subr.mxu0 0.0
  %7453 = vmatpush1.msra.mxu0 0.0
  %7454 = vmatprep.subr.mxu0 0.0
  %7455 = vmatpush1.msra.mxu0 0.0
  %7456 = vmatprep.subr.mxu0 0.0
  %7457 = vmatpush1.msra.mxu0 0.0
  %7458 = vmatprep.subr.mxu0 0.0
  %7459 = vmatpush1.msra.mxu0 0.0
  %7460 = vmatprep.subr.mxu0 0.0
  %7461 = vmatpush1.msra.mxu0 0.0
  %7462 = vmatprep.subr.mxu0 0.0
  %7463 = vmatpush1.msra.mxu0 0.0
  %7464 = vmatprep.subr.mxu0 0.0
  %7465 = vmatpush1.msra.mxu0 0.0
  %7466 = vmatprep.subr.mxu0 0.0
  %7467 = vmatpush1.msra.mxu0 0.0
  %7468 = vmatprep.subr.mxu0 0.0
  %7469 = vmatpush1.msra.mxu0 0.0
  %7470 = vmatprep.mubr.f32.mxu0 0.0
  %v7471 = vand.u32 %v7317, 4294901760
  %7472 = vmatmul.mubr.f32.gmra.mrb[0].mxu0 %v7471
  %v7473 = vpop.f32.mrb[0].mxu0
  %v7474 = vadd.f32 %v7393, %v7473
  %v7475 = vpop.f32.mrb[0].mxu0
  %7476 = vdwg.mxu0
  %7477 = vmatprep.subr.mxu0 0.0
  %v7478 = vand.u32 %v14, 4294901760
  %v7479 = vsub.f32 %v14, %v7478
  %7480 = vmatpush1.msra.mxu0 %v7479
  %7481 = vmatprep.subr.mxu0 0.0
  %v7482 = vand.u32 %v15, 4294901760
  %v7483 = vsub.f32 %v15, %v7482
  %7484 = vmatpush1.msra.mxu0 %v7483
  %7485 = vmatprep.subr.mxu0 0.0
  %7486 = vmatpush1.msra.mxu0 0.0
  %7487 = vmatprep.subr.mxu0 0.0
  %7488 = vmatpush1.msra.mxu0 0.0
  %7489 = vmatprep.subr.mxu0 0.0
  %7490 = vmatpush1.msra.mxu0 0.0
  %7491 = vmatprep.subr.mxu0 0.0
  %7492 = vmatpush1.msra.mxu0 0.0
  %7493 = vmatprep.subr.mxu0 0.0
  %7494 = vmatpush1.msra.mxu0 0.0
  %7495 = vmatprep.subr.mxu0 0.0
  %7496 = vmatpush1.msra.mxu0 0.0
  %7497 = vmatprep.subr.mxu0 0.0
  %7498 = vmatpush1.msra.mxu0 0.0
  %7499 = vmatprep.subr.mxu0 0.0
  %7500 = vmatpush1.msra.mxu0 0.0
  %7501 = vmatprep.subr.mxu0 0.0
  %7502 = vmatpush1.msra.mxu0 0.0
  %7503 = vmatprep.subr.mxu0 0.0
  %7504 = vmatpush1.msra.mxu0 0.0
  %7505 = vmatprep.subr.mxu0 0.0
  %7506 = vmatpush1.msra.mxu0 0.0
  %7507 = vmatprep.subr.mxu0 0.0
  %7508 = vmatpush1.msra.mxu0 0.0
  %7509 = vmatprep.subr.mxu0 0.0
  %7510 = vmatpush1.msra.mxu0 0.0
  %7511 = vmatprep.subr.mxu0 0.0
  %7512 = vmatpush1.msra.mxu0 0.0
  %7513 = vmatprep.subr.mxu0 0.0
  %7514 = vmatpush1.msra.mxu0 0.0
  %7515 = vmatprep.subr.mxu0 0.0
  %7516 = vmatpush1.msra.mxu0 0.0
  %7517 = vmatprep.subr.mxu0 0.0
  %7518 = vmatpush1.msra.mxu0 0.0
  %7519 = vmatprep.subr.mxu0 0.0
  %7520 = vmatpush1.msra.mxu0 0.0
  %7521 = vmatprep.subr.mxu0 0.0
  %7522 = vmatpush1.msra.mxu0 0.0
  %7523 = vmatprep.subr.mxu0 0.0
  %7524 = vmatpush1.msra.mxu0 0.0
  %7525 = vmatprep.subr.mxu0 0.0
  %7526 = vmatpush1.msra.mxu0 0.0
  %7527 = vmatprep.subr.mxu0 0.0
  %7528 = vmatpush1.msra.mxu0 0.0
  %7529 = vmatprep.subr.mxu0 0.0
  %7530 = vmatpush1.msra.mxu0 0.0
  %7531 = vmatprep.subr.mxu0 0.0
  %7532 = vmatpush1.msra.mxu0 0.0
  %7533 = vmatprep.subr.mxu0 0.0
  %7534 = vmatpush1.msra.mxu0 0.0
  %7535 = vmatprep.subr.mxu0 0.0
  %7536 = vmatpush1.msra.mxu0 0.0
  %7537 = vmatprep.subr.mxu0 0.0
  %7538 = vmatpush1.msra.mxu0 0.0
  %7539 = vmatprep.subr.mxu0 0.0
  %7540 = vmatpush1.msra.mxu0 0.0
  %7541 = vmatprep.subr.mxu0 0.0
  %7542 = vmatpush1.msra.mxu0 0.0
  %7543 = vmatprep.subr.mxu0 0.0
  %7544 = vmatpush1.msra.mxu0 0.0
  %7545 = vmatprep.mubr.f32.mxu0 0.0
  %v7546 = vand.u32 %v7317, 4294901760
  %v7547 = vsub.f32 %v7317, %v7546
  %7548 = vmatmul.mubr.f32.gmra.mrb[0].mxu0 %v7547
  %v7549 = vpop.f32.mrb[0].mxu0
  %v7550 = vadd.f32 %v7474, %v7549
  %v7551 = vpop.f32.mrb[0].mxu0
  %7552 = vdwg.mxu0
  %7553 = vmatprep.subr.mxu0 0.0
  %v7554 = vand.u32 %v14, 4294901760
  %7555 = vmatpush1.msra.mxu0 %v7554
  %7556 = vmatprep.subr.mxu0 0.0
  %v7557 = vand.u32 %v15, 4294901760
  %7558 = vmatpush1.msra.mxu0 %v7557
  %7559 = vmatprep.subr.mxu0 0.0
  %7560 = vmatpush1.msra.mxu0 0.0
  %7561 = vmatprep.subr.mxu0 0.0
  %7562 = vmatpush1.msra.mxu0 0.0
  %7563 = vmatprep.subr.mxu0 0.0
  %7564 = vmatpush1.msra.mxu0 0.0
  %7565 = vmatprep.subr.mxu0 0.0
  %7566 = vmatpush1.msra.mxu0 0.0
  %7567 = vmatprep.subr.mxu0 0.0
  %7568 = vmatpush1.msra.mxu0 0.0
  %7569 = vmatprep.subr.mxu0 0.0
  %7570 = vmatpush1.msra.mxu0 0.0
  %7571 = vmatprep.subr.mxu0 0.0
  %7572 = vmatpush1.msra.mxu0 0.0
  %7573 = vmatprep.subr.mxu0 0.0
  %7574 = vmatpush1.msra.mxu0 0.0
  %7575 = vmatprep.subr.mxu0 0.0
  %7576 = vmatpush1.msra.mxu0 0.0
  %7577 = vmatprep.subr.mxu0 0.0
  %7578 = vmatpush1.msra.mxu0 0.0
  %7579 = vmatprep.subr.mxu0 0.0
  %7580 = vmatpush1.msra.mxu0 0.0
  %7581 = vmatprep.subr.mxu0 0.0
  %7582 = vmatpush1.msra.mxu0 0.0
  %7583 = vmatprep.subr.mxu0 0.0
  %7584 = vmatpush1.msra.mxu0 0.0
  %7585 = vmatprep.subr.mxu0 0.0
  %7586 = vmatpush1.msra.mxu0 0.0
  %7587 = vmatprep.subr.mxu0 0.0
  %7588 = vmatpush1.msra.mxu0 0.0
  %7589 = vmatprep.subr.mxu0 0.0
  %7590 = vmatpush1.msra.mxu0 0.0
  %7591 = vmatprep.subr.mxu0 0.0
  %7592 = vmatpush1.msra.mxu0 0.0
  %7593 = vmatprep.subr.mxu0 0.0
  %7594 = vmatpush1.msra.mxu0 0.0
  %7595 = vmatprep.subr.mxu0 0.0
  %7596 = vmatpush1.msra.mxu0 0.0
  %7597 = vmatprep.subr.mxu0 0.0
  %7598 = vmatpush1.msra.mxu0 0.0
  %7599 = vmatprep.subr.mxu0 0.0
  %7600 = vmatpush1.msra.mxu0 0.0
  %7601 = vmatprep.subr.mxu0 0.0
  %7602 = vmatpush1.msra.mxu0 0.0
  %7603 = vmatprep.subr.mxu0 0.0
  %7604 = vmatpush1.msra.mxu0 0.0
  %7605 = vmatprep.subr.mxu0 0.0
  %7606 = vmatpush1.msra.mxu0 0.0
  %7607 = vmatprep.subr.mxu0 0.0
  %7608 = vmatpush1.msra.mxu0 0.0
  %7609 = vmatprep.subr.mxu0 0.0
  %7610 = vmatpush1.msra.mxu0 0.0
  %7611 = vmatprep.subr.mxu0 0.0
  %7612 = vmatpush1.msra.mxu0 0.0
  %7613 = vmatprep.subr.mxu0 0.0
  %7614 = vmatpush1.msra.mxu0 0.0
  %7615 = vmatprep.subr.mxu0 0.0
  %7616 = vmatpush1.msra.mxu0 0.0
  %7617 = vmatprep.subr.mxu0 0.0
  %7618 = vmatpush1.msra.mxu0 0.0
  %7619 = vmatprep.mubr.f32.mxu0 0.0
  %v7620 = vand.u32 %v7317, 4294901760
  %v7621 = vsub.f32 %v7317, %v7620
  %v7622 = vand.u32 %v7621, 4294901760
  %7623 = vmatmul.mubr.f32.gmra.mrb[0].mxu0 %v7622
  %v7624 = vpop.f32.mrb[0].mxu0
  %v7625 = vadd.f32 %v7550, %v7624
  %v7626 = vpop.f32.mrb[0].mxu0
  %7627 = vdwg.mxu0
  %7628 = vmatprep.subr.mxu0 0.0
  %v7629 = vand.u32 %v14, 4294901760
  %v7630 = vsub.f32 %v14, %v7629
  %v7631 = vand.u32 %v7630, 4294901760
  %7632 = vmatpush1.msra.mxu0 %v7631
  %7633 = vmatprep.subr.mxu0 0.0
  %v7634 = vand.u32 %v15, 4294901760
  %v7635 = vsub.f32 %v15, %v7634
  %v7636 = vand.u32 %v7635, 4294901760
  %7637 = vmatpush1.msra.mxu0 %v7636
  %7638 = vmatprep.subr.mxu0 0.0
  %7639 = vmatpush1.msra.mxu0 0.0
  %7640 = vmatprep.subr.mxu0 0.0
  %7641 = vmatpush1.msra.mxu0 0.0
  %7642 = vmatprep.subr.mxu0 0.0
  %7643 = vmatpush1.msra.mxu0 0.0
  %7644 = vmatprep.subr.mxu0 0.0
  %7645 = vmatpush1.msra.mxu0 0.0
  %7646 = vmatprep.subr.mxu0 0.0
  %7647 = vmatpush1.msra.mxu0 0.0
  %7648 = vmatprep.subr.mxu0 0.0
  %7649 = vmatpush1.msra.mxu0 0.0
  %7650 = vmatprep.subr.mxu0 0.0
  %7651 = vmatpush1.msra.mxu0 0.0
  %7652 = vmatprep.subr.mxu0 0.0
  %7653 = vmatpush1.msra.mxu0 0.0
  %7654 = vmatprep.subr.mxu0 0.0
  %7655 = vmatpush1.msra.mxu0 0.0
  %7656 = vmatprep.subr.mxu0 0.0
  %7657 = vmatpush1.msra.mxu0 0.0
  %7658 = vmatprep.subr.mxu0 0.0
  %7659 = vmatpush1.msra.mxu0 0.0
  %7660 = vmatprep.subr.mxu0 0.0
  %7661 = vmatpush1.msra.mxu0 0.0
  %7662 = vmatprep.subr.mxu0 0.0
  %7663 = vmatpush1.msra.mxu0 0.0
  %7664 = vmatprep.subr.mxu0 0.0
  %7665 = vmatpush1.msra.mxu0 0.0
  %7666 = vmatprep.subr.mxu0 0.0
  %7667 = vmatpush1.msra.mxu0 0.0
  %7668 = vmatprep.subr.mxu0 0.0
  %7669 = vmatpush1.msra.mxu0 0.0
  %7670 = vmatprep.subr.mxu0 0.0
  %7671 = vmatpush1.msra.mxu0 0.0
  %7672 = vmatprep.subr.mxu0 0.0
  %7673 = vmatpush1.msra.mxu0 0.0
  %7674 = vmatprep.subr.mxu0 0.0
  %7675 = vmatpush1.msra.mxu0 0.0
  %7676 = vmatprep.subr.mxu0 0.0
  %7677 = vmatpush1.msra.mxu0 0.0
  %7678 = vmatprep.subr.mxu0 0.0
  %7679 = vmatpush1.msra.mxu0 0.0
  %7680 = vmatprep.subr.mxu0 0.0
  %7681 = vmatpush1.msra.mxu0 0.0
  %7682 = vmatprep.subr.mxu0 0.0
  %7683 = vmatpush1.msra.mxu0 0.0
  %7684 = vmatprep.subr.mxu0 0.0
  %7685 = vmatpush1.msra.mxu0 0.0
  %7686 = vmatprep.subr.mxu0 0.0
  %7687 = vmatpush1.msra.mxu0 0.0
  %7688 = vmatprep.subr.mxu0 0.0
  %7689 = vmatpush1.msra.mxu0 0.0
  %7690 = vmatprep.subr.mxu0 0.0
  %7691 = vmatpush1.msra.mxu0 0.0
  %7692 = vmatprep.subr.mxu0 0.0
  %7693 = vmatpush1.msra.mxu0 0.0
  %7694 = vmatprep.subr.mxu0 0.0
  %7695 = vmatpush1.msra.mxu0 0.0
  %7696 = vmatprep.subr.mxu0 0.0
  %7697 = vmatpush1.msra.mxu0 0.0
  %7698 = vmatprep.mubr.f32.mxu0 0.0
  %v7699 = vand.u32 %v7317, 4294901760
  %7700 = vmatmul.mubr.f32.gmra.mrb[0].mxu0 %v7699
  %v7701 = vpop.f32.mrb[0].mxu0
  %v7702 = vadd.f32 %v7625, %v7701
  %v7703 = vpop.f32.mrb[0].mxu0
  %7704 = vdwg.mxu0
  %7705 = vmatprep.subr.mxu0 0.0
  %v7706 = vand.u32 %v14, 4294901760
  %7707 = vmatpush1.msra.mxu0 %v7706
  %7708 = vmatprep.subr.mxu0 0.0
  %v7709 = vand.u32 %v15, 4294901760
  %7710 = vmatpush1.msra.mxu0 %v7709
  %7711 = vmatprep.subr.mxu0 0.0
  %7712 = vmatpush1.msra.mxu0 0.0
  %7713 = vmatprep.subr.mxu0 0.0
  %7714 = vmatpush1.msra.mxu0 0.0
  %7715 = vmatprep.subr.mxu0 0.0
  %7716 = vmatpush1.msra.mxu0 0.0
  %7717 = vmatprep.subr.mxu0 0.0
  %7718 = vmatpush1.msra.mxu0 0.0
  %7719 = vmatprep.subr.mxu0 0.0
  %7720 = vmatpush1.msra.mxu0 0.0
  %7721 = vmatprep.subr.mxu0 0.0
  %7722 = vmatpush1.msra.mxu0 0.0
  %7723 = vmatprep.subr.mxu0 0.0
  %7724 = vmatpush1.msra.mxu0 0.0
  %7725 = vmatprep.subr.mxu0 0.0
  %7726 = vmatpush1.msra.mxu0 0.0
  %7727 = vmatprep.subr.mxu0 0.0
  %7728 = vmatpush1.msra.mxu0 0.0
  %7729 = vmatprep.subr.mxu0 0.0
  %7730 = vmatpush1.msra.mxu0 0.0
  %7731 = vmatprep.subr.mxu0 0.0
  %7732 = vmatpush1.msra.mxu0 0.0
  %7733 = vmatprep.subr.mxu0 0.0
  %7734 = vmatpush1.msra.mxu0 0.0
  %7735 = vmatprep.subr.mxu0 0.0
  %7736 = vmatpush1.msra.mxu0 0.0
  %7737 = vmatprep.subr.mxu0 0.0
  %7738 = vmatpush1.msra.mxu0 0.0
  %7739 = vmatprep.subr.mxu0 0.0
  %7740 = vmatpush1.msra.mxu0 0.0
  %7741 = vmatprep.subr.mxu0 0.0
  %7742 = vmatpush1.msra.mxu0 0.0
  %7743 = vmatprep.subr.mxu0 0.0
  %7744 = vmatpush1.msra.mxu0 0.0
  %7745 = vmatprep.subr.mxu0 0.0
  %7746 = vmatpush1.msra.mxu0 0.0
  %7747 = vmatprep.subr.mxu0 0.0
  %7748 = vmatpush1.msra.mxu0 0.0
  %7749 = vmatprep.subr.mxu0 0.0
  %7750 = vmatpush1.msra.mxu0 0.0
  %7751 = vmatprep.subr.mxu0 0.0
  %7752 = vmatpush1.msra.mxu0 0.0
  %7753 = vmatprep.subr.mxu0 0.0
  %7754 = vmatpush1.msra.mxu0 0.0
  %7755 = vmatprep.subr.mxu0 0.0
  %7756 = vmatpush1.msra.mxu0 0.0
  %7757 = vmatprep.subr.mxu0 0.0
  %7758 = vmatpush1.msra.mxu0 0.0
  %7759 = vmatprep.subr.mxu0 0.0
  %7760 = vmatpush1.msra.mxu0 0.0
  %7761 = vmatprep.subr.mxu0 0.0
  %7762 = vmatpush1.msra.mxu0 0.0
  %7763 = vmatprep.subr.mxu0 0.0
  %7764 = vmatpush1.msra.mxu0 0.0
  %7765 = vmatprep.subr.mxu0 0.0
  %7766 = vmatpush1.msra.mxu0 0.0
  %7767 = vmatprep.subr.mxu0 0.0
  %7768 = vmatpush1.msra.mxu0 0.0
  %7769 = vmatprep.subr.mxu0 0.0
  %7770 = vmatpush1.msra.mxu0 0.0
  %7771 = vmatprep.mubr.f32.mxu0 0.0
  %v7772 = vand.u32 %v7317, 4294901760
  %7773 = vmatmul.mubr.f32.gmra.mrb[0].mxu0 %v7772
  %v7774 = vpop.f32.mrb[0].mxu0
  %v7775 = vadd.f32 %v7702, %v7774
  %v7776 = vpop.f32.mrb[0].mxu0
  %7777 = vdwg.mxu0
  %v7778 = vmul.f32 %v7775, 0.0625
  %v7780 = vcombine.high %v7778, %v7778
  %v7782 = vunpack.c.l.s4 1966171168
  %v7783 = vunpack.c.0.s8 %v7782
  %v7784 = vlaneseq
  %v7785 = vshrl.u32 %v7784, 7
  %v7786 = vsub.s32 %v7783, %v7785
  %v7787 = vrot.slane %v7778, %v7786
  %v7789 = vunpack.c.l.s4 1966171168
  %v7790 = vunpack.c.0.s8 %v7789
  %v7791 = vlaneseq
  %v7792 = vshrl.u32 %v7791, 7
  %v7793 = vsub.s32 %v7790, %v7792
  %v7794 = vrot.slane %v7780, %v7793
  %v7795 = vcombine.high %v7787, %v7787
  %v7796 = vcombine.high %v7794, %v7794
  %v7798 = vunpack.c.l.s4 1966171168
  %v7799 = vunpack.c.0.s8 %v7798
  %v7800 = vlaneseq
  %v7801 = vshrl.u32 %v7800, 7
  %v7802 = vsub.s32 %v7799, %v7801
  %v7803 = vrot.slane %v7787, %v7802
  %v7805 = vunpack.c.l.s4 1966171168
  %v7806 = vunpack.c.0.s8 %v7805
  %v7807 = vlaneseq
  %v7808 = vshrl.u32 %v7807, 7
  %v7809 = vsub.s32 %v7806, %v7808
  %v7810 = vrot.slane %v7794, %v7809
  %v7812 = vunpack.c.l.s4 1966171168
  %v7813 = vunpack.c.0.s8 %v7812
  %v7814 = vlaneseq
  %v7815 = vshrl.u32 %v7814, 7
  %v7816 = vsub.s32 %v7813, %v7815
  %v7817 = vrot.slane %v7795, %v7816
  %v7819 = vunpack.c.l.s4 1966171168
  %v7820 = vunpack.c.0.s8 %v7819
  %v7821 = vlaneseq
  %v7822 = vshrl.u32 %v7821, 7
  %v7823 = vsub.s32 %v7820, %v7822
  %v7824 = vrot.slane %v7796, %v7823
  %v7825 = vcombine.high %v7803, %v7803
  %v7826 = vcombine.high %v7810, %v7810
  %v7827 = vcombine.high %v7817, %v7817
  %v7828 = vcombine.high %v7824, %v7824
  %7837 = vst.msk [vmem:[%s3 + $0x3] sm:$0x1] %vm4833, %v7803
  %7838 = vst.msk [vmem:[%s3 + $0xb] sm:$0x1] %vm4833, %v7817
  %7839 = vst.msk [vmem:[%s3 + $0x13] sm:$0x1] %vm4833, %v7825
  %7840 = vst.msk [vmem:[%s3 + $0x1b] sm:$0x1] %vm4833, %v7827
  %7841 = vst.msk [vmem:[%s3 + $0x23] sm:$0x1] %vm4833, %v7810
  %7842 = vst.msk [vmem:[%s3 + $0x2b] sm:$0x1] %vm4833, %v7824
  %7843 = vst.msk [vmem:[%s3 + $0x33] sm:$0x1] %vm4833, %v7826
  %7844 = vst.msk [vmem:[%s3 + $0x3b] sm:$0x1] %vm4833, %v7828
  %v7845 = vld [vmem:[%s1469] sm:$0xff]
  %v7846 = vld [vmem:[%s1930] sm:$0xff]
  %v7847 = vld [vmem:[%s3377] sm:$0xff]
  %v7848 = vld [vmem:[%s3838] sm:$0xff]
  %v7849 = vmul.f32 %v7845, %v7847
  %v7850 = vmul.f32 %v7846, %v7848
  %v7851 = vsub.f32 %v7849, %v7850
  %v7852 = vmul.f32 %v7845, %v7848
  %v7853 = vmul.f32 %v7846, %v7847
  %v7854 = vadd.f32 %v7852, %v7853
  %v7856 = vsel %vm55, %v7854, 0
  %7858 = vmatprep.subr.mxu0 0.0
  %v7859 = vand.u32 %v16, 4294901760
  %7860 = vmatpush1.msra.mxu0 %v7859
  %7861 = vmatprep.subr.mxu0 0.0
  %v7862 = vand.u32 %v17, 4294901760
  %7863 = vmatpush1.msra.mxu0 %v7862
  %7864 = vmatprep.subr.mxu0 0.0
  %7865 = vmatpush1.msra.mxu0 0.0
  %7866 = vmatprep.subr.mxu0 0.0
  %7867 = vmatpush1.msra.mxu0 0.0
  %7868 = vmatprep.subr.mxu0 0.0
  %7869 = vmatpush1.msra.mxu0 0.0
  %7870 = vmatprep.subr.mxu0 0.0
  %7871 = vmatpush1.msra.mxu0 0.0
  %7872 = vmatprep.subr.mxu0 0.0
  %7873 = vmatpush1.msra.mxu0 0.0
  %7874 = vmatprep.subr.mxu0 0.0
  %7875 = vmatpush1.msra.mxu0 0.0
  %7876 = vmatprep.subr.mxu0 0.0
  %7877 = vmatpush1.msra.mxu0 0.0
  %7878 = vmatprep.subr.mxu0 0.0
  %7879 = vmatpush1.msra.mxu0 0.0
  %7880 = vmatprep.subr.mxu0 0.0
  %7881 = vmatpush1.msra.mxu0 0.0
  %7882 = vmatprep.subr.mxu0 0.0
  %7883 = vmatpush1.msra.mxu0 0.0
  %7884 = vmatprep.subr.mxu0 0.0
  %7885 = vmatpush1.msra.mxu0 0.0
  %7886 = vmatprep.subr.mxu0 0.0
  %7887 = vmatpush1.msra.mxu0 0.0
  %7888 = vmatprep.subr.mxu0 0.0
  %7889 = vmatpush1.msra.mxu0 0.0
  %7890 = vmatprep.subr.mxu0 0.0
  %7891 = vmatpush1.msra.mxu0 0.0
  %7892 = vmatprep.subr.mxu0 0.0
  %7893 = vmatpush1.msra.mxu0 0.0
  %7894 = vmatprep.subr.mxu0 0.0
  %7895 = vmatpush1.msra.mxu0 0.0
  %7896 = vmatprep.subr.mxu0 0.0
  %7897 = vmatpush1.msra.mxu0 0.0
  %7898 = vmatprep.subr.mxu0 0.0
  %7899 = vmatpush1.msra.mxu0 0.0
  %7900 = vmatprep.subr.mxu0 0.0
  %7901 = vmatpush1.msra.mxu0 0.0
  %7902 = vmatprep.subr.mxu0 0.0
  %7903 = vmatpush1.msra.mxu0 0.0
  %7904 = vmatprep.subr.mxu0 0.0
  %7905 = vmatpush1.msra.mxu0 0.0
  %7906 = vmatprep.subr.mxu0 0.0
  %7907 = vmatpush1.msra.mxu0 0.0
  %7908 = vmatprep.subr.mxu0 0.0
  %7909 = vmatpush1.msra.mxu0 0.0
  %7910 = vmatprep.subr.mxu0 0.0
  %7911 = vmatpush1.msra.mxu0 0.0
  %7912 = vmatprep.subr.mxu0 0.0
  %7913 = vmatpush1.msra.mxu0 0.0
  %7914 = vmatprep.subr.mxu0 0.0
  %7915 = vmatpush1.msra.mxu0 0.0
  %7916 = vmatprep.subr.mxu0 0.0
  %7917 = vmatpush1.msra.mxu0 0.0
  %7918 = vmatprep.subr.mxu0 0.0
  %7919 = vmatpush1.msra.mxu0 0.0
  %7920 = vmatprep.subr.mxu0 0.0
  %7921 = vmatpush1.msra.mxu0 0.0
  %7922 = vmatprep.subr.mxu0 0.0
  %7923 = vmatpush1.msra.mxu0 0.0
  %7924 = vmatprep.mubr.f32.mxu0 0.0
  %v7925 = vand.u32 %v7856, 4294901760
  %v7926 = vsub.f32 %v7856, %v7925
  %v7927 = vand.u32 %v7926, 4294901760
  %v7928 = vsub.f32 %v7926, %v7927
  %v7929 = vand.u32 %v7928, 4294901760
  %7930 = vmatmul.mubr.f32.gmra.mrb[0].mxu0 %v7929
  %v7931 = vpop.f32.mrb[0].mxu0
  %v7932 = vadd.f32 0.0, %v7931
  %v7933 = vpop.f32.mrb[0].mxu0
  %7934 = vdwg.mxu0
  %7935 = vmatprep.subr.mxu0 0.0
  %v7936 = vand.u32 %v16, 4294901760
  %v7937 = vsub.f32 %v16, %v7936
  %v7938 = vand.u32 %v7937, 4294901760
  %v7939 = vsub.f32 %v7937, %v7938
  %v7940 = vand.u32 %v7939, 4294901760
  %7941 = vmatpush1.msra.mxu0 %v7940
  %7942 = vmatprep.subr.mxu0 0.0
  %v7943 = vand.u32 %v17, 4294901760
  %v7944 = vsub.f32 %v17, %v7943
  %v7945 = vand.u32 %v7944, 4294901760
  %v7946 = vsub.f32 %v7944, %v7945
  %v7947 = vand.u32 %v7946, 4294901760
  %7948 = vmatpush1.msra.mxu0 %v7947
  %7949 = vmatprep.subr.mxu0 0.0
  %7950 = vmatpush1.msra.mxu0 0.0
  %7951 = vmatprep.subr.mxu0 0.0
  %7952 = vmatpush1.msra.mxu0 0.0
  %7953 = vmatprep.subr.mxu0 0.0
  %7954 = vmatpush1.msra.mxu0 0.0
  %7955 = vmatprep.subr.mxu0 0.0
  %7956 = vmatpush1.msra.mxu0 0.0
  %7957 = vmatprep.subr.mxu0 0.0
  %7958 = vmatpush1.msra.mxu0 0.0
  %7959 = vmatprep.subr.mxu0 0.0
  %7960 = vmatpush1.msra.mxu0 0.0
  %7961 = vmatprep.subr.mxu0 0.0
  %7962 = vmatpush1.msra.mxu0 0.0
  %7963 = vmatprep.subr.mxu0 0.0
  %7964 = vmatpush1.msra.mxu0 0.0
  %7965 = vmatprep.subr.mxu0 0.0
  %7966 = vmatpush1.msra.mxu0 0.0
  %7967 = vmatprep.subr.mxu0 0.0
  %7968 = vmatpush1.msra.mxu0 0.0
  %7969 = vmatprep.subr.mxu0 0.0
  %7970 = vmatpush1.msra.mxu0 0.0
  %7971 = vmatprep.subr.mxu0 0.0
  %7972 = vmatpush1.msra.mxu0 0.0
  %7973 = vmatprep.subr.mxu0 0.0
  %7974 = vmatpush1.msra.mxu0 0.0
  %7975 = vmatprep.subr.mxu0 0.0
  %7976 = vmatpush1.msra.mxu0 0.0
  %7977 = vmatprep.subr.mxu0 0.0
  %7978 = vmatpush1.msra.mxu0 0.0
  %7979 = vmatprep.subr.mxu0 0.0
  %7980 = vmatpush1.msra.mxu0 0.0
  %7981 = vmatprep.subr.mxu0 0.0
  %7982 = vmatpush1.msra.mxu0 0.0
  %7983 = vmatprep.subr.mxu0 0.0
  %7984 = vmatpush1.msra.mxu0 0.0
  %7985 = vmatprep.subr.mxu0 0.0
  %7986 = vmatpush1.msra.mxu0 0.0
  %7987 = vmatprep.subr.mxu0 0.0
  %7988 = vmatpush1.msra.mxu0 0.0
  %7989 = vmatprep.subr.mxu0 0.0
  %7990 = vmatpush1.msra.mxu0 0.0
  %7991 = vmatprep.subr.mxu0 0.0
  %7992 = vmatpush1.msra.mxu0 0.0
  %7993 = vmatprep.subr.mxu0 0.0
  %7994 = vmatpush1.msra.mxu0 0.0
  %7995 = vmatprep.subr.mxu0 0.0
  %7996 = vmatpush1.msra.mxu0 0.0
  %7997 = vmatprep.subr.mxu0 0.0
  %7998 = vmatpush1.msra.mxu0 0.0
  %7999 = vmatprep.subr.mxu0 0.0
  %8000 = vmatpush1.msra.mxu0 0.0
  %8001 = vmatprep.subr.mxu0 0.0
  %8002 = vmatpush1.msra.mxu0 0.0
  %8003 = vmatprep.subr.mxu0 0.0
  %8004 = vmatpush1.msra.mxu0 0.0
  %8005 = vmatprep.subr.mxu0 0.0
  %8006 = vmatpush1.msra.mxu0 0.0
  %8007 = vmatprep.subr.mxu0 0.0
  %8008 = vmatpush1.msra.mxu0 0.0
  %8009 = vmatprep.mubr.f32.mxu0 0.0
  %v8010 = vand.u32 %v7856, 4294901760
  %8011 = vmatmul.mubr.f32.gmra.mrb[0].mxu0 %v8010
  %v8012 = vpop.f32.mrb[0].mxu0
  %v8013 = vadd.f32 %v7932, %v8012
  %v8014 = vpop.f32.mrb[0].mxu0
  %8015 = vdwg.mxu0
  %8016 = vmatprep.subr.mxu0 0.0
  %v8017 = vand.u32 %v16, 4294901760
  %v8018 = vsub.f32 %v16, %v8017
  %8019 = vmatpush1.msra.mxu0 %v8018
  %8020 = vmatprep.subr.mxu0 0.0
  %v8021 = vand.u32 %v17, 4294901760
  %v8022 = vsub.f32 %v17, %v8021
  %8023 = vmatpush1.msra.mxu0 %v8022
  %8024 = vmatprep.subr.mxu0 0.0
  %8025 = vmatpush1.msra.mxu0 0.0
  %8026 = vmatprep.subr.mxu0 0.0
  %8027 = vmatpush1.msra.mxu0 0.0
  %8028 = vmatprep.subr.mxu0 0.0
  %8029 = vmatpush1.msra.mxu0 0.0
  %8030 = vmatprep.subr.mxu0 0.0
  %8031 = vmatpush1.msra.mxu0 0.0
  %8032 = vmatprep.subr.mxu0 0.0
  %8033 = vmatpush1.msra.mxu0 0.0
  %8034 = vmatprep.subr.mxu0 0.0
  %8035 = vmatpush1.msra.mxu0 0.0
  %8036 = vmatprep.subr.mxu0 0.0
  %8037 = vmatpush1.msra.mxu0 0.0
  %8038 = vmatprep.subr.mxu0 0.0
  %8039 = vmatpush1.msra.mxu0 0.0
  %8040 = vmatprep.subr.mxu0 0.0
  %8041 = vmatpush1.msra.mxu0 0.0
  %8042 = vmatprep.subr.mxu0 0.0
  %8043 = vmatpush1.msra.mxu0 0.0
  %8044 = vmatprep.subr.mxu0 0.0
  %8045 = vmatpush1.msra.mxu0 0.0
  %8046 = vmatprep.subr.mxu0 0.0
  %8047 = vmatpush1.msra.mxu0 0.0
  %8048 = vmatprep.subr.mxu0 0.0
  %8049 = vmatpush1.msra.mxu0 0.0
  %8050 = vmatprep.subr.mxu0 0.0
  %8051 = vmatpush1.msra.mxu0 0.0
  %8052 = vmatprep.subr.mxu0 0.0
  %8053 = vmatpush1.msra.mxu0 0.0
  %8054 = vmatprep.subr.mxu0 0.0
  %8055 = vmatpush1.msra.mxu0 0.0
  %8056 = vmatprep.subr.mxu0 0.0
  %8057 = vmatpush1.msra.mxu0 0.0
  %8058 = vmatprep.subr.mxu0 0.0
  %8059 = vmatpush1.msra.mxu0 0.0
  %8060 = vmatprep.subr.mxu0 0.0
  %8061 = vmatpush1.msra.mxu0 0.0
  %8062 = vmatprep.subr.mxu0 0.0
  %8063 = vmatpush1.msra.mxu0 0.0
  %8064 = vmatprep.subr.mxu0 0.0
  %8065 = vmatpush1.msra.mxu0 0.0
  %8066 = vmatprep.subr.mxu0 0.0
  %8067 = vmatpush1.msra.mxu0 0.0
  %8068 = vmatprep.subr.mxu0 0.0
  %8069 = vmatpush1.msra.mxu0 0.0
  %8070 = vmatprep.subr.mxu0 0.0
  %8071 = vmatpush1.msra.mxu0 0.0
  %8072 = vmatprep.subr.mxu0 0.0
  %8073 = vmatpush1.msra.mxu0 0.0
  %8074 = vmatprep.subr.mxu0 0.0
  %8075 = vmatpush1.msra.mxu0 0.0
  %8076 = vmatprep.subr.mxu0 0.0
  %8077 = vmatpush1.msra.mxu0 0.0
  %8078 = vmatprep.subr.mxu0 0.0
  %8079 = vmatpush1.msra.mxu0 0.0
  %8080 = vmatprep.subr.mxu0 0.0
  %8081 = vmatpush1.msra.mxu0 0.0
  %8082 = vmatprep.subr.mxu0 0.0
  %8083 = vmatpush1.msra.mxu0 0.0
  %8084 = vmatprep.mubr.f32.mxu0 0.0
  %v8085 = vand.u32 %v7856, 4294901760
  %v8086 = vsub.f32 %v7856, %v8085
  %8087 = vmatmul.mubr.f32.gmra.mrb[0].mxu0 %v8086
  %v8088 = vpop.f32.mrb[0].mxu0
  %v8089 = vadd.f32 %v8013, %v8088
  %v8090 = vpop.f32.mrb[0].mxu0
  %8091 = vdwg.mxu0
  %8092 = vmatprep.subr.mxu0 0.0
  %v8093 = vand.u32 %v16, 4294901760
  %8094 = vmatpush1.msra.mxu0 %v8093
  %8095 = vmatprep.subr.mxu0 0.0
  %v8096 = vand.u32 %v17, 4294901760
  %8097 = vmatpush1.msra.mxu0 %v8096
  %8098 = vmatprep.subr.mxu0 0.0
  %8099 = vmatpush1.msra.mxu0 0.0
  %8100 = vmatprep.subr.mxu0 0.0
  %8101 = vmatpush1.msra.mxu0 0.0
  %8102 = vmatprep.subr.mxu0 0.0
  %8103 = vmatpush1.msra.mxu0 0.0
  %8104 = vmatprep.subr.mxu0 0.0
  %8105 = vmatpush1.msra.mxu0 0.0
  %8106 = vmatprep.subr.mxu0 0.0
  %8107 = vmatpush1.msra.mxu0 0.0
  %8108 = vmatprep.subr.mxu0 0.0
  %8109 = vmatpush1.msra.mxu0 0.0
  %8110 = vmatprep.subr.mxu0 0.0
  %8111 = vmatpush1.msra.mxu0 0.0
  %8112 = vmatprep.subr.mxu0 0.0
  %8113 = vmatpush1.msra.mxu0 0.0
  %8114 = vmatprep.subr.mxu0 0.0
  %8115 = vmatpush1.msra.mxu0 0.0
  %8116 = vmatprep.subr.mxu0 0.0
  %8117 = vmatpush1.msra.mxu0 0.0
  %8118 = vmatprep.subr.mxu0 0.0
  %8119 = vmatpush1.msra.mxu0 0.0
  %8120 = vmatprep.subr.mxu0 0.0
  %8121 = vmatpush1.msra.mxu0 0.0
  %8122 = vmatprep.subr.mxu0 0.0
  %8123 = vmatpush1.msra.mxu0 0.0
  %8124 = vmatprep.subr.mxu0 0.0
  %8125 = vmatpush1.msra.mxu0 0.0
  %8126 = vmatprep.subr.mxu0 0.0
  %8127 = vmatpush1.msra.mxu0 0.0
  %8128 = vmatprep.subr.mxu0 0.0
  %8129 = vmatpush1.msra.mxu0 0.0
  %8130 = vmatprep.subr.mxu0 0.0
  %8131 = vmatpush1.msra.mxu0 0.0
  %8132 = vmatprep.subr.mxu0 0.0
  %8133 = vmatpush1.msra.mxu0 0.0
  %8134 = vmatprep.subr.mxu0 0.0
  %8135 = vmatpush1.msra.mxu0 0.0
  %8136 = vmatprep.subr.mxu0 0.0
  %8137 = vmatpush1.msra.mxu0 0.0
  %8138 = vmatprep.subr.mxu0 0.0
  %8139 = vmatpush1.msra.mxu0 0.0
  %8140 = vmatprep.subr.mxu0 0.0
  %8141 = vmatpush1.msra.mxu0 0.0
  %8142 = vmatprep.subr.mxu0 0.0
  %8143 = vmatpush1.msra.mxu0 0.0
  %8144 = vmatprep.subr.mxu0 0.0
  %8145 = vmatpush1.msra.mxu0 0.0
  %8146 = vmatprep.subr.mxu0 0.0
  %8147 = vmatpush1.msra.mxu0 0.0
  %8148 = vmatprep.subr.mxu0 0.0
  %8149 = vmatpush1.msra.mxu0 0.0
  %8150 = vmatprep.subr.mxu0 0.0
  %8151 = vmatpush1.msra.mxu0 0.0
  %8152 = vmatprep.subr.mxu0 0.0
  %8153 = vmatpush1.msra.mxu0 0.0
  %8154 = vmatprep.subr.mxu0 0.0
  %8155 = vmatpush1.msra.mxu0 0.0
  %8156 = vmatprep.subr.mxu0 0.0
  %8157 = vmatpush1.msra.mxu0 0.0
  %8158 = vmatprep.mubr.f32.mxu0 0.0
  %v8159 = vand.u32 %v7856, 4294901760
  %v8160 = vsub.f32 %v7856, %v8159
  %v8161 = vand.u32 %v8160, 4294901760
  %8162 = vmatmul.mubr.f32.gmra.mrb[0].mxu0 %v8161
  %v8163 = vpop.f32.mrb[0].mxu0
  %v8164 = vadd.f32 %v8089, %v8163
  %v8165 = vpop.f32.mrb[0].mxu0
  %8166 = vdwg.mxu0
  %8167 = vmatprep.subr.mxu0 0.0
  %v8168 = vand.u32 %v16, 4294901760
  %v8169 = vsub.f32 %v16, %v8168
  %v8170 = vand.u32 %v8169, 4294901760
  %8171 = vmatpush1.msra.mxu0 %v8170
  %8172 = vmatprep.subr.mxu0 0.0
  %v8173 = vand.u32 %v17, 4294901760
  %v8174 = vsub.f32 %v17, %v8173
  %v8175 = vand.u32 %v8174, 4294901760
  %8176 = vmatpush1.msra.mxu0 %v8175
  %8177 = vmatprep.subr.mxu0 0.0
  %8178 = vmatpush1.msra.mxu0 0.0
  %8179 = vmatprep.subr.mxu0 0.0
  %8180 = vmatpush1.msra.mxu0 0.0
  %8181 = vmatprep.subr.mxu0 0.0
  %8182 = vmatpush1.msra.mxu0 0.0
  %8183 = vmatprep.subr.mxu0 0.0
  %8184 = vmatpush1.msra.mxu0 0.0
  %8185 = vmatprep.subr.mxu0 0.0
  %8186 = vmatpush1.msra.mxu0 0.0
  %8187 = vmatprep.subr.mxu0 0.0
  %8188 = vmatpush1.msra.mxu0 0.0
  %8189 = vmatprep.subr.mxu0 0.0
  %8190 = vmatpush1.msra.mxu0 0.0
  %8191 = vmatprep.subr.mxu0 0.0
  %8192 = vmatpush1.msra.mxu0 0.0
  %8193 = vmatprep.subr.mxu0 0.0
  %8194 = vmatpush1.msra.mxu0 0.0
  %8195 = vmatprep.subr.mxu0 0.0
  %8196 = vmatpush1.msra.mxu0 0.0
  %8197 = vmatprep.subr.mxu0 0.0
  %8198 = vmatpush1.msra.mxu0 0.0
  %8199 = vmatprep.subr.mxu0 0.0
  %8200 = vmatpush1.msra.mxu0 0.0
  %8201 = vmatprep.subr.mxu0 0.0
  %8202 = vmatpush1.msra.mxu0 0.0
  %8203 = vmatprep.subr.mxu0 0.0
  %8204 = vmatpush1.msra.mxu0 0.0
  %8205 = vmatprep.subr.mxu0 0.0
  %8206 = vmatpush1.msra.mxu0 0.0
  %8207 = vmatprep.subr.mxu0 0.0
  %8208 = vmatpush1.msra.mxu0 0.0
  %8209 = vmatprep.subr.mxu0 0.0
  %8210 = vmatpush1.msra.mxu0 0.0
  %8211 = vmatprep.subr.mxu0 0.0
  %8212 = vmatpush1.msra.mxu0 0.0
  %8213 = vmatprep.subr.mxu0 0.0
  %8214 = vmatpush1.msra.mxu0 0.0
  %8215 = vmatprep.subr.mxu0 0.0
  %8216 = vmatpush1.msra.mxu0 0.0
  %8217 = vmatprep.subr.mxu0 0.0
  %8218 = vmatpush1.msra.mxu0 0.0
  %8219 = vmatprep.subr.mxu0 0.0
  %8220 = vmatpush1.msra.mxu0 0.0
  %8221 = vmatprep.subr.mxu0 0.0
  %8222 = vmatpush1.msra.mxu0 0.0
  %8223 = vmatprep.subr.mxu0 0.0
  %8224 = vmatpush1.msra.mxu0 0.0
  %8225 = vmatprep.subr.mxu0 0.0
  %8226 = vmatpush1.msra.mxu0 0.0
  %8227 = vmatprep.subr.mxu0 0.0
  %8228 = vmatpush1.msra.mxu0 0.0
  %8229 = vmatprep.subr.mxu0 0.0
  %8230 = vmatpush1.msra.mxu0 0.0
  %8231 = vmatprep.subr.mxu0 0.0
  %8232 = vmatpush1.msra.mxu0 0.0
  %8233 = vmatprep.subr.mxu0 0.0
  %8234 = vmatpush1.msra.mxu0 0.0
  %8235 = vmatprep.subr.mxu0 0.0
  %8236 = vmatpush1.msra.mxu0 0.0
  %8237 = vmatprep.mubr.f32.mxu0 0.0
  %v8238 = vand.u32 %v7856, 4294901760
  %8239 = vmatmul.mubr.f32.gmra.mrb[0].mxu0 %v8238
  %v8240 = vpop.f32.mrb[0].mxu0
  %v8241 = vadd.f32 %v8164, %v8240
  %v8242 = vpop.f32.mrb[0].mxu0
  %8243 = vdwg.mxu0
  %8244 = vmatprep.subr.mxu0 0.0
  %v8245 = vand.u32 %v16, 4294901760
  %8246 = vmatpush1.msra.mxu0 %v8245
  %8247 = vmatprep.subr.mxu0 0.0
  %v8248 = vand.u32 %v17, 4294901760
  %8249 = vmatpush1.msra.mxu0 %v8248
  %8250 = vmatprep.subr.mxu0 0.0
  %8251 = vmatpush1.msra.mxu0 0.0
  %8252 = vmatprep.subr.mxu0 0.0
  %8253 = vmatpush1.msra.mxu0 0.0
  %8254 = vmatprep.subr.mxu0 0.0
  %8255 = vmatpush1.msra.mxu0 0.0
  %8256 = vmatprep.subr.mxu0 0.0
  %8257 = vmatpush1.msra.mxu0 0.0
  %8258 = vmatprep.subr.mxu0 0.0
  %8259 = vmatpush1.msra.mxu0 0.0
  %8260 = vmatprep.subr.mxu0 0.0
  %8261 = vmatpush1.msra.mxu0 0.0
  %8262 = vmatprep.subr.mxu0 0.0
  %8263 = vmatpush1.msra.mxu0 0.0
  %8264 = vmatprep.subr.mxu0 0.0
  %8265 = vmatpush1.msra.mxu0 0.0
  %8266 = vmatprep.subr.mxu0 0.0
  %8267 = vmatpush1.msra.mxu0 0.0
  %8268 = vmatprep.subr.mxu0 0.0
  %8269 = vmatpush1.msra.mxu0 0.0
  %8270 = vmatprep.subr.mxu0 0.0
  %8271 = vmatpush1.msra.mxu0 0.0
  %8272 = vmatprep.subr.mxu0 0.0
  %8273 = vmatpush1.msra.mxu0 0.0
  %8274 = vmatprep.subr.mxu0 0.0
  %8275 = vmatpush1.msra.mxu0 0.0
  %8276 = vmatprep.subr.mxu0 0.0
  %8277 = vmatpush1.msra.mxu0 0.0
  %8278 = vmatprep.subr.mxu0 0.0
  %8279 = vmatpush1.msra.mxu0 0.0
  %8280 = vmatprep.subr.mxu0 0.0
  %8281 = vmatpush1.msra.mxu0 0.0
  %8282 = vmatprep.subr.mxu0 0.0
  %8283 = vmatpush1.msra.mxu0 0.0
  %8284 = vmatprep.subr.mxu0 0.0
  %8285 = vmatpush1.msra.mxu0 0.0
  %8286 = vmatprep.subr.mxu0 0.0
  %8287 = vmatpush1.msra.mxu0 0.0
  %8288 = vmatprep.subr.mxu0 0.0
  %8289 = vmatpush1.msra.mxu0 0.0
  %8290 = vmatprep.subr.mxu0 0.0
  %8291 = vmatpush1.msra.mxu0 0.0
  %8292 = vmatprep.subr.mxu0 0.0
  %8293 = vmatpush1.msra.mxu0 0.0
  %8294 = vmatprep.subr.mxu0 0.0
  %8295 = vmatpush1.msra.mxu0 0.0
  %8296 = vmatprep.subr.mxu0 0.0
  %8297 = vmatpush1.msra.mxu0 0.0
  %8298 = vmatprep.subr.mxu0 0.0
  %8299 = vmatpush1.msra.mxu0 0.0
  %8300 = vmatprep.subr.mxu0 0.0
  %8301 = vmatpush1.msra.mxu0 0.0
  %8302 = vmatprep.subr.mxu0 0.0
  %8303 = vmatpush1.msra.mxu0 0.0
  %8304 = vmatprep.subr.mxu0 0.0
  %8305 = vmatpush1.msra.mxu0 0.0
  %8306 = vmatprep.subr.mxu0 0.0
  %8307 = vmatpush1.msra.mxu0 0.0
  %8308 = vmatprep.subr.mxu0 0.0
  %8309 = vmatpush1.msra.mxu0 0.0
  %8310 = vmatprep.mubr.f32.mxu0 0.0
  %v8311 = vand.u32 %v7856, 4294901760
  %8312 = vmatmul.mubr.f32.gmra.mrb[0].mxu0 %v8311
  %v8313 = vpop.f32.mrb[0].mxu0
  %v8314 = vadd.f32 %v8241, %v8313
  %v8315 = vpop.f32.mrb[0].mxu0
  %8316 = vdwg.mxu0
  %v8318 = vsel %vm55, %v7851, 0
  %8320 = vmatprep.subr.mxu0 0.0
  %v8321 = vand.u32 %v14, 4294901760
  %8322 = vmatpush1.msra.mxu0 %v8321
  %8323 = vmatprep.subr.mxu0 0.0
  %v8324 = vand.u32 %v15, 4294901760
  %8325 = vmatpush1.msra.mxu0 %v8324
  %8326 = vmatprep.subr.mxu0 0.0
  %8327 = vmatpush1.msra.mxu0 0.0
  %8328 = vmatprep.subr.mxu0 0.0
  %8329 = vmatpush1.msra.mxu0 0.0
  %8330 = vmatprep.subr.mxu0 0.0
  %8331 = vmatpush1.msra.mxu0 0.0
  %8332 = vmatprep.subr.mxu0 0.0
  %8333 = vmatpush1.msra.mxu0 0.0
  %8334 = vmatprep.subr.mxu0 0.0
  %8335 = vmatpush1.msra.mxu0 0.0
  %8336 = vmatprep.subr.mxu0 0.0
  %8337 = vmatpush1.msra.mxu0 0.0
  %8338 = vmatprep.subr.mxu0 0.0
  %8339 = vmatpush1.msra.mxu0 0.0
  %8340 = vmatprep.subr.mxu0 0.0
  %8341 = vmatpush1.msra.mxu0 0.0
  %8342 = vmatprep.subr.mxu0 0.0
  %8343 = vmatpush1.msra.mxu0 0.0
  %8344 = vmatprep.subr.mxu0 0.0
  %8345 = vmatpush1.msra.mxu0 0.0
  %8346 = vmatprep.subr.mxu0 0.0
  %8347 = vmatpush1.msra.mxu0 0.0
  %8348 = vmatprep.subr.mxu0 0.0
  %8349 = vmatpush1.msra.mxu0 0.0
  %8350 = vmatprep.subr.mxu0 0.0
  %8351 = vmatpush1.msra.mxu0 0.0
  %8352 = vmatprep.subr.mxu0 0.0
  %8353 = vmatpush1.msra.mxu0 0.0
  %8354 = vmatprep.subr.mxu0 0.0
  %8355 = vmatpush1.msra.mxu0 0.0
  %8356 = vmatprep.subr.mxu0 0.0
  %8357 = vmatpush1.msra.mxu0 0.0
  %8358 = vmatprep.subr.mxu0 0.0
  %8359 = vmatpush1.msra.mxu0 0.0
  %8360 = vmatprep.subr.mxu0 0.0
  %8361 = vmatpush1.msra.mxu0 0.0
  %8362 = vmatprep.subr.mxu0 0.0
  %8363 = vmatpush1.msra.mxu0 0.0
  %8364 = vmatprep.subr.mxu0 0.0
  %8365 = vmatpush1.msra.mxu0 0.0
  %8366 = vmatprep.subr.mxu0 0.0
  %8367 = vmatpush1.msra.mxu0 0.0
  %8368 = vmatprep.subr.mxu0 0.0
  %8369 = vmatpush1.msra.mxu0 0.0
  %8370 = vmatprep.subr.mxu0 0.0
  %8371 = vmatpush1.msra.mxu0 0.0
  %8372 = vmatprep.subr.mxu0 0.0
  %8373 = vmatpush1.msra.mxu0 0.0
  %8374 = vmatprep.subr.mxu0 0.0
  %8375 = vmatpush1.msra.mxu0 0.0
  %8376 = vmatprep.subr.mxu0 0.0
  %8377 = vmatpush1.msra.mxu0 0.0
  %8378 = vmatprep.subr.mxu0 0.0
  %8379 = vmatpush1.msra.mxu0 0.0
  %8380 = vmatprep.subr.mxu0 0.0
  %8381 = vmatpush1.msra.mxu0 0.0
  %8382 = vmatprep.subr.mxu0 0.0
  %8383 = vmatpush1.msra.mxu0 0.0
  %8384 = vmatprep.subr.mxu0 0.0
  %8385 = vmatpush1.msra.mxu0 0.0
  %8386 = vmatprep.mubr.f32.mxu0 0.0
  %v8387 = vand.u32 %v8318, 4294901760
  %v8388 = vsub.f32 %v8318, %v8387
  %v8389 = vand.u32 %v8388, 4294901760
  %v8390 = vsub.f32 %v8388, %v8389
  %v8391 = vand.u32 %v8390, 4294901760
  %8392 = vmatmul.mubr.f32.gmra.mrb[0].mxu0 %v8391
  %v8393 = vpop.f32.mrb[0].mxu0
  %v8394 = vadd.f32 %v8314, %v8393
  %v8395 = vpop.f32.mrb[0].mxu0
  %8396 = vdwg.mxu0
  %8397 = vmatprep.subr.mxu0 0.0
  %v8398 = vand.u32 %v14, 4294901760
  %v8399 = vsub.f32 %v14, %v8398
  %v8400 = vand.u32 %v8399, 4294901760
  %v8401 = vsub.f32 %v8399, %v8400
  %v8402 = vand.u32 %v8401, 4294901760
  %8403 = vmatpush1.msra.mxu0 %v8402
  %8404 = vmatprep.subr.mxu0 0.0
  %v8405 = vand.u32 %v15, 4294901760
  %v8406 = vsub.f32 %v15, %v8405
  %v8407 = vand.u32 %v8406, 4294901760
  %v8408 = vsub.f32 %v8406, %v8407
  %v8409 = vand.u32 %v8408, 4294901760
  %8410 = vmatpush1.msra.mxu0 %v8409
  %8411 = vmatprep.subr.mxu0 0.0
  %8412 = vmatpush1.msra.mxu0 0.0
  %8413 = vmatprep.subr.mxu0 0.0
  %8414 = vmatpush1.msra.mxu0 0.0
  %8415 = vmatprep.subr.mxu0 0.0
  %8416 = vmatpush1.msra.mxu0 0.0
  %8417 = vmatprep.subr.mxu0 0.0
  %8418 = vmatpush1.msra.mxu0 0.0
  %8419 = vmatprep.subr.mxu0 0.0
  %8420 = vmatpush1.msra.mxu0 0.0
  %8421 = vmatprep.subr.mxu0 0.0
  %8422 = vmatpush1.msra.mxu0 0.0
  %8423 = vmatprep.subr.mxu0 0.0
  %8424 = vmatpush1.msra.mxu0 0.0
  %8425 = vmatprep.subr.mxu0 0.0
  %8426 = vmatpush1.msra.mxu0 0.0
  %8427 = vmatprep.subr.mxu0 0.0
  %8428 = vmatpush1.msra.mxu0 0.0
  %8429 = vmatprep.subr.mxu0 0.0
  %8430 = vmatpush1.msra.mxu0 0.0
  %8431 = vmatprep.subr.mxu0 0.0
  %8432 = vmatpush1.msra.mxu0 0.0
  %8433 = vmatprep.subr.mxu0 0.0
  %8434 = vmatpush1.msra.mxu0 0.0
  %8435 = vmatprep.subr.mxu0 0.0
  %8436 = vmatpush1.msra.mxu0 0.0
  %8437 = vmatprep.subr.mxu0 0.0
  %8438 = vmatpush1.msra.mxu0 0.0
  %8439 = vmatprep.subr.mxu0 0.0
  %8440 = vmatpush1.msra.mxu0 0.0
  %8441 = vmatprep.subr.mxu0 0.0
  %8442 = vmatpush1.msra.mxu0 0.0
  %8443 = vmatprep.subr.mxu0 0.0
  %8444 = vmatpush1.msra.mxu0 0.0
  %8445 = vmatprep.subr.mxu0 0.0
  %8446 = vmatpush1.msra.mxu0 0.0
  %8447 = vmatprep.subr.mxu0 0.0
  %8448 = vmatpush1.msra.mxu0 0.0
  %8449 = vmatprep.subr.mxu0 0.0
  %8450 = vmatpush1.msra.mxu0 0.0
  %8451 = vmatprep.subr.mxu0 0.0
  %8452 = vmatpush1.msra.mxu0 0.0
  %8453 = vmatprep.subr.mxu0 0.0
  %8454 = vmatpush1.msra.mxu0 0.0
  %8455 = vmatprep.subr.mxu0 0.0
  %8456 = vmatpush1.msra.mxu0 0.0
  %8457 = vmatprep.subr.mxu0 0.0
  %8458 = vmatpush1.msra.mxu0 0.0
  %8459 = vmatprep.subr.mxu0 0.0
  %8460 = vmatpush1.msra.mxu0 0.0
  %8461 = vmatprep.subr.mxu0 0.0
  %8462 = vmatpush1.msra.mxu0 0.0
  %8463 = vmatprep.subr.mxu0 0.0
  %8464 = vmatpush1.msra.mxu0 0.0
  %8465 = vmatprep.subr.mxu0 0.0
  %8466 = vmatpush1.msra.mxu0 0.0
  %8467 = vmatprep.subr.mxu0 0.0
  %8468 = vmatpush1.msra.mxu0 0.0
  %8469 = vmatprep.subr.mxu0 0.0
  %8470 = vmatpush1.msra.mxu0 0.0
  %8471 = vmatprep.mubr.f32.mxu0 0.0
  %v8472 = vand.u32 %v8318, 4294901760
  %8473 = vmatmul.mubr.f32.gmra.mrb[0].mxu0 %v8472
  %v8474 = vpop.f32.mrb[0].mxu0
  %v8475 = vadd.f32 %v8394, %v8474
  %v8476 = vpop.f32.mrb[0].mxu0
  %8477 = vdwg.mxu0
  %8478 = vmatprep.subr.mxu0 0.0
  %v8479 = vand.u32 %v14, 4294901760
  %v8480 = vsub.f32 %v14, %v8479
  %8481 = vmatpush1.msra.mxu0 %v8480
  %8482 = vmatprep.subr.mxu0 0.0
  %v8483 = vand.u32 %v15, 4294901760
  %v8484 = vsub.f32 %v15, %v8483
  %8485 = vmatpush1.msra.mxu0 %v8484
  %8486 = vmatprep.subr.mxu0 0.0
  %8487 = vmatpush1.msra.mxu0 0.0
  %8488 = vmatprep.subr.mxu0 0.0
  %8489 = vmatpush1.msra.mxu0 0.0
  %8490 = vmatprep.subr.mxu0 0.0
  %8491 = vmatpush1.msra.mxu0 0.0
  %8492 = vmatprep.subr.mxu0 0.0
  %8493 = vmatpush1.msra.mxu0 0.0
  %8494 = vmatprep.subr.mxu0 0.0
  %8495 = vmatpush1.msra.mxu0 0.0
  %8496 = vmatprep.subr.mxu0 0.0
  %8497 = vmatpush1.msra.mxu0 0.0
  %8498 = vmatprep.subr.mxu0 0.0
  %8499 = vmatpush1.msra.mxu0 0.0
  %8500 = vmatprep.subr.mxu0 0.0
  %8501 = vmatpush1.msra.mxu0 0.0
  %8502 = vmatprep.subr.mxu0 0.0
  %8503 = vmatpush1.msra.mxu0 0.0
  %8504 = vmatprep.subr.mxu0 0.0
  %8505 = vmatpush1.msra.mxu0 0.0
  %8506 = vmatprep.subr.mxu0 0.0
  %8507 = vmatpush1.msra.mxu0 0.0
  %8508 = vmatprep.subr.mxu0 0.0
  %8509 = vmatpush1.msra.mxu0 0.0
  %8510 = vmatprep.subr.mxu0 0.0
  %8511 = vmatpush1.msra.mxu0 0.0
  %8512 = vmatprep.subr.mxu0 0.0
  %8513 = vmatpush1.msra.mxu0 0.0
  %8514 = vmatprep.subr.mxu0 0.0
  %8515 = vmatpush1.msra.mxu0 0.0
  %8516 = vmatprep.subr.mxu0 0.0
  %8517 = vmatpush1.msra.mxu0 0.0
  %8518 = vmatprep.subr.mxu0 0.0
  %8519 = vmatpush1.msra.mxu0 0.0
  %8520 = vmatprep.subr.mxu0 0.0
  %8521 = vmatpush1.msra.mxu0 0.0
  %8522 = vmatprep.subr.mxu0 0.0
  %8523 = vmatpush1.msra.mxu0 0.0
  %8524 = vmatprep.subr.mxu0 0.0
  %8525 = vmatpush1.msra.mxu0 0.0
  %8526 = vmatprep.subr.mxu0 0.0
  %8527 = vmatpush1.msra.mxu0 0.0
  %8528 = vmatprep.subr.mxu0 0.0
  %8529 = vmatpush1.msra.mxu0 0.0
  %8530 = vmatprep.subr.mxu0 0.0
  %8531 = vmatpush1.msra.mxu0 0.0
  %8532 = vmatprep.subr.mxu0 0.0
  %8533 = vmatpush1.msra.mxu0 0.0
  %8534 = vmatprep.subr.mxu0 0.0
  %8535 = vmatpush1.msra.mxu0 0.0
  %8536 = vmatprep.subr.mxu0 0.0
  %8537 = vmatpush1.msra.mxu0 0.0
  %8538 = vmatprep.subr.mxu0 0.0
  %8539 = vmatpush1.msra.mxu0 0.0
  %8540 = vmatprep.subr.mxu0 0.0
  %8541 = vmatpush1.msra.mxu0 0.0
  %8542 = vmatprep.subr.mxu0 0.0
  %8543 = vmatpush1.msra.mxu0 0.0
  %8544 = vmatprep.subr.mxu0 0.0
  %8545 = vmatpush1.msra.mxu0 0.0
  %8546 = vmatprep.mubr.f32.mxu0 0.0
  %v8547 = vand.u32 %v8318, 4294901760
  %v8548 = vsub.f32 %v8318, %v8547
  %8549 = vmatmul.mubr.f32.gmra.mrb[0].mxu0 %v8548
  %v8550 = vpop.f32.mrb[0].mxu0
  %v8551 = vadd.f32 %v8475, %v8550
  %v8552 = vpop.f32.mrb[0].mxu0
  %8553 = vdwg.mxu0
  %8554 = vmatprep.subr.mxu0 0.0
  %v8555 = vand.u32 %v14, 4294901760
  %8556 = vmatpush1.msra.mxu0 %v8555
  %8557 = vmatprep.subr.mxu0 0.0
  %v8558 = vand.u32 %v15, 4294901760
  %8559 = vmatpush1.msra.mxu0 %v8558
  %8560 = vmatprep.subr.mxu0 0.0
  %8561 = vmatpush1.msra.mxu0 0.0
  %8562 = vmatprep.subr.mxu0 0.0
  %8563 = vmatpush1.msra.mxu0 0.0
  %8564 = vmatprep.subr.mxu0 0.0
  %8565 = vmatpush1.msra.mxu0 0.0
  %8566 = vmatprep.subr.mxu0 0.0
  %8567 = vmatpush1.msra.mxu0 0.0
  %8568 = vmatprep.subr.mxu0 0.0
  %8569 = vmatpush1.msra.mxu0 0.0
  %8570 = vmatprep.subr.mxu0 0.0
  %8571 = vmatpush1.msra.mxu0 0.0
  %8572 = vmatprep.subr.mxu0 0.0
  %8573 = vmatpush1.msra.mxu0 0.0
  %8574 = vmatprep.subr.mxu0 0.0
  %8575 = vmatpush1.msra.mxu0 0.0
  %8576 = vmatprep.subr.mxu0 0.0
  %8577 = vmatpush1.msra.mxu0 0.0
  %8578 = vmatprep.subr.mxu0 0.0
  %8579 = vmatpush1.msra.mxu0 0.0
  %8580 = vmatprep.subr.mxu0 0.0
  %8581 = vmatpush1.msra.mxu0 0.0
  %8582 = vmatprep.subr.mxu0 0.0
  %8583 = vmatpush1.msra.mxu0 0.0
  %8584 = vmatprep.subr.mxu0 0.0
  %8585 = vmatpush1.msra.mxu0 0.0
  %8586 = vmatprep.subr.mxu0 0.0
  %8587 = vmatpush1.msra.mxu0 0.0
  %8588 = vmatprep.subr.mxu0 0.0
  %8589 = vmatpush1.msra.mxu0 0.0
  %8590 = vmatprep.subr.mxu0 0.0
  %8591 = vmatpush1.msra.mxu0 0.0
  %8592 = vmatprep.subr.mxu0 0.0
  %8593 = vmatpush1.msra.mxu0 0.0
  %8594 = vmatprep.subr.mxu0 0.0
  %8595 = vmatpush1.msra.mxu0 0.0
  %8596 = vmatprep.subr.mxu0 0.0
  %8597 = vmatpush1.msra.mxu0 0.0
  %8598 = vmatprep.subr.mxu0 0.0
  %8599 = vmatpush1.msra.mxu0 0.0
  %8600 = vmatprep.subr.mxu0 0.0
  %8601 = vmatpush1.msra.mxu0 0.0
  %8602 = vmatprep.subr.mxu0 0.0
  %8603 = vmatpush1.msra.mxu0 0.0
  %8604 = vmatprep.subr.mxu0 0.0
  %8605 = vmatpush1.msra.mxu0 0.0
  %8606 = vmatprep.subr.mxu0 0.0
  %8607 = vmatpush1.msra.mxu0 0.0
  %8608 = vmatprep.subr.mxu0 0.0
  %8609 = vmatpush1.msra.mxu0 0.0
  %8610 = vmatprep.subr.mxu0 0.0
  %8611 = vmatpush1.msra.mxu0 0.0
  %8612 = vmatprep.subr.mxu0 0.0
  %8613 = vmatpush1.msra.mxu0 0.0
  %8614 = vmatprep.subr.mxu0 0.0
  %8615 = vmatpush1.msra.mxu0 0.0
  %8616 = vmatprep.subr.mxu0 0.0
  %8617 = vmatpush1.msra.mxu0 0.0
  %8618 = vmatprep.subr.mxu0 0.0
  %8619 = vmatpush1.msra.mxu0 0.0
  %8620 = vmatprep.mubr.f32.mxu0 0.0
  %v8621 = vand.u32 %v8318, 4294901760
  %v8622 = vsub.f32 %v8318, %v8621
  %v8623 = vand.u32 %v8622, 4294901760
  %8624 = vmatmul.mubr.f32.gmra.mrb[0].mxu0 %v8623
  %v8625 = vpop.f32.mrb[0].mxu0
  %v8626 = vadd.f32 %v8551, %v8625
  %v8627 = vpop.f32.mrb[0].mxu0
  %8628 = vdwg.mxu0
  %8629 = vmatprep.subr.mxu0 0.0
  %v8630 = vand.u32 %v14, 4294901760
  %v8631 = vsub.f32 %v14, %v8630
  %v8632 = vand.u32 %v8631, 4294901760
  %8633 = vmatpush1.msra.mxu0 %v8632
  %8634 = vmatprep.subr.mxu0 0.0
  %v8635 = vand.u32 %v15, 4294901760
  %v8636 = vsub.f32 %v15, %v8635
  %v8637 = vand.u32 %v8636, 4294901760
  %8638 = vmatpush1.msra.mxu0 %v8637
  %8639 = vmatprep.subr.mxu0 0.0
  %8640 = vmatpush1.msra.mxu0 0.0
  %8641 = vmatprep.subr.mxu0 0.0
  %8642 = vmatpush1.msra.mxu0 0.0
  %8643 = vmatprep.subr.mxu0 0.0
  %8644 = vmatpush1.msra.mxu0 0.0
  %8645 = vmatprep.subr.mxu0 0.0
  %8646 = vmatpush1.msra.mxu0 0.0
  %8647 = vmatprep.subr.mxu0 0.0
  %8648 = vmatpush1.msra.mxu0 0.0
  %8649 = vmatprep.subr.mxu0 0.0
  %8650 = vmatpush1.msra.mxu0 0.0
  %8651 = vmatprep.subr.mxu0 0.0
  %8652 = vmatpush1.msra.mxu0 0.0
  %8653 = vmatprep.subr.mxu0 0.0
  %8654 = vmatpush1.msra.mxu0 0.0
  %8655 = vmatprep.subr.mxu0 0.0
  %8656 = vmatpush1.msra.mxu0 0.0
  %8657 = vmatprep.subr.mxu0 0.0
  %8658 = vmatpush1.msra.mxu0 0.0
  %8659 = vmatprep.subr.mxu0 0.0
  %8660 = vmatpush1.msra.mxu0 0.0
  %8661 = vmatprep.subr.mxu0 0.0
  %8662 = vmatpush1.msra.mxu0 0.0
  %8663 = vmatprep.subr.mxu0 0.0
  %8664 = vmatpush1.msra.mxu0 0.0
  %8665 = vmatprep.subr.mxu0 0.0
  %8666 = vmatpush1.msra.mxu0 0.0
  %8667 = vmatprep.subr.mxu0 0.0
  %8668 = vmatpush1.msra.mxu0 0.0
  %8669 = vmatprep.subr.mxu0 0.0
  %8670 = vmatpush1.msra.mxu0 0.0
  %8671 = vmatprep.subr.mxu0 0.0
  %8672 = vmatpush1.msra.mxu0 0.0
  %8673 = vmatprep.subr.mxu0 0.0
  %8674 = vmatpush1.msra.mxu0 0.0
  %8675 = vmatprep.subr.mxu0 0.0
  %8676 = vmatpush1.msra.mxu0 0.0
  %8677 = vmatprep.subr.mxu0 0.0
  %8678 = vmatpush1.msra.mxu0 0.0
  %8679 = vmatprep.subr.mxu0 0.0
  %8680 = vmatpush1.msra.mxu0 0.0
  %8681 = vmatprep.subr.mxu0 0.0
  %8682 = vmatpush1.msra.mxu0 0.0
  %8683 = vmatprep.subr.mxu0 0.0
  %8684 = vmatpush1.msra.mxu0 0.0
  %8685 = vmatprep.subr.mxu0 0.0
  %8686 = vmatpush1.msra.mxu0 0.0
  %8687 = vmatprep.subr.mxu0 0.0
  %8688 = vmatpush1.msra.mxu0 0.0
  %8689 = vmatprep.subr.mxu0 0.0
  %8690 = vmatpush1.msra.mxu0 0.0
  %8691 = vmatprep.subr.mxu0 0.0
  %8692 = vmatpush1.msra.mxu0 0.0
  %8693 = vmatprep.subr.mxu0 0.0
  %8694 = vmatpush1.msra.mxu0 0.0
  %8695 = vmatprep.subr.mxu0 0.0
  %8696 = vmatpush1.msra.mxu0 0.0
  %8697 = vmatprep.subr.mxu0 0.0
  %8698 = vmatpush1.msra.mxu0 0.0
  %8699 = vmatprep.mubr.f32.mxu0 0.0
  %v8700 = vand.u32 %v8318, 4294901760
  %8701 = vmatmul.mubr.f32.gmra.mrb[0].mxu0 %v8700
  %v8702 = vpop.f32.mrb[0].mxu0
  %v8703 = vadd.f32 %v8626, %v8702
  %v8704 = vpop.f32.mrb[0].mxu0
  %8705 = vdwg.mxu0
  %8706 = vmatprep.subr.mxu0 0.0
  %v8707 = vand.u32 %v14, 4294901760
  %8708 = vmatpush1.msra.mxu0 %v8707
  %8709 = vmatprep.subr.mxu0 0.0
  %v8710 = vand.u32 %v15, 4294901760
  %8711 = vmatpush1.msra.mxu0 %v8710
  %8712 = vmatprep.subr.mxu0 0.0
  %8713 = vmatpush1.msra.mxu0 0.0
  %8714 = vmatprep.subr.mxu0 0.0
  %8715 = vmatpush1.msra.mxu0 0.0
  %8716 = vmatprep.subr.mxu0 0.0
  %8717 = vmatpush1.msra.mxu0 0.0
  %8718 = vmatprep.subr.mxu0 0.0
  %8719 = vmatpush1.msra.mxu0 0.0
  %8720 = vmatprep.subr.mxu0 0.0
  %8721 = vmatpush1.msra.mxu0 0.0
  %8722 = vmatprep.subr.mxu0 0.0
  %8723 = vmatpush1.msra.mxu0 0.0
  %8724 = vmatprep.subr.mxu0 0.0
  %8725 = vmatpush1.msra.mxu0 0.0
  %8726 = vmatprep.subr.mxu0 0.0
  %8727 = vmatpush1.msra.mxu0 0.0
  %8728 = vmatprep.subr.mxu0 0.0
  %8729 = vmatpush1.msra.mxu0 0.0
  %8730 = vmatprep.subr.mxu0 0.0
  %8731 = vmatpush1.msra.mxu0 0.0
  %8732 = vmatprep.subr.mxu0 0.0
  %8733 = vmatpush1.msra.mxu0 0.0
  %8734 = vmatprep.subr.mxu0 0.0
  %8735 = vmatpush1.msra.mxu0 0.0
  %8736 = vmatprep.subr.mxu0 0.0
  %8737 = vmatpush1.msra.mxu0 0.0
  %8738 = vmatprep.subr.mxu0 0.0
  %8739 = vmatpush1.msra.mxu0 0.0
  %8740 = vmatprep.subr.mxu0 0.0
  %8741 = vmatpush1.msra.mxu0 0.0
  %8742 = vmatprep.subr.mxu0 0.0
  %8743 = vmatpush1.msra.mxu0 0.0
  %8744 = vmatprep.subr.mxu0 0.0
  %8745 = vmatpush1.msra.mxu0 0.0
  %8746 = vmatprep.subr.mxu0 0.0
  %8747 = vmatpush1.msra.mxu0 0.0
  %8748 = vmatprep.subr.mxu0 0.0
  %8749 = vmatpush1.msra.mxu0 0.0
  %8750 = vmatprep.subr.mxu0 0.0
  %8751 = vmatpush1.msra.mxu0 0.0
  %8752 = vmatprep.subr.mxu0 0.0
  %8753 = vmatpush1.msra.mxu0 0.0
  %8754 = vmatprep.subr.mxu0 0.0
  %8755 = vmatpush1.msra.mxu0 0.0
  %8756 = vmatprep.subr.mxu0 0.0
  %8757 = vmatpush1.msra.mxu0 0.0
  %8758 = vmatprep.subr.mxu0 0.0
  %8759 = vmatpush1.msra.mxu0 0.0
  %8760 = vmatprep.subr.mxu0 0.0
  %8761 = vmatpush1.msra.mxu0 0.0
  %8762 = vmatprep.subr.mxu0 0.0
  %8763 = vmatpush1.msra.mxu0 0.0
  %8764 = vmatprep.subr.mxu0 0.0
  %8765 = vmatpush1.msra.mxu0 0.0
  %8766 = vmatprep.subr.mxu0 0.0
  %8767 = vmatpush1.msra.mxu0 0.0
  %8768 = vmatprep.subr.mxu0 0.0
  %8769 = vmatpush1.msra.mxu0 0.0
  %8770 = vmatprep.subr.mxu0 0.0
  %8771 = vmatpush1.msra.mxu0 0.0
  %8772 = vmatprep.mubr.f32.mxu0 0.0
  %v8773 = vand.u32 %v8318, 4294901760
  %8774 = vmatmul.mubr.f32.gmra.mrb[0].mxu0 %v8773
  %v8775 = vpop.f32.mrb[0].mxu0
  %v8776 = vadd.f32 %v8703, %v8775
  %v8777 = vpop.f32.mrb[0].mxu0
  %8778 = vdwg.mxu0
  %v8779 = vmul.f32 %v8776, 0.0625
  %v8781 = vcombine.high %v8779, %v8779
  %v8783 = vunpack.c.l.s4 1966171168
  %v8784 = vunpack.c.0.s8 %v8783
  %v8785 = vlaneseq
  %v8786 = vshrl.u32 %v8785, 7
  %v8787 = vsub.s32 %v8784, %v8786
  %v8788 = vrot.slane %v8779, %v8787
  %v8790 = vunpack.c.l.s4 1966171168
  %v8791 = vunpack.c.0.s8 %v8790
  %v8792 = vlaneseq
  %v8793 = vshrl.u32 %v8792, 7
  %v8794 = vsub.s32 %v8791, %v8793
  %v8795 = vrot.slane %v8781, %v8794
  %v8796 = vcombine.high %v8788, %v8788
  %v8797 = vcombine.high %v8795, %v8795
  %v8799 = vunpack.c.l.s4 1966171168
  %v8800 = vunpack.c.0.s8 %v8799
  %v8801 = vlaneseq
  %v8802 = vshrl.u32 %v8801, 7
  %v8803 = vsub.s32 %v8800, %v8802
  %v8804 = vrot.slane %v8788, %v8803
  %v8806 = vunpack.c.l.s4 1966171168
  %v8807 = vunpack.c.0.s8 %v8806
  %v8808 = vlaneseq
  %v8809 = vshrl.u32 %v8808, 7
  %v8810 = vsub.s32 %v8807, %v8809
  %v8811 = vrot.slane %v8795, %v8810
  %v8813 = vunpack.c.l.s4 1966171168
  %v8814 = vunpack.c.0.s8 %v8813
  %v8815 = vlaneseq
  %v8816 = vshrl.u32 %v8815, 7
  %v8817 = vsub.s32 %v8814, %v8816
  %v8818 = vrot.slane %v8796, %v8817
  %v8820 = vunpack.c.l.s4 1966171168
  %v8821 = vunpack.c.0.s8 %v8820
  %v8822 = vlaneseq
  %v8823 = vshrl.u32 %v8822, 7
  %v8824 = vsub.s32 %v8821, %v8823
  %v8825 = vrot.slane %v8797, %v8824
  %v8826 = vcombine.high %v8804, %v8804
  %v8827 = vcombine.high %v8811, %v8811
  %v8828 = vcombine.high %v8818, %v8818
  %v8829 = vcombine.high %v8825, %v8825
  %8838 = vst.msk [vmem:[%s3 + $0x4] sm:$0x1] %vm4833, %v8804
  %8839 = vst.msk [vmem:[%s3 + $0xc] sm:$0x1] %vm4833, %v8818
  %8840 = vst.msk [vmem:[%s3 + $0x14] sm:$0x1] %vm4833, %v8826
  %8841 = vst.msk [vmem:[%s3 + $0x1c] sm:$0x1] %vm4833, %v8828
  %8842 = vst.msk [vmem:[%s3 + $0x24] sm:$0x1] %vm4833, %v8811
  %8843 = vst.msk [vmem:[%s3 + $0x2c] sm:$0x1] %vm4833, %v8825
  %8844 = vst.msk [vmem:[%s3 + $0x34] sm:$0x1] %vm4833, %v8827
  %8845 = vst.msk [vmem:[%s3 + $0x3c] sm:$0x1] %vm4833, %v8829
  %v8846 = vld [vmem:[%s2423] sm:$0xff]
  %v8847 = vld [vmem:[%s2884] sm:$0xff]
  %v8848 = vld [vmem:[%s3377] sm:$0xff]
  %v8849 = vld [vmem:[%s3838] sm:$0xff]
  %v8850 = vmul.f32 %v8846, %v8848
  %v8851 = vmul.f32 %v8847, %v8849
  %v8852 = vsub.f32 %v8850, %v8851
  %v8853 = vmul.f32 %v8846, %v8849
  %v8854 = vmul.f32 %v8847, %v8848
  %v8855 = vadd.f32 %v8853, %v8854
  %v8857 = vsel %vm55, %v8855, 0
  %8859 = vmatprep.subr.mxu0 0.0
  %v8860 = vand.u32 %v16, 4294901760
  %8861 = vmatpush1.msra.mxu0 %v8860
  %8862 = vmatprep.subr.mxu0 0.0
  %v8863 = vand.u32 %v17, 4294901760
  %8864 = vmatpush1.msra.mxu0 %v8863
  %8865 = vmatprep.subr.mxu0 0.0
  %8866 = vmatpush1.msra.mxu0 0.0
  %8867 = vmatprep.subr.mxu0 0.0
  %8868 = vmatpush1.msra.mxu0 0.0
  %8869 = vmatprep.subr.mxu0 0.0
  %8870 = vmatpush1.msra.mxu0 0.0
  %8871 = vmatprep.subr.mxu0 0.0
  %8872 = vmatpush1.msra.mxu0 0.0
  %8873 = vmatprep.subr.mxu0 0.0
  %8874 = vmatpush1.msra.mxu0 0.0
  %8875 = vmatprep.subr.mxu0 0.0
  %8876 = vmatpush1.msra.mxu0 0.0
  %8877 = vmatprep.subr.mxu0 0.0
  %8878 = vmatpush1.msra.mxu0 0.0
  %8879 = vmatprep.subr.mxu0 0.0
  %8880 = vmatpush1.msra.mxu0 0.0
  %8881 = vmatprep.subr.mxu0 0.0
  %8882 = vmatpush1.msra.mxu0 0.0
  %8883 = vmatprep.subr.mxu0 0.0
  %8884 = vmatpush1.msra.mxu0 0.0
  %8885 = vmatprep.subr.mxu0 0.0
  %8886 = vmatpush1.msra.mxu0 0.0
  %8887 = vmatprep.subr.mxu0 0.0
  %8888 = vmatpush1.msra.mxu0 0.0
  %8889 = vmatprep.subr.mxu0 0.0
  %8890 = vmatpush1.msra.mxu0 0.0
  %8891 = vmatprep.subr.mxu0 0.0
  %8892 = vmatpush1.msra.mxu0 0.0
  %8893 = vmatprep.subr.mxu0 0.0
  %8894 = vmatpush1.msra.mxu0 0.0
  %8895 = vmatprep.subr.mxu0 0.0
  %8896 = vmatpush1.msra.mxu0 0.0
  %8897 = vmatprep.subr.mxu0 0.0
  %8898 = vmatpush1.msra.mxu0 0.0
  %8899 = vmatprep.subr.mxu0 0.0
  %8900 = vmatpush1.msra.mxu0 0.0
  %8901 = vmatprep.subr.mxu0 0.0
  %8902 = vmatpush1.msra.mxu0 0.0
  %8903 = vmatprep.subr.mxu0 0.0
  %8904 = vmatpush1.msra.mxu0 0.0
  %8905 = vmatprep.subr.mxu0 0.0
  %8906 = vmatpush1.msra.mxu0 0.0
  %8907 = vmatprep.subr.mxu0 0.0
  %8908 = vmatpush1.msra.mxu0 0.0
  %8909 = vmatprep.subr.mxu0 0.0
  %8910 = vmatpush1.msra.mxu0 0.0
  %8911 = vmatprep.subr.mxu0 0.0
  %8912 = vmatpush1.msra.mxu0 0.0
  %8913 = vmatprep.subr.mxu0 0.0
  %8914 = vmatpush1.msra.mxu0 0.0
  %8915 = vmatprep.subr.mxu0 0.0
  %8916 = vmatpush1.msra.mxu0 0.0
  %8917 = vmatprep.subr.mxu0 0.0
  %8918 = vmatpush1.msra.mxu0 0.0
  %8919 = vmatprep.subr.mxu0 0.0
  %8920 = vmatpush1.msra.mxu0 0.0
  %8921 = vmatprep.subr.mxu0 0.0
  %8922 = vmatpush1.msra.mxu0 0.0
  %8923 = vmatprep.subr.mxu0 0.0
  %8924 = vmatpush1.msra.mxu0 0.0
  %8925 = vmatprep.mubr.f32.mxu0 0.0
  %v8926 = vand.u32 %v8857, 4294901760
  %v8927 = vsub.f32 %v8857, %v8926
  %v8928 = vand.u32 %v8927, 4294901760
  %v8929 = vsub.f32 %v8927, %v8928
  %v8930 = vand.u32 %v8929, 4294901760
  %8931 = vmatmul.mubr.f32.gmra.mrb[0].mxu0 %v8930
  %v8932 = vpop.f32.mrb[0].mxu0
  %v8933 = vadd.f32 0.0, %v8932
  %v8934 = vpop.f32.mrb[0].mxu0
  %8935 = vdwg.mxu0
  %8936 = vmatprep.subr.mxu0 0.0
  %v8937 = vand.u32 %v16, 4294901760
  %v8938 = vsub.f32 %v16, %v8937
  %v8939 = vand.u32 %v8938, 4294901760
  %v8940 = vsub.f32 %v8938, %v8939
  %v8941 = vand.u32 %v8940, 4294901760
  %8942 = vmatpush1.msra.mxu0 %v8941
  %8943 = vmatprep.subr.mxu0 0.0
  %v8944 = vand.u32 %v17, 4294901760
  %v8945 = vsub.f32 %v17, %v8944
  %v8946 = vand.u32 %v8945, 4294901760
  %v8947 = vsub.f32 %v8945, %v8946
  %v8948 = vand.u32 %v8947, 4294901760
  %8949 = vmatpush1.msra.mxu0 %v8948
  %8950 = vmatprep.subr.mxu0 0.0
  %8951 = vmatpush1.msra.mxu0 0.0
  %8952 = vmatprep.subr.mxu0 0.0
  %8953 = vmatpush1.msra.mxu0 0.0
  %8954 = vmatprep.subr.mxu0 0.0
  %8955 = vmatpush1.msra.mxu0 0.0
  %8956 = vmatprep.subr.mxu0 0.0
  %8957 = vmatpush1.msra.mxu0 0.0
  %8958 = vmatprep.subr.mxu0 0.0
  %8959 = vmatpush1.msra.mxu0 0.0
  %8960 = vmatprep.subr.mxu0 0.0
  %8961 = vmatpush1.msra.mxu0 0.0
  %8962 = vmatprep.subr.mxu0 0.0
  %8963 = vmatpush1.msra.mxu0 0.0
  %8964 = vmatprep.subr.mxu0 0.0
  %8965 = vmatpush1.msra.mxu0 0.0
  %8966 = vmatprep.subr.mxu0 0.0
  %8967 = vmatpush1.msra.mxu0 0.0
  %8968 = vmatprep.subr.mxu0 0.0
  %8969 = vmatpush1.msra.mxu0 0.0
  %8970 = vmatprep.subr.mxu0 0.0
  %8971 = vmatpush1.msra.mxu0 0.0
  %8972 = vmatprep.subr.mxu0 0.0
  %8973 = vmatpush1.msra.mxu0 0.0
  %8974 = vmatprep.subr.mxu0 0.0
  %8975 = vmatpush1.msra.mxu0 0.0
  %8976 = vmatprep.subr.mxu0 0.0
  %8977 = vmatpush1.msra.mxu0 0.0
  %8978 = vmatprep.subr.mxu0 0.0
  %8979 = vmatpush1.msra.mxu0 0.0
  %8980 = vmatprep.subr.mxu0 0.0
  %8981 = vmatpush1.msra.mxu0 0.0
  %8982 = vmatprep.subr.mxu0 0.0
  %8983 = vmatpush1.msra.mxu0 0.0
  %8984 = vmatprep.subr.mxu0 0.0
  %8985 = vmatpush1.msra.mxu0 0.0
  %8986 = vmatprep.subr.mxu0 0.0
  %8987 = vmatpush1.msra.mxu0 0.0
  %8988 = vmatprep.subr.mxu0 0.0
  %8989 = vmatpush1.msra.mxu0 0.0
  %8990 = vmatprep.subr.mxu0 0.0
  %8991 = vmatpush1.msra.mxu0 0.0
  %8992 = vmatprep.subr.mxu0 0.0
  %8993 = vmatpush1.msra.mxu0 0.0
  %8994 = vmatprep.subr.mxu0 0.0
  %8995 = vmatpush1.msra.mxu0 0.0
  %8996 = vmatprep.subr.mxu0 0.0
  %8997 = vmatpush1.msra.mxu0 0.0
  %8998 = vmatprep.subr.mxu0 0.0
  %8999 = vmatpush1.msra.mxu0 0.0
  %9000 = vmatprep.subr.mxu0 0.0
  %9001 = vmatpush1.msra.mxu0 0.0
  %9002 = vmatprep.subr.mxu0 0.0
  %9003 = vmatpush1.msra.mxu0 0.0
  %9004 = vmatprep.subr.mxu0 0.0
  %9005 = vmatpush1.msra.mxu0 0.0
  %9006 = vmatprep.subr.mxu0 0.0
  %9007 = vmatpush1.msra.mxu0 0.0
  %9008 = vmatprep.subr.mxu0 0.0
  %9009 = vmatpush1.msra.mxu0 0.0
  %9010 = vmatprep.mubr.f32.mxu0 0.0
  %v9011 = vand.u32 %v8857, 4294901760
  %9012 = vmatmul.mubr.f32.gmra.mrb[0].mxu0 %v9011
  %v9013 = vpop.f32.mrb[0].mxu0
  %v9014 = vadd.f32 %v8933, %v9013
  %v9015 = vpop.f32.mrb[0].mxu0
  %9016 = vdwg.mxu0
  %9017 = vmatprep.subr.mxu0 0.0
  %v9018 = vand.u32 %v16, 4294901760
  %v9019 = vsub.f32 %v16, %v9018
  %9020 = vmatpush1.msra.mxu0 %v9019
  %9021 = vmatprep.subr.mxu0 0.0
  %v9022 = vand.u32 %v17, 4294901760
  %v9023 = vsub.f32 %v17, %v9022
  %9024 = vmatpush1.msra.mxu0 %v9023
  %9025 = vmatprep.subr.mxu0 0.0
  %9026 = vmatpush1.msra.mxu0 0.0
  %9027 = vmatprep.subr.mxu0 0.0
  %9028 = vmatpush1.msra.mxu0 0.0
  %9029 = vmatprep.subr.mxu0 0.0
  %9030 = vmatpush1.msra.mxu0 0.0
  %9031 = vmatprep.subr.mxu0 0.0
  %9032 = vmatpush1.msra.mxu0 0.0
  %9033 = vmatprep.subr.mxu0 0.0
  %9034 = vmatpush1.msra.mxu0 0.0
  %9035 = vmatprep.subr.mxu0 0.0
  %9036 = vmatpush1.msra.mxu0 0.0
  %9037 = vmatprep.subr.mxu0 0.0
  %9038 = vmatpush1.msra.mxu0 0.0
  %9039 = vmatprep.subr.mxu0 0.0
  %9040 = vmatpush1.msra.mxu0 0.0
  %9041 = vmatprep.subr.mxu0 0.0
  %9042 = vmatpush1.msra.mxu0 0.0
  %9043 = vmatprep.subr.mxu0 0.0
  %9044 = vmatpush1.msra.mxu0 0.0
  %9045 = vmatprep.subr.mxu0 0.0
  %9046 = vmatpush1.msra.mxu0 0.0
  %9047 = vmatprep.subr.mxu0 0.0
  %9048 = vmatpush1.msra.mxu0 0.0
  %9049 = vmatprep.subr.mxu0 0.0
  %9050 = vmatpush1.msra.mxu0 0.0
  %9051 = vmatprep.subr.mxu0 0.0
  %9052 = vmatpush1.msra.mxu0 0.0
  %9053 = vmatprep.subr.mxu0 0.0
  %9054 = vmatpush1.msra.mxu0 0.0
  %9055 = vmatprep.subr.mxu0 0.0
  %9056 = vmatpush1.msra.mxu0 0.0
  %9057 = vmatprep.subr.mxu0 0.0
  %9058 = vmatpush1.msra.mxu0 0.0
  %9059 = vmatprep.subr.mxu0 0.0
  %9060 = vmatpush1.msra.mxu0 0.0
  %9061 = vmatprep.subr.mxu0 0.0
  %9062 = vmatpush1.msra.mxu0 0.0
  %9063 = vmatprep.subr.mxu0 0.0
  %9064 = vmatpush1.msra.mxu0 0.0
  %9065 = vmatprep.subr.mxu0 0.0
  %9066 = vmatpush1.msra.mxu0 0.0
  %9067 = vmatprep.subr.mxu0 0.0
  %9068 = vmatpush1.msra.mxu0 0.0
  %9069 = vmatprep.subr.mxu0 0.0
  %9070 = vmatpush1.msra.mxu0 0.0
  %9071 = vmatprep.subr.mxu0 0.0
  %9072 = vmatpush1.msra.mxu0 0.0
  %9073 = vmatprep.subr.mxu0 0.0
  %9074 = vmatpush1.msra.mxu0 0.0
  %9075 = vmatprep.subr.mxu0 0.0
  %9076 = vmatpush1.msra.mxu0 0.0
  %9077 = vmatprep.subr.mxu0 0.0
  %9078 = vmatpush1.msra.mxu0 0.0
  %9079 = vmatprep.subr.mxu0 0.0
  %9080 = vmatpush1.msra.mxu0 0.0
  %9081 = vmatprep.subr.mxu0 0.0
  %9082 = vmatpush1.msra.mxu0 0.0
  %9083 = vmatprep.subr.mxu0 0.0
  %9084 = vmatpush1.msra.mxu0 0.0
  %9085 = vmatprep.mubr.f32.mxu0 0.0
  %v9086 = vand.u32 %v8857, 4294901760
  %v9087 = vsub.f32 %v8857, %v9086
  %9088 = vmatmul.mubr.f32.gmra.mrb[0].mxu0 %v9087
  %v9089 = vpop.f32.mrb[0].mxu0
  %v9090 = vadd.f32 %v9014, %v9089
  %v9091 = vpop.f32.mrb[0].mxu0
  %9092 = vdwg.mxu0
  %9093 = vmatprep.subr.mxu0 0.0
  %v9094 = vand.u32 %v16, 4294901760
  %9095 = vmatpush1.msra.mxu0 %v9094
  %9096 = vmatprep.subr.mxu0 0.0
  %v9097 = vand.u32 %v17, 4294901760
  %9098 = vmatpush1.msra.mxu0 %v9097
  %9099 = vmatprep.subr.mxu0 0.0
  %9100 = vmatpush1.msra.mxu0 0.0
  %9101 = vmatprep.subr.mxu0 0.0
  %9102 = vmatpush1.msra.mxu0 0.0
  %9103 = vmatprep.subr.mxu0 0.0
  %9104 = vmatpush1.msra.mxu0 0.0
  %9105 = vmatprep.subr.mxu0 0.0
  %9106 = vmatpush1.msra.mxu0 0.0
  %9107 = vmatprep.subr.mxu0 0.0
  %9108 = vmatpush1.msra.mxu0 0.0
  %9109 = vmatprep.subr.mxu0 0.0
  %9110 = vmatpush1.msra.mxu0 0.0
  %9111 = vmatprep.subr.mxu0 0.0
  %9112 = vmatpush1.msra.mxu0 0.0
  %9113 = vmatprep.subr.mxu0 0.0
  %9114 = vmatpush1.msra.mxu0 0.0
  %9115 = vmatprep.subr.mxu0 0.0
  %9116 = vmatpush1.msra.mxu0 0.0
  %9117 = vmatprep.subr.mxu0 0.0
  %9118 = vmatpush1.msra.mxu0 0.0
  %9119 = vmatprep.subr.mxu0 0.0
  %9120 = vmatpush1.msra.mxu0 0.0
  %9121 = vmatprep.subr.mxu0 0.0
  %9122 = vmatpush1.msra.mxu0 0.0
  %9123 = vmatprep.subr.mxu0 0.0
  %9124 = vmatpush1.msra.mxu0 0.0
  %9125 = vmatprep.subr.mxu0 0.0
  %9126 = vmatpush1.msra.mxu0 0.0
  %9127 = vmatprep.subr.mxu0 0.0
  %9128 = vmatpush1.msra.mxu0 0.0
  %9129 = vmatprep.subr.mxu0 0.0
  %9130 = vmatpush1.msra.mxu0 0.0
  %9131 = vmatprep.subr.mxu0 0.0
  %9132 = vmatpush1.msra.mxu0 0.0
  %9133 = vmatprep.subr.mxu0 0.0
  %9134 = vmatpush1.msra.mxu0 0.0
  %9135 = vmatprep.subr.mxu0 0.0
  %9136 = vmatpush1.msra.mxu0 0.0
  %9137 = vmatprep.subr.mxu0 0.0
  %9138 = vmatpush1.msra.mxu0 0.0
  %9139 = vmatprep.subr.mxu0 0.0
  %9140 = vmatpush1.msra.mxu0 0.0
  %9141 = vmatprep.subr.mxu0 0.0
  %9142 = vmatpush1.msra.mxu0 0.0
  %9143 = vmatprep.subr.mxu0 0.0
  %9144 = vmatpush1.msra.mxu0 0.0
  %9145 = vmatprep.subr.mxu0 0.0
  %9146 = vmatpush1.msra.mxu0 0.0
  %9147 = vmatprep.subr.mxu0 0.0
  %9148 = vmatpush1.msra.mxu0 0.0
  %9149 = vmatprep.subr.mxu0 0.0
  %9150 = vmatpush1.msra.mxu0 0.0
  %9151 = vmatprep.subr.mxu0 0.0
  %9152 = vmatpush1.msra.mxu0 0.0
  %9153 = vmatprep.subr.mxu0 0.0
  %9154 = vmatpush1.msra.mxu0 0.0
  %9155 = vmatprep.subr.mxu0 0.0
  %9156 = vmatpush1.msra.mxu0 0.0
  %9157 = vmatprep.subr.mxu0 0.0
  %9158 = vmatpush1.msra.mxu0 0.0
  %9159 = vmatprep.mubr.f32.mxu0 0.0
  %v9160 = vand.u32 %v8857, 4294901760
  %v9161 = vsub.f32 %v8857, %v9160
  %v9162 = vand.u32 %v9161, 4294901760
  %9163 = vmatmul.mubr.f32.gmra.mrb[0].mxu0 %v9162
  %v9164 = vpop.f32.mrb[0].mxu0
  %v9165 = vadd.f32 %v9090, %v9164
  %v9166 = vpop.f32.mrb[0].mxu0
  %9167 = vdwg.mxu0
  %9168 = vmatprep.subr.mxu0 0.0
  %v9169 = vand.u32 %v16, 4294901760
  %v9170 = vsub.f32 %v16, %v9169
  %v9171 = vand.u32 %v9170, 4294901760
  %9172 = vmatpush1.msra.mxu0 %v9171
  %9173 = vmatprep.subr.mxu0 0.0
  %v9174 = vand.u32 %v17, 4294901760
  %v9175 = vsub.f32 %v17, %v9174
  %v9176 = vand.u32 %v9175, 4294901760
  %9177 = vmatpush1.msra.mxu0 %v9176
  %9178 = vmatprep.subr.mxu0 0.0
  %9179 = vmatpush1.msra.mxu0 0.0
  %9180 = vmatprep.subr.mxu0 0.0
  %9181 = vmatpush1.msra.mxu0 0.0
  %9182 = vmatprep.subr.mxu0 0.0
  %9183 = vmatpush1.msra.mxu0 0.0
  %9184 = vmatprep.subr.mxu0 0.0
  %9185 = vmatpush1.msra.mxu0 0.0
  %9186 = vmatprep.subr.mxu0 0.0
  %9187 = vmatpush1.msra.mxu0 0.0
  %9188 = vmatprep.subr.mxu0 0.0
  %9189 = vmatpush1.msra.mxu0 0.0
  %9190 = vmatprep.subr.mxu0 0.0
  %9191 = vmatpush1.msra.mxu0 0.0
  %9192 = vmatprep.subr.mxu0 0.0
  %9193 = vmatpush1.msra.mxu0 0.0
  %9194 = vmatprep.subr.mxu0 0.0
  %9195 = vmatpush1.msra.mxu0 0.0
  %9196 = vmatprep.subr.mxu0 0.0
  %9197 = vmatpush1.msra.mxu0 0.0
  %9198 = vmatprep.subr.mxu0 0.0
  %9199 = vmatpush1.msra.mxu0 0.0
  %9200 = vmatprep.subr.mxu0 0.0
  %9201 = vmatpush1.msra.mxu0 0.0
  %9202 = vmatprep.subr.mxu0 0.0
  %9203 = vmatpush1.msra.mxu0 0.0
  %9204 = vmatprep.subr.mxu0 0.0
  %9205 = vmatpush1.msra.mxu0 0.0
  %9206 = vmatprep.subr.mxu0 0.0
  %9207 = vmatpush1.msra.mxu0 0.0
  %9208 = vmatprep.subr.mxu0 0.0
  %9209 = vmatpush1.msra.mxu0 0.0
  %9210 = vmatprep.subr.mxu0 0.0
  %9211 = vmatpush1.msra.mxu0 0.0
  %9212 = vmatprep.subr.mxu0 0.0
  %9213 = vmatpush1.msra.mxu0 0.0
  %9214 = vmatprep.subr.mxu0 0.0
  %9215 = vmatpush1.msra.mxu0 0.0
  %9216 = vmatprep.subr.mxu0 0.0
  %9217 = vmatpush1.msra.mxu0 0.0
  %9218 = vmatprep.subr.mxu0 0.0
  %9219 = vmatpush1.msra.mxu0 0.0
  %9220 = vmatprep.subr.mxu0 0.0
  %9221 = vmatpush1.msra.mxu0 0.0
  %9222 = vmatprep.subr.mxu0 0.0
  %9223 = vmatpush1.msra.mxu0 0.0
  %9224 = vmatprep.subr.mxu0 0.0
  %9225 = vmatpush1.msra.mxu0 0.0
  %9226 = vmatprep.subr.mxu0 0.0
  %9227 = vmatpush1.msra.mxu0 0.0
  %9228 = vmatprep.subr.mxu0 0.0
  %9229 = vmatpush1.msra.mxu0 0.0
  %9230 = vmatprep.subr.mxu0 0.0
  %9231 = vmatpush1.msra.mxu0 0.0
  %9232 = vmatprep.subr.mxu0 0.0
  %9233 = vmatpush1.msra.mxu0 0.0
  %9234 = vmatprep.subr.mxu0 0.0
  %9235 = vmatpush1.msra.mxu0 0.0
  %9236 = vmatprep.subr.mxu0 0.0
  %9237 = vmatpush1.msra.mxu0 0.0
  %9238 = vmatprep.mubr.f32.mxu0 0.0
  %v9239 = vand.u32 %v8857, 4294901760
  %9240 = vmatmul.mubr.f32.gmra.mrb[0].mxu0 %v9239
  %v9241 = vpop.f32.mrb[0].mxu0
  %v9242 = vadd.f32 %v9165, %v9241
  %v9243 = vpop.f32.mrb[0].mxu0
  %9244 = vdwg.mxu0
  %9245 = vmatprep.subr.mxu0 0.0
  %v9246 = vand.u32 %v16, 4294901760
  %9247 = vmatpush1.msra.mxu0 %v9246
  %9248 = vmatprep.subr.mxu0 0.0
  %v9249 = vand.u32 %v17, 4294901760
  %9250 = vmatpush1.msra.mxu0 %v9249
  %9251 = vmatprep.subr.mxu0 0.0
  %9252 = vmatpush1.msra.mxu0 0.0
  %9253 = vmatprep.subr.mxu0 0.0
  %9254 = vmatpush1.msra.mxu0 0.0
  %9255 = vmatprep.subr.mxu0 0.0
  %9256 = vmatpush1.msra.mxu0 0.0
  %9257 = vmatprep.subr.mxu0 0.0
  %9258 = vmatpush1.msra.mxu0 0.0
  %9259 = vmatprep.subr.mxu0 0.0
  %9260 = vmatpush1.msra.mxu0 0.0
  %9261 = vmatprep.subr.mxu0 0.0
  %9262 = vmatpush1.msra.mxu0 0.0
  %9263 = vmatprep.subr.mxu0 0.0
  %9264 = vmatpush1.msra.mxu0 0.0
  %9265 = vmatprep.subr.mxu0 0.0
  %9266 = vmatpush1.msra.mxu0 0.0
  %9267 = vmatprep.subr.mxu0 0.0
  %9268 = vmatpush1.msra.mxu0 0.0
  %9269 = vmatprep.subr.mxu0 0.0
  %9270 = vmatpush1.msra.mxu0 0.0
  %9271 = vmatprep.subr.mxu0 0.0
  %9272 = vmatpush1.msra.mxu0 0.0
  %9273 = vmatprep.subr.mxu0 0.0
  %9274 = vmatpush1.msra.mxu0 0.0
  %9275 = vmatprep.subr.mxu0 0.0
  %9276 = vmatpush1.msra.mxu0 0.0
  %9277 = vmatprep.subr.mxu0 0.0
  %9278 = vmatpush1.msra.mxu0 0.0
  %9279 = vmatprep.subr.mxu0 0.0
  %9280 = vmatpush1.msra.mxu0 0.0
  %9281 = vmatprep.subr.mxu0 0.0
  %9282 = vmatpush1.msra.mxu0 0.0
  %9283 = vmatprep.subr.mxu0 0.0
  %9284 = vmatpush1.msra.mxu0 0.0
  %9285 = vmatprep.subr.mxu0 0.0
  %9286 = vmatpush1.msra.mxu0 0.0
  %9287 = vmatprep.subr.mxu0 0.0
  %9288 = vmatpush1.msra.mxu0 0.0
  %9289 = vmatprep.subr.mxu0 0.0
  %9290 = vmatpush1.msra.mxu0 0.0
  %9291 = vmatprep.subr.mxu0 0.0
  %9292 = vmatpush1.msra.mxu0 0.0
  %9293 = vmatprep.subr.mxu0 0.0
  %9294 = vmatpush1.msra.mxu0 0.0
  %9295 = vmatprep.subr.mxu0 0.0
  %9296 = vmatpush1.msra.mxu0 0.0
  %9297 = vmatprep.subr.mxu0 0.0
  %9298 = vmatpush1.msra.mxu0 0.0
  %9299 = vmatprep.subr.mxu0 0.0
  %9300 = vmatpush1.msra.mxu0 0.0
  %9301 = vmatprep.subr.mxu0 0.0
  %9302 = vmatpush1.msra.mxu0 0.0
  %9303 = vmatprep.subr.mxu0 0.0
  %9304 = vmatpush1.msra.mxu0 0.0
  %9305 = vmatprep.subr.mxu0 0.0
  %9306 = vmatpush1.msra.mxu0 0.0
  %9307 = vmatprep.subr.mxu0 0.0
  %9308 = vmatpush1.msra.mxu0 0.0
  %9309 = vmatprep.subr.mxu0 0.0
  %9310 = vmatpush1.msra.mxu0 0.0
  %9311 = vmatprep.mubr.f32.mxu0 0.0
  %v9312 = vand.u32 %v8857, 4294901760
  %9313 = vmatmul.mubr.f32.gmra.mrb[0].mxu0 %v9312
  %v9314 = vpop.f32.mrb[0].mxu0
  %v9315 = vadd.f32 %v9242, %v9314
  %v9316 = vpop.f32.mrb[0].mxu0
  %9317 = vdwg.mxu0
  %v9319 = vsel %vm55, %v8852, 0
  %9321 = vmatprep.subr.mxu0 0.0
  %v9322 = vand.u32 %v14, 4294901760
  %9323 = vmatpush1.msra.mxu0 %v9322
  %9324 = vmatprep.subr.mxu0 0.0
  %v9325 = vand.u32 %v15, 4294901760
  %9326 = vmatpush1.msra.mxu0 %v9325
  %9327 = vmatprep.subr.mxu0 0.0
  %9328 = vmatpush1.msra.mxu0 0.0
  %9329 = vmatprep.subr.mxu0 0.0
  %9330 = vmatpush1.msra.mxu0 0.0
  %9331 = vmatprep.subr.mxu0 0.0
  %9332 = vmatpush1.msra.mxu0 0.0
  %9333 = vmatprep.subr.mxu0 0.0
  %9334 = vmatpush1.msra.mxu0 0.0
  %9335 = vmatprep.subr.mxu0 0.0
  %9336 = vmatpush1.msra.mxu0 0.0
  %9337 = vmatprep.subr.mxu0 0.0
  %9338 = vmatpush1.msra.mxu0 0.0
  %9339 = vmatprep.subr.mxu0 0.0
  %9340 = vmatpush1.msra.mxu0 0.0
  %9341 = vmatprep.subr.mxu0 0.0
  %9342 = vmatpush1.msra.mxu0 0.0
  %9343 = vmatprep.subr.mxu0 0.0
  %9344 = vmatpush1.msra.mxu0 0.0
  %9345 = vmatprep.subr.mxu0 0.0
  %9346 = vmatpush1.msra.mxu0 0.0
  %9347 = vmatprep.subr.mxu0 0.0
  %9348 = vmatpush1.msra.mxu0 0.0
  %9349 = vmatprep.subr.mxu0 0.0
  %9350 = vmatpush1.msra.mxu0 0.0
  %9351 = vmatprep.subr.mxu0 0.0
  %9352 = vmatpush1.msra.mxu0 0.0
  %9353 = vmatprep.subr.mxu0 0.0
  %9354 = vmatpush1.msra.mxu0 0.0
  %9355 = vmatprep.subr.mxu0 0.0
  %9356 = vmatpush1.msra.mxu0 0.0
  %9357 = vmatprep.subr.mxu0 0.0
  %9358 = vmatpush1.msra.mxu0 0.0
  %9359 = vmatprep.subr.mxu0 0.0
  %9360 = vmatpush1.msra.mxu0 0.0
  %9361 = vmatprep.subr.mxu0 0.0
  %9362 = vmatpush1.msra.mxu0 0.0
  %9363 = vmatprep.subr.mxu0 0.0
  %9364 = vmatpush1.msra.mxu0 0.0
  %9365 = vmatprep.subr.mxu0 0.0
  %9366 = vmatpush1.msra.mxu0 0.0
  %9367 = vmatprep.subr.mxu0 0.0
  %9368 = vmatpush1.msra.mxu0 0.0
  %9369 = vmatprep.subr.mxu0 0.0
  %9370 = vmatpush1.msra.mxu0 0.0
  %9371 = vmatprep.subr.mxu0 0.0
  %9372 = vmatpush1.msra.mxu0 0.0
  %9373 = vmatprep.subr.mxu0 0.0
  %9374 = vmatpush1.msra.mxu0 0.0
  %9375 = vmatprep.subr.mxu0 0.0
  %9376 = vmatpush1.msra.mxu0 0.0
  %9377 = vmatprep.subr.mxu0 0.0
  %9378 = vmatpush1.msra.mxu0 0.0
  %9379 = vmatprep.subr.mxu0 0.0
  %9380 = vmatpush1.msra.mxu0 0.0
  %9381 = vmatprep.subr.mxu0 0.0
  %9382 = vmatpush1.msra.mxu0 0.0
  %9383 = vmatprep.subr.mxu0 0.0
  %9384 = vmatpush1.msra.mxu0 0.0
  %9385 = vmatprep.subr.mxu0 0.0
  %9386 = vmatpush1.msra.mxu0 0.0
  %9387 = vmatprep.mubr.f32.mxu0 0.0
  %v9388 = vand.u32 %v9319, 4294901760
  %v9389 = vsub.f32 %v9319, %v9388
  %v9390 = vand.u32 %v9389, 4294901760
  %v9391 = vsub.f32 %v9389, %v9390
  %v9392 = vand.u32 %v9391, 4294901760
  %9393 = vmatmul.mubr.f32.gmra.mrb[0].mxu0 %v9392
  %v9394 = vpop.f32.mrb[0].mxu0
  %v9395 = vadd.f32 %v9315, %v9394
  %v9396 = vpop.f32.mrb[0].mxu0
  %9397 = vdwg.mxu0
  %9398 = vmatprep.subr.mxu0 0.0
  %v9399 = vand.u32 %v14, 4294901760
  %v9400 = vsub.f32 %v14, %v9399
  %v9401 = vand.u32 %v9400, 4294901760
  %v9402 = vsub.f32 %v9400, %v9401
  %v9403 = vand.u32 %v9402, 4294901760
  %9404 = vmatpush1.msra.mxu0 %v9403
  %9405 = vmatprep.subr.mxu0 0.0
  %v9406 = vand.u32 %v15, 4294901760
  %v9407 = vsub.f32 %v15, %v9406
  %v9408 = vand.u32 %v9407, 4294901760
  %v9409 = vsub.f32 %v9407, %v9408
  %v9410 = vand.u32 %v9409, 4294901760
  %9411 = vmatpush1.msra.mxu0 %v9410
  %9412 = vmatprep.subr.mxu0 0.0
  %9413 = vmatpush1.msra.mxu0 0.0
  %9414 = vmatprep.subr.mxu0 0.0
  %9415 = vmatpush1.msra.mxu0 0.0
  %9416 = vmatprep.subr.mxu0 0.0
  %9417 = vmatpush1.msra.mxu0 0.0
  %9418 = vmatprep.subr.mxu0 0.0
  %9419 = vmatpush1.msra.mxu0 0.0
  %9420 = vmatprep.subr.mxu0 0.0
  %9421 = vmatpush1.msra.mxu0 0.0
  %9422 = vmatprep.subr.mxu0 0.0
  %9423 = vmatpush1.msra.mxu0 0.0
  %9424 = vmatprep.subr.mxu0 0.0
  %9425 = vmatpush1.msra.mxu0 0.0
  %9426 = vmatprep.subr.mxu0 0.0
  %9427 = vmatpush1.msra.mxu0 0.0
  %9428 = vmatprep.subr.mxu0 0.0
  %9429 = vmatpush1.msra.mxu0 0.0
  %9430 = vmatprep.subr.mxu0 0.0
  %9431 = vmatpush1.msra.mxu0 0.0
  %9432 = vmatprep.subr.mxu0 0.0
  %9433 = vmatpush1.msra.mxu0 0.0
  %9434 = vmatprep.subr.mxu0 0.0
  %9435 = vmatpush1.msra.mxu0 0.0
  %9436 = vmatprep.subr.mxu0 0.0
  %9437 = vmatpush1.msra.mxu0 0.0
  %9438 = vmatprep.subr.mxu0 0.0
  %9439 = vmatpush1.msra.mxu0 0.0
  %9440 = vmatprep.subr.mxu0 0.0
  %9441 = vmatpush1.msra.mxu0 0.0
  %9442 = vmatprep.subr.mxu0 0.0
  %9443 = vmatpush1.msra.mxu0 0.0
  %9444 = vmatprep.subr.mxu0 0.0
  %9445 = vmatpush1.msra.mxu0 0.0
  %9446 = vmatprep.subr.mxu0 0.0
  %9447 = vmatpush1.msra.mxu0 0.0
  %9448 = vmatprep.subr.mxu0 0.0
  %9449 = vmatpush1.msra.mxu0 0.0
  %9450 = vmatprep.subr.mxu0 0.0
  %9451 = vmatpush1.msra.mxu0 0.0
  %9452 = vmatprep.subr.mxu0 0.0
  %9453 = vmatpush1.msra.mxu0 0.0
  %9454 = vmatprep.subr.mxu0 0.0
  %9455 = vmatpush1.msra.mxu0 0.0
  %9456 = vmatprep.subr.mxu0 0.0
  %9457 = vmatpush1.msra.mxu0 0.0
  %9458 = vmatprep.subr.mxu0 0.0
  %9459 = vmatpush1.msra.mxu0 0.0
  %9460 = vmatprep.subr.mxu0 0.0
  %9461 = vmatpush1.msra.mxu0 0.0
  %9462 = vmatprep.subr.mxu0 0.0
  %9463 = vmatpush1.msra.mxu0 0.0
  %9464 = vmatprep.subr.mxu0 0.0
  %9465 = vmatpush1.msra.mxu0 0.0
  %9466 = vmatprep.subr.mxu0 0.0
  %9467 = vmatpush1.msra.mxu0 0.0
  %9468 = vmatprep.subr.mxu0 0.0
  %9469 = vmatpush1.msra.mxu0 0.0
  %9470 = vmatprep.subr.mxu0 0.0
  %9471 = vmatpush1.msra.mxu0 0.0
  %9472 = vmatprep.mubr.f32.mxu0 0.0
  %v9473 = vand.u32 %v9319, 4294901760
  %9474 = vmatmul.mubr.f32.gmra.mrb[0].mxu0 %v9473
  %v9475 = vpop.f32.mrb[0].mxu0
  %v9476 = vadd.f32 %v9395, %v9475
  %v9477 = vpop.f32.mrb[0].mxu0
  %9478 = vdwg.mxu0
  %9479 = vmatprep.subr.mxu0 0.0
  %v9480 = vand.u32 %v14, 4294901760
  %v9481 = vsub.f32 %v14, %v9480
  %9482 = vmatpush1.msra.mxu0 %v9481
  %9483 = vmatprep.subr.mxu0 0.0
  %v9484 = vand.u32 %v15, 4294901760
  %v9485 = vsub.f32 %v15, %v9484
  %9486 = vmatpush1.msra.mxu0 %v9485
  %9487 = vmatprep.subr.mxu0 0.0
  %9488 = vmatpush1.msra.mxu0 0.0
  %9489 = vmatprep.subr.mxu0 0.0
  %9490 = vmatpush1.msra.mxu0 0.0
  %9491 = vmatprep.subr.mxu0 0.0
  %9492 = vmatpush1.msra.mxu0 0.0
  %9493 = vmatprep.subr.mxu0 0.0
  %9494 = vmatpush1.msra.mxu0 0.0
  %9495 = vmatprep.subr.mxu0 0.0
  %9496 = vmatpush1.msra.mxu0 0.0
  %9497 = vmatprep.subr.mxu0 0.0
  %9498 = vmatpush1.msra.mxu0 0.0
  %9499 = vmatprep.subr.mxu0 0.0
  %9500 = vmatpush1.msra.mxu0 0.0
  %9501 = vmatprep.subr.mxu0 0.0
  %9502 = vmatpush1.msra.mxu0 0.0
  %9503 = vmatprep.subr.mxu0 0.0
  %9504 = vmatpush1.msra.mxu0 0.0
  %9505 = vmatprep.subr.mxu0 0.0
  %9506 = vmatpush1.msra.mxu0 0.0
  %9507 = vmatprep.subr.mxu0 0.0
  %9508 = vmatpush1.msra.mxu0 0.0
  %9509 = vmatprep.subr.mxu0 0.0
  %9510 = vmatpush1.msra.mxu0 0.0
  %9511 = vmatprep.subr.mxu0 0.0
  %9512 = vmatpush1.msra.mxu0 0.0
  %9513 = vmatprep.subr.mxu0 0.0
  %9514 = vmatpush1.msra.mxu0 0.0
  %9515 = vmatprep.subr.mxu0 0.0
  %9516 = vmatpush1.msra.mxu0 0.0
  %9517 = vmatprep.subr.mxu0 0.0
  %9518 = vmatpush1.msra.mxu0 0.0
  %9519 = vmatprep.subr.mxu0 0.0
  %9520 = vmatpush1.msra.mxu0 0.0
  %9521 = vmatprep.subr.mxu0 0.0
  %9522 = vmatpush1.msra.mxu0 0.0
  %9523 = vmatprep.subr.mxu0 0.0
  %9524 = vmatpush1.msra.mxu0 0.0
  %9525 = vmatprep.subr.mxu0 0.0
  %9526 = vmatpush1.msra.mxu0 0.0
  %9527 = vmatprep.subr.mxu0 0.0
  %9528 = vmatpush1.msra.mxu0 0.0
  %9529 = vmatprep.subr.mxu0 0.0
  %9530 = vmatpush1.msra.mxu0 0.0
  %9531 = vmatprep.subr.mxu0 0.0
  %9532 = vmatpush1.msra.mxu0 0.0
  %9533 = vmatprep.subr.mxu0 0.0
  %9534 = vmatpush1.msra.mxu0 0.0
  %9535 = vmatprep.subr.mxu0 0.0
  %9536 = vmatpush1.msra.mxu0 0.0
  %9537 = vmatprep.subr.mxu0 0.0
  %9538 = vmatpush1.msra.mxu0 0.0
  %9539 = vmatprep.subr.mxu0 0.0
  %9540 = vmatpush1.msra.mxu0 0.0
  %9541 = vmatprep.subr.mxu0 0.0
  %9542 = vmatpush1.msra.mxu0 0.0
  %9543 = vmatprep.subr.mxu0 0.0
  %9544 = vmatpush1.msra.mxu0 0.0
  %9545 = vmatprep.subr.mxu0 0.0
  %9546 = vmatpush1.msra.mxu0 0.0
  %9547 = vmatprep.mubr.f32.mxu0 0.0
  %v9548 = vand.u32 %v9319, 4294901760
  %v9549 = vsub.f32 %v9319, %v9548
  %9550 = vmatmul.mubr.f32.gmra.mrb[0].mxu0 %v9549
  %v9551 = vpop.f32.mrb[0].mxu0
  %v9552 = vadd.f32 %v9476, %v9551
  %v9553 = vpop.f32.mrb[0].mxu0
  %9554 = vdwg.mxu0
  %9555 = vmatprep.subr.mxu0 0.0
  %v9556 = vand.u32 %v14, 4294901760
  %9557 = vmatpush1.msra.mxu0 %v9556
  %9558 = vmatprep.subr.mxu0 0.0
  %v9559 = vand.u32 %v15, 4294901760
  %9560 = vmatpush1.msra.mxu0 %v9559
  %9561 = vmatprep.subr.mxu0 0.0
  %9562 = vmatpush1.msra.mxu0 0.0
  %9563 = vmatprep.subr.mxu0 0.0
  %9564 = vmatpush1.msra.mxu0 0.0
  %9565 = vmatprep.subr.mxu0 0.0
  %9566 = vmatpush1.msra.mxu0 0.0
  %9567 = vmatprep.subr.mxu0 0.0
  %9568 = vmatpush1.msra.mxu0 0.0
  %9569 = vmatprep.subr.mxu0 0.0
  %9570 = vmatpush1.msra.mxu0 0.0
  %9571 = vmatprep.subr.mxu0 0.0
  %9572 = vmatpush1.msra.mxu0 0.0
  %9573 = vmatprep.subr.mxu0 0.0
  %9574 = vmatpush1.msra.mxu0 0.0
  %9575 = vmatprep.subr.mxu0 0.0
  %9576 = vmatpush1.msra.mxu0 0.0
  %9577 = vmatprep.subr.mxu0 0.0
  %9578 = vmatpush1.msra.mxu0 0.0
  %9579 = vmatprep.subr.mxu0 0.0
  %9580 = vmatpush1.msra.mxu0 0.0
  %9581 = vmatprep.subr.mxu0 0.0
  %9582 = vmatpush1.msra.mxu0 0.0
  %9583 = vmatprep.subr.mxu0 0.0
  %9584 = vmatpush1.msra.mxu0 0.0
  %9585 = vmatprep.subr.mxu0 0.0
  %9586 = vmatpush1.msra.mxu0 0.0
  %9587 = vmatprep.subr.mxu0 0.0
  %9588 = vmatpush1.msra.mxu0 0.0
  %9589 = vmatprep.subr.mxu0 0.0
  %9590 = vmatpush1.msra.mxu0 0.0
  %9591 = vmatprep.subr.mxu0 0.0
  %9592 = vmatpush1.msra.mxu0 0.0
  %9593 = vmatprep.subr.mxu0 0.0
  %9594 = vmatpush1.msra.mxu0 0.0
  %9595 = vmatprep.subr.mxu0 0.0
  %9596 = vmatpush1.msra.mxu0 0.0
  %9597 = vmatprep.subr.mxu0 0.0
  %9598 = vmatpush1.msra.mxu0 0.0
  %9599 = vmatprep.subr.mxu0 0.0
  %9600 = vmatpush1.msra.mxu0 0.0
  %9601 = vmatprep.subr.mxu0 0.0
  %9602 = vmatpush1.msra.mxu0 0.0
  %9603 = vmatprep.subr.mxu0 0.0
  %9604 = vmatpush1.msra.mxu0 0.0
  %9605 = vmatprep.subr.mxu0 0.0
  %9606 = vmatpush1.msra.mxu0 0.0
  %9607 = vmatprep.subr.mxu0 0.0
  %9608 = vmatpush1.msra.mxu0 0.0
  %9609 = vmatprep.subr.mxu0 0.0
  %9610 = vmatpush1.msra.mxu0 0.0
  %9611 = vmatprep.subr.mxu0 0.0
  %9612 = vmatpush1.msra.mxu0 0.0
  %9613 = vmatprep.subr.mxu0 0.0
  %9614 = vmatpush1.msra.mxu0 0.0
  %9615 = vmatprep.subr.mxu0 0.0
  %9616 = vmatpush1.msra.mxu0 0.0
  %9617 = vmatprep.subr.mxu0 0.0
  %9618 = vmatpush1.msra.mxu0 0.0
  %9619 = vmatprep.subr.mxu0 0.0
  %9620 = vmatpush1.msra.mxu0 0.0
  %9621 = vmatprep.mubr.f32.mxu0 0.0
  %v9622 = vand.u32 %v9319, 4294901760
  %v9623 = vsub.f32 %v9319, %v9622
  %v9624 = vand.u32 %v9623, 4294901760
  %9625 = vmatmul.mubr.f32.gmra.mrb[0].mxu0 %v9624
  %v9626 = vpop.f32.mrb[0].mxu0
  %v9627 = vadd.f32 %v9552, %v9626
  %v9628 = vpop.f32.mrb[0].mxu0
  %9629 = vdwg.mxu0
  %9630 = vmatprep.subr.mxu0 0.0
  %v9631 = vand.u32 %v14, 4294901760
  %v9632 = vsub.f32 %v14, %v9631
  %v9633 = vand.u32 %v9632, 4294901760
  %9634 = vmatpush1.msra.mxu0 %v9633
  %9635 = vmatprep.subr.mxu0 0.0
  %v9636 = vand.u32 %v15, 4294901760
  %v9637 = vsub.f32 %v15, %v9636
  %v9638 = vand.u32 %v9637, 4294901760
  %9639 = vmatpush1.msra.mxu0 %v9638
  %9640 = vmatprep.subr.mxu0 0.0
  %9641 = vmatpush1.msra.mxu0 0.0
  %9642 = vmatprep.subr.mxu0 0.0
  %9643 = vmatpush1.msra.mxu0 0.0
  %9644 = vmatprep.subr.mxu0 0.0
  %9645 = vmatpush1.msra.mxu0 0.0
  %9646 = vmatprep.subr.mxu0 0.0
  %9647 = vmatpush1.msra.mxu0 0.0
  %9648 = vmatprep.subr.mxu0 0.0
  %9649 = vmatpush1.msra.mxu0 0.0
  %9650 = vmatprep.subr.mxu0 0.0
  %9651 = vmatpush1.msra.mxu0 0.0
  %9652 = vmatprep.subr.mxu0 0.0
  %9653 = vmatpush1.msra.mxu0 0.0
  %9654 = vmatprep.subr.mxu0 0.0
  %9655 = vmatpush1.msra.mxu0 0.0
  %9656 = vmatprep.subr.mxu0 0.0
  %9657 = vmatpush1.msra.mxu0 0.0
  %9658 = vmatprep.subr.mxu0 0.0
  %9659 = vmatpush1.msra.mxu0 0.0
  %9660 = vmatprep.subr.mxu0 0.0
  %9661 = vmatpush1.msra.mxu0 0.0
  %9662 = vmatprep.subr.mxu0 0.0
  %9663 = vmatpush1.msra.mxu0 0.0
  %9664 = vmatprep.subr.mxu0 0.0
  %9665 = vmatpush1.msra.mxu0 0.0
  %9666 = vmatprep.subr.mxu0 0.0
  %9667 = vmatpush1.msra.mxu0 0.0
  %9668 = vmatprep.subr.mxu0 0.0
  %9669 = vmatpush1.msra.mxu0 0.0
  %9670 = vmatprep.subr.mxu0 0.0
  %9671 = vmatpush1.msra.mxu0 0.0
  %9672 = vmatprep.subr.mxu0 0.0
  %9673 = vmatpush1.msra.mxu0 0.0
  %9674 = vmatprep.subr.mxu0 0.0
  %9675 = vmatpush1.msra.mxu0 0.0
  %9676 = vmatprep.subr.mxu0 0.0
  %9677 = vmatpush1.msra.mxu0 0.0
  %9678 = vmatprep.subr.mxu0 0.0
  %9679 = vmatpush1.msra.mxu0 0.0
  %9680 = vmatprep.subr.mxu0 0.0
  %9681 = vmatpush1.msra.mxu0 0.0
  %9682 = vmatprep.subr.mxu0 0.0
  %9683 = vmatpush1.msra.mxu0 0.0
  %9684 = vmatprep.subr.mxu0 0.0
  %9685 = vmatpush1.msra.mxu0 0.0
  %9686 = vmatprep.subr.mxu0 0.0
  %9687 = vmatpush1.msra.mxu0 0.0
  %9688 = vmatprep.subr.mxu0 0.0
  %9689 = vmatpush1.msra.mxu0 0.0
  %9690 = vmatprep.subr.mxu0 0.0
  %9691 = vmatpush1.msra.mxu0 0.0
  %9692 = vmatprep.subr.mxu0 0.0
  %9693 = vmatpush1.msra.mxu0 0.0
  %9694 = vmatprep.subr.mxu0 0.0
  %9695 = vmatpush1.msra.mxu0 0.0
  %9696 = vmatprep.subr.mxu0 0.0
  %9697 = vmatpush1.msra.mxu0 0.0
  %9698 = vmatprep.subr.mxu0 0.0
  %9699 = vmatpush1.msra.mxu0 0.0
  %9700 = vmatprep.mubr.f32.mxu0 0.0
  %v9701 = vand.u32 %v9319, 4294901760
  %9702 = vmatmul.mubr.f32.gmra.mrb[0].mxu0 %v9701
  %v9703 = vpop.f32.mrb[0].mxu0
  %v9704 = vadd.f32 %v9627, %v9703
  %v9705 = vpop.f32.mrb[0].mxu0
  %9706 = vdwg.mxu0
  %9707 = vmatprep.subr.mxu0 0.0
  %v9708 = vand.u32 %v14, 4294901760
  %9709 = vmatpush1.msra.mxu0 %v9708
  %9710 = vmatprep.subr.mxu0 0.0
  %v9711 = vand.u32 %v15, 4294901760
  %9712 = vmatpush1.msra.mxu0 %v9711
  %9713 = vmatprep.subr.mxu0 0.0
  %9714 = vmatpush1.msra.mxu0 0.0
  %9715 = vmatprep.subr.mxu0 0.0
  %9716 = vmatpush1.msra.mxu0 0.0
  %9717 = vmatprep.subr.mxu0 0.0
  %9718 = vmatpush1.msra.mxu0 0.0
  %9719 = vmatprep.subr.mxu0 0.0
  %9720 = vmatpush1.msra.mxu0 0.0
  %9721 = vmatprep.subr.mxu0 0.0
  %9722 = vmatpush1.msra.mxu0 0.0
  %9723 = vmatprep.subr.mxu0 0.0
  %9724 = vmatpush1.msra.mxu0 0.0
  %9725 = vmatprep.subr.mxu0 0.0
  %9726 = vmatpush1.msra.mxu0 0.0
  %9727 = vmatprep.subr.mxu0 0.0
  %9728 = vmatpush1.msra.mxu0 0.0
  %9729 = vmatprep.subr.mxu0 0.0
  %9730 = vmatpush1.msra.mxu0 0.0
  %9731 = vmatprep.subr.mxu0 0.0
  %9732 = vmatpush1.msra.mxu0 0.0
  %9733 = vmatprep.subr.mxu0 0.0
  %9734 = vmatpush1.msra.mxu0 0.0
  %9735 = vmatprep.subr.mxu0 0.0
  %9736 = vmatpush1.msra.mxu0 0.0
  %9737 = vmatprep.subr.mxu0 0.0
  %9738 = vmatpush1.msra.mxu0 0.0
  %9739 = vmatprep.subr.mxu0 0.0
  %9740 = vmatpush1.msra.mxu0 0.0
  %9741 = vmatprep.subr.mxu0 0.0
  %9742 = vmatpush1.msra.mxu0 0.0
  %9743 = vmatprep.subr.mxu0 0.0
  %9744 = vmatpush1.msra.mxu0 0.0
  %9745 = vmatprep.subr.mxu0 0.0
  %9746 = vmatpush1.msra.mxu0 0.0
  %9747 = vmatprep.subr.mxu0 0.0
  %9748 = vmatpush1.msra.mxu0 0.0
  %9749 = vmatprep.subr.mxu0 0.0
  %9750 = vmatpush1.msra.mxu0 0.0
  %9751 = vmatprep.subr.mxu0 0.0
  %9752 = vmatpush1.msra.mxu0 0.0
  %9753 = vmatprep.subr.mxu0 0.0
  %9754 = vmatpush1.msra.mxu0 0.0
  %9755 = vmatprep.subr.mxu0 0.0
  %9756 = vmatpush1.msra.mxu0 0.0
  %9757 = vmatprep.subr.mxu0 0.0
  %9758 = vmatpush1.msra.mxu0 0.0
  %9759 = vmatprep.subr.mxu0 0.0
  %9760 = vmatpush1.msra.mxu0 0.0
  %9761 = vmatprep.subr.mxu0 0.0
  %9762 = vmatpush1.msra.mxu0 0.0
  %9763 = vmatprep.subr.mxu0 0.0
  %9764 = vmatpush1.msra.mxu0 0.0
  %9765 = vmatprep.subr.mxu0 0.0
  %9766 = vmatpush1.msra.mxu0 0.0
  %9767 = vmatprep.subr.mxu0 0.0
  %9768 = vmatpush1.msra.mxu0 0.0
  %9769 = vmatprep.subr.mxu0 0.0
  %9770 = vmatpush1.msra.mxu0 0.0
  %9771 = vmatprep.subr.mxu0 0.0
  %9772 = vmatpush1.msra.mxu0 0.0
  %9773 = vmatprep.mubr.f32.mxu0 0.0
  %v9774 = vand.u32 %v9319, 4294901760
  %9775 = vmatmul.mubr.f32.gmra.mrb[0].mxu0 %v9774
  %v9776 = vpop.f32.mrb[0].mxu0
  %v9777 = vadd.f32 %v9704, %v9776
  %v9778 = vpop.f32.mrb[0].mxu0
  %9779 = vdwg.mxu0
  %v9780 = vmul.f32 %v9777, 0.0625
  %v9782 = vcombine.high %v9780, %v9780
  %v9784 = vunpack.c.l.s4 1966171168
  %v9785 = vunpack.c.0.s8 %v9784
  %v9786 = vlaneseq
  %v9787 = vshrl.u32 %v9786, 7
  %v9788 = vsub.s32 %v9785, %v9787
  %v9789 = vrot.slane %v9780, %v9788
  %v9791 = vunpack.c.l.s4 1966171168
  %v9792 = vunpack.c.0.s8 %v9791
  %v9793 = vlaneseq
  %v9794 = vshrl.u32 %v9793, 7
  %v9795 = vsub.s32 %v9792, %v9794
  %v9796 = vrot.slane %v9782, %v9795
  %v9797 = vcombine.high %v9789, %v9789
  %v9798 = vcombine.high %v9796, %v9796
  %v9800 = vunpack.c.l.s4 1966171168
  %v9801 = vunpack.c.0.s8 %v9800
  %v9802 = vlaneseq
  %v9803 = vshrl.u32 %v9802, 7
  %v9804 = vsub.s32 %v9801, %v9803
  %v9805 = vrot.slane %v9789, %v9804
  %v9807 = vunpack.c.l.s4 1966171168
  %v9808 = vunpack.c.0.s8 %v9807
  %v9809 = vlaneseq
  %v9810 = vshrl.u32 %v9809, 7
  %v9811 = vsub.s32 %v9808, %v9810
  %v9812 = vrot.slane %v9796, %v9811
  %v9814 = vunpack.c.l.s4 1966171168
  %v9815 = vunpack.c.0.s8 %v9814
  %v9816 = vlaneseq
  %v9817 = vshrl.u32 %v9816, 7
  %v9818 = vsub.s32 %v9815, %v9817
  %v9819 = vrot.slane %v9797, %v9818
  %v9821 = vunpack.c.l.s4 1966171168
  %v9822 = vunpack.c.0.s8 %v9821
  %v9823 = vlaneseq
  %v9824 = vshrl.u32 %v9823, 7
  %v9825 = vsub.s32 %v9822, %v9824
  %v9826 = vrot.slane %v9798, %v9825
  %v9827 = vcombine.high %v9805, %v9805
  %v9828 = vcombine.high %v9812, %v9812
  %v9829 = vcombine.high %v9819, %v9819
  %v9830 = vcombine.high %v9826, %v9826
  %9839 = vst.msk [vmem:[%s3 + $0x5] sm:$0x1] %vm4833, %v9805
  %9840 = vst.msk [vmem:[%s3 + $0xd] sm:$0x1] %vm4833, %v9819
  %9841 = vst.msk [vmem:[%s3 + $0x15] sm:$0x1] %vm4833, %v9827
  %9842 = vst.msk [vmem:[%s3 + $0x1d] sm:$0x1] %vm4833, %v9829
  %9843 = vst.msk [vmem:[%s3 + $0x25] sm:$0x1] %vm4833, %v9812
  %9844 = vst.msk [vmem:[%s3 + $0x2d] sm:$0x1] %vm4833, %v9826
  %9845 = vst.msk [vmem:[%s3 + $0x35] sm:$0x1] %vm4833, %v9828
  %9846 = vst.msk [vmem:[%s3 + $0x3d] sm:$0x1] %vm4833, %v9830
  // Predicated region
  $region14: #{holographic_interaction.1} parent=0 // pred_check
    _
  $region15: #{holographic_interaction.1} parent=0 // pred_check_branch
    %9848 = sbr.rel (0) target = $region17
  $region16: #{holographic_interaction.1} parent=0 // pred_region
    _
  $region17: #{holographic_interaction.1} parent=0 // pred_fallthru
    _
  // Predicated region
  $region18: #{holographic_interaction.1} parent=0 // pred_check
    _
  $region19: #{holographic_interaction.1} parent=0 // pred_check_branch
    %9850 = sbr.rel (0) target = $region21
  $region20: #{holographic_interaction.1} parent=0 // pred_region
    _
  $region21: #{holographic_interaction.1} parent=0 // pred_fallthru
    _

</llo_original>
